<compile_context>
chip_gen: v7x
topology: tpu7x:2x2x1
jax: 0.10.0
libtpu: 0.0.40
codegen_flags: <defaults>
</compile_context>

<pallas_src>
import functools

import jax
import jax.numpy as jnp
from jax.experimental import pallas as pl
from jax.experimental.pallas import tpu as pltpu


CFG = dict(vocab=100, type_vocab=2, max_pos=16, H=32, heads=4, layers=2, ffn=64)


# --------------------------- fused forward kernel ---------------------------

def _transformer_kernel(
    emb_ref, amask_ref, emb_g_ref, emb_b_ref,
    wq_ref, bq_ref, wk_ref, bk_ref, wv_ref, bv_ref,
    wo_ref, bo_ref, ln1_g_ref, ln1_b_ref,
    w1_ref, b1_ref, w2_ref, b2_ref, ln2_g_ref, ln2_b_ref,
    pool_w_ref, pool_b_ref, fin_w_ref, fin_b_ref,
    out_ref, *, S, H, nh, F, L, eps):
  """One grid step = full forward pass for one batch element (kept in VMEM)."""
  D = H // nh
  scale = 1.0 / float(D) ** 0.5

  def layer_norm(x, g, b):
    mu = jnp.mean(x, axis=-1, keepdims=True)
    var = jnp.mean(jnp.square(x - mu), axis=-1, keepdims=True)
    return (x - mu) * jax.lax.rsqrt(var + eps) * g + b

  def gelu_exact(x):
    # Exact erf-based GELU (as in torch nn.GELU / HF BERT).  erf(x/sqrt(2)) via
    # Abramowitz-Stegun 7.1.26 (|err| <= 1.5e-7): only exp/mul/where, all of
    # which lower cleanly on Mosaic (no reliance on an erf primitive).
    sgn = jnp.where(x >= 0.0, 1.0, -1.0)
    z = x * sgn * 0.7071067811865476          # |x| / sqrt(2)
    t = 1.0 / (1.0 + 0.3275911 * z)
    poly = ((((1.061405429 * t - 1.453152027) * t + 1.421413741) * t
             - 0.284496736) * t + 0.254829592) * t
    erf = sgn * (1.0 - poly * jnp.exp(-z * z))
    return 0.5 * x * (1.0 + erf)

  amask = amask_ref[0]                                              # (1, S): 0 / -1e9
  h = layer_norm(emb_ref[0], emb_g_ref[...], emb_b_ref[...])        # (S, H)

  for l in range(L):
    # ----- multi-head self-attention; head concat folded into W_o -----
    attn = None
    for hh in range(nh):
      i = l * nh + hh
      q = jnp.dot(h, wq_ref[i], preferred_element_type=jnp.float32) + bq_ref[i]
      k = jnp.dot(h, wk_ref[i], preferred_element_type=jnp.float32) + bk_ref[i]
      v = jnp.dot(h, wv_ref[i], preferred_element_type=jnp.float32) + bv_ref[i]
      s = jnp.dot(q, k.T, preferred_element_type=jnp.float32) * scale + amask
      m = jnp.max(s, axis=-1, keepdims=True)
      p = jnp.exp(s - m)
      p = p * pl.reciprocal(jnp.sum(p, axis=-1, keepdims=True), approx=True)
      ctx = jnp.dot(p, v, preferred_element_type=jnp.float32)               # (S, D)
      contrib = jnp.dot(ctx, wo_ref[i], preferred_element_type=jnp.float32)  # (S, H)
      attn = contrib if attn is None else attn + contrib
    attn = attn + bo_ref[l]
    h1 = layer_norm(h + attn, ln1_g_ref[l], ln1_b_ref[l])          # residual fused

    # ----- feed-forward -----
    ffn = jnp.dot(h1, w1_ref[l], preferred_element_type=jnp.float32) + b1_ref[l]
    ffn = gelu_exact(ffn)
    ffn = jnp.dot(ffn, w2_ref[l], preferred_element_type=jnp.float32) + b2_ref[l]
    h = layer_norm(h1 + ffn, ln2_g_ref[l], ln2_b_ref[l])           # residual fused

  # ----- pooler_output (= outputs[1]) + Dropout(identity) + final + sigmoid -----
  first = h[0:1, :]                                                 # token 0: (1, H)
  pooled = jnp.tanh(
      jnp.dot(first, pool_w_ref[...], preferred_element_type=jnp.float32)
      + pool_b_ref[...])
  y = (jnp.dot(pooled, fin_w_ref[...], preferred_element_type=jnp.float32)
       + fin_b_ref[...])
  out_ref[0] = jax.nn.sigmoid(y).astype(out_ref.dtype)              # (1, 1)


# --------------------------- parameters (synthetic) ---------------------------

def init_params(key, cfg):
  H, F = cfg["H"], cfg["ffn"]

  def nrm(k, shape, scale=0.02):
    return scale * jax.random.normal(k, shape, dtype=jnp.float32)

  keys = iter(jax.random.split(key, 128))
  p = {
      "word_emb": nrm(next(keys), (cfg["vocab"], H)),
      "pos_emb": nrm(next(keys), (cfg["max_pos"], H)),
      "type_emb": nrm(next(keys), (cfg["type_vocab"], H)),
      "emb_ln_g": jnp.ones((H,), jnp.float32),
      "emb_ln_b": jnp.zeros((H,), jnp.float32),
      "layers": [],
      "pool_w": nrm(next(keys), (H, H)),
      "pool_b": jnp.zeros((H,), jnp.float32),
      "final_w": nrm(next(keys), (H, 1)),
      "final_b": jnp.zeros((1,), jnp.float32),
  }
  for _ in range(cfg["layers"]):
    p["layers"].append(dict(
        wq=nrm(next(keys), (H, H)), bq=jnp.zeros((H,), jnp.float32),
        wk=nrm(next(keys), (H, H)), bk=jnp.zeros((H,), jnp.float32),
        wv=nrm(next(keys), (H, H)), bv=jnp.zeros((H,), jnp.float32),
        wo=nrm(next(keys), (H, H)), bo=jnp.zeros((H,), jnp.float32),
        ln1_g=jnp.ones((H,), jnp.float32), ln1_b=jnp.zeros((H,), jnp.float32),
        w1=nrm(next(keys), (H, F)), b1=jnp.zeros((F,), jnp.float32),
        w2=nrm(next(keys), (F, H)), b2=jnp.zeros((H,), jnp.float32),
        ln2_g=jnp.ones((H,), jnp.float32), ln2_b=jnp.zeros((H,), jnp.float32),
    ))
  return p


# ------------------------------ forward pass ------------------------------

def transformer_reg_forward(params, x, x_mask, token_type_ids, cfg=CFG):
  B, S = x.shape
  H, nh, L, F = cfg["H"], cfg["heads"], cfg["layers"], cfg["ffn"]
  D = H // nh

  # ---- XLA glue: embedding gathers + additive mask + one-time weight re-layout ----
  emb = (params["word_emb"][x]
         + params["pos_emb"][jnp.arange(S)][None, :, :]
         + params["type_emb"][token_type_ids]).astype(jnp.float32)        # (B, S, H)
  amask = ((x_mask.astype(jnp.float32) - 1.0) * 1e9).reshape(B, 1, S)     # 0 / -1e9

  def stack(name):
    return jnp.stack([lp[name] for lp in params["layers"]], axis=0)

  # Per-head splits of Q/K/V/W_o done here (free), so the kernel never slices
  # the lane axis; biases reshaped to 2D rows for clean broadcasting.
  wq = stack("wq").reshape(L, H, nh, D).transpose(0, 2, 1, 3).reshape(L * nh, H, D)
  wk = stack("wk").reshape(L, H, nh, D).transpose(0, 2, 1, 3).reshape(L * nh, H, D)
  wv = stack("wv").reshape(L, H, nh, D).transpose(0, 2, 1, 3).reshape(L * nh, H, D)
  bq = stack("bq").reshape(L * nh, 1, D)
  bk = stack("bk").reshape(L * nh, 1, D)
  bv = stack("bv").reshape(L * nh, 1, D)
  wo = stack("wo").reshape(L * nh, D, H)
  bo = stack("bo").reshape(L, 1, H)
  ln1_g = stack("ln1_g").reshape(L, 1, H)
  ln1_b = stack("ln1_b").reshape(L, 1, H)
  w1 = stack("w1")                                  # (L, H, F)
  b1 = stack("b1").reshape(L, 1, F)
  w2 = stack("w2")                                  # (L, F, H)
  b2 = stack("b2").reshape(L, 1, H)
  ln2_g = stack("ln2_g").reshape(L, 1, H)
  ln2_b = stack("ln2_b").reshape(L, 1, H)

  inputs = (emb, amask,
            params["emb_ln_g"].reshape(1, H), params["emb_ln_b"].reshape(1, H),
            wq, bq, wk, bk, wv, bv, wo, bo, ln1_g, ln1_b,
            w1, b1, w2, b2, ln2_g, ln2_b,
            params["pool_w"], params["pool_b"].reshape(1, H),
            params["final_w"], params["final_b"].reshape(1, 1))

  def const_spec(a):
    zeros = (0,) * a.ndim
    return pl.BlockSpec(a.shape, lambda b, _z=zeros: _z)   # resident across steps

  in_specs = [
      pl.BlockSpec((1, S, H), lambda b: (b, 0, 0)),        # embeddings, per batch
      pl.BlockSpec((1, 1, S), lambda b: (b, 0, 0)),        # additive mask, per batch
  ] + [const_spec(a) for a in inputs[2:]]

  out = pl.pallas_call(
      functools.partial(_transformer_kernel,
                        S=S, H=H, nh=nh, F=F, L=L, eps=1e-12),
      out_shape=jax.ShapeDtypeStruct((B, 1, 1), jnp.float32),
      grid=(B,),
      in_specs=in_specs,
      out_specs=pl.BlockSpec((1, 1, 1), lambda b: (b, 0, 0)),
      compiler_params=pltpu.CompilerParams(
          dimension_semantics=("parallel",)),               # megacore on v7x
  )(*inputs)
  return out.reshape(B)                                     # y_pred.view(B)


# ---------------------------------- main ----------------------------------

if __name__ == "__main__":
  key = jax.random.PRNGKey(0)
  kp, kx, kt = jax.random.split(key, 3)

  B, S = 2, 8
  params = init_params(kp, CFG)

  x = jax.random.randint(kx, (B, S), 0, CFG["vocab"], dtype=jnp.int32)
  # attention mask: batch 0 fully valid, batch 1 has 2 padding tokens at the end
  x_mask = jnp.array([[1] * S, [1] * (S - 2) + [0] * 2], dtype=jnp.int32)
  token_type_ids = jax.random.randint(kt, (B, S), 0, CFG["type_vocab"],
                                      dtype=jnp.int32)

  forward = jax.jit(transformer_reg_forward)
  y_pred = forward(params, x, x_mask, token_type_ids)
  y_pred = jax.block_until_ready(y_pred)

  assert y_pred.shape == (B,)
  assert bool(jnp.all(jnp.isfinite(y_pred)))
  assert bool(jnp.all((y_pred > 0.0) & (y_pred < 1.0)))
  print("KERNEL_OK")
</pallas_src>

<mosaic_0001>
module attributes {stable_mosaic.version = 11 : i64} {
  func.func @_transformer_kernel(%arg0: i32, %arg1: memref<1x8x32xf32, #tpu.memory_space<vmem>>, %arg2: memref<1x1x8xf32, #tpu.memory_space<vmem>>, %arg3: memref<1x32xf32, #tpu.memory_space<vmem>>, %arg4: memref<1x32xf32, #tpu.memory_space<vmem>>, %arg5: memref<8x32x8xf32, #tpu.memory_space<vmem>>, %arg6: memref<8x1x8xf32, #tpu.memory_space<vmem>>, %arg7: memref<8x32x8xf32, #tpu.memory_space<vmem>>, %arg8: memref<8x1x8xf32, #tpu.memory_space<vmem>>, %arg9: memref<8x32x8xf32, #tpu.memory_space<vmem>>, %arg10: memref<8x1x8xf32, #tpu.memory_space<vmem>>, %arg11: memref<8x8x32xf32, #tpu.memory_space<vmem>>, %arg12: memref<2x1x32xf32, #tpu.memory_space<vmem>>, %arg13: memref<2x1x32xf32, #tpu.memory_space<vmem>>, %arg14: memref<2x1x32xf32, #tpu.memory_space<vmem>>, %arg15: memref<2x32x64xf32, #tpu.memory_space<vmem>>, %arg16: memref<2x1x64xf32, #tpu.memory_space<vmem>>, %arg17: memref<2x64x32xf32, #tpu.memory_space<vmem>>, %arg18: memref<2x1x32xf32, #tpu.memory_space<vmem>>, %arg19: memref<2x1x32xf32, #tpu.memory_space<vmem>>, %arg20: memref<2x1x32xf32, #tpu.memory_space<vmem>>, %arg21: memref<32x32xf32, #tpu.memory_space<vmem>>, %arg22: memref<1x32xf32, #tpu.memory_space<vmem>>, %arg23: memref<32x1xf32, #tpu.memory_space<vmem>>, %arg24: memref<1x1xf32, #tpu.memory_space<vmem>>, %arg25: memref<1x1x1xf32, #tpu.memory_space<vmem>>) attributes {dimension_semantics = [#tpu.dimension_semantics<parallel>], iteration_bounds = array<i64: 2>, scalar_prefetch = 0 : i64, scratch_operands = 0 : i64, tpu.core_type = #tpu.core_type<tc>, window_params = [{transform_indices = @transform_0, window_bounds = array<i64: 1, 8, 32>}, {transform_indices = @transform_1, window_bounds = array<i64: 1, 1, 8>}, {pipeline_mode = #tpu.pipeline_mode<synchronous>, transform_indices = @transform_2, window_bounds = array<i64: 1, 32>}, {pipeline_mode = #tpu.pipeline_mode<synchronous>, transform_indices = @transform_3, window_bounds = array<i64: 1, 32>}, {pipeline_mode = #tpu.pipeline_mode<synchronous>, transform_indices = @transform_4, window_bounds = array<i64: 8, 32, 8>}, {pipeline_mode = #tpu.pipeline_mode<synchronous>, transform_indices = @transform_5, window_bounds = array<i64: 8, 1, 8>}, {pipeline_mode = #tpu.pipeline_mode<synchronous>, transform_indices = @transform_6, window_bounds = array<i64: 8, 32, 8>}, {pipeline_mode = #tpu.pipeline_mode<synchronous>, transform_indices = @transform_7, window_bounds = array<i64: 8, 1, 8>}, {pipeline_mode = #tpu.pipeline_mode<synchronous>, transform_indices = @transform_8, window_bounds = array<i64: 8, 32, 8>}, {pipeline_mode = #tpu.pipeline_mode<synchronous>, transform_indices = @transform_9, window_bounds = array<i64: 8, 1, 8>}, {pipeline_mode = #tpu.pipeline_mode<synchronous>, transform_indices = @transform_10, window_bounds = array<i64: 8, 8, 32>}, {pipeline_mode = #tpu.pipeline_mode<synchronous>, transform_indices = @transform_11, window_bounds = array<i64: 2, 1, 32>}, {pipeline_mode = #tpu.pipeline_mode<synchronous>, transform_indices = @transform_12, window_bounds = array<i64: 2, 1, 32>}, {pipeline_mode = #tpu.pipeline_mode<synchronous>, transform_indices = @transform_13, window_bounds = array<i64: 2, 1, 32>}, {pipeline_mode = #tpu.pipeline_mode<synchronous>, transform_indices = @transform_14, window_bounds = array<i64: 2, 32, 64>}, {pipeline_mode = #tpu.pipeline_mode<synchronous>, transform_indices = @transform_15, window_bounds = array<i64: 2, 1, 64>}, {pipeline_mode = #tpu.pipeline_mode<synchronous>, transform_indices = @transform_16, window_bounds = array<i64: 2, 64, 32>}, {pipeline_mode = #tpu.pipeline_mode<synchronous>, transform_indices = @transform_17, window_bounds = array<i64: 2, 1, 32>}, {pipeline_mode = #tpu.pipeline_mode<synchronous>, transform_indices = @transform_18, window_bounds = array<i64: 2, 1, 32>}, {pipeline_mode = #tpu.pipeline_mode<synchronous>, transform_indices = @transform_19, window_bounds = array<i64: 2, 1, 32>}, {pipeline_mode = #tpu.pipeline_mode<synchronous>, transform_indices = @transform_20, window_bounds = array<i64: 32, 32>}, {pipeline_mode = #tpu.pipeline_mode<synchronous>, transform_indices = @transform_21, window_bounds = array<i64: 1, 32>}, {pipeline_mode = #tpu.pipeline_mode<synchronous>, transform_indices = @transform_22, window_bounds = array<i64: 32, 1>}, {pipeline_mode = #tpu.pipeline_mode<synchronous>, transform_indices = @transform_23, window_bounds = array<i64: 1, 1>}, {transform_indices = @transform_24, window_bounds = array<i64: 1, 1, 1>}]} {
    %c0 = arith.constant 0 : index
    %c0_0 = arith.constant 0 : index
    %c0_1 = arith.constant 0 : index
    %0 = vector.load %arg2[%c0, %c0_0, %c0_1] : memref<1x1x8xf32, #tpu.memory_space<vmem>>, vector<1x1x8xf32>
    %1 = vector.shape_cast %0 : vector<1x1x8xf32> to vector<1x8xf32>
    %c0_2 = arith.constant 0 : index
    %c0_3 = arith.constant 0 : index
    %c0_4 = arith.constant 0 : index
    %2 = vector.load %arg1[%c0_2, %c0_3, %c0_4] : memref<1x8x32xf32, #tpu.memory_space<vmem>>, vector<1x8x32xf32>
    %3 = vector.shape_cast %2 : vector<1x8x32xf32> to vector<8x32xf32>
    %c0_5 = arith.constant 0 : index
    %c0_6 = arith.constant 0 : index
    %4 = vector.load %arg3[%c0_5, %c0_6] : memref<1x32xf32, #tpu.memory_space<vmem>>, vector<1x32xf32>
    %c0_7 = arith.constant 0 : index
    %c0_8 = arith.constant 0 : index
    %5 = vector.load %arg4[%c0_7, %c0_8] : memref<1x32xf32, #tpu.memory_space<vmem>>, vector<1x32xf32>
    %cst = arith.constant dense<0.000000e+00> : vector<8xf32>
    %6 = vector.multi_reduction <add>, %3, %cst [1] : vector<8x32xf32> to vector<8xf32>
    %7 = vector.shape_cast %6 : vector<8xf32> to vector<8x1xf32>
    %cst_9 = arith.constant 3.200000e+01 : f32
    %8 = vector.broadcast %cst_9 : f32 to vector<8x1xf32>
    %9 = arith.divf %7, %8 : vector<8x1xf32>
    %10 = vector.broadcast %9 : vector<8x1xf32> to vector<8x32xf32>
    %11 = arith.subf %3, %10 : vector<8x32xf32>
    %12 = arith.mulf %11, %11 : vector<8x32xf32>
    %cst_10 = arith.constant dense<0.000000e+00> : vector<8xf32>
    %13 = vector.multi_reduction <add>, %12, %cst_10 [1] : vector<8x32xf32> to vector<8xf32>
    %14 = vector.shape_cast %13 : vector<8xf32> to vector<8x1xf32>
    %cst_11 = arith.constant 3.200000e+01 : f32
    %15 = vector.broadcast %cst_11 : f32 to vector<8x1xf32>
    %16 = arith.divf %14, %15 : vector<8x1xf32>
    %17 = vector.broadcast %9 : vector<8x1xf32> to vector<8x32xf32>
    %18 = arith.subf %3, %17 : vector<8x32xf32>
    %cst_12 = arith.constant 9.99999996E-13 : f32
    %19 = vector.broadcast %cst_12 : f32 to vector<8x1xf32>
    %20 = arith.addf %16, %19 : vector<8x1xf32>
    %21 = math.rsqrt %20 : vector<8x1xf32>
    %22 = vector.broadcast %21 : vector<8x1xf32> to vector<8x32xf32>
    %23 = arith.mulf %18, %22 : vector<8x32xf32>
    %24 = vector.broadcast %4 : vector<1x32xf32> to vector<8x32xf32>
    %25 = arith.mulf %23, %24 : vector<8x32xf32>
    %26 = vector.broadcast %5 : vector<1x32xf32> to vector<8x32xf32>
    %27 = arith.addf %25, %26 : vector<8x32xf32>
    %c0_13 = arith.constant 0 : index
    %c0_14 = arith.constant 0 : index
    %c0_15 = arith.constant 0 : index
    %28 = vector.load %arg5[%c0_13, %c0_14, %c0_15] : memref<8x32x8xf32, #tpu.memory_space<vmem>>, vector<1x32x8xf32>
    %29 = vector.shape_cast %28 : vector<1x32x8xf32> to vector<32x8xf32>
    %cst_16 = arith.constant dense<0.000000e+00> : vector<8x8xf32>
    %30 = tpu.matmul %27, %29, %cst_16 {dimension_numbers = #tpu.dot_dimension_numbers<[1], [0], [0], [1], [0, 0, 1, 1], [], []>} : vector<8x32xf32>, vector<32x8xf32>, vector<8x8xf32> -> vector<8x8xf32>
    %c0_17 = arith.constant 0 : index
    %c0_18 = arith.constant 0 : index
    %c0_19 = arith.constant 0 : index
    %31 = vector.load %arg6[%c0_17, %c0_18, %c0_19] : memref<8x1x8xf32, #tpu.memory_space<vmem>>, vector<1x1x8xf32>
    %32 = vector.shape_cast %31 : vector<1x1x8xf32> to vector<1x8xf32>
    %33 = vector.broadcast %32 : vector<1x8xf32> to vector<8x8xf32>
    %34 = arith.addf %30, %33 : vector<8x8xf32>
    %c0_20 = arith.constant 0 : index
    %c0_21 = arith.constant 0 : index
    %c0_22 = arith.constant 0 : index
    %35 = vector.load %arg7[%c0_20, %c0_21, %c0_22] : memref<8x32x8xf32, #tpu.memory_space<vmem>>, vector<1x32x8xf32>
    %36 = vector.shape_cast %35 : vector<1x32x8xf32> to vector<32x8xf32>
    %cst_23 = arith.constant dense<0.000000e+00> : vector<8x8xf32>
    %37 = tpu.matmul %27, %36, %cst_23 {dimension_numbers = #tpu.dot_dimension_numbers<[1], [0], [0], [1], [0, 0, 1, 1], [], []>} : vector<8x32xf32>, vector<32x8xf32>, vector<8x8xf32> -> vector<8x8xf32>
    %c0_24 = arith.constant 0 : index
    %c0_25 = arith.constant 0 : index
    %c0_26 = arith.constant 0 : index
    %38 = vector.load %arg8[%c0_24, %c0_25, %c0_26] : memref<8x1x8xf32, #tpu.memory_space<vmem>>, vector<1x1x8xf32>
    %39 = vector.shape_cast %38 : vector<1x1x8xf32> to vector<1x8xf32>
    %40 = vector.broadcast %39 : vector<1x8xf32> to vector<8x8xf32>
    %41 = arith.addf %37, %40 : vector<8x8xf32>
    %c0_27 = arith.constant 0 : index
    %c0_28 = arith.constant 0 : index
    %c0_29 = arith.constant 0 : index
    %42 = vector.load %arg9[%c0_27, %c0_28, %c0_29] : memref<8x32x8xf32, #tpu.memory_space<vmem>>, vector<1x32x8xf32>
    %43 = vector.shape_cast %42 : vector<1x32x8xf32> to vector<32x8xf32>
    %cst_30 = arith.constant dense<0.000000e+00> : vector<8x8xf32>
    %44 = tpu.matmul %27, %43, %cst_30 {dimension_numbers = #tpu.dot_dimension_numbers<[1], [0], [0], [1], [0, 0, 1, 1], [], []>} : vector<8x32xf32>, vector<32x8xf32>, vector<8x8xf32> -> vector<8x8xf32>
    %c0_31 = arith.constant 0 : index
    %c0_32 = arith.constant 0 : index
    %c0_33 = arith.constant 0 : index
    %45 = vector.load %arg10[%c0_31, %c0_32, %c0_33] : memref<8x1x8xf32, #tpu.memory_space<vmem>>, vector<1x1x8xf32>
    %46 = vector.shape_cast %45 : vector<1x1x8xf32> to vector<1x8xf32>
    %47 = vector.broadcast %46 : vector<1x8xf32> to vector<8x8xf32>
    %48 = arith.addf %44, %47 : vector<8x8xf32>
    %49 = tpu.transpose %41, [1, 0] : vector<8x8xf32> -> vector<8x8xf32>
    %cst_34 = arith.constant dense<0.000000e+00> : vector<8x8xf32>
    %50 = tpu.matmul %34, %49, %cst_34 {dimension_numbers = #tpu.dot_dimension_numbers<[1], [0], [0], [1], [0, 0, 1, 1], [], []>} : vector<8x8xf32>, vector<8x8xf32>, vector<8x8xf32> -> vector<8x8xf32>
    %cst_35 = arith.constant 0.353553385 : f32
    %51 = vector.broadcast %cst_35 : f32 to vector<8x8xf32>
    %52 = arith.mulf %50, %51 : vector<8x8xf32>
    %53 = vector.broadcast %1 : vector<1x8xf32> to vector<8x8xf32>
    %54 = arith.addf %52, %53 : vector<8x8xf32>
    %cst_36 = arith.constant dense<0xFF800000> : vector<8xf32>
    %55 = vector.multi_reduction <maximumf>, %54, %cst_36 [1] : vector<8x8xf32> to vector<8xf32>
    %56 = vector.shape_cast %55 : vector<8xf32> to vector<8x1xf32>
    %57 = vector.broadcast %56 : vector<8x1xf32> to vector<8x8xf32>
    %58 = arith.subf %54, %57 : vector<8x8xf32>
    %59 = math.exp %58 : vector<8x8xf32>
    %cst_37 = arith.constant dense<0.000000e+00> : vector<8xf32>
    %60 = vector.multi_reduction <add>, %59, %cst_37 [1] : vector<8x8xf32> to vector<8xf32>
    %61 = vector.shape_cast %60 : vector<8xf32> to vector<8x1xf32>
    %62 = tpu.reciprocal %61 {approx = true} : vector<8x1xf32> -> vector<8x1xf32>
    %63 = vector.broadcast %62 : vector<8x1xf32> to vector<8x8xf32>
    %64 = arith.mulf %59, %63 : vector<8x8xf32>
    %cst_38 = arith.constant dense<0.000000e+00> : vector<8x8xf32>
    %65 = tpu.matmul %64, %48, %cst_38 {dimension_numbers = #tpu.dot_dimension_numbers<[1], [0], [0], [1], [0, 0, 1, 1], [], []>} : vector<8x8xf32>, vector<8x8xf32>, vector<8x8xf32> -> vector<8x8xf32>
    %c0_39 = arith.constant 0 : index
    %c0_40 = arith.constant 0 : index
    %c0_41 = arith.constant 0 : index
    %66 = vector.load %arg11[%c0_39, %c0_40, %c0_41] : memref<8x8x32xf32, #tpu.memory_space<vmem>>, vector<1x8x32xf32>
    %67 = vector.shape_cast %66 : vector<1x8x32xf32> to vector<8x32xf32>
    %cst_42 = arith.constant dense<0.000000e+00> : vector<8x32xf32>
    %68 = tpu.matmul %65, %67, %cst_42 {dimension_numbers = #tpu.dot_dimension_numbers<[1], [0], [0], [1], [0, 0, 1, 1], [], []>} : vector<8x8xf32>, vector<8x32xf32>, vector<8x32xf32> -> vector<8x32xf32>
    %c1 = arith.constant 1 : index
    %c0_43 = arith.constant 0 : index
    %c0_44 = arith.constant 0 : index
    %69 = vector.load %arg5[%c1, %c0_43, %c0_44] : memref<8x32x8xf32, #tpu.memory_space<vmem>>, vector<1x32x8xf32>
    %70 = vector.shape_cast %69 : vector<1x32x8xf32> to vector<32x8xf32>
    %cst_45 = arith.constant dense<0.000000e+00> : vector<8x8xf32>
    %71 = tpu.matmul %27, %70, %cst_45 {dimension_numbers = #tpu.dot_dimension_numbers<[1], [0], [0], [1], [0, 0, 1, 1], [], []>} : vector<8x32xf32>, vector<32x8xf32>, vector<8x8xf32> -> vector<8x8xf32>
    %c1_46 = arith.constant 1 : index
    %c0_47 = arith.constant 0 : index
    %c0_48 = arith.constant 0 : index
    %72 = vector.load %arg6[%c1_46, %c0_47, %c0_48] : memref<8x1x8xf32, #tpu.memory_space<vmem>>, vector<1x1x8xf32>
    %73 = vector.shape_cast %72 : vector<1x1x8xf32> to vector<1x8xf32>
    %74 = vector.broadcast %73 : vector<1x8xf32> to vector<8x8xf32>
    %75 = arith.addf %71, %74 : vector<8x8xf32>
    %c1_49 = arith.constant 1 : index
    %c0_50 = arith.constant 0 : index
    %c0_51 = arith.constant 0 : index
    %76 = vector.load %arg7[%c1_49, %c0_50, %c0_51] : memref<8x32x8xf32, #tpu.memory_space<vmem>>, vector<1x32x8xf32>
    %77 = vector.shape_cast %76 : vector<1x32x8xf32> to vector<32x8xf32>
    %cst_52 = arith.constant dense<0.000000e+00> : vector<8x8xf32>
    %78 = tpu.matmul %27, %77, %cst_52 {dimension_numbers = #tpu.dot_dimension_numbers<[1], [0], [0], [1], [0, 0, 1, 1], [], []>} : vector<8x32xf32>, vector<32x8xf32>, vector<8x8xf32> -> vector<8x8xf32>
    %c1_53 = arith.constant 1 : index
    %c0_54 = arith.constant 0 : index
    %c0_55 = arith.constant 0 : index
    %79 = vector.load %arg8[%c1_53, %c0_54, %c0_55] : memref<8x1x8xf32, #tpu.memory_space<vmem>>, vector<1x1x8xf32>
    %80 = vector.shape_cast %79 : vector<1x1x8xf32> to vector<1x8xf32>
    %81 = vector.broadcast %80 : vector<1x8xf32> to vector<8x8xf32>
    %82 = arith.addf %78, %81 : vector<8x8xf32>
    %c1_56 = arith.constant 1 : index
    %c0_57 = arith.constant 0 : index
    %c0_58 = arith.constant 0 : index
    %83 = vector.load %arg9[%c1_56, %c0_57, %c0_58] : memref<8x32x8xf32, #tpu.memory_space<vmem>>, vector<1x32x8xf32>
    %84 = vector.shape_cast %83 : vector<1x32x8xf32> to vector<32x8xf32>
    %cst_59 = arith.constant dense<0.000000e+00> : vector<8x8xf32>
    %85 = tpu.matmul %27, %84, %cst_59 {dimension_numbers = #tpu.dot_dimension_numbers<[1], [0], [0], [1], [0, 0, 1, 1], [], []>} : vector<8x32xf32>, vector<32x8xf32>, vector<8x8xf32> -> vector<8x8xf32>
    %c1_60 = arith.constant 1 : index
    %c0_61 = arith.constant 0 : index
    %c0_62 = arith.constant 0 : index
    %86 = vector.load %arg10[%c1_60, %c0_61, %c0_62] : memref<8x1x8xf32, #tpu.memory_space<vmem>>, vector<1x1x8xf32>
    %87 = vector.shape_cast %86 : vector<1x1x8xf32> to vector<1x8xf32>
    %88 = vector.broadcast %87 : vector<1x8xf32> to vector<8x8xf32>
    %89 = arith.addf %85, %88 : vector<8x8xf32>
    %90 = tpu.transpose %82, [1, 0] : vector<8x8xf32> -> vector<8x8xf32>
    %cst_63 = arith.constant dense<0.000000e+00> : vector<8x8xf32>
    %91 = tpu.matmul %75, %90, %cst_63 {dimension_numbers = #tpu.dot_dimension_numbers<[1], [0], [0], [1], [0, 0, 1, 1], [], []>} : vector<8x8xf32>, vector<8x8xf32>, vector<8x8xf32> -> vector<8x8xf32>
    %cst_64 = arith.constant 0.353553385 : f32
    %92 = vector.broadcast %cst_64 : f32 to vector<8x8xf32>
    %93 = arith.mulf %91, %92 : vector<8x8xf32>
    %94 = vector.broadcast %1 : vector<1x8xf32> to vector<8x8xf32>
    %95 = arith.addf %93, %94 : vector<8x8xf32>
    %cst_65 = arith.constant dense<0xFF800000> : vector<8xf32>
    %96 = vector.multi_reduction <maximumf>, %95, %cst_65 [1] : vector<8x8xf32> to vector<8xf32>
    %97 = vector.shape_cast %96 : vector<8xf32> to vector<8x1xf32>
    %98 = vector.broadcast %97 : vector<8x1xf32> to vector<8x8xf32>
    %99 = arith.subf %95, %98 : vector<8x8xf32>
    %100 = math.exp %99 : vector<8x8xf32>
    %cst_66 = arith.constant dense<0.000000e+00> : vector<8xf32>
    %101 = vector.multi_reduction <add>, %100, %cst_66 [1] : vector<8x8xf32> to vector<8xf32>
    %102 = vector.shape_cast %101 : vector<8xf32> to vector<8x1xf32>
    %103 = tpu.reciprocal %102 {approx = true} : vector<8x1xf32> -> vector<8x1xf32>
    %104 = vector.broadcast %103 : vector<8x1xf32> to vector<8x8xf32>
    %105 = arith.mulf %100, %104 : vector<8x8xf32>
    %cst_67 = arith.constant dense<0.000000e+00> : vector<8x8xf32>
    %106 = tpu.matmul %105, %89, %cst_67 {dimension_numbers = #tpu.dot_dimension_numbers<[1], [0], [0], [1], [0, 0, 1, 1], [], []>} : vector<8x8xf32>, vector<8x8xf32>, vector<8x8xf32> -> vector<8x8xf32>
    %c1_68 = arith.constant 1 : index
    %c0_69 = arith.constant 0 : index
    %c0_70 = arith.constant 0 : index
    %107 = vector.load %arg11[%c1_68, %c0_69, %c0_70] : memref<8x8x32xf32, #tpu.memory_space<vmem>>, vector<1x8x32xf32>
    %108 = vector.shape_cast %107 : vector<1x8x32xf32> to vector<8x32xf32>
    %cst_71 = arith.constant dense<0.000000e+00> : vector<8x32xf32>
    %109 = tpu.matmul %106, %108, %cst_71 {dimension_numbers = #tpu.dot_dimension_numbers<[1], [0], [0], [1], [0, 0, 1, 1], [], []>} : vector<8x8xf32>, vector<8x32xf32>, vector<8x32xf32> -> vector<8x32xf32>
    %110 = arith.addf %68, %109 : vector<8x32xf32>
    %c2 = arith.constant 2 : index
    %c0_72 = arith.constant 0 : index
    %c0_73 = arith.constant 0 : index
    %111 = vector.load %arg5[%c2, %c0_72, %c0_73] : memref<8x32x8xf32, #tpu.memory_space<vmem>>, vector<1x32x8xf32>
    %112 = vector.shape_cast %111 : vector<1x32x8xf32> to vector<32x8xf32>
    %cst_74 = arith.constant dense<0.000000e+00> : vector<8x8xf32>
    %113 = tpu.matmul %27, %112, %cst_74 {dimension_numbers = #tpu.dot_dimension_numbers<[1], [0], [0], [1], [0, 0, 1, 1], [], []>} : vector<8x32xf32>, vector<32x8xf32>, vector<8x8xf32> -> vector<8x8xf32>
    %c2_75 = arith.constant 2 : index
    %c0_76 = arith.constant 0 : index
    %c0_77 = arith.constant 0 : index
    %114 = vector.load %arg6[%c2_75, %c0_76, %c0_77] : memref<8x1x8xf32, #tpu.memory_space<vmem>>, vector<1x1x8xf32>
    %115 = vector.shape_cast %114 : vector<1x1x8xf32> to vector<1x8xf32>
    %116 = vector.broadcast %115 : vector<1x8xf32> to vector<8x8xf32>
    %117 = arith.addf %113, %116 : vector<8x8xf32>
    %c2_78 = arith.constant 2 : index
    %c0_79 = arith.constant 0 : index
    %c0_80 = arith.constant 0 : index
    %118 = vector.load %arg7[%c2_78, %c0_79, %c0_80] : memref<8x32x8xf32, #tpu.memory_space<vmem>>, vector<1x32x8xf32>
    %119 = vector.shape_cast %118 : vector<1x32x8xf32> to vector<32x8xf32>
    %cst_81 = arith.constant dense<0.000000e+00> : vector<8x8xf32>
    %120 = tpu.matmul %27, %119, %cst_81 {dimension_numbers = #tpu.dot_dimension_numbers<[1], [0], [0], [1], [0, 0, 1, 1], [], []>} : vector<8x32xf32>, vector<32x8xf32>, vector<8x8xf32> -> vector<8x8xf32>
    %c2_82 = arith.constant 2 : index
    %c0_83 = arith.constant 0 : index
    %c0_84 = arith.constant 0 : index
    %121 = vector.load %arg8[%c2_82, %c0_83, %c0_84] : memref<8x1x8xf32, #tpu.memory_space<vmem>>, vector<1x1x8xf32>
    %122 = vector.shape_cast %121 : vector<1x1x8xf32> to vector<1x8xf32>
    %123 = vector.broadcast %122 : vector<1x8xf32> to vector<8x8xf32>
    %124 = arith.addf %120, %123 : vector<8x8xf32>
    %c2_85 = arith.constant 2 : index
    %c0_86 = arith.constant 0 : index
    %c0_87 = arith.constant 0 : index
    %125 = vector.load %arg9[%c2_85, %c0_86, %c0_87] : memref<8x32x8xf32, #tpu.memory_space<vmem>>, vector<1x32x8xf32>
    %126 = vector.shape_cast %125 : vector<1x32x8xf32> to vector<32x8xf32>
    %cst_88 = arith.constant dense<0.000000e+00> : vector<8x8xf32>
    %127 = tpu.matmul %27, %126, %cst_88 {dimension_numbers = #tpu.dot_dimension_numbers<[1], [0], [0], [1], [0, 0, 1, 1], [], []>} : vector<8x32xf32>, vector<32x8xf32>, vector<8x8xf32> -> vector<8x8xf32>
    %c2_89 = arith.constant 2 : index
    %c0_90 = arith.constant 0 : index
    %c0_91 = arith.constant 0 : index
    %128 = vector.load %arg10[%c2_89, %c0_90, %c0_91] : memref<8x1x8xf32, #tpu.memory_space<vmem>>, vector<1x1x8xf32>
    %129 = vector.shape_cast %128 : vector<1x1x8xf32> to vector<1x8xf32>
    %130 = vector.broadcast %129 : vector<1x8xf32> to vector<8x8xf32>
    %131 = arith.addf %127, %130 : vector<8x8xf32>
    %132 = tpu.transpose %124, [1, 0] : vector<8x8xf32> -> vector<8x8xf32>
    %cst_92 = arith.constant dense<0.000000e+00> : vector<8x8xf32>
    %133 = tpu.matmul %117, %132, %cst_92 {dimension_numbers = #tpu.dot_dimension_numbers<[1], [0], [0], [1], [0, 0, 1, 1], [], []>} : vector<8x8xf32>, vector<8x8xf32>, vector<8x8xf32> -> vector<8x8xf32>
    %cst_93 = arith.constant 0.353553385 : f32
    %134 = vector.broadcast %cst_93 : f32 to vector<8x8xf32>
    %135 = arith.mulf %133, %134 : vector<8x8xf32>
    %136 = vector.broadcast %1 : vector<1x8xf32> to vector<8x8xf32>
    %137 = arith.addf %135, %136 : vector<8x8xf32>
    %cst_94 = arith.constant dense<0xFF800000> : vector<8xf32>
    %138 = vector.multi_reduction <maximumf>, %137, %cst_94 [1] : vector<8x8xf32> to vector<8xf32>
    %139 = vector.shape_cast %138 : vector<8xf32> to vector<8x1xf32>
    %140 = vector.broadcast %139 : vector<8x1xf32> to vector<8x8xf32>
    %141 = arith.subf %137, %140 : vector<8x8xf32>
    %142 = math.exp %141 : vector<8x8xf32>
    %cst_95 = arith.constant dense<0.000000e+00> : vector<8xf32>
    %143 = vector.multi_reduction <add>, %142, %cst_95 [1] : vector<8x8xf32> to vector<8xf32>
    %144 = vector.shape_cast %143 : vector<8xf32> to vector<8x1xf32>
    %145 = tpu.reciprocal %144 {approx = true} : vector<8x1xf32> -> vector<8x1xf32>
    %146 = vector.broadcast %145 : vector<8x1xf32> to vector<8x8xf32>
    %147 = arith.mulf %142, %146 : vector<8x8xf32>
    %cst_96 = arith.constant dense<0.000000e+00> : vector<8x8xf32>
    %148 = tpu.matmul %147, %131, %cst_96 {dimension_numbers = #tpu.dot_dimension_numbers<[1], [0], [0], [1], [0, 0, 1, 1], [], []>} : vector<8x8xf32>, vector<8x8xf32>, vector<8x8xf32> -> vector<8x8xf32>
    %c2_97 = arith.constant 2 : index
    %c0_98 = arith.constant 0 : index
    %c0_99 = arith.constant 0 : index
    %149 = vector.load %arg11[%c2_97, %c0_98, %c0_99] : memref<8x8x32xf32, #tpu.memory_space<vmem>>, vector<1x8x32xf32>
    %150 = vector.shape_cast %149 : vector<1x8x32xf32> to vector<8x32xf32>
    %cst_100 = arith.constant dense<0.000000e+00> : vector<8x32xf32>
    %151 = tpu.matmul %148, %150, %cst_100 {dimension_numbers = #tpu.dot_dimension_numbers<[1], [0], [0], [1], [0, 0, 1, 1], [], []>} : vector<8x8xf32>, vector<8x32xf32>, vector<8x32xf32> -> vector<8x32xf32>
    %152 = arith.addf %110, %151 : vector<8x32xf32>
    %c3 = arith.constant 3 : index
    %c0_101 = arith.constant 0 : index
    %c0_102 = arith.constant 0 : index
    %153 = vector.load %arg5[%c3, %c0_101, %c0_102] : memref<8x32x8xf32, #tpu.memory_space<vmem>>, vector<1x32x8xf32>
    %154 = vector.shape_cast %153 : vector<1x32x8xf32> to vector<32x8xf32>
    %cst_103 = arith.constant dense<0.000000e+00> : vector<8x8xf32>
    %155 = tpu.matmul %27, %154, %cst_103 {dimension_numbers = #tpu.dot_dimension_numbers<[1], [0], [0], [1], [0, 0, 1, 1], [], []>} : vector<8x32xf32>, vector<32x8xf32>, vector<8x8xf32> -> vector<8x8xf32>
    %c3_104 = arith.constant 3 : index
    %c0_105 = arith.constant 0 : index
    %c0_106 = arith.constant 0 : index
    %156 = vector.load %arg6[%c3_104, %c0_105, %c0_106] : memref<8x1x8xf32, #tpu.memory_space<vmem>>, vector<1x1x8xf32>
    %157 = vector.shape_cast %156 : vector<1x1x8xf32> to vector<1x8xf32>
    %158 = vector.broadcast %157 : vector<1x8xf32> to vector<8x8xf32>
    %159 = arith.addf %155, %158 : vector<8x8xf32>
    %c3_107 = arith.constant 3 : index
    %c0_108 = arith.constant 0 : index
    %c0_109 = arith.constant 0 : index
    %160 = vector.load %arg7[%c3_107, %c0_108, %c0_109] : memref<8x32x8xf32, #tpu.memory_space<vmem>>, vector<1x32x8xf32>
    %161 = vector.shape_cast %160 : vector<1x32x8xf32> to vector<32x8xf32>
    %cst_110 = arith.constant dense<0.000000e+00> : vector<8x8xf32>
    %162 = tpu.matmul %27, %161, %cst_110 {dimension_numbers = #tpu.dot_dimension_numbers<[1], [0], [0], [1], [0, 0, 1, 1], [], []>} : vector<8x32xf32>, vector<32x8xf32>, vector<8x8xf32> -> vector<8x8xf32>
    %c3_111 = arith.constant 3 : index
    %c0_112 = arith.constant 0 : index
    %c0_113 = arith.constant 0 : index
    %163 = vector.load %arg8[%c3_111, %c0_112, %c0_113] : memref<8x1x8xf32, #tpu.memory_space<vmem>>, vector<1x1x8xf32>
    %164 = vector.shape_cast %163 : vector<1x1x8xf32> to vector<1x8xf32>
    %165 = vector.broadcast %164 : vector<1x8xf32> to vector<8x8xf32>
    %166 = arith.addf %162, %165 : vector<8x8xf32>
    %c3_114 = arith.constant 3 : index
    %c0_115 = arith.constant 0 : index
    %c0_116 = arith.constant 0 : index
    %167 = vector.load %arg9[%c3_114, %c0_115, %c0_116] : memref<8x32x8xf32, #tpu.memory_space<vmem>>, vector<1x32x8xf32>
    %168 = vector.shape_cast %167 : vector<1x32x8xf32> to vector<32x8xf32>
    %cst_117 = arith.constant dense<0.000000e+00> : vector<8x8xf32>
    %169 = tpu.matmul %27, %168, %cst_117 {dimension_numbers = #tpu.dot_dimension_numbers<[1], [0], [0], [1], [0, 0, 1, 1], [], []>} : vector<8x32xf32>, vector<32x8xf32>, vector<8x8xf32> -> vector<8x8xf32>
    %c3_118 = arith.constant 3 : index
    %c0_119 = arith.constant 0 : index
    %c0_120 = arith.constant 0 : index
    %170 = vector.load %arg10[%c3_118, %c0_119, %c0_120] : memref<8x1x8xf32, #tpu.memory_space<vmem>>, vector<1x1x8xf32>
    %171 = vector.shape_cast %170 : vector<1x1x8xf32> to vector<1x8xf32>
    %172 = vector.broadcast %171 : vector<1x8xf32> to vector<8x8xf32>
    %173 = arith.addf %169, %172 : vector<8x8xf32>
    %174 = tpu.transpose %166, [1, 0] : vector<8x8xf32> -> vector<8x8xf32>
    %cst_121 = arith.constant dense<0.000000e+00> : vector<8x8xf32>
    %175 = tpu.matmul %159, %174, %cst_121 {dimension_numbers = #tpu.dot_dimension_numbers<[1], [0], [0], [1], [0, 0, 1, 1], [], []>} : vector<8x8xf32>, vector<8x8xf32>, vector<8x8xf32> -> vector<8x8xf32>
    %cst_122 = arith.constant 0.353553385 : f32
    %176 = vector.broadcast %cst_122 : f32 to vector<8x8xf32>
    %177 = arith.mulf %175, %176 : vector<8x8xf32>
    %178 = vector.broadcast %1 : vector<1x8xf32> to vector<8x8xf32>
    %179 = arith.addf %177, %178 : vector<8x8xf32>
    %cst_123 = arith.constant dense<0xFF800000> : vector<8xf32>
    %180 = vector.multi_reduction <maximumf>, %179, %cst_123 [1] : vector<8x8xf32> to vector<8xf32>
    %181 = vector.shape_cast %180 : vector<8xf32> to vector<8x1xf32>
    %182 = vector.broadcast %181 : vector<8x1xf32> to vector<8x8xf32>
    %183 = arith.subf %179, %182 : vector<8x8xf32>
    %184 = math.exp %183 : vector<8x8xf32>
    %cst_124 = arith.constant dense<0.000000e+00> : vector<8xf32>
    %185 = vector.multi_reduction <add>, %184, %cst_124 [1] : vector<8x8xf32> to vector<8xf32>
    %186 = vector.shape_cast %185 : vector<8xf32> to vector<8x1xf32>
    %187 = tpu.reciprocal %186 {approx = true} : vector<8x1xf32> -> vector<8x1xf32>
    %188 = vector.broadcast %187 : vector<8x1xf32> to vector<8x8xf32>
    %189 = arith.mulf %184, %188 : vector<8x8xf32>
    %cst_125 = arith.constant dense<0.000000e+00> : vector<8x8xf32>
    %190 = tpu.matmul %189, %173, %cst_125 {dimension_numbers = #tpu.dot_dimension_numbers<[1], [0], [0], [1], [0, 0, 1, 1], [], []>} : vector<8x8xf32>, vector<8x8xf32>, vector<8x8xf32> -> vector<8x8xf32>
    %c3_126 = arith.constant 3 : index
    %c0_127 = arith.constant 0 : index
    %c0_128 = arith.constant 0 : index
    %191 = vector.load %arg11[%c3_126, %c0_127, %c0_128] : memref<8x8x32xf32, #tpu.memory_space<vmem>>, vector<1x8x32xf32>
    %192 = vector.shape_cast %191 : vector<1x8x32xf32> to vector<8x32xf32>
    %cst_129 = arith.constant dense<0.000000e+00> : vector<8x32xf32>
    %193 = tpu.matmul %190, %192, %cst_129 {dimension_numbers = #tpu.dot_dimension_numbers<[1], [0], [0], [1], [0, 0, 1, 1], [], []>} : vector<8x8xf32>, vector<8x32xf32>, vector<8x32xf32> -> vector<8x32xf32>
    %194 = arith.addf %152, %193 : vector<8x32xf32>
    %c0_130 = arith.constant 0 : index
    %c0_131 = arith.constant 0 : index
    %c0_132 = arith.constant 0 : index
    %195 = vector.load %arg12[%c0_130, %c0_131, %c0_132] : memref<2x1x32xf32, #tpu.memory_space<vmem>>, vector<1x1x32xf32>
    %196 = vector.shape_cast %195 : vector<1x1x32xf32> to vector<1x32xf32>
    %197 = vector.broadcast %196 : vector<1x32xf32> to vector<8x32xf32>
    %198 = arith.addf %194, %197 : vector<8x32xf32>
    %199 = arith.addf %27, %198 : vector<8x32xf32>
    %c0_133 = arith.constant 0 : index
    %c0_134 = arith.constant 0 : index
    %c0_135 = arith.constant 0 : index
    %200 = vector.load %arg13[%c0_133, %c0_134, %c0_135] : memref<2x1x32xf32, #tpu.memory_space<vmem>>, vector<1x1x32xf32>
    %201 = vector.shape_cast %200 : vector<1x1x32xf32> to vector<1x32xf32>
    %c0_136 = arith.constant 0 : index
    %c0_137 = arith.constant 0 : index
    %c0_138 = arith.constant 0 : index
    %202 = vector.load %arg14[%c0_136, %c0_137, %c0_138] : memref<2x1x32xf32, #tpu.memory_space<vmem>>, vector<1x1x32xf32>
    %203 = vector.shape_cast %202 : vector<1x1x32xf32> to vector<1x32xf32>
    %cst_139 = arith.constant dense<0.000000e+00> : vector<8xf32>
    %204 = vector.multi_reduction <add>, %199, %cst_139 [1] : vector<8x32xf32> to vector<8xf32>
    %205 = vector.shape_cast %204 : vector<8xf32> to vector<8x1xf32>
    %cst_140 = arith.constant 3.200000e+01 : f32
    %206 = vector.broadcast %cst_140 : f32 to vector<8x1xf32>
    %207 = arith.divf %205, %206 : vector<8x1xf32>
    %208 = vector.broadcast %207 : vector<8x1xf32> to vector<8x32xf32>
    %209 = arith.subf %199, %208 : vector<8x32xf32>
    %210 = arith.mulf %209, %209 : vector<8x32xf32>
    %cst_141 = arith.constant dense<0.000000e+00> : vector<8xf32>
    %211 = vector.multi_reduction <add>, %210, %cst_141 [1] : vector<8x32xf32> to vector<8xf32>
    %212 = vector.shape_cast %211 : vector<8xf32> to vector<8x1xf32>
    %cst_142 = arith.constant 3.200000e+01 : f32
    %213 = vector.broadcast %cst_142 : f32 to vector<8x1xf32>
    %214 = arith.divf %212, %213 : vector<8x1xf32>
    %215 = vector.broadcast %207 : vector<8x1xf32> to vector<8x32xf32>
    %216 = arith.subf %199, %215 : vector<8x32xf32>
    %cst_143 = arith.constant 9.99999996E-13 : f32
    %217 = vector.broadcast %cst_143 : f32 to vector<8x1xf32>
    %218 = arith.addf %214, %217 : vector<8x1xf32>
    %219 = math.rsqrt %218 : vector<8x1xf32>
    %220 = vector.broadcast %219 : vector<8x1xf32> to vector<8x32xf32>
    %221 = arith.mulf %216, %220 : vector<8x32xf32>
    %222 = vector.broadcast %201 : vector<1x32xf32> to vector<8x32xf32>
    %223 = arith.mulf %221, %222 : vector<8x32xf32>
    %224 = vector.broadcast %203 : vector<1x32xf32> to vector<8x32xf32>
    %225 = arith.addf %223, %224 : vector<8x32xf32>
    %c0_144 = arith.constant 0 : index
    %c0_145 = arith.constant 0 : index
    %c0_146 = arith.constant 0 : index
    %226 = vector.load %arg15[%c0_144, %c0_145, %c0_146] : memref<2x32x64xf32, #tpu.memory_space<vmem>>, vector<1x32x64xf32>
    %227 = vector.shape_cast %226 : vector<1x32x64xf32> to vector<32x64xf32>
    %cst_147 = arith.constant dense<0.000000e+00> : vector<8x64xf32>
    %228 = tpu.matmul %225, %227, %cst_147 {dimension_numbers = #tpu.dot_dimension_numbers<[1], [0], [0], [1], [0, 0, 1, 1], [], []>} : vector<8x32xf32>, vector<32x64xf32>, vector<8x64xf32> -> vector<8x64xf32>
    %c0_148 = arith.constant 0 : index
    %c0_149 = arith.constant 0 : index
    %c0_150 = arith.constant 0 : index
    %229 = vector.load %arg16[%c0_148, %c0_149, %c0_150] : memref<2x1x64xf32, #tpu.memory_space<vmem>>, vector<1x1x64xf32>
    %230 = vector.shape_cast %229 : vector<1x1x64xf32> to vector<1x64xf32>
    %231 = vector.broadcast %230 : vector<1x64xf32> to vector<8x64xf32>
    %232 = arith.addf %228, %231 : vector<8x64xf32>
    %cst_151 = arith.constant 0.000000e+00 : f32
    %233 = vector.broadcast %cst_151 : f32 to vector<8x64xf32>
    %234 = arith.cmpf oge, %232, %233 : vector<8x64xf32>
    %cst_152 = arith.constant 1.000000e+00 : f32
    %cst_153 = arith.constant -1.000000e+00 : f32
    %235 = vector.broadcast %cst_152 : f32 to vector<8x64xf32>
    %236 = vector.broadcast %cst_153 : f32 to vector<8x64xf32>
    %237 = arith.select %234, %235, %236 : vector<8x64xi1>, vector<8x64xf32>
    %238 = arith.mulf %232, %237 : vector<8x64xf32>
    %cst_154 = arith.constant 0.707106769 : f32
    %239 = vector.broadcast %cst_154 : f32 to vector<8x64xf32>
    %240 = arith.mulf %238, %239 : vector<8x64xf32>
    %cst_155 = arith.constant 0.327591091 : f32
    %241 = vector.broadcast %cst_155 : f32 to vector<8x64xf32>
    %242 = arith.mulf %241, %240 : vector<8x64xf32>
    %cst_156 = arith.constant 1.000000e+00 : f32
    %243 = vector.broadcast %cst_156 : f32 to vector<8x64xf32>
    %244 = arith.addf %243, %242 : vector<8x64xf32>
    %cst_157 = arith.constant 1.000000e+00 : f32
    %245 = vector.broadcast %cst_157 : f32 to vector<8x64xf32>
    %246 = arith.divf %245, %244 : vector<8x64xf32>
    %cst_158 = arith.constant 1.06140542 : f32
    %247 = vector.broadcast %cst_158 : f32 to vector<8x64xf32>
    %248 = arith.mulf %247, %246 : vector<8x64xf32>
    %cst_159 = arith.constant 1.45315206 : f32
    %249 = vector.broadcast %cst_159 : f32 to vector<8x64xf32>
    %250 = arith.subf %248, %249 : vector<8x64xf32>
    %251 = arith.mulf %250, %246 : vector<8x64xf32>
    %cst_160 = arith.constant 1.42141378 : f32
    %252 = vector.broadcast %cst_160 : f32 to vector<8x64xf32>
    %253 = arith.addf %251, %252 : vector<8x64xf32>
    %254 = arith.mulf %253, %246 : vector<8x64xf32>
    %cst_161 = arith.constant 0.284496725 : f32
    %255 = vector.broadcast %cst_161 : f32 to vector<8x64xf32>
    %256 = arith.subf %254, %255 : vector<8x64xf32>
    %257 = arith.mulf %256, %246 : vector<8x64xf32>
    %cst_162 = arith.constant 0.254829586 : f32
    %258 = vector.broadcast %cst_162 : f32 to vector<8x64xf32>
    %259 = arith.addf %257, %258 : vector<8x64xf32>
    %260 = arith.mulf %259, %246 : vector<8x64xf32>
    %cst_163 = arith.constant 0.000000e+00 : f32
    %261 = vector.broadcast %cst_163 : f32 to vector<8x64xf32>
    %262 = arith.subf %261, %240 : vector<8x64xf32>
    %263 = arith.mulf %262, %240 : vector<8x64xf32>
    %264 = math.exp %263 : vector<8x64xf32>
    %265 = arith.mulf %260, %264 : vector<8x64xf32>
    %cst_164 = arith.constant 1.000000e+00 : f32
    %266 = vector.broadcast %cst_164 : f32 to vector<8x64xf32>
    %267 = arith.subf %266, %265 : vector<8x64xf32>
    %268 = arith.mulf %237, %267 : vector<8x64xf32>
    %cst_165 = arith.constant 5.000000e-01 : f32
    %269 = vector.broadcast %cst_165 : f32 to vector<8x64xf32>
    %270 = arith.mulf %269, %232 : vector<8x64xf32>
    %cst_166 = arith.constant 1.000000e+00 : f32
    %271 = vector.broadcast %cst_166 : f32 to vector<8x64xf32>
    %272 = arith.addf %271, %268 : vector<8x64xf32>
    %273 = arith.mulf %270, %272 : vector<8x64xf32>
    %c0_167 = arith.constant 0 : index
    %c0_168 = arith.constant 0 : index
    %c0_169 = arith.constant 0 : index
    %274 = vector.load %arg17[%c0_167, %c0_168, %c0_169] : memref<2x64x32xf32, #tpu.memory_space<vmem>>, vector<1x64x32xf32>
    %275 = vector.shape_cast %274 : vector<1x64x32xf32> to vector<64x32xf32>
    %cst_170 = arith.constant dense<0.000000e+00> : vector<8x32xf32>
    %276 = tpu.matmul %273, %275, %cst_170 {dimension_numbers = #tpu.dot_dimension_numbers<[1], [0], [0], [1], [0, 0, 1, 1], [], []>} : vector<8x64xf32>, vector<64x32xf32>, vector<8x32xf32> -> vector<8x32xf32>
    %c0_171 = arith.constant 0 : index
    %c0_172 = arith.constant 0 : index
    %c0_173 = arith.constant 0 : index
    %277 = vector.load %arg18[%c0_171, %c0_172, %c0_173] : memref<2x1x32xf32, #tpu.memory_space<vmem>>, vector<1x1x32xf32>
    %278 = vector.shape_cast %277 : vector<1x1x32xf32> to vector<1x32xf32>
    %279 = vector.broadcast %278 : vector<1x32xf32> to vector<8x32xf32>
    %280 = arith.addf %276, %279 : vector<8x32xf32>
    %281 = arith.addf %225, %280 : vector<8x32xf32>
    %c0_174 = arith.constant 0 : index
    %c0_175 = arith.constant 0 : index
    %c0_176 = arith.constant 0 : index
    %282 = vector.load %arg19[%c0_174, %c0_175, %c0_176] : memref<2x1x32xf32, #tpu.memory_space<vmem>>, vector<1x1x32xf32>
    %283 = vector.shape_cast %282 : vector<1x1x32xf32> to vector<1x32xf32>
    %c0_177 = arith.constant 0 : index
    %c0_178 = arith.constant 0 : index
    %c0_179 = arith.constant 0 : index
    %284 = vector.load %arg20[%c0_177, %c0_178, %c0_179] : memref<2x1x32xf32, #tpu.memory_space<vmem>>, vector<1x1x32xf32>
    %285 = vector.shape_cast %284 : vector<1x1x32xf32> to vector<1x32xf32>
    %cst_180 = arith.constant dense<0.000000e+00> : vector<8xf32>
    %286 = vector.multi_reduction <add>, %281, %cst_180 [1] : vector<8x32xf32> to vector<8xf32>
    %287 = vector.shape_cast %286 : vector<8xf32> to vector<8x1xf32>
    %cst_181 = arith.constant 3.200000e+01 : f32
    %288 = vector.broadcast %cst_181 : f32 to vector<8x1xf32>
    %289 = arith.divf %287, %288 : vector<8x1xf32>
    %290 = vector.broadcast %289 : vector<8x1xf32> to vector<8x32xf32>
    %291 = arith.subf %281, %290 : vector<8x32xf32>
    %292 = arith.mulf %291, %291 : vector<8x32xf32>
    %cst_182 = arith.constant dense<0.000000e+00> : vector<8xf32>
    %293 = vector.multi_reduction <add>, %292, %cst_182 [1] : vector<8x32xf32> to vector<8xf32>
    %294 = vector.shape_cast %293 : vector<8xf32> to vector<8x1xf32>
    %cst_183 = arith.constant 3.200000e+01 : f32
    %295 = vector.broadcast %cst_183 : f32 to vector<8x1xf32>
    %296 = arith.divf %294, %295 : vector<8x1xf32>
    %297 = vector.broadcast %289 : vector<8x1xf32> to vector<8x32xf32>
    %298 = arith.subf %281, %297 : vector<8x32xf32>
    %cst_184 = arith.constant 9.99999996E-13 : f32
    %299 = vector.broadcast %cst_184 : f32 to vector<8x1xf32>
    %300 = arith.addf %296, %299 : vector<8x1xf32>
    %301 = math.rsqrt %300 : vector<8x1xf32>
    %302 = vector.broadcast %301 : vector<8x1xf32> to vector<8x32xf32>
    %303 = arith.mulf %298, %302 : vector<8x32xf32>
    %304 = vector.broadcast %283 : vector<1x32xf32> to vector<8x32xf32>
    %305 = arith.mulf %303, %304 : vector<8x32xf32>
    %306 = vector.broadcast %285 : vector<1x32xf32> to vector<8x32xf32>
    %307 = arith.addf %305, %306 : vector<8x32xf32>
    %c4 = arith.constant 4 : index
    %c0_185 = arith.constant 0 : index
    %c0_186 = arith.constant 0 : index
    %308 = vector.load %arg5[%c4, %c0_185, %c0_186] : memref<8x32x8xf32, #tpu.memory_space<vmem>>, vector<1x32x8xf32>
    %309 = vector.shape_cast %308 : vector<1x32x8xf32> to vector<32x8xf32>
    %cst_187 = arith.constant dense<0.000000e+00> : vector<8x8xf32>
    %310 = tpu.matmul %307, %309, %cst_187 {dimension_numbers = #tpu.dot_dimension_numbers<[1], [0], [0], [1], [0, 0, 1, 1], [], []>} : vector<8x32xf32>, vector<32x8xf32>, vector<8x8xf32> -> vector<8x8xf32>
    %c4_188 = arith.constant 4 : index
    %c0_189 = arith.constant 0 : index
    %c0_190 = arith.constant 0 : index
    %311 = vector.load %arg6[%c4_188, %c0_189, %c0_190] : memref<8x1x8xf32, #tpu.memory_space<vmem>>, vector<1x1x8xf32>
    %312 = vector.shape_cast %311 : vector<1x1x8xf32> to vector<1x8xf32>
    %313 = vector.broadcast %312 : vector<1x8xf32> to vector<8x8xf32>
    %314 = arith.addf %310, %313 : vector<8x8xf32>
    %c4_191 = arith.constant 4 : index
    %c0_192 = arith.constant 0 : index
    %c0_193 = arith.constant 0 : index
    %315 = vector.load %arg7[%c4_191, %c0_192, %c0_193] : memref<8x32x8xf32, #tpu.memory_space<vmem>>, vector<1x32x8xf32>
    %316 = vector.shape_cast %315 : vector<1x32x8xf32> to vector<32x8xf32>
    %cst_194 = arith.constant dense<0.000000e+00> : vector<8x8xf32>
    %317 = tpu.matmul %307, %316, %cst_194 {dimension_numbers = #tpu.dot_dimension_numbers<[1], [0], [0], [1], [0, 0, 1, 1], [], []>} : vector<8x32xf32>, vector<32x8xf32>, vector<8x8xf32> -> vector<8x8xf32>
    %c4_195 = arith.constant 4 : index
    %c0_196 = arith.constant 0 : index
    %c0_197 = arith.constant 0 : index
    %318 = vector.load %arg8[%c4_195, %c0_196, %c0_197] : memref<8x1x8xf32, #tpu.memory_space<vmem>>, vector<1x1x8xf32>
    %319 = vector.shape_cast %318 : vector<1x1x8xf32> to vector<1x8xf32>
    %320 = vector.broadcast %319 : vector<1x8xf32> to vector<8x8xf32>
    %321 = arith.addf %317, %320 : vector<8x8xf32>
    %c4_198 = arith.constant 4 : index
    %c0_199 = arith.constant 0 : index
    %c0_200 = arith.constant 0 : index
    %322 = vector.load %arg9[%c4_198, %c0_199, %c0_200] : memref<8x32x8xf32, #tpu.memory_space<vmem>>, vector<1x32x8xf32>
    %323 = vector.shape_cast %322 : vector<1x32x8xf32> to vector<32x8xf32>
    %cst_201 = arith.constant dense<0.000000e+00> : vector<8x8xf32>
    %324 = tpu.matmul %307, %323, %cst_201 {dimension_numbers = #tpu.dot_dimension_numbers<[1], [0], [0], [1], [0, 0, 1, 1], [], []>} : vector<8x32xf32>, vector<32x8xf32>, vector<8x8xf32> -> vector<8x8xf32>
    %c4_202 = arith.constant 4 : index
    %c0_203 = arith.constant 0 : index
    %c0_204 = arith.constant 0 : index
    %325 = vector.load %arg10[%c4_202, %c0_203, %c0_204] : memref<8x1x8xf32, #tpu.memory_space<vmem>>, vector<1x1x8xf32>
    %326 = vector.shape_cast %325 : vector<1x1x8xf32> to vector<1x8xf32>
    %327 = vector.broadcast %326 : vector<1x8xf32> to vector<8x8xf32>
    %328 = arith.addf %324, %327 : vector<8x8xf32>
    %329 = tpu.transpose %321, [1, 0] : vector<8x8xf32> -> vector<8x8xf32>
    %cst_205 = arith.constant dense<0.000000e+00> : vector<8x8xf32>
    %330 = tpu.matmul %314, %329, %cst_205 {dimension_numbers = #tpu.dot_dimension_numbers<[1], [0], [0], [1], [0, 0, 1, 1], [], []>} : vector<8x8xf32>, vector<8x8xf32>, vector<8x8xf32> -> vector<8x8xf32>
    %cst_206 = arith.constant 0.353553385 : f32
    %331 = vector.broadcast %cst_206 : f32 to vector<8x8xf32>
    %332 = arith.mulf %330, %331 : vector<8x8xf32>
    %333 = vector.broadcast %1 : vector<1x8xf32> to vector<8x8xf32>
    %334 = arith.addf %332, %333 : vector<8x8xf32>
    %cst_207 = arith.constant dense<0xFF800000> : vector<8xf32>
    %335 = vector.multi_reduction <maximumf>, %334, %cst_207 [1] : vector<8x8xf32> to vector<8xf32>
    %336 = vector.shape_cast %335 : vector<8xf32> to vector<8x1xf32>
    %337 = vector.broadcast %336 : vector<8x1xf32> to vector<8x8xf32>
    %338 = arith.subf %334, %337 : vector<8x8xf32>
    %339 = math.exp %338 : vector<8x8xf32>
    %cst_208 = arith.constant dense<0.000000e+00> : vector<8xf32>
    %340 = vector.multi_reduction <add>, %339, %cst_208 [1] : vector<8x8xf32> to vector<8xf32>
    %341 = vector.shape_cast %340 : vector<8xf32> to vector<8x1xf32>
    %342 = tpu.reciprocal %341 {approx = true} : vector<8x1xf32> -> vector<8x1xf32>
    %343 = vector.broadcast %342 : vector<8x1xf32> to vector<8x8xf32>
    %344 = arith.mulf %339, %343 : vector<8x8xf32>
    %cst_209 = arith.constant dense<0.000000e+00> : vector<8x8xf32>
    %345 = tpu.matmul %344, %328, %cst_209 {dimension_numbers = #tpu.dot_dimension_numbers<[1], [0], [0], [1], [0, 0, 1, 1], [], []>} : vector<8x8xf32>, vector<8x8xf32>, vector<8x8xf32> -> vector<8x8xf32>
    %c4_210 = arith.constant 4 : index
    %c0_211 = arith.constant 0 : index
    %c0_212 = arith.constant 0 : index
    %346 = vector.load %arg11[%c4_210, %c0_211, %c0_212] : memref<8x8x32xf32, #tpu.memory_space<vmem>>, vector<1x8x32xf32>
    %347 = vector.shape_cast %346 : vector<1x8x32xf32> to vector<8x32xf32>
    %cst_213 = arith.constant dense<0.000000e+00> : vector<8x32xf32>
    %348 = tpu.matmul %345, %347, %cst_213 {dimension_numbers = #tpu.dot_dimension_numbers<[1], [0], [0], [1], [0, 0, 1, 1], [], []>} : vector<8x8xf32>, vector<8x32xf32>, vector<8x32xf32> -> vector<8x32xf32>
    %c5 = arith.constant 5 : index
    %c0_214 = arith.constant 0 : index
    %c0_215 = arith.constant 0 : index
    %349 = vector.load %arg5[%c5, %c0_214, %c0_215] : memref<8x32x8xf32, #tpu.memory_space<vmem>>, vector<1x32x8xf32>
    %350 = vector.shape_cast %349 : vector<1x32x8xf32> to vector<32x8xf32>
    %cst_216 = arith.constant dense<0.000000e+00> : vector<8x8xf32>
    %351 = tpu.matmul %307, %350, %cst_216 {dimension_numbers = #tpu.dot_dimension_numbers<[1], [0], [0], [1], [0, 0, 1, 1], [], []>} : vector<8x32xf32>, vector<32x8xf32>, vector<8x8xf32> -> vector<8x8xf32>
    %c5_217 = arith.constant 5 : index
    %c0_218 = arith.constant 0 : index
    %c0_219 = arith.constant 0 : index
    %352 = vector.load %arg6[%c5_217, %c0_218, %c0_219] : memref<8x1x8xf32, #tpu.memory_space<vmem>>, vector<1x1x8xf32>
    %353 = vector.shape_cast %352 : vector<1x1x8xf32> to vector<1x8xf32>
    %354 = vector.broadcast %353 : vector<1x8xf32> to vector<8x8xf32>
    %355 = arith.addf %351, %354 : vector<8x8xf32>
    %c5_220 = arith.constant 5 : index
    %c0_221 = arith.constant 0 : index
    %c0_222 = arith.constant 0 : index
    %356 = vector.load %arg7[%c5_220, %c0_221, %c0_222] : memref<8x32x8xf32, #tpu.memory_space<vmem>>, vector<1x32x8xf32>
    %357 = vector.shape_cast %356 : vector<1x32x8xf32> to vector<32x8xf32>
    %cst_223 = arith.constant dense<0.000000e+00> : vector<8x8xf32>
    %358 = tpu.matmul %307, %357, %cst_223 {dimension_numbers = #tpu.dot_dimension_numbers<[1], [0], [0], [1], [0, 0, 1, 1], [], []>} : vector<8x32xf32>, vector<32x8xf32>, vector<8x8xf32> -> vector<8x8xf32>
    %c5_224 = arith.constant 5 : index
    %c0_225 = arith.constant 0 : index
    %c0_226 = arith.constant 0 : index
    %359 = vector.load %arg8[%c5_224, %c0_225, %c0_226] : memref<8x1x8xf32, #tpu.memory_space<vmem>>, vector<1x1x8xf32>
    %360 = vector.shape_cast %359 : vector<1x1x8xf32> to vector<1x8xf32>
    %361 = vector.broadcast %360 : vector<1x8xf32> to vector<8x8xf32>
    %362 = arith.addf %358, %361 : vector<8x8xf32>
    %c5_227 = arith.constant 5 : index
    %c0_228 = arith.constant 0 : index
    %c0_229 = arith.constant 0 : index
    %363 = vector.load %arg9[%c5_227, %c0_228, %c0_229] : memref<8x32x8xf32, #tpu.memory_space<vmem>>, vector<1x32x8xf32>
    %364 = vector.shape_cast %363 : vector<1x32x8xf32> to vector<32x8xf32>
    %cst_230 = arith.constant dense<0.000000e+00> : vector<8x8xf32>
    %365 = tpu.matmul %307, %364, %cst_230 {dimension_numbers = #tpu.dot_dimension_numbers<[1], [0], [0], [1], [0, 0, 1, 1], [], []>} : vector<8x32xf32>, vector<32x8xf32>, vector<8x8xf32> -> vector<8x8xf32>
    %c5_231 = arith.constant 5 : index
    %c0_232 = arith.constant 0 : index
    %c0_233 = arith.constant 0 : index
    %366 = vector.load %arg10[%c5_231, %c0_232, %c0_233] : memref<8x1x8xf32, #tpu.memory_space<vmem>>, vector<1x1x8xf32>
    %367 = vector.shape_cast %366 : vector<1x1x8xf32> to vector<1x8xf32>
    %368 = vector.broadcast %367 : vector<1x8xf32> to vector<8x8xf32>
    %369 = arith.addf %365, %368 : vector<8x8xf32>
    %370 = tpu.transpose %362, [1, 0] : vector<8x8xf32> -> vector<8x8xf32>
    %cst_234 = arith.constant dense<0.000000e+00> : vector<8x8xf32>
    %371 = tpu.matmul %355, %370, %cst_234 {dimension_numbers = #tpu.dot_dimension_numbers<[1], [0], [0], [1], [0, 0, 1, 1], [], []>} : vector<8x8xf32>, vector<8x8xf32>, vector<8x8xf32> -> vector<8x8xf32>
    %cst_235 = arith.constant 0.353553385 : f32
    %372 = vector.broadcast %cst_235 : f32 to vector<8x8xf32>
    %373 = arith.mulf %371, %372 : vector<8x8xf32>
    %374 = vector.broadcast %1 : vector<1x8xf32> to vector<8x8xf32>
    %375 = arith.addf %373, %374 : vector<8x8xf32>
    %cst_236 = arith.constant dense<0xFF800000> : vector<8xf32>
    %376 = vector.multi_reduction <maximumf>, %375, %cst_236 [1] : vector<8x8xf32> to vector<8xf32>
    %377 = vector.shape_cast %376 : vector<8xf32> to vector<8x1xf32>
    %378 = vector.broadcast %377 : vector<8x1xf32> to vector<8x8xf32>
    %379 = arith.subf %375, %378 : vector<8x8xf32>
    %380 = math.exp %379 : vector<8x8xf32>
    %cst_237 = arith.constant dense<0.000000e+00> : vector<8xf32>
    %381 = vector.multi_reduction <add>, %380, %cst_237 [1] : vector<8x8xf32> to vector<8xf32>
    %382 = vector.shape_cast %381 : vector<8xf32> to vector<8x1xf32>
    %383 = tpu.reciprocal %382 {approx = true} : vector<8x1xf32> -> vector<8x1xf32>
    %384 = vector.broadcast %383 : vector<8x1xf32> to vector<8x8xf32>
    %385 = arith.mulf %380, %384 : vector<8x8xf32>
    %cst_238 = arith.constant dense<0.000000e+00> : vector<8x8xf32>
    %386 = tpu.matmul %385, %369, %cst_238 {dimension_numbers = #tpu.dot_dimension_numbers<[1], [0], [0], [1], [0, 0, 1, 1], [], []>} : vector<8x8xf32>, vector<8x8xf32>, vector<8x8xf32> -> vector<8x8xf32>
    %c5_239 = arith.constant 5 : index
    %c0_240 = arith.constant 0 : index
    %c0_241 = arith.constant 0 : index
    %387 = vector.load %arg11[%c5_239, %c0_240, %c0_241] : memref<8x8x32xf32, #tpu.memory_space<vmem>>, vector<1x8x32xf32>
    %388 = vector.shape_cast %387 : vector<1x8x32xf32> to vector<8x32xf32>
    %cst_242 = arith.constant dense<0.000000e+00> : vector<8x32xf32>
    %389 = tpu.matmul %386, %388, %cst_242 {dimension_numbers = #tpu.dot_dimension_numbers<[1], [0], [0], [1], [0, 0, 1, 1], [], []>} : vector<8x8xf32>, vector<8x32xf32>, vector<8x32xf32> -> vector<8x32xf32>
    %390 = arith.addf %348, %389 : vector<8x32xf32>
    %c6 = arith.constant 6 : index
    %c0_243 = arith.constant 0 : index
    %c0_244 = arith.constant 0 : index
    %391 = vector.load %arg5[%c6, %c0_243, %c0_244] : memref<8x32x8xf32, #tpu.memory_space<vmem>>, vector<1x32x8xf32>
    %392 = vector.shape_cast %391 : vector<1x32x8xf32> to vector<32x8xf32>
    %cst_245 = arith.constant dense<0.000000e+00> : vector<8x8xf32>
    %393 = tpu.matmul %307, %392, %cst_245 {dimension_numbers = #tpu.dot_dimension_numbers<[1], [0], [0], [1], [0, 0, 1, 1], [], []>} : vector<8x32xf32>, vector<32x8xf32>, vector<8x8xf32> -> vector<8x8xf32>
    %c6_246 = arith.constant 6 : index
    %c0_247 = arith.constant 0 : index
    %c0_248 = arith.constant 0 : index
    %394 = vector.load %arg6[%c6_246, %c0_247, %c0_248] : memref<8x1x8xf32, #tpu.memory_space<vmem>>, vector<1x1x8xf32>
    %395 = vector.shape_cast %394 : vector<1x1x8xf32> to vector<1x8xf32>
    %396 = vector.broadcast %395 : vector<1x8xf32> to vector<8x8xf32>
    %397 = arith.addf %393, %396 : vector<8x8xf32>
    %c6_249 = arith.constant 6 : index
    %c0_250 = arith.constant 0 : index
    %c0_251 = arith.constant 0 : index
    %398 = vector.load %arg7[%c6_249, %c0_250, %c0_251] : memref<8x32x8xf32, #tpu.memory_space<vmem>>, vector<1x32x8xf32>
    %399 = vector.shape_cast %398 : vector<1x32x8xf32> to vector<32x8xf32>
    %cst_252 = arith.constant dense<0.000000e+00> : vector<8x8xf32>
    %400 = tpu.matmul %307, %399, %cst_252 {dimension_numbers = #tpu.dot_dimension_numbers<[1], [0], [0], [1], [0, 0, 1, 1], [], []>} : vector<8x32xf32>, vector<32x8xf32>, vector<8x8xf32> -> vector<8x8xf32>
    %c6_253 = arith.constant 6 : index
    %c0_254 = arith.constant 0 : index
    %c0_255 = arith.constant 0 : index
    %401 = vector.load %arg8[%c6_253, %c0_254, %c0_255] : memref<8x1x8xf32, #tpu.memory_space<vmem>>, vector<1x1x8xf32>
    %402 = vector.shape_cast %401 : vector<1x1x8xf32> to vector<1x8xf32>
    %403 = vector.broadcast %402 : vector<1x8xf32> to vector<8x8xf32>
    %404 = arith.addf %400, %403 : vector<8x8xf32>
    %c6_256 = arith.constant 6 : index
    %c0_257 = arith.constant 0 : index
    %c0_258 = arith.constant 0 : index
    %405 = vector.load %arg9[%c6_256, %c0_257, %c0_258] : memref<8x32x8xf32, #tpu.memory_space<vmem>>, vector<1x32x8xf32>
    %406 = vector.shape_cast %405 : vector<1x32x8xf32> to vector<32x8xf32>
    %cst_259 = arith.constant dense<0.000000e+00> : vector<8x8xf32>
    %407 = tpu.matmul %307, %406, %cst_259 {dimension_numbers = #tpu.dot_dimension_numbers<[1], [0], [0], [1], [0, 0, 1, 1], [], []>} : vector<8x32xf32>, vector<32x8xf32>, vector<8x8xf32> -> vector<8x8xf32>
    %c6_260 = arith.constant 6 : index
    %c0_261 = arith.constant 0 : index
    %c0_262 = arith.constant 0 : index
    %408 = vector.load %arg10[%c6_260, %c0_261, %c0_262] : memref<8x1x8xf32, #tpu.memory_space<vmem>>, vector<1x1x8xf32>
    %409 = vector.shape_cast %408 : vector<1x1x8xf32> to vector<1x8xf32>
    %410 = vector.broadcast %409 : vector<1x8xf32> to vector<8x8xf32>
    %411 = arith.addf %407, %410 : vector<8x8xf32>
    %412 = tpu.transpose %404, [1, 0] : vector<8x8xf32> -> vector<8x8xf32>
    %cst_263 = arith.constant dense<0.000000e+00> : vector<8x8xf32>
    %413 = tpu.matmul %397, %412, %cst_263 {dimension_numbers = #tpu.dot_dimension_numbers<[1], [0], [0], [1], [0, 0, 1, 1], [], []>} : vector<8x8xf32>, vector<8x8xf32>, vector<8x8xf32> -> vector<8x8xf32>
    %cst_264 = arith.constant 0.353553385 : f32
    %414 = vector.broadcast %cst_264 : f32 to vector<8x8xf32>
    %415 = arith.mulf %413, %414 : vector<8x8xf32>
    %416 = vector.broadcast %1 : vector<1x8xf32> to vector<8x8xf32>
    %417 = arith.addf %415, %416 : vector<8x8xf32>
    %cst_265 = arith.constant dense<0xFF800000> : vector<8xf32>
    %418 = vector.multi_reduction <maximumf>, %417, %cst_265 [1] : vector<8x8xf32> to vector<8xf32>
    %419 = vector.shape_cast %418 : vector<8xf32> to vector<8x1xf32>
    %420 = vector.broadcast %419 : vector<8x1xf32> to vector<8x8xf32>
    %421 = arith.subf %417, %420 : vector<8x8xf32>
    %422 = math.exp %421 : vector<8x8xf32>
    %cst_266 = arith.constant dense<0.000000e+00> : vector<8xf32>
    %423 = vector.multi_reduction <add>, %422, %cst_266 [1] : vector<8x8xf32> to vector<8xf32>
    %424 = vector.shape_cast %423 : vector<8xf32> to vector<8x1xf32>
    %425 = tpu.reciprocal %424 {approx = true} : vector<8x1xf32> -> vector<8x1xf32>
    %426 = vector.broadcast %425 : vector<8x1xf32> to vector<8x8xf32>
    %427 = arith.mulf %422, %426 : vector<8x8xf32>
    %cst_267 = arith.constant dense<0.000000e+00> : vector<8x8xf32>
    %428 = tpu.matmul %427, %411, %cst_267 {dimension_numbers = #tpu.dot_dimension_numbers<[1], [0], [0], [1], [0, 0, 1, 1], [], []>} : vector<8x8xf32>, vector<8x8xf32>, vector<8x8xf32> -> vector<8x8xf32>
    %c6_268 = arith.constant 6 : index
    %c0_269 = arith.constant 0 : index
    %c0_270 = arith.constant 0 : index
    %429 = vector.load %arg11[%c6_268, %c0_269, %c0_270] : memref<8x8x32xf32, #tpu.memory_space<vmem>>, vector<1x8x32xf32>
    %430 = vector.shape_cast %429 : vector<1x8x32xf32> to vector<8x32xf32>
    %cst_271 = arith.constant dense<0.000000e+00> : vector<8x32xf32>
    %431 = tpu.matmul %428, %430, %cst_271 {dimension_numbers = #tpu.dot_dimension_numbers<[1], [0], [0], [1], [0, 0, 1, 1], [], []>} : vector<8x8xf32>, vector<8x32xf32>, vector<8x32xf32> -> vector<8x32xf32>
    %432 = arith.addf %390, %431 : vector<8x32xf32>
    %c7 = arith.constant 7 : index
    %c0_272 = arith.constant 0 : index
    %c0_273 = arith.constant 0 : index
    %433 = vector.load %arg5[%c7, %c0_272, %c0_273] : memref<8x32x8xf32, #tpu.memory_space<vmem>>, vector<1x32x8xf32>
    %434 = vector.shape_cast %433 : vector<1x32x8xf32> to vector<32x8xf32>
    %cst_274 = arith.constant dense<0.000000e+00> : vector<8x8xf32>
    %435 = tpu.matmul %307, %434, %cst_274 {dimension_numbers = #tpu.dot_dimension_numbers<[1], [0], [0], [1], [0, 0, 1, 1], [], []>} : vector<8x32xf32>, vector<32x8xf32>, vector<8x8xf32> -> vector<8x8xf32>
    %c7_275 = arith.constant 7 : index
    %c0_276 = arith.constant 0 : index
    %c0_277 = arith.constant 0 : index
    %436 = vector.load %arg6[%c7_275, %c0_276, %c0_277] : memref<8x1x8xf32, #tpu.memory_space<vmem>>, vector<1x1x8xf32>
    %437 = vector.shape_cast %436 : vector<1x1x8xf32> to vector<1x8xf32>
    %438 = vector.broadcast %437 : vector<1x8xf32> to vector<8x8xf32>
    %439 = arith.addf %435, %438 : vector<8x8xf32>
    %c7_278 = arith.constant 7 : index
    %c0_279 = arith.constant 0 : index
    %c0_280 = arith.constant 0 : index
    %440 = vector.load %arg7[%c7_278, %c0_279, %c0_280] : memref<8x32x8xf32, #tpu.memory_space<vmem>>, vector<1x32x8xf32>
    %441 = vector.shape_cast %440 : vector<1x32x8xf32> to vector<32x8xf32>
    %cst_281 = arith.constant dense<0.000000e+00> : vector<8x8xf32>
    %442 = tpu.matmul %307, %441, %cst_281 {dimension_numbers = #tpu.dot_dimension_numbers<[1], [0], [0], [1], [0, 0, 1, 1], [], []>} : vector<8x32xf32>, vector<32x8xf32>, vector<8x8xf32> -> vector<8x8xf32>
    %c7_282 = arith.constant 7 : index
    %c0_283 = arith.constant 0 : index
    %c0_284 = arith.constant 0 : index
    %443 = vector.load %arg8[%c7_282, %c0_283, %c0_284] : memref<8x1x8xf32, #tpu.memory_space<vmem>>, vector<1x1x8xf32>
    %444 = vector.shape_cast %443 : vector<1x1x8xf32> to vector<1x8xf32>
    %445 = vector.broadcast %444 : vector<1x8xf32> to vector<8x8xf32>
    %446 = arith.addf %442, %445 : vector<8x8xf32>
    %c7_285 = arith.constant 7 : index
    %c0_286 = arith.constant 0 : index
    %c0_287 = arith.constant 0 : index
    %447 = vector.load %arg9[%c7_285, %c0_286, %c0_287] : memref<8x32x8xf32, #tpu.memory_space<vmem>>, vector<1x32x8xf32>
    %448 = vector.shape_cast %447 : vector<1x32x8xf32> to vector<32x8xf32>
    %cst_288 = arith.constant dense<0.000000e+00> : vector<8x8xf32>
    %449 = tpu.matmul %307, %448, %cst_288 {dimension_numbers = #tpu.dot_dimension_numbers<[1], [0], [0], [1], [0, 0, 1, 1], [], []>} : vector<8x32xf32>, vector<32x8xf32>, vector<8x8xf32> -> vector<8x8xf32>
    %c7_289 = arith.constant 7 : index
    %c0_290 = arith.constant 0 : index
    %c0_291 = arith.constant 0 : index
    %450 = vector.load %arg10[%c7_289, %c0_290, %c0_291] : memref<8x1x8xf32, #tpu.memory_space<vmem>>, vector<1x1x8xf32>
    %451 = vector.shape_cast %450 : vector<1x1x8xf32> to vector<1x8xf32>
    %452 = vector.broadcast %451 : vector<1x8xf32> to vector<8x8xf32>
    %453 = arith.addf %449, %452 : vector<8x8xf32>
    %454 = tpu.transpose %446, [1, 0] : vector<8x8xf32> -> vector<8x8xf32>
    %cst_292 = arith.constant dense<0.000000e+00> : vector<8x8xf32>
    %455 = tpu.matmul %439, %454, %cst_292 {dimension_numbers = #tpu.dot_dimension_numbers<[1], [0], [0], [1], [0, 0, 1, 1], [], []>} : vector<8x8xf32>, vector<8x8xf32>, vector<8x8xf32> -> vector<8x8xf32>
    %cst_293 = arith.constant 0.353553385 : f32
    %456 = vector.broadcast %cst_293 : f32 to vector<8x8xf32>
    %457 = arith.mulf %455, %456 : vector<8x8xf32>
    %458 = vector.broadcast %1 : vector<1x8xf32> to vector<8x8xf32>
    %459 = arith.addf %457, %458 : vector<8x8xf32>
    %cst_294 = arith.constant dense<0xFF800000> : vector<8xf32>
    %460 = vector.multi_reduction <maximumf>, %459, %cst_294 [1] : vector<8x8xf32> to vector<8xf32>
    %461 = vector.shape_cast %460 : vector<8xf32> to vector<8x1xf32>
    %462 = vector.broadcast %461 : vector<8x1xf32> to vector<8x8xf32>
    %463 = arith.subf %459, %462 : vector<8x8xf32>
    %464 = math.exp %463 : vector<8x8xf32>
    %cst_295 = arith.constant dense<0.000000e+00> : vector<8xf32>
    %465 = vector.multi_reduction <add>, %464, %cst_295 [1] : vector<8x8xf32> to vector<8xf32>
    %466 = vector.shape_cast %465 : vector<8xf32> to vector<8x1xf32>
    %467 = tpu.reciprocal %466 {approx = true} : vector<8x1xf32> -> vector<8x1xf32>
    %468 = vector.broadcast %467 : vector<8x1xf32> to vector<8x8xf32>
    %469 = arith.mulf %464, %468 : vector<8x8xf32>
    %cst_296 = arith.constant dense<0.000000e+00> : vector<8x8xf32>
    %470 = tpu.matmul %469, %453, %cst_296 {dimension_numbers = #tpu.dot_dimension_numbers<[1], [0], [0], [1], [0, 0, 1, 1], [], []>} : vector<8x8xf32>, vector<8x8xf32>, vector<8x8xf32> -> vector<8x8xf32>
    %c7_297 = arith.constant 7 : index
    %c0_298 = arith.constant 0 : index
    %c0_299 = arith.constant 0 : index
    %471 = vector.load %arg11[%c7_297, %c0_298, %c0_299] : memref<8x8x32xf32, #tpu.memory_space<vmem>>, vector<1x8x32xf32>
    %472 = vector.shape_cast %471 : vector<1x8x32xf32> to vector<8x32xf32>
    %cst_300 = arith.constant dense<0.000000e+00> : vector<8x32xf32>
    %473 = tpu.matmul %470, %472, %cst_300 {dimension_numbers = #tpu.dot_dimension_numbers<[1], [0], [0], [1], [0, 0, 1, 1], [], []>} : vector<8x8xf32>, vector<8x32xf32>, vector<8x32xf32> -> vector<8x32xf32>
    %474 = arith.addf %432, %473 : vector<8x32xf32>
    %c1_301 = arith.constant 1 : index
    %c0_302 = arith.constant 0 : index
    %c0_303 = arith.constant 0 : index
    %475 = vector.load %arg12[%c1_301, %c0_302, %c0_303] : memref<2x1x32xf32, #tpu.memory_space<vmem>>, vector<1x1x32xf32>
    %476 = vector.shape_cast %475 : vector<1x1x32xf32> to vector<1x32xf32>
    %477 = vector.broadcast %476 : vector<1x32xf32> to vector<8x32xf32>
    %478 = arith.addf %474, %477 : vector<8x32xf32>
    %479 = arith.addf %307, %478 : vector<8x32xf32>
    %c1_304 = arith.constant 1 : index
    %c0_305 = arith.constant 0 : index
    %c0_306 = arith.constant 0 : index
    %480 = vector.load %arg13[%c1_304, %c0_305, %c0_306] : memref<2x1x32xf32, #tpu.memory_space<vmem>>, vector<1x1x32xf32>
    %481 = vector.shape_cast %480 : vector<1x1x32xf32> to vector<1x32xf32>
    %c1_307 = arith.constant 1 : index
    %c0_308 = arith.constant 0 : index
    %c0_309 = arith.constant 0 : index
    %482 = vector.load %arg14[%c1_307, %c0_308, %c0_309] : memref<2x1x32xf32, #tpu.memory_space<vmem>>, vector<1x1x32xf32>
    %483 = vector.shape_cast %482 : vector<1x1x32xf32> to vector<1x32xf32>
    %cst_310 = arith.constant dense<0.000000e+00> : vector<8xf32>
    %484 = vector.multi_reduction <add>, %479, %cst_310 [1] : vector<8x32xf32> to vector<8xf32>
    %485 = vector.shape_cast %484 : vector<8xf32> to vector<8x1xf32>
    %cst_311 = arith.constant 3.200000e+01 : f32
    %486 = vector.broadcast %cst_311 : f32 to vector<8x1xf32>
    %487 = arith.divf %485, %486 : vector<8x1xf32>
    %488 = vector.broadcast %487 : vector<8x1xf32> to vector<8x32xf32>
    %489 = arith.subf %479, %488 : vector<8x32xf32>
    %490 = arith.mulf %489, %489 : vector<8x32xf32>
    %cst_312 = arith.constant dense<0.000000e+00> : vector<8xf32>
    %491 = vector.multi_reduction <add>, %490, %cst_312 [1] : vector<8x32xf32> to vector<8xf32>
    %492 = vector.shape_cast %491 : vector<8xf32> to vector<8x1xf32>
    %cst_313 = arith.constant 3.200000e+01 : f32
    %493 = vector.broadcast %cst_313 : f32 to vector<8x1xf32>
    %494 = arith.divf %492, %493 : vector<8x1xf32>
    %495 = vector.broadcast %487 : vector<8x1xf32> to vector<8x32xf32>
    %496 = arith.subf %479, %495 : vector<8x32xf32>
    %cst_314 = arith.constant 9.99999996E-13 : f32
    %497 = vector.broadcast %cst_314 : f32 to vector<8x1xf32>
    %498 = arith.addf %494, %497 : vector<8x1xf32>
    %499 = math.rsqrt %498 : vector<8x1xf32>
    %500 = vector.broadcast %499 : vector<8x1xf32> to vector<8x32xf32>
    %501 = arith.mulf %496, %500 : vector<8x32xf32>
    %502 = vector.broadcast %481 : vector<1x32xf32> to vector<8x32xf32>
    %503 = arith.mulf %501, %502 : vector<8x32xf32>
    %504 = vector.broadcast %483 : vector<1x32xf32> to vector<8x32xf32>
    %505 = arith.addf %503, %504 : vector<8x32xf32>
    %c1_315 = arith.constant 1 : index
    %c0_316 = arith.constant 0 : index
    %c0_317 = arith.constant 0 : index
    %506 = vector.load %arg15[%c1_315, %c0_316, %c0_317] : memref<2x32x64xf32, #tpu.memory_space<vmem>>, vector<1x32x64xf32>
    %507 = vector.shape_cast %506 : vector<1x32x64xf32> to vector<32x64xf32>
    %cst_318 = arith.constant dense<0.000000e+00> : vector<8x64xf32>
    %508 = tpu.matmul %505, %507, %cst_318 {dimension_numbers = #tpu.dot_dimension_numbers<[1], [0], [0], [1], [0, 0, 1, 1], [], []>} : vector<8x32xf32>, vector<32x64xf32>, vector<8x64xf32> -> vector<8x64xf32>
    %c1_319 = arith.constant 1 : index
    %c0_320 = arith.constant 0 : index
    %c0_321 = arith.constant 0 : index
    %509 = vector.load %arg16[%c1_319, %c0_320, %c0_321] : memref<2x1x64xf32, #tpu.memory_space<vmem>>, vector<1x1x64xf32>
    %510 = vector.shape_cast %509 : vector<1x1x64xf32> to vector<1x64xf32>
    %511 = vector.broadcast %510 : vector<1x64xf32> to vector<8x64xf32>
    %512 = arith.addf %508, %511 : vector<8x64xf32>
    %cst_322 = arith.constant 0.000000e+00 : f32
    %513 = vector.broadcast %cst_322 : f32 to vector<8x64xf32>
    %514 = arith.cmpf oge, %512, %513 : vector<8x64xf32>
    %cst_323 = arith.constant 1.000000e+00 : f32
    %cst_324 = arith.constant -1.000000e+00 : f32
    %515 = vector.broadcast %cst_323 : f32 to vector<8x64xf32>
    %516 = vector.broadcast %cst_324 : f32 to vector<8x64xf32>
    %517 = arith.select %514, %515, %516 : vector<8x64xi1>, vector<8x64xf32>
    %518 = arith.mulf %512, %517 : vector<8x64xf32>
    %cst_325 = arith.constant 0.707106769 : f32
    %519 = vector.broadcast %cst_325 : f32 to vector<8x64xf32>
    %520 = arith.mulf %518, %519 : vector<8x64xf32>
    %cst_326 = arith.constant 0.327591091 : f32
    %521 = vector.broadcast %cst_326 : f32 to vector<8x64xf32>
    %522 = arith.mulf %521, %520 : vector<8x64xf32>
    %cst_327 = arith.constant 1.000000e+00 : f32
    %523 = vector.broadcast %cst_327 : f32 to vector<8x64xf32>
    %524 = arith.addf %523, %522 : vector<8x64xf32>
    %cst_328 = arith.constant 1.000000e+00 : f32
    %525 = vector.broadcast %cst_328 : f32 to vector<8x64xf32>
    %526 = arith.divf %525, %524 : vector<8x64xf32>
    %cst_329 = arith.constant 1.06140542 : f32
    %527 = vector.broadcast %cst_329 : f32 to vector<8x64xf32>
    %528 = arith.mulf %527, %526 : vector<8x64xf32>
    %cst_330 = arith.constant 1.45315206 : f32
    %529 = vector.broadcast %cst_330 : f32 to vector<8x64xf32>
    %530 = arith.subf %528, %529 : vector<8x64xf32>
    %531 = arith.mulf %530, %526 : vector<8x64xf32>
    %cst_331 = arith.constant 1.42141378 : f32
    %532 = vector.broadcast %cst_331 : f32 to vector<8x64xf32>
    %533 = arith.addf %531, %532 : vector<8x64xf32>
    %534 = arith.mulf %533, %526 : vector<8x64xf32>
    %cst_332 = arith.constant 0.284496725 : f32
    %535 = vector.broadcast %cst_332 : f32 to vector<8x64xf32>
    %536 = arith.subf %534, %535 : vector<8x64xf32>
    %537 = arith.mulf %536, %526 : vector<8x64xf32>
    %cst_333 = arith.constant 0.254829586 : f32
    %538 = vector.broadcast %cst_333 : f32 to vector<8x64xf32>
    %539 = arith.addf %537, %538 : vector<8x64xf32>
    %540 = arith.mulf %539, %526 : vector<8x64xf32>
    %cst_334 = arith.constant 0.000000e+00 : f32
    %541 = vector.broadcast %cst_334 : f32 to vector<8x64xf32>
    %542 = arith.subf %541, %520 : vector<8x64xf32>
    %543 = arith.mulf %542, %520 : vector<8x64xf32>
    %544 = math.exp %543 : vector<8x64xf32>
    %545 = arith.mulf %540, %544 : vector<8x64xf32>
    %cst_335 = arith.constant 1.000000e+00 : f32
    %546 = vector.broadcast %cst_335 : f32 to vector<8x64xf32>
    %547 = arith.subf %546, %545 : vector<8x64xf32>
    %548 = arith.mulf %517, %547 : vector<8x64xf32>
    %cst_336 = arith.constant 5.000000e-01 : f32
    %549 = vector.broadcast %cst_336 : f32 to vector<8x64xf32>
    %550 = arith.mulf %549, %512 : vector<8x64xf32>
    %cst_337 = arith.constant 1.000000e+00 : f32
    %551 = vector.broadcast %cst_337 : f32 to vector<8x64xf32>
    %552 = arith.addf %551, %548 : vector<8x64xf32>
    %553 = arith.mulf %550, %552 : vector<8x64xf32>
    %c1_338 = arith.constant 1 : index
    %c0_339 = arith.constant 0 : index
    %c0_340 = arith.constant 0 : index
    %554 = vector.load %arg17[%c1_338, %c0_339, %c0_340] : memref<2x64x32xf32, #tpu.memory_space<vmem>>, vector<1x64x32xf32>
    %555 = vector.shape_cast %554 : vector<1x64x32xf32> to vector<64x32xf32>
    %cst_341 = arith.constant dense<0.000000e+00> : vector<8x32xf32>
    %556 = tpu.matmul %553, %555, %cst_341 {dimension_numbers = #tpu.dot_dimension_numbers<[1], [0], [0], [1], [0, 0, 1, 1], [], []>} : vector<8x64xf32>, vector<64x32xf32>, vector<8x32xf32> -> vector<8x32xf32>
    %c1_342 = arith.constant 1 : index
    %c0_343 = arith.constant 0 : index
    %c0_344 = arith.constant 0 : index
    %557 = vector.load %arg18[%c1_342, %c0_343, %c0_344] : memref<2x1x32xf32, #tpu.memory_space<vmem>>, vector<1x1x32xf32>
    %558 = vector.shape_cast %557 : vector<1x1x32xf32> to vector<1x32xf32>
    %559 = vector.broadcast %558 : vector<1x32xf32> to vector<8x32xf32>
    %560 = arith.addf %556, %559 : vector<8x32xf32>
    %561 = arith.addf %505, %560 : vector<8x32xf32>
    %c1_345 = arith.constant 1 : index
    %c0_346 = arith.constant 0 : index
    %c0_347 = arith.constant 0 : index
    %562 = vector.load %arg19[%c1_345, %c0_346, %c0_347] : memref<2x1x32xf32, #tpu.memory_space<vmem>>, vector<1x1x32xf32>
    %563 = vector.shape_cast %562 : vector<1x1x32xf32> to vector<1x32xf32>
    %c1_348 = arith.constant 1 : index
    %c0_349 = arith.constant 0 : index
    %c0_350 = arith.constant 0 : index
    %564 = vector.load %arg20[%c1_348, %c0_349, %c0_350] : memref<2x1x32xf32, #tpu.memory_space<vmem>>, vector<1x1x32xf32>
    %565 = vector.shape_cast %564 : vector<1x1x32xf32> to vector<1x32xf32>
    %cst_351 = arith.constant dense<0.000000e+00> : vector<8xf32>
    %566 = vector.multi_reduction <add>, %561, %cst_351 [1] : vector<8x32xf32> to vector<8xf32>
    %567 = vector.shape_cast %566 : vector<8xf32> to vector<8x1xf32>
    %cst_352 = arith.constant 3.200000e+01 : f32
    %568 = vector.broadcast %cst_352 : f32 to vector<8x1xf32>
    %569 = arith.divf %567, %568 : vector<8x1xf32>
    %570 = vector.broadcast %569 : vector<8x1xf32> to vector<8x32xf32>
    %571 = arith.subf %561, %570 : vector<8x32xf32>
    %572 = arith.mulf %571, %571 : vector<8x32xf32>
    %cst_353 = arith.constant dense<0.000000e+00> : vector<8xf32>
    %573 = vector.multi_reduction <add>, %572, %cst_353 [1] : vector<8x32xf32> to vector<8xf32>
    %574 = vector.shape_cast %573 : vector<8xf32> to vector<8x1xf32>
    %cst_354 = arith.constant 3.200000e+01 : f32
    %575 = vector.broadcast %cst_354 : f32 to vector<8x1xf32>
    %576 = arith.divf %574, %575 : vector<8x1xf32>
    %577 = vector.broadcast %569 : vector<8x1xf32> to vector<8x32xf32>
    %578 = arith.subf %561, %577 : vector<8x32xf32>
    %cst_355 = arith.constant 9.99999996E-13 : f32
    %579 = vector.broadcast %cst_355 : f32 to vector<8x1xf32>
    %580 = arith.addf %576, %579 : vector<8x1xf32>
    %581 = math.rsqrt %580 : vector<8x1xf32>
    %582 = vector.broadcast %581 : vector<8x1xf32> to vector<8x32xf32>
    %583 = arith.mulf %578, %582 : vector<8x32xf32>
    %584 = vector.broadcast %563 : vector<1x32xf32> to vector<8x32xf32>
    %585 = arith.mulf %583, %584 : vector<8x32xf32>
    %586 = vector.broadcast %565 : vector<1x32xf32> to vector<8x32xf32>
    %587 = arith.addf %585, %586 : vector<8x32xf32>
    %588 = vector.extract_strided_slice %587 {offsets = [0, 0], sizes = [1, 32], strides = [1, 1]} : vector<8x32xf32> to vector<1x32xf32>
    %c0_356 = arith.constant 0 : index
    %c0_357 = arith.constant 0 : index
    %589 = vector.load %arg21[%c0_356, %c0_357] : memref<32x32xf32, #tpu.memory_space<vmem>>, vector<32x32xf32>
    %cst_358 = arith.constant dense<0.000000e+00> : vector<1x32xf32>
    %590 = tpu.matmul %588, %589, %cst_358 {dimension_numbers = #tpu.dot_dimension_numbers<[1], [0], [0], [1], [0, 0, 1, 1], [], []>} : vector<1x32xf32>, vector<32x32xf32>, vector<1x32xf32> -> vector<1x32xf32>
    %c0_359 = arith.constant 0 : index
    %c0_360 = arith.constant 0 : index
    %591 = vector.load %arg22[%c0_359, %c0_360] : memref<1x32xf32, #tpu.memory_space<vmem>>, vector<1x32xf32>
    %592 = arith.addf %590, %591 : vector<1x32xf32>
    %593 = math.tanh %592 : vector<1x32xf32>
    %c0_361 = arith.constant 0 : index
    %c0_362 = arith.constant 0 : index
    %594 = vector.load %arg23[%c0_361, %c0_362] : memref<32x1xf32, #tpu.memory_space<vmem>>, vector<32x1xf32>
    %cst_363 = arith.constant dense<0.000000e+00> : vector<1x1xf32>
    %595 = tpu.matmul %593, %594, %cst_363 {dimension_numbers = #tpu.dot_dimension_numbers<[1], [0], [0], [1], [0, 0, 1, 1], [], []>} : vector<1x32xf32>, vector<32x1xf32>, vector<1x1xf32> -> vector<1x1xf32>
    %c0_364 = arith.constant 0 : index
    %c0_365 = arith.constant 0 : index
    %596 = vector.load %arg24[%c0_364, %c0_365] : memref<1x1xf32, #tpu.memory_space<vmem>>, vector<1x1xf32>
    %597 = arith.addf %595, %596 : vector<1x1xf32>
    %598 = arith.negf %597 : vector<1x1xf32>
    %599 = math.exp %598 : vector<1x1xf32>
    %cst_366 = arith.constant 1.000000e+00 : f32
    %600 = vector.broadcast %cst_366 : f32 to vector<1x1xf32>
    %601 = arith.addf %600, %599 : vector<1x1xf32>
    %602 = arith.divf %600, %601 : vector<1x1xf32>
    %c0_367 = arith.constant 0 : index
    %c0_368 = arith.constant 0 : index
    %c0_369 = arith.constant 0 : index
    %603 = vector.load %arg25[%c0_367, %c0_368, %c0_369] : memref<1x1x1xf32, #tpu.memory_space<vmem>>, vector<1x1x1xf32>
    %604 = vector.shape_cast %603 : vector<1x1x1xf32> to vector<1x1xf32>
    %605 = vector.shape_cast %602 : vector<1x1xf32> to vector<1x1x1xf32>
    tpu.vector_store %arg25[%c0_367, %c0_368, %c0_369], %605 {strides = array<i32>} : memref<1x1x1xf32, #tpu.memory_space<vmem>>, vector<1x1x1xf32>,
    return
  }
  func.func @transform_0(%arg0: i32) -> (i32, i32, i32) {
    %c0_i32 = arith.constant 0 : i32
    %c0_i32_0 = arith.constant 0 : i32
    %c0_i32_1 = arith.constant 0 : i32
    return %arg0, %c0_i32, %c0_i32_0 : i32, i32, i32
  }
  func.func @transform_1(%arg0: i32) -> (i32, i32, i32) {
    %c0_i32 = arith.constant 0 : i32
    %c0_i32_0 = arith.constant 0 : i32
    %c0_i32_1 = arith.constant 0 : i32
    return %arg0, %c0_i32, %c0_i32_0 : i32, i32, i32
  }
  func.func @transform_2(%arg0: i32) -> (i32, i32) {
    %c0_i32 = arith.constant 0 : i32
    %c0_i32_0 = arith.constant 0 : i32
    %c0_i32_1 = arith.constant 0 : i32
    return %c0_i32, %c0_i32_0 : i32, i32
  }
  func.func @transform_3(%arg0: i32) -> (i32, i32) {
    %c0_i32 = arith.constant 0 : i32
    %c0_i32_0 = arith.constant 0 : i32
    %c0_i32_1 = arith.constant 0 : i32
    return %c0_i32, %c0_i32_0 : i32, i32
  }
  func.func @transform_4(%arg0: i32) -> (i32, i32, i32) {
    %c0_i32 = arith.constant 0 : i32
    %c0_i32_0 = arith.constant 0 : i32
    %c0_i32_1 = arith.constant 0 : i32
    %c0_i32_2 = arith.constant 0 : i32
    return %c0_i32, %c0_i32_0, %c0_i32_1 : i32, i32, i32
  }
  func.func @transform_5(%arg0: i32) -> (i32, i32, i32) {
    %c0_i32 = arith.constant 0 : i32
    %c0_i32_0 = arith.constant 0 : i32
    %c0_i32_1 = arith.constant 0 : i32
    %c0_i32_2 = arith.constant 0 : i32
    return %c0_i32, %c0_i32_0, %c0_i32_1 : i32, i32, i32
  }
  func.func @transform_6(%arg0: i32) -> (i32, i32, i32) {
    %c0_i32 = arith.constant 0 : i32
    %c0_i32_0 = arith.constant 0 : i32
    %c0_i32_1 = arith.constant 0 : i32
    %c0_i32_2 = arith.constant 0 : i32
    return %c0_i32, %c0_i32_0, %c0_i32_1 : i32, i32, i32
  }
  func.func @transform_7(%arg0: i32) -> (i32, i32, i32) {
    %c0_i32 = arith.constant 0 : i32
    %c0_i32_0 = arith.constant 0 : i32
    %c0_i32_1 = arith.constant 0 : i32
    %c0_i32_2 = arith.constant 0 : i32
    return %c0_i32, %c0_i32_0, %c0_i32_1 : i32, i32, i32
  }
  func.func @transform_8(%arg0: i32) -> (i32, i32, i32) {
    %c0_i32 = arith.constant 0 : i32
    %c0_i32_0 = arith.constant 0 : i32
    %c0_i32_1 = arith.constant 0 : i32
    %c0_i32_2 = arith.constant 0 : i32
    return %c0_i32, %c0_i32_0, %c0_i32_1 : i32, i32, i32
  }
  func.func @transform_9(%arg0: i32) -> (i32, i32, i32) {
    %c0_i32 = arith.constant 0 : i32
    %c0_i32_0 = arith.constant 0 : i32
    %c0_i32_1 = arith.constant 0 : i32
    %c0_i32_2 = arith.constant 0 : i32
    return %c0_i32, %c0_i32_0, %c0_i32_1 : i32, i32, i32
  }
  func.func @transform_10(%arg0: i32) -> (i32, i32, i32) {
    %c0_i32 = arith.constant 0 : i32
    %c0_i32_0 = arith.constant 0 : i32
    %c0_i32_1 = arith.constant 0 : i32
    %c0_i32_2 = arith.constant 0 : i32
    return %c0_i32, %c0_i32_0, %c0_i32_1 : i32, i32, i32
  }
  func.func @transform_11(%arg0: i32) -> (i32, i32, i32) {
    %c0_i32 = arith.constant 0 : i32
    %c0_i32_0 = arith.constant 0 : i32
    %c0_i32_1 = arith.constant 0 : i32
    %c0_i32_2 = arith.constant 0 : i32
    return %c0_i32, %c0_i32_0, %c0_i32_1 : i32, i32, i32
  }
  func.func @transform_12(%arg0: i32) -> (i32, i32, i32) {
    %c0_i32 = arith.constant 0 : i32
    %c0_i32_0 = arith.constant 0 : i32
    %c0_i32_1 = arith.constant 0 : i32
    %c0_i32_2 = arith.constant 0 : i32
    return %c0_i32, %c0_i32_0, %c0_i32_1 : i32, i32, i32
  }
  func.func @transform_13(%arg0: i32) -> (i32, i32, i32) {
    %c0_i32 = arith.constant 0 : i32
    %c0_i32_0 = arith.constant 0 : i32
    %c0_i32_1 = arith.constant 0 : i32
    %c0_i32_2 = arith.constant 0 : i32
    return %c0_i32, %c0_i32_0, %c0_i32_1 : i32, i32, i32
  }
  func.func @transform_14(%arg0: i32) -> (i32, i32, i32) {
    %c0_i32 = arith.constant 0 : i32
    %c0_i32_0 = arith.constant 0 : i32
    %c0_i32_1 = arith.constant 0 : i32
    %c0_i32_2 = arith.constant 0 : i32
    return %c0_i32, %c0_i32_0, %c0_i32_1 : i32, i32, i32
  }
  func.func @transform_15(%arg0: i32) -> (i32, i32, i32) {
    %c0_i32 = arith.constant 0 : i32
    %c0_i32_0 = arith.constant 0 : i32
    %c0_i32_1 = arith.constant 0 : i32
    %c0_i32_2 = arith.constant 0 : i32
    return %c0_i32, %c0_i32_0, %c0_i32_1 : i32, i32, i32
  }
  func.func @transform_16(%arg0: i32) -> (i32, i32, i32) {
    %c0_i32 = arith.constant 0 : i32
    %c0_i32_0 = arith.constant 0 : i32
    %c0_i32_1 = arith.constant 0 : i32
    %c0_i32_2 = arith.constant 0 : i32
    return %c0_i32, %c0_i32_0, %c0_i32_1 : i32, i32, i32
  }
  func.func @transform_17(%arg0: i32) -> (i32, i32, i32) {
    %c0_i32 = arith.constant 0 : i32
    %c0_i32_0 = arith.constant 0 : i32
    %c0_i32_1 = arith.constant 0 : i32
    %c0_i32_2 = arith.constant 0 : i32
    return %c0_i32, %c0_i32_0, %c0_i32_1 : i32, i32, i32
  }
  func.func @transform_18(%arg0: i32) -> (i32, i32, i32) {
    %c0_i32 = arith.constant 0 : i32
    %c0_i32_0 = arith.constant 0 : i32
    %c0_i32_1 = arith.constant 0 : i32
    %c0_i32_2 = arith.constant 0 : i32
    return %c0_i32, %c0_i32_0, %c0_i32_1 : i32, i32, i32
  }
  func.func @transform_19(%arg0: i32) -> (i32, i32, i32) {
    %c0_i32 = arith.constant 0 : i32
    %c0_i32_0 = arith.constant 0 : i32
    %c0_i32_1 = arith.constant 0 : i32
    %c0_i32_2 = arith.constant 0 : i32
    return %c0_i32, %c0_i32_0, %c0_i32_1 : i32, i32, i32
  }
  func.func @transform_20(%arg0: i32) -> (i32, i32) {
    %c0_i32 = arith.constant 0 : i32
    %c0_i32_0 = arith.constant 0 : i32
    %c0_i32_1 = arith.constant 0 : i32
    return %c0_i32, %c0_i32_0 : i32, i32
  }
  func.func @transform_21(%arg0: i32) -> (i32, i32) {
    %c0_i32 = arith.constant 0 : i32
    %c0_i32_0 = arith.constant 0 : i32
    %c0_i32_1 = arith.constant 0 : i32
    return %c0_i32, %c0_i32_0 : i32, i32
  }
  func.func @transform_22(%arg0: i32) -> (i32, i32) {
    %c0_i32 = arith.constant 0 : i32
    %c0_i32_0 = arith.constant 0 : i32
    %c0_i32_1 = arith.constant 0 : i32
    return %c0_i32, %c0_i32_0 : i32, i32
  }
  func.func @transform_23(%arg0: i32) -> (i32, i32) {
    %c0_i32 = arith.constant 0 : i32
    %c0_i32_0 = arith.constant 0 : i32
    %c0_i32_1 = arith.constant 0 : i32
    return %c0_i32, %c0_i32_0 : i32, i32
  }
  func.func @transform_24(%arg0: i32) -> (i32, i32, i32) {
    %c0_i32 = arith.constant 0 : i32
    %c0_i32_0 = arith.constant 0 : i32
    %c0_i32_1 = arith.constant 0 : i32
    return %arg0, %c0_i32, %c0_i32_0 : i32, i32, i32
  }
}

</mosaic_0001>

<llo_original>
// kernel: transformer_reg_forward.1
$region0: #{transformer_reg_forward.1}
  #allocation0 [shape = 'u32[]', space=smem, size = 0x4, offset = 0x4, fixed_abs, tag = 'smem constant byte address 0x4 - core index']
  #allocation1 [shape = 'u32[144,128]{1,0:T(1,128)}', space=vmem, size = 0x12000, scoped, tag = 'internal scratch']
  #allocation2 [shape = 'f32[1,1]{1,0:T(1,128)S(1)}', space=vmem, size = 0x200, scoped, tag = 'scoped memory for transformer_reg_forward.1']
  %s0 = inlined_call_operand.vmem [shape: f32[2,8,32], index: 0, kind: input, shape index: {}]
  %s1 = inlined_call_operand.vmem [shape: f32[2,1,8], index: 1, kind: input, shape index: {}]
  %s2 = inlined_call_operand.vmem [shape: f32[1,32], index: 2, kind: input, shape index: {}]
  %s3 = inlined_call_operand.vmem [shape: f32[1,32], index: 3, kind: input, shape index: {}]
  %s4 = inlined_call_operand.vmem [shape: f32[8,32,8], index: 4, kind: input, shape index: {}]
  %s5 = inlined_call_operand.vmem [shape: f32[8,1,8], index: 5, kind: input, shape index: {}]
  %s6 = inlined_call_operand.vmem [shape: f32[8,32,8], index: 6, kind: input, shape index: {}]
  %s7 = inlined_call_operand.vmem [shape: f32[8,1,8], index: 7, kind: input, shape index: {}]
  %s8 = inlined_call_operand.vmem [shape: f32[8,32,8], index: 8, kind: input, shape index: {}]
  %s9 = inlined_call_operand.vmem [shape: f32[8,1,8], index: 9, kind: input, shape index: {}]
  %s10 = inlined_call_operand.vmem [shape: f32[8,8,32], index: 10, kind: input, shape index: {}]
  %s11 = inlined_call_operand.vmem [shape: f32[2,1,32], index: 11, kind: input, shape index: {}]
  %s12 = inlined_call_operand.vmem [shape: f32[2,1,32], index: 12, kind: input, shape index: {}]
  %s13 = inlined_call_operand.vmem [shape: f32[2,1,32], index: 13, kind: input, shape index: {}]
  %s14 = inlined_call_operand.vmem [shape: f32[2,32,64], index: 14, kind: input, shape index: {}]
  %s15 = inlined_call_operand.vmem [shape: f32[2,1,64], index: 15, kind: input, shape index: {}]
  %s16 = inlined_call_operand.vmem [shape: f32[2,64,32], index: 16, kind: input, shape index: {}]
  %s17 = inlined_call_operand.vmem [shape: f32[2,1,32], index: 17, kind: input, shape index: {}]
  %s18 = inlined_call_operand.vmem [shape: f32[2,1,32], index: 18, kind: input, shape index: {}]
  %s19 = inlined_call_operand.vmem [shape: f32[2,1,32], index: 19, kind: input, shape index: {}]
  %s20 = inlined_call_operand.vmem [shape: f32[32,32], index: 20, kind: input, shape index: {}]
  %s21 = inlined_call_operand.vmem [shape: f32[1,32], index: 21, kind: input, shape index: {}]
  %s22 = inlined_call_operand.vmem [shape: f32[32,1], index: 22, kind: input, shape index: {}]
  %s23 = inlined_call_operand.<no memory space> [shape: f32[1,1], index: 23, kind: input, shape index: {}]
  %s24 = inlined_call_operand.vmem [shape: f32[2,1,1], index: 24, kind: output, shape index: {}]
  %s25 = sld [smem:[#allocation0]]
  $region129: #{transformer_reg_forward.1} parent=0
    _
  %s27 = ssub.s32 1, %s25
  %s28 = scalar_select 0, %s27, %s25
  %v29 = vstv %s23
  %30 = vst [vmem:[#allocation2] sm:$0x1] %v29
  loop: start=0, step=1, limit=4
  $region2: #{transformer_reg_forward.1} parent=0 // loop_pre_header
    _
  $region3: #{transformer_reg_forward.1} parent=0 // loop_header
    %s32 = sphi 0, %s36
    %p33 = scmp.ge.s32.totalorder %s32, 4
    %s42 = sphi 0, %s44
    %s45 = sphi 0, %s42
    %s46 = sphi 0, %s45
    %s62 = sphi 0, %s46
    %s68 = sphi 0, %s70
    %s71 = sphi 0, %s68
    %s72 = sphi 0, %s71
    %s88 = sphi 0, %s72
    %s92 = sphi 0, %s92
    %s94 = sphi 0, %s92
    %s95 = sphi 0, %s94
    %s109 = sphi 0, %s95
    %s113 = sphi 0, %s113
    %s115 = sphi 0, %s113
    %s116 = sphi 0, %s115
    %s130 = sphi 0, %s116
    %s134 = sphi 0, %s134
    %s136 = sphi 0, %s134
    %s137 = sphi 0, %s136
    %s151 = sphi 0, %s137
    %s155 = sphi 0, %s155
    %s157 = sphi 0, %s155
    %s158 = sphi 0, %s157
    %s172 = sphi 0, %s158
    %s176 = sphi 0, %s176
    %s178 = sphi 0, %s176
    %s179 = sphi 0, %s178
    %s193 = sphi 0, %s179
    %s197 = sphi 0, %s197
    %s199 = sphi 0, %s197
    %s200 = sphi 0, %s199
    %s214 = sphi 0, %s200
    %s218 = sphi 0, %s218
    %s220 = sphi 0, %s218
    %s221 = sphi 0, %s220
    %s235 = sphi 0, %s221
    %s239 = sphi 0, %s239
    %s241 = sphi 0, %s239
    %s242 = sphi 0, %s241
    %s256 = sphi 0, %s242
    %s260 = sphi 0, %s260
    %s262 = sphi 0, %s260
    %s263 = sphi 0, %s262
    %s277 = sphi 0, %s263
    %s281 = sphi 0, %s281
    %s283 = sphi 0, %s281
    %s284 = sphi 0, %s283
    %s298 = sphi 0, %s284
    %s302 = sphi 0, %s302
    %s304 = sphi 0, %s302
    %s305 = sphi 0, %s304
    %s319 = sphi 0, %s305
    %s323 = sphi 0, %s323
    %s325 = sphi 0, %s323
    %s326 = sphi 0, %s325
    %s340 = sphi 0, %s326
    %s344 = sphi 0, %s344
    %s346 = sphi 0, %s344
    %s347 = sphi 0, %s346
    %s361 = sphi 0, %s347
    %s365 = sphi 0, %s365
    %s367 = sphi 0, %s365
    %s368 = sphi 0, %s367
    %s382 = sphi 0, %s368
    %s386 = sphi 0, %s386
    %s388 = sphi 0, %s386
    %s389 = sphi 0, %s388
    %s403 = sphi 0, %s389
    %s407 = sphi 0, %s407
    %s409 = sphi 0, %s407
    %s410 = sphi 0, %s409
    %s424 = sphi 0, %s410
    %s428 = sphi 0, %s428
    %s430 = sphi 0, %s428
    %s431 = sphi 0, %s430
    %s445 = sphi 0, %s431
    %s449 = sphi 0, %s449
    %s451 = sphi 0, %s449
    %s452 = sphi 0, %s451
    %s466 = sphi 0, %s452
    %s470 = sphi 0, %s470
    %s472 = sphi 0, %s470
    %s473 = sphi 0, %s472
    %s487 = sphi 0, %s473
    %s491 = sphi 0, %s491
    %s493 = sphi 0, %s491
    %s494 = sphi 0, %s493
    %s508 = sphi 0, %s494
    %s512 = sphi 0, %s512
    %s514 = sphi 0, %s512
    %s515 = sphi 0, %s514
    %s529 = sphi 0, %s515
    %s533 = sphi 0, %s533
    %s535 = sphi 0, %s533
    %s536 = sphi 0, %s535
    %s550 = sphi 0, %s536
    %s556 = sphi 0, %s558
    %s559 = sphi 0, %s556
    %s560 = sphi 0, %s559
    %s576 = sphi 0, %s560
  $region4: #{transformer_reg_forward.1} parent=0 // loop_header_branch
    %35 = sbr.rel (%p33) target = $region8
  $region5: #{transformer_reg_forward.1} parent=0 // loop_body
    %s37 = ssub.s32 %s32, 1
    %s38 = ssub.s32 %s32, 2
    %s39 = sadd.s32 %s32, 1
    %s40 = ssub.s32 %s32, %s39
    %p41 = scmp.eq.s32.totalorder %s40, 0
    %s43 = sadd.s32 %s42, 1
    %s44 = scalar_select %p41, %s42, %s43
    %p47 = pneg %p41
    %p48 = scmp.eq.s32.totalorder %s32, 1
    %p49 = por %p47, %p48
    %p50 = scmp.ne.s32.totalorder %s42, %s45
    %p51 = scmp.eq.s32.totalorder %s32, 0
    %p52 = por %p50, %p51
    %p53 = scmp.ne.s32.totalorder %s42, %s45
    %p54 = scmp.eq.s32.totalorder %s37, 1
    %p55 = por %p53, %p54
    %p56 = scmp.ne.s32.totalorder %s45, %s46
    %p57 = scmp.eq.s32.totalorder %s37, 0
    %p58 = por %p56, %p57
    %p59 = scmp.ne.s32.totalorder %s45, %s46
    %p60 = scmp.eq.s32.totalorder %s38, 1
    %p61 = por %p59, %p60
    %p63 = scmp.ne.s32.totalorder %s46, %s62
    %p64 = scmp.eq.s32.totalorder %s38, 0
    %p65 = por %p63, %p64
    %s66 = ssub.s32 %s32, %s39
    %p67 = scmp.eq.s32.totalorder %s66, 0
    %s69 = sadd.s32 %s68, 1
    %s70 = scalar_select %p67, %s68, %s69
    %p73 = pneg %p67
    %p74 = scmp.eq.s32.totalorder %s32, 1
    %p75 = por %p73, %p74
    %p76 = scmp.ne.s32.totalorder %s68, %s71
    %p77 = scmp.eq.s32.totalorder %s32, 0
    %p78 = por %p76, %p77
    %p79 = scmp.ne.s32.totalorder %s68, %s71
    %p80 = scmp.eq.s32.totalorder %s37, 1
    %p81 = por %p79, %p80
    %p82 = scmp.ne.s32.totalorder %s71, %s72
    %p83 = scmp.eq.s32.totalorder %s37, 0
    %p84 = por %p82, %p83
    %p85 = scmp.ne.s32.totalorder %s71, %s72
    %p86 = scmp.eq.s32.totalorder %s38, 1
    %p87 = por %p85, %p86
    %p89 = scmp.ne.s32.totalorder %s72, %s88
    %p90 = scmp.eq.s32.totalorder %s38, 0
    %p91 = por %p89, %p90
    %s93 = sadd.s32 %s92, 1
    %p96 = scmp.eq.s32.totalorder %s32, 1
    %p97 = scmp.ne.s32.totalorder %s92, %s94
    %p98 = scmp.eq.s32.totalorder %s32, 0
    %p99 = por %p97, %p98
    %p100 = scmp.ne.s32.totalorder %s92, %s94
    %p101 = scmp.eq.s32.totalorder %s37, 1
    %p102 = por %p100, %p101
    %p103 = scmp.ne.s32.totalorder %s94, %s95
    %p104 = scmp.eq.s32.totalorder %s37, 0
    %p105 = por %p103, %p104
    %p106 = scmp.ne.s32.totalorder %s94, %s95
    %p107 = scmp.eq.s32.totalorder %s38, 1
    %p108 = por %p106, %p107
    %p110 = scmp.ne.s32.totalorder %s95, %s109
    %p111 = scmp.eq.s32.totalorder %s38, 0
    %p112 = por %p110, %p111
    %s114 = sadd.s32 %s113, 1
    %p117 = scmp.eq.s32.totalorder %s32, 1
    %p118 = scmp.ne.s32.totalorder %s113, %s115
    %p119 = scmp.eq.s32.totalorder %s32, 0
    %p120 = por %p118, %p119
    %p121 = scmp.ne.s32.totalorder %s113, %s115
    %p122 = scmp.eq.s32.totalorder %s37, 1
    %p123 = por %p121, %p122
    %p124 = scmp.ne.s32.totalorder %s115, %s116
    %p125 = scmp.eq.s32.totalorder %s37, 0
    %p126 = por %p124, %p125
    %p127 = scmp.ne.s32.totalorder %s115, %s116
    %p128 = scmp.eq.s32.totalorder %s38, 1
    %p129 = por %p127, %p128
    %p131 = scmp.ne.s32.totalorder %s116, %s130
    %p132 = scmp.eq.s32.totalorder %s38, 0
    %p133 = por %p131, %p132
    %s135 = sadd.s32 %s134, 1
    %p138 = scmp.eq.s32.totalorder %s32, 1
    %p139 = scmp.ne.s32.totalorder %s134, %s136
    %p140 = scmp.eq.s32.totalorder %s32, 0
    %p141 = por %p139, %p140
    %p142 = scmp.ne.s32.totalorder %s134, %s136
    %p143 = scmp.eq.s32.totalorder %s37, 1
    %p144 = por %p142, %p143
    %p145 = scmp.ne.s32.totalorder %s136, %s137
    %p146 = scmp.eq.s32.totalorder %s37, 0
    %p147 = por %p145, %p146
    %p148 = scmp.ne.s32.totalorder %s136, %s137
    %p149 = scmp.eq.s32.totalorder %s38, 1
    %p150 = por %p148, %p149
    %p152 = scmp.ne.s32.totalorder %s137, %s151
    %p153 = scmp.eq.s32.totalorder %s38, 0
    %p154 = por %p152, %p153
    %s156 = sadd.s32 %s155, 1
    %p159 = scmp.eq.s32.totalorder %s32, 1
    %p160 = scmp.ne.s32.totalorder %s155, %s157
    %p161 = scmp.eq.s32.totalorder %s32, 0
    %p162 = por %p160, %p161
    %p163 = scmp.ne.s32.totalorder %s155, %s157
    %p164 = scmp.eq.s32.totalorder %s37, 1
    %p165 = por %p163, %p164
    %p166 = scmp.ne.s32.totalorder %s157, %s158
    %p167 = scmp.eq.s32.totalorder %s37, 0
    %p168 = por %p166, %p167
    %p169 = scmp.ne.s32.totalorder %s157, %s158
    %p170 = scmp.eq.s32.totalorder %s38, 1
    %p171 = por %p169, %p170
    %p173 = scmp.ne.s32.totalorder %s158, %s172
    %p174 = scmp.eq.s32.totalorder %s38, 0
    %p175 = por %p173, %p174
    %s177 = sadd.s32 %s176, 1
    %p180 = scmp.eq.s32.totalorder %s32, 1
    %p181 = scmp.ne.s32.totalorder %s176, %s178
    %p182 = scmp.eq.s32.totalorder %s32, 0
    %p183 = por %p181, %p182
    %p184 = scmp.ne.s32.totalorder %s176, %s178
    %p185 = scmp.eq.s32.totalorder %s37, 1
    %p186 = por %p184, %p185
    %p187 = scmp.ne.s32.totalorder %s178, %s179
    %p188 = scmp.eq.s32.totalorder %s37, 0
    %p189 = por %p187, %p188
    %p190 = scmp.ne.s32.totalorder %s178, %s179
    %p191 = scmp.eq.s32.totalorder %s38, 1
    %p192 = por %p190, %p191
    %p194 = scmp.ne.s32.totalorder %s179, %s193
    %p195 = scmp.eq.s32.totalorder %s38, 0
    %p196 = por %p194, %p195
    %s198 = sadd.s32 %s197, 1
    %p201 = scmp.eq.s32.totalorder %s32, 1
    %p202 = scmp.ne.s32.totalorder %s197, %s199
    %p203 = scmp.eq.s32.totalorder %s32, 0
    %p204 = por %p202, %p203
    %p205 = scmp.ne.s32.totalorder %s197, %s199
    %p206 = scmp.eq.s32.totalorder %s37, 1
    %p207 = por %p205, %p206
    %p208 = scmp.ne.s32.totalorder %s199, %s200
    %p209 = scmp.eq.s32.totalorder %s37, 0
    %p210 = por %p208, %p209
    %p211 = scmp.ne.s32.totalorder %s199, %s200
    %p212 = scmp.eq.s32.totalorder %s38, 1
    %p213 = por %p211, %p212
    %p215 = scmp.ne.s32.totalorder %s200, %s214
    %p216 = scmp.eq.s32.totalorder %s38, 0
    %p217 = por %p215, %p216
    %s219 = sadd.s32 %s218, 1
    %p222 = scmp.eq.s32.totalorder %s32, 1
    %p223 = scmp.ne.s32.totalorder %s218, %s220
    %p224 = scmp.eq.s32.totalorder %s32, 0
    %p225 = por %p223, %p224
    %p226 = scmp.ne.s32.totalorder %s218, %s220
    %p227 = scmp.eq.s32.totalorder %s37, 1
    %p228 = por %p226, %p227
    %p229 = scmp.ne.s32.totalorder %s220, %s221
    %p230 = scmp.eq.s32.totalorder %s37, 0
    %p231 = por %p229, %p230
    %p232 = scmp.ne.s32.totalorder %s220, %s221
    %p233 = scmp.eq.s32.totalorder %s38, 1
    %p234 = por %p232, %p233
    %p236 = scmp.ne.s32.totalorder %s221, %s235
    %p237 = scmp.eq.s32.totalorder %s38, 0
    %p238 = por %p236, %p237
    %s240 = sadd.s32 %s239, 1
    %p243 = scmp.eq.s32.totalorder %s32, 1
    %p244 = scmp.ne.s32.totalorder %s239, %s241
    %p245 = scmp.eq.s32.totalorder %s32, 0
    %p246 = por %p244, %p245
    %p247 = scmp.ne.s32.totalorder %s239, %s241
    %p248 = scmp.eq.s32.totalorder %s37, 1
    %p249 = por %p247, %p248
    %p250 = scmp.ne.s32.totalorder %s241, %s242
    %p251 = scmp.eq.s32.totalorder %s37, 0
    %p252 = por %p250, %p251
    %p253 = scmp.ne.s32.totalorder %s241, %s242
    %p254 = scmp.eq.s32.totalorder %s38, 1
    %p255 = por %p253, %p254
    %p257 = scmp.ne.s32.totalorder %s242, %s256
    %p258 = scmp.eq.s32.totalorder %s38, 0
    %p259 = por %p257, %p258
    %s261 = sadd.s32 %s260, 1
    %p264 = scmp.eq.s32.totalorder %s32, 1
    %p265 = scmp.ne.s32.totalorder %s260, %s262
    %p266 = scmp.eq.s32.totalorder %s32, 0
    %p267 = por %p265, %p266
    %p268 = scmp.ne.s32.totalorder %s260, %s262
    %p269 = scmp.eq.s32.totalorder %s37, 1
    %p270 = por %p268, %p269
    %p271 = scmp.ne.s32.totalorder %s262, %s263
    %p272 = scmp.eq.s32.totalorder %s37, 0
    %p273 = por %p271, %p272
    %p274 = scmp.ne.s32.totalorder %s262, %s263
    %p275 = scmp.eq.s32.totalorder %s38, 1
    %p276 = por %p274, %p275
    %p278 = scmp.ne.s32.totalorder %s263, %s277
    %p279 = scmp.eq.s32.totalorder %s38, 0
    %p280 = por %p278, %p279
    %s282 = sadd.s32 %s281, 1
    %p285 = scmp.eq.s32.totalorder %s32, 1
    %p286 = scmp.ne.s32.totalorder %s281, %s283
    %p287 = scmp.eq.s32.totalorder %s32, 0
    %p288 = por %p286, %p287
    %p289 = scmp.ne.s32.totalorder %s281, %s283
    %p290 = scmp.eq.s32.totalorder %s37, 1
    %p291 = por %p289, %p290
    %p292 = scmp.ne.s32.totalorder %s283, %s284
    %p293 = scmp.eq.s32.totalorder %s37, 0
    %p294 = por %p292, %p293
    %p295 = scmp.ne.s32.totalorder %s283, %s284
    %p296 = scmp.eq.s32.totalorder %s38, 1
    %p297 = por %p295, %p296
    %p299 = scmp.ne.s32.totalorder %s284, %s298
    %p300 = scmp.eq.s32.totalorder %s38, 0
    %p301 = por %p299, %p300
    %s303 = sadd.s32 %s302, 1
    %p306 = scmp.eq.s32.totalorder %s32, 1
    %p307 = scmp.ne.s32.totalorder %s302, %s304
    %p308 = scmp.eq.s32.totalorder %s32, 0
    %p309 = por %p307, %p308
    %p310 = scmp.ne.s32.totalorder %s302, %s304
    %p311 = scmp.eq.s32.totalorder %s37, 1
    %p312 = por %p310, %p311
    %p313 = scmp.ne.s32.totalorder %s304, %s305
    %p314 = scmp.eq.s32.totalorder %s37, 0
    %p315 = por %p313, %p314
    %p316 = scmp.ne.s32.totalorder %s304, %s305
    %p317 = scmp.eq.s32.totalorder %s38, 1
    %p318 = por %p316, %p317
    %p320 = scmp.ne.s32.totalorder %s305, %s319
    %p321 = scmp.eq.s32.totalorder %s38, 0
    %p322 = por %p320, %p321
    %s324 = sadd.s32 %s323, 1
    %p327 = scmp.eq.s32.totalorder %s32, 1
    %p328 = scmp.ne.s32.totalorder %s323, %s325
    %p329 = scmp.eq.s32.totalorder %s32, 0
    %p330 = por %p328, %p329
    %p331 = scmp.ne.s32.totalorder %s323, %s325
    %p332 = scmp.eq.s32.totalorder %s37, 1
    %p333 = por %p331, %p332
    %p334 = scmp.ne.s32.totalorder %s325, %s326
    %p335 = scmp.eq.s32.totalorder %s37, 0
    %p336 = por %p334, %p335
    %p337 = scmp.ne.s32.totalorder %s325, %s326
    %p338 = scmp.eq.s32.totalorder %s38, 1
    %p339 = por %p337, %p338
    %p341 = scmp.ne.s32.totalorder %s326, %s340
    %p342 = scmp.eq.s32.totalorder %s38, 0
    %p343 = por %p341, %p342
    %s345 = sadd.s32 %s344, 1
    %p348 = scmp.eq.s32.totalorder %s32, 1
    %p349 = scmp.ne.s32.totalorder %s344, %s346
    %p350 = scmp.eq.s32.totalorder %s32, 0
    %p351 = por %p349, %p350
    %p352 = scmp.ne.s32.totalorder %s344, %s346
    %p353 = scmp.eq.s32.totalorder %s37, 1
    %p354 = por %p352, %p353
    %p355 = scmp.ne.s32.totalorder %s346, %s347
    %p356 = scmp.eq.s32.totalorder %s37, 0
    %p357 = por %p355, %p356
    %p358 = scmp.ne.s32.totalorder %s346, %s347
    %p359 = scmp.eq.s32.totalorder %s38, 1
    %p360 = por %p358, %p359
    %p362 = scmp.ne.s32.totalorder %s347, %s361
    %p363 = scmp.eq.s32.totalorder %s38, 0
    %p364 = por %p362, %p363
    %s366 = sadd.s32 %s365, 1
    %p369 = scmp.eq.s32.totalorder %s32, 1
    %p370 = scmp.ne.s32.totalorder %s365, %s367
    %p371 = scmp.eq.s32.totalorder %s32, 0
    %p372 = por %p370, %p371
    %p373 = scmp.ne.s32.totalorder %s365, %s367
    %p374 = scmp.eq.s32.totalorder %s37, 1
    %p375 = por %p373, %p374
    %p376 = scmp.ne.s32.totalorder %s367, %s368
    %p377 = scmp.eq.s32.totalorder %s37, 0
    %p378 = por %p376, %p377
    %p379 = scmp.ne.s32.totalorder %s367, %s368
    %p380 = scmp.eq.s32.totalorder %s38, 1
    %p381 = por %p379, %p380
    %p383 = scmp.ne.s32.totalorder %s368, %s382
    %p384 = scmp.eq.s32.totalorder %s38, 0
    %p385 = por %p383, %p384
    %s387 = sadd.s32 %s386, 1
    %p390 = scmp.eq.s32.totalorder %s32, 1
    %p391 = scmp.ne.s32.totalorder %s386, %s388
    %p392 = scmp.eq.s32.totalorder %s32, 0
    %p393 = por %p391, %p392
    %p394 = scmp.ne.s32.totalorder %s386, %s388
    %p395 = scmp.eq.s32.totalorder %s37, 1
    %p396 = por %p394, %p395
    %p397 = scmp.ne.s32.totalorder %s388, %s389
    %p398 = scmp.eq.s32.totalorder %s37, 0
    %p399 = por %p397, %p398
    %p400 = scmp.ne.s32.totalorder %s388, %s389
    %p401 = scmp.eq.s32.totalorder %s38, 1
    %p402 = por %p400, %p401
    %p404 = scmp.ne.s32.totalorder %s389, %s403
    %p405 = scmp.eq.s32.totalorder %s38, 0
    %p406 = por %p404, %p405
    %s408 = sadd.s32 %s407, 1
    %p411 = scmp.eq.s32.totalorder %s32, 1
    %p412 = scmp.ne.s32.totalorder %s407, %s409
    %p413 = scmp.eq.s32.totalorder %s32, 0
    %p414 = por %p412, %p413
    %p415 = scmp.ne.s32.totalorder %s407, %s409
    %p416 = scmp.eq.s32.totalorder %s37, 1
    %p417 = por %p415, %p416
    %p418 = scmp.ne.s32.totalorder %s409, %s410
    %p419 = scmp.eq.s32.totalorder %s37, 0
    %p420 = por %p418, %p419
    %p421 = scmp.ne.s32.totalorder %s409, %s410
    %p422 = scmp.eq.s32.totalorder %s38, 1
    %p423 = por %p421, %p422
    %p425 = scmp.ne.s32.totalorder %s410, %s424
    %p426 = scmp.eq.s32.totalorder %s38, 0
    %p427 = por %p425, %p426
    %s429 = sadd.s32 %s428, 1
    %p432 = scmp.eq.s32.totalorder %s32, 1
    %p433 = scmp.ne.s32.totalorder %s428, %s430
    %p434 = scmp.eq.s32.totalorder %s32, 0
    %p435 = por %p433, %p434
    %p436 = scmp.ne.s32.totalorder %s428, %s430
    %p437 = scmp.eq.s32.totalorder %s37, 1
    %p438 = por %p436, %p437
    %p439 = scmp.ne.s32.totalorder %s430, %s431
    %p440 = scmp.eq.s32.totalorder %s37, 0
    %p441 = por %p439, %p440
    %p442 = scmp.ne.s32.totalorder %s430, %s431
    %p443 = scmp.eq.s32.totalorder %s38, 1
    %p444 = por %p442, %p443
    %p446 = scmp.ne.s32.totalorder %s431, %s445
    %p447 = scmp.eq.s32.totalorder %s38, 0
    %p448 = por %p446, %p447
    %s450 = sadd.s32 %s449, 1
    %p453 = scmp.eq.s32.totalorder %s32, 1
    %p454 = scmp.ne.s32.totalorder %s449, %s451
    %p455 = scmp.eq.s32.totalorder %s32, 0
    %p456 = por %p454, %p455
    %p457 = scmp.ne.s32.totalorder %s449, %s451
    %p458 = scmp.eq.s32.totalorder %s37, 1
    %p459 = por %p457, %p458
    %p460 = scmp.ne.s32.totalorder %s451, %s452
    %p461 = scmp.eq.s32.totalorder %s37, 0
    %p462 = por %p460, %p461
    %p463 = scmp.ne.s32.totalorder %s451, %s452
    %p464 = scmp.eq.s32.totalorder %s38, 1
    %p465 = por %p463, %p464
    %p467 = scmp.ne.s32.totalorder %s452, %s466
    %p468 = scmp.eq.s32.totalorder %s38, 0
    %p469 = por %p467, %p468
    %s471 = sadd.s32 %s470, 1
    %p474 = scmp.eq.s32.totalorder %s32, 1
    %p475 = scmp.ne.s32.totalorder %s470, %s472
    %p476 = scmp.eq.s32.totalorder %s32, 0
    %p477 = por %p475, %p476
    %p478 = scmp.ne.s32.totalorder %s470, %s472
    %p479 = scmp.eq.s32.totalorder %s37, 1
    %p480 = por %p478, %p479
    %p481 = scmp.ne.s32.totalorder %s472, %s473
    %p482 = scmp.eq.s32.totalorder %s37, 0
    %p483 = por %p481, %p482
    %p484 = scmp.ne.s32.totalorder %s472, %s473
    %p485 = scmp.eq.s32.totalorder %s38, 1
    %p486 = por %p484, %p485
    %p488 = scmp.ne.s32.totalorder %s473, %s487
    %p489 = scmp.eq.s32.totalorder %s38, 0
    %p490 = por %p488, %p489
    %s492 = sadd.s32 %s491, 1
    %p495 = scmp.eq.s32.totalorder %s32, 1
    %p496 = scmp.ne.s32.totalorder %s491, %s493
    %p497 = scmp.eq.s32.totalorder %s32, 0
    %p498 = por %p496, %p497
    %p499 = scmp.ne.s32.totalorder %s491, %s493
    %p500 = scmp.eq.s32.totalorder %s37, 1
    %p501 = por %p499, %p500
    %p502 = scmp.ne.s32.totalorder %s493, %s494
    %p503 = scmp.eq.s32.totalorder %s37, 0
    %p504 = por %p502, %p503
    %p505 = scmp.ne.s32.totalorder %s493, %s494
    %p506 = scmp.eq.s32.totalorder %s38, 1
    %p507 = por %p505, %p506
    %p509 = scmp.ne.s32.totalorder %s494, %s508
    %p510 = scmp.eq.s32.totalorder %s38, 0
    %p511 = por %p509, %p510
    %s513 = sadd.s32 %s512, 1
    %p516 = scmp.eq.s32.totalorder %s32, 1
    %p517 = scmp.ne.s32.totalorder %s512, %s514
    %p518 = scmp.eq.s32.totalorder %s32, 0
    %p519 = por %p517, %p518
    %p520 = scmp.ne.s32.totalorder %s512, %s514
    %p521 = scmp.eq.s32.totalorder %s37, 1
    %p522 = por %p520, %p521
    %p523 = scmp.ne.s32.totalorder %s514, %s515
    %p524 = scmp.eq.s32.totalorder %s37, 0
    %p525 = por %p523, %p524
    %p526 = scmp.ne.s32.totalorder %s514, %s515
    %p527 = scmp.eq.s32.totalorder %s38, 1
    %p528 = por %p526, %p527
    %p530 = scmp.ne.s32.totalorder %s515, %s529
    %p531 = scmp.eq.s32.totalorder %s38, 0
    %p532 = por %p530, %p531
    %s534 = sadd.s32 %s533, 1
    %p537 = scmp.eq.s32.totalorder %s32, 1
    %p538 = scmp.ne.s32.totalorder %s533, %s535
    %p539 = scmp.eq.s32.totalorder %s32, 0
    %p540 = por %p538, %p539
    %p541 = scmp.ne.s32.totalorder %s533, %s535
    %p542 = scmp.eq.s32.totalorder %s37, 1
    %p543 = por %p541, %p542
    %p544 = scmp.ne.s32.totalorder %s535, %s536
    %p545 = scmp.eq.s32.totalorder %s37, 0
    %p546 = por %p544, %p545
    %p547 = scmp.ne.s32.totalorder %s535, %s536
    %p548 = scmp.eq.s32.totalorder %s38, 1
    %p549 = por %p547, %p548
    %p551 = scmp.ne.s32.totalorder %s536, %s550
    %p552 = scmp.eq.s32.totalorder %s38, 0
    %p553 = por %p551, %p552
    %s554 = ssub.s32 %s32, %s39
    %p555 = scmp.eq.s32.totalorder %s554, 0
    %s557 = sadd.s32 %s556, 1
    %s558 = scalar_select %p555, %s556, %s557
    %p561 = pneg %p555
    %p562 = scmp.eq.s32.totalorder %s32, 1
    %p563 = por %p561, %p562
    %p564 = scmp.ne.s32.totalorder %s556, %s559
    %p565 = scmp.eq.s32.totalorder %s32, 0
    %p566 = por %p564, %p565
    %p567 = scmp.ne.s32.totalorder %s556, %s559
    %p568 = scmp.eq.s32.totalorder %s37, 1
    %p569 = por %p567, %p568
    %p570 = scmp.ne.s32.totalorder %s559, %s560
    %p571 = scmp.eq.s32.totalorder %s37, 0
    %p572 = por %p570, %p571
    %p573 = scmp.ne.s32.totalorder %s559, %s560
    %p574 = scmp.eq.s32.totalorder %s38, 1
    %p575 = por %p573, %p574
    %p577 = scmp.ne.s32.totalorder %s560, %s576
    %p578 = scmp.eq.s32.totalorder %s38, 0
    %p579 = por %p577, %p578
    %p580 = scmp.le.s32.totalorder 1, %s32
    %p581 = scmp.lt.s32.totalorder %s32, 3
    %p582 = pnand %p580, %p581
    %p583 = pneg %p582
    // Predicated region
    $region9: #{transformer_reg_forward.1} parent=5 // pred_check
      _
    $region10: #{transformer_reg_forward.1} parent=5 // pred_check_branch
      %585 = sbr.rel (%p582) target = $region12
    $region11: #{transformer_reg_forward.1} parent=5 // pred_region
      %s586 = ssub.s32 %s32, 1
      // Predicated region
      $region13: #{transformer_reg_forward.1} parent=11 // pred_check
        %p587 = pneg %p105
      $region14: #{transformer_reg_forward.1} parent=11 // pred_check_branch
        %589 = sbr.rel (%p587) target = $region16
      $region15: #{transformer_reg_forward.1} parent=11 // pred_region
        _
      $region16: #{transformer_reg_forward.1} parent=11 // pred_fallthru
        _
      // Predicated region
      $region17: #{transformer_reg_forward.1} parent=11 // pred_check
        %p590 = pneg %p126
      $region18: #{transformer_reg_forward.1} parent=11 // pred_check_branch
        %592 = sbr.rel (%p590) target = $region20
      $region19: #{transformer_reg_forward.1} parent=11 // pred_region
        _
      $region20: #{transformer_reg_forward.1} parent=11 // pred_fallthru
        _
      // Predicated region
      $region21: #{transformer_reg_forward.1} parent=11 // pred_check
        %p593 = pneg %p147
      $region22: #{transformer_reg_forward.1} parent=11 // pred_check_branch
        %595 = sbr.rel (%p593) target = $region24
      $region23: #{transformer_reg_forward.1} parent=11 // pred_region
        _
      $region24: #{transformer_reg_forward.1} parent=11 // pred_fallthru
        _
      // Predicated region
      $region25: #{transformer_reg_forward.1} parent=11 // pred_check
        %p596 = pneg %p168
      $region26: #{transformer_reg_forward.1} parent=11 // pred_check_branch
        %598 = sbr.rel (%p596) target = $region28
      $region27: #{transformer_reg_forward.1} parent=11 // pred_region
        _
      $region28: #{transformer_reg_forward.1} parent=11 // pred_fallthru
        _
      // Predicated region
      $region29: #{transformer_reg_forward.1} parent=11 // pred_check
        %p599 = pneg %p189
      $region30: #{transformer_reg_forward.1} parent=11 // pred_check_branch
        %601 = sbr.rel (%p599) target = $region32
      $region31: #{transformer_reg_forward.1} parent=11 // pred_region
        _
      $region32: #{transformer_reg_forward.1} parent=11 // pred_fallthru
        _
      // Predicated region
      $region33: #{transformer_reg_forward.1} parent=11 // pred_check
        %p602 = pneg %p210
      $region34: #{transformer_reg_forward.1} parent=11 // pred_check_branch
        %604 = sbr.rel (%p602) target = $region36
      $region35: #{transformer_reg_forward.1} parent=11 // pred_region
        _
      $region36: #{transformer_reg_forward.1} parent=11 // pred_fallthru
        _
      // Predicated region
      $region37: #{transformer_reg_forward.1} parent=11 // pred_check
        %p605 = pneg %p231
      $region38: #{transformer_reg_forward.1} parent=11 // pred_check_branch
        %607 = sbr.rel (%p605) target = $region40
      $region39: #{transformer_reg_forward.1} parent=11 // pred_region
        _
      $region40: #{transformer_reg_forward.1} parent=11 // pred_fallthru
        _
      // Predicated region
      $region41: #{transformer_reg_forward.1} parent=11 // pred_check
        %p608 = pneg %p252
      $region42: #{transformer_reg_forward.1} parent=11 // pred_check_branch
        %610 = sbr.rel (%p608) target = $region44
      $region43: #{transformer_reg_forward.1} parent=11 // pred_region
        _
      $region44: #{transformer_reg_forward.1} parent=11 // pred_fallthru
        _
      // Predicated region
      $region45: #{transformer_reg_forward.1} parent=11 // pred_check
        %p611 = pneg %p273
      $region46: #{transformer_reg_forward.1} parent=11 // pred_check_branch
        %613 = sbr.rel (%p611) target = $region48
      $region47: #{transformer_reg_forward.1} parent=11 // pred_region
        _
      $region48: #{transformer_reg_forward.1} parent=11 // pred_fallthru
        _
      // Predicated region
      $region49: #{transformer_reg_forward.1} parent=11 // pred_check
        %p614 = pneg %p294
      $region50: #{transformer_reg_forward.1} parent=11 // pred_check_branch
        %616 = sbr.rel (%p614) target = $region52
      $region51: #{transformer_reg_forward.1} parent=11 // pred_region
        _
      $region52: #{transformer_reg_forward.1} parent=11 // pred_fallthru
        _
      // Predicated region
      $region53: #{transformer_reg_forward.1} parent=11 // pred_check
        %p617 = pneg %p315
      $region54: #{transformer_reg_forward.1} parent=11 // pred_check_branch
        %619 = sbr.rel (%p617) target = $region56
      $region55: #{transformer_reg_forward.1} parent=11 // pred_region
        _
      $region56: #{transformer_reg_forward.1} parent=11 // pred_fallthru
        _
      // Predicated region
      $region57: #{transformer_reg_forward.1} parent=11 // pred_check
        %p620 = pneg %p336
      $region58: #{transformer_reg_forward.1} parent=11 // pred_check_branch
        %622 = sbr.rel (%p620) target = $region60
      $region59: #{transformer_reg_forward.1} parent=11 // pred_region
        _
      $region60: #{transformer_reg_forward.1} parent=11 // pred_fallthru
        _
      // Predicated region
      $region61: #{transformer_reg_forward.1} parent=11 // pred_check
        %p623 = pneg %p357
      $region62: #{transformer_reg_forward.1} parent=11 // pred_check_branch
        %625 = sbr.rel (%p623) target = $region64
      $region63: #{transformer_reg_forward.1} parent=11 // pred_region
        _
      $region64: #{transformer_reg_forward.1} parent=11 // pred_fallthru
        _
      // Predicated region
      $region65: #{transformer_reg_forward.1} parent=11 // pred_check
        %p626 = pneg %p378
      $region66: #{transformer_reg_forward.1} parent=11 // pred_check_branch
        %628 = sbr.rel (%p626) target = $region68
      $region67: #{transformer_reg_forward.1} parent=11 // pred_region
        _
      $region68: #{transformer_reg_forward.1} parent=11 // pred_fallthru
        _
      // Predicated region
      $region69: #{transformer_reg_forward.1} parent=11 // pred_check
        %p629 = pneg %p399
      $region70: #{transformer_reg_forward.1} parent=11 // pred_check_branch
        %631 = sbr.rel (%p629) target = $region72
      $region71: #{transformer_reg_forward.1} parent=11 // pred_region
        _
      $region72: #{transformer_reg_forward.1} parent=11 // pred_fallthru
        _
      // Predicated region
      $region73: #{transformer_reg_forward.1} parent=11 // pred_check
        %p632 = pneg %p420
      $region74: #{transformer_reg_forward.1} parent=11 // pred_check_branch
        %634 = sbr.rel (%p632) target = $region76
      $region75: #{transformer_reg_forward.1} parent=11 // pred_region
        _
      $region76: #{transformer_reg_forward.1} parent=11 // pred_fallthru
        _
      // Predicated region
      $region77: #{transformer_reg_forward.1} parent=11 // pred_check
        %p635 = pneg %p441
      $region78: #{transformer_reg_forward.1} parent=11 // pred_check_branch
        %637 = sbr.rel (%p635) target = $region80
      $region79: #{transformer_reg_forward.1} parent=11 // pred_region
        _
      $region80: #{transformer_reg_forward.1} parent=11 // pred_fallthru
        _
      // Predicated region
      $region81: #{transformer_reg_forward.1} parent=11 // pred_check
        %p638 = pneg %p462
      $region82: #{transformer_reg_forward.1} parent=11 // pred_check_branch
        %640 = sbr.rel (%p638) target = $region84
      $region83: #{transformer_reg_forward.1} parent=11 // pred_region
        _
      $region84: #{transformer_reg_forward.1} parent=11 // pred_fallthru
        _
      // Predicated region
      $region85: #{transformer_reg_forward.1} parent=11 // pred_check
        %p641 = pneg %p483
      $region86: #{transformer_reg_forward.1} parent=11 // pred_check_branch
        %643 = sbr.rel (%p641) target = $region88
      $region87: #{transformer_reg_forward.1} parent=11 // pred_region
        _
      $region88: #{transformer_reg_forward.1} parent=11 // pred_fallthru
        _
      // Predicated region
      $region89: #{transformer_reg_forward.1} parent=11 // pred_check
        %p644 = pneg %p504
      $region90: #{transformer_reg_forward.1} parent=11 // pred_check_branch
        %646 = sbr.rel (%p644) target = $region92
      $region91: #{transformer_reg_forward.1} parent=11 // pred_region
        _
      $region92: #{transformer_reg_forward.1} parent=11 // pred_fallthru
        _
      // Predicated region
      $region93: #{transformer_reg_forward.1} parent=11 // pred_check
        %p647 = pneg %p525
      $region94: #{transformer_reg_forward.1} parent=11 // pred_check_branch
        %649 = sbr.rel (%p647) target = $region96
      $region95: #{transformer_reg_forward.1} parent=11 // pred_region
        _
      $region96: #{transformer_reg_forward.1} parent=11 // pred_fallthru
        _
      // Predicated region
      $region97: #{transformer_reg_forward.1} parent=11 // pred_check
        %p650 = pneg %p546
      $region98: #{transformer_reg_forward.1} parent=11 // pred_check_branch
        %652 = sbr.rel (%p650) target = $region100
      $region99: #{transformer_reg_forward.1} parent=11 // pred_region
        _
      $region100: #{transformer_reg_forward.1} parent=11 // pred_fallthru
        _
    $region12: #{transformer_reg_forward.1} parent=5 // pred_fallthru
      _
    %p653 = scmp.lt.s32.totalorder %s32, 2
    // Predicated region
    $region101: #{transformer_reg_forward.1} parent=5 // pred_check
      %p654 = pneg %p653
    $region102: #{transformer_reg_forward.1} parent=5 // pred_check_branch
      %656 = sbr.rel (%p654) target = $region104
    $region103: #{transformer_reg_forward.1} parent=5 // pred_region
      // Predicated region
      $region105: #{transformer_reg_forward.1} parent=103 // pred_check
        %p657 = pneg %p52
      $region106: #{transformer_reg_forward.1} parent=103 // pred_check_branch
        %659 = sbr.rel (%p657) target = $region108
      $region107: #{transformer_reg_forward.1} parent=103 // pred_region
        %p660 = scmp.lt.s32.totalorder %s32, 1
        %s661 = scalar_select %p660, %s32, 1
        %s662 = smul.addr %s661, 8
        %s663 = scalar_lea.vmem %s0, %s662
      $region108: #{transformer_reg_forward.1} parent=103 // pred_fallthru
        _
      // Predicated region
      $region109: #{transformer_reg_forward.1} parent=103 // pred_check
        %p664 = pneg %p78
      $region110: #{transformer_reg_forward.1} parent=103 // pred_check_branch
        %666 = sbr.rel (%p664) target = $region112
      $region111: #{transformer_reg_forward.1} parent=103 // pred_region
        %p667 = scmp.lt.s32.totalorder %s32, 1
        %s668 = scalar_select %p667, %s32, 1
        %s669 = scalar_lea.vmem %s1, %s668
      $region112: #{transformer_reg_forward.1} parent=103 // pred_fallthru
        _
    $region104: #{transformer_reg_forward.1} parent=5 // pred_fallthru
      _
    %p670 = scmp.le.s32.totalorder 1, %s32
    %p671 = scmp.lt.s32.totalorder %s32, 3
    %p672 = pnand %p670, %p671
    %p673 = pneg %p672
    // Predicated region
    $region113: #{transformer_reg_forward.1} parent=5 // pred_check
      _
    $region114: #{transformer_reg_forward.1} parent=5 // pred_check_branch
      %675 = sbr.rel (%p672) target = $region116
    $region115: #{transformer_reg_forward.1} parent=5 // pred_region
      %s676 = ssub.s32 %s32, 1
      %p677 = scmp.lt.s32.totalorder %s37, 1
      %s678 = scalar_select %p677, %s37, 1
      %s679 = smul.addr %s678, 8
      %s680 = scalar_lea.vmem %s0, %s679
      %p681 = pneg %p58
      %p682 = pneg %p55
      %p683 = scmp.lt.s32.totalorder %s37, 1
      %s684 = scalar_select %p683, %s37, 1
      %s685 = scalar_lea.vmem %s1, %s684
      %p686 = pneg %p84
      %p687 = pneg %p81
      %p688 = pneg %p105
      %p689 = pneg %p102
      %p690 = pneg %p126
      %p691 = pneg %p123
      %p692 = pneg %p147
      %p693 = pneg %p144
      %p694 = pneg %p168
      %p695 = pneg %p165
      %p696 = pneg %p189
      %p697 = pneg %p186
      %p698 = pneg %p210
      %p699 = pneg %p207
      %p700 = pneg %p231
      %p701 = pneg %p228
      %p702 = pneg %p252
      %p703 = pneg %p249
      %p704 = pneg %p273
      %p705 = pneg %p270
      %p706 = pneg %p294
      %p707 = pneg %p291
      %p708 = pneg %p315
      %p709 = pneg %p312
      %p710 = pneg %p336
      %p711 = pneg %p333
      %p712 = pneg %p357
      %p713 = pneg %p354
      %p714 = pneg %p378
      %p715 = pneg %p375
      %p716 = pneg %p399
      %p717 = pneg %p396
      %p718 = pneg %p420
      %p719 = pneg %p417
      %p720 = pneg %p441
      %p721 = pneg %p438
      %p722 = pneg %p462
      %p723 = pneg %p459
      %p724 = pneg %p483
      %p725 = pneg %p480
      %p726 = pneg %p504
      %p727 = pneg %p501
      %p728 = pneg %p525
      %p729 = pneg %p522
      %p730 = pneg %p546
      %p731 = pneg %p543
      %p732 = pneg %p572
      %p733 = pneg %p569
      %p734 = scmp.lt.s32.totalorder %s37, 1
      %s735 = scalar_select %p734, %s37, 1
      %s736 = scalar_lea.vmem %s24, %s735
      %p737 = scmp.lt.s32.totalorder %s37, 1
      %s738 = scalar_select %p737, %s37, 1
      %s739 = smul.addr %s738, 8
      %s740 = scalar_lea.vmem %s0, %s739
      %p741 = scmp.lt.s32.totalorder %s37, 1
      %s742 = scalar_select %p741, %s37, 1
      %s743 = scalar_lea.vmem %s1, %s742
      %p744 = scmp.lt.s32.totalorder %s37, 1
      %s745 = scalar_select %p744, %s37, 1
      %s746 = scalar_lea.vmem %s24, %s745
      %v747 = vld [vmem:[%s743] sm:$0x1]
      %v748 = vld [vmem:[%s740] sm:$0xff]
      %v749 = vld [vmem:[%s2] sm:$0x1]
      %v750 = vld [vmem:[%s3] sm:$0x1]
      %vm751 = vcmask 261120
      %v752 = vsel %vm751, %v748, 0.0
      %753 = vadd.xlane.f32.xlu0 %v752
      %v754 = vpop.xlane.xlu0 %753
      %v755 = vrcp.pop 32.0
      %v756 = vmul.f32 %v754, %v755
      %v757 = vsub.f32 %v748, %v756
      %v758 = vmul.f32 %v757, %v757
      %v759 = vsel %vm751, %v758, 0.0
      %760 = vadd.xlane.f32.xlu0 %v759
      %v761 = vpop.xlane.xlu0 %760
      %v762 = vmul.f32 %v761, %v755
      %v763 = vadd.f32 %v762, 1e-12
      %v764 = vrsqrt.pop %v763
      %v765 = vmul.f32 %v757, %v764
      %v767 = vlaneseq
      %v768 = vshrl.u32 %v767, 7
      %v769 = vsub.s32 0, %v768
      %v770 = vrot.slane %v749, %v769
      %v772 = vmul.f32 %v765, %v770
      %v774 = vlaneseq
      %v775 = vshrl.u32 %v774, 7
      %v776 = vsub.s32 0, %v775
      %v777 = vrot.slane %v750, %v776
      %v779 = vadd.f32 %v772, %v777
      %v780 = vld [vmem:[%s4] sm:$0xff]
      %v781 = vld [vmem:[%s4 + $0x8] sm:$0xff]
      %v782 = vld [vmem:[%s4 + $0x10] sm:$0xff]
      %v783 = vld [vmem:[%s4 + $0x18] sm:$0xff]
      %v784 = vld [vmem:[%s5] sm:$0x1]
      %v786 = vlaneseq
      %v787 = vshrl.u32 %v786, 7
      %v788 = vsub.s32 0, %v787
      %v789 = vrot.slane %v784, %v788
      %v792 = vsel %vm751, %v779, 0
      %794 = vmatprep.subr.mxu0 0.0
      %795 = vmatpush1.msra.mxu0 %v780
      %796 = vmatprep.subr.mxu0 0.0
      %797 = vmatpush1.msra.mxu0 %v781
      %798 = vmatprep.subr.mxu0 0.0
      %799 = vmatpush1.msra.mxu0 %v782
      %800 = vmatprep.subr.mxu0 0.0
      %801 = vmatpush1.msra.mxu0 %v783
      %802 = vmatprep.subr.mxu0 0.0
      %803 = vmatpush1.msra.mxu0 0.0
      %804 = vmatprep.subr.mxu0 0.0
      %805 = vmatpush1.msra.mxu0 0.0
      %806 = vmatprep.subr.mxu0 0.0
      %807 = vmatpush1.msra.mxu0 0.0
      %808 = vmatprep.subr.mxu0 0.0
      %809 = vmatpush1.msra.mxu0 0.0
      %810 = vmatprep.subr.mxu0 0.0
      %811 = vmatpush1.msra.mxu0 0.0
      %812 = vmatprep.subr.mxu0 0.0
      %813 = vmatpush1.msra.mxu0 0.0
      %814 = vmatprep.subr.mxu0 0.0
      %815 = vmatpush1.msra.mxu0 0.0
      %816 = vmatprep.subr.mxu0 0.0
      %817 = vmatpush1.msra.mxu0 0.0
      %818 = vmatprep.subr.mxu0 0.0
      %819 = vmatpush1.msra.mxu0 0.0
      %820 = vmatprep.subr.mxu0 0.0
      %821 = vmatpush1.msra.mxu0 0.0
      %822 = vmatprep.subr.mxu0 0.0
      %823 = vmatpush1.msra.mxu0 0.0
      %824 = vmatprep.subr.mxu0 0.0
      %825 = vmatpush1.msra.mxu0 0.0
      %826 = vmatprep.subr.mxu0 0.0
      %827 = vmatpush1.msra.mxu0 0.0
      %828 = vmatprep.subr.mxu0 0.0
      %829 = vmatpush1.msra.mxu0 0.0
      %830 = vmatprep.subr.mxu0 0.0
      %831 = vmatpush1.msra.mxu0 0.0
      %832 = vmatprep.subr.mxu0 0.0
      %833 = vmatpush1.msra.mxu0 0.0
      %834 = vmatprep.subr.mxu0 0.0
      %835 = vmatpush1.msra.mxu0 0.0
      %836 = vmatprep.subr.mxu0 0.0
      %837 = vmatpush1.msra.mxu0 0.0
      %838 = vmatprep.subr.mxu0 0.0
      %839 = vmatpush1.msra.mxu0 0.0
      %840 = vmatprep.subr.mxu0 0.0
      %841 = vmatpush1.msra.mxu0 0.0
      %842 = vmatprep.subr.mxu0 0.0
      %843 = vmatpush1.msra.mxu0 0.0
      %844 = vmatprep.subr.mxu0 0.0
      %845 = vmatpush1.msra.mxu0 0.0
      %846 = vmatprep.subr.mxu0 0.0
      %847 = vmatpush1.msra.mxu0 0.0
      %848 = vmatprep.subr.mxu0 0.0
      %849 = vmatpush1.msra.mxu0 0.0
      %850 = vmatprep.subr.mxu0 0.0
      %851 = vmatpush1.msra.mxu0 0.0
      %852 = vmatprep.subr.mxu0 0.0
      %853 = vmatpush1.msra.mxu0 0.0
      %854 = vmatprep.subr.mxu0 0.0
      %855 = vmatpush1.msra.mxu0 0.0
      %856 = vmatprep.subr.mxu0 0.0
      %857 = vmatpush1.msra.mxu0 0.0
      %858 = vmatprep.mubr.f32.mxu0 0.0
      %859 = vmatmul.mubr.f32.gmra.mrb[0].mxu0 %v792
      %v860 = vpop.f32.mrb[0].mxu0
      %v861 = vadd.f32 %v789, %v860
      %v862 = vpop.f32.mrb[0].mxu0
      %863 = vdwg.mxu0
      %v864 = vld [vmem:[%s6] sm:$0xff]
      %v865 = vld [vmem:[%s6 + $0x8] sm:$0xff]
      %v866 = vld [vmem:[%s6 + $0x10] sm:$0xff]
      %v867 = vld [vmem:[%s6 + $0x18] sm:$0xff]
      %v868 = vld [vmem:[%s7] sm:$0x1]
      %v870 = vlaneseq
      %v871 = vshrl.u32 %v870, 7
      %v872 = vsub.s32 0, %v871
      %v873 = vrot.slane %v868, %v872
      %875 = vmatprep.subr.mxu0 0.0
      %876 = vmatpush1.msra.mxu0 %v864
      %877 = vmatprep.subr.mxu0 0.0
      %878 = vmatpush1.msra.mxu0 %v865
      %879 = vmatprep.subr.mxu0 0.0
      %880 = vmatpush1.msra.mxu0 %v866
      %881 = vmatprep.subr.mxu0 0.0
      %882 = vmatpush1.msra.mxu0 %v867
      %883 = vmatprep.subr.mxu0 0.0
      %884 = vmatpush1.msra.mxu0 0.0
      %885 = vmatprep.subr.mxu0 0.0
      %886 = vmatpush1.msra.mxu0 0.0
      %887 = vmatprep.subr.mxu0 0.0
      %888 = vmatpush1.msra.mxu0 0.0
      %889 = vmatprep.subr.mxu0 0.0
      %890 = vmatpush1.msra.mxu0 0.0
      %891 = vmatprep.subr.mxu0 0.0
      %892 = vmatpush1.msra.mxu0 0.0
      %893 = vmatprep.subr.mxu0 0.0
      %894 = vmatpush1.msra.mxu0 0.0
      %895 = vmatprep.subr.mxu0 0.0
      %896 = vmatpush1.msra.mxu0 0.0
      %897 = vmatprep.subr.mxu0 0.0
      %898 = vmatpush1.msra.mxu0 0.0
      %899 = vmatprep.subr.mxu0 0.0
      %900 = vmatpush1.msra.mxu0 0.0
      %901 = vmatprep.subr.mxu0 0.0
      %902 = vmatpush1.msra.mxu0 0.0
      %903 = vmatprep.subr.mxu0 0.0
      %904 = vmatpush1.msra.mxu0 0.0
      %905 = vmatprep.subr.mxu0 0.0
      %906 = vmatpush1.msra.mxu0 0.0
      %907 = vmatprep.subr.mxu0 0.0
      %908 = vmatpush1.msra.mxu0 0.0
      %909 = vmatprep.subr.mxu0 0.0
      %910 = vmatpush1.msra.mxu0 0.0
      %911 = vmatprep.subr.mxu0 0.0
      %912 = vmatpush1.msra.mxu0 0.0
      %913 = vmatprep.subr.mxu0 0.0
      %914 = vmatpush1.msra.mxu0 0.0
      %915 = vmatprep.subr.mxu0 0.0
      %916 = vmatpush1.msra.mxu0 0.0
      %917 = vmatprep.subr.mxu0 0.0
      %918 = vmatpush1.msra.mxu0 0.0
      %919 = vmatprep.subr.mxu0 0.0
      %920 = vmatpush1.msra.mxu0 0.0
      %921 = vmatprep.subr.mxu0 0.0
      %922 = vmatpush1.msra.mxu0 0.0
      %923 = vmatprep.subr.mxu0 0.0
      %924 = vmatpush1.msra.mxu0 0.0
      %925 = vmatprep.subr.mxu0 0.0
      %926 = vmatpush1.msra.mxu0 0.0
      %927 = vmatprep.subr.mxu0 0.0
      %928 = vmatpush1.msra.mxu0 0.0
      %929 = vmatprep.subr.mxu0 0.0
      %930 = vmatpush1.msra.mxu0 0.0
      %931 = vmatprep.subr.mxu0 0.0
      %932 = vmatpush1.msra.mxu0 0.0
      %933 = vmatprep.subr.mxu0 0.0
      %934 = vmatpush1.msra.mxu0 0.0
      %935 = vmatprep.subr.mxu0 0.0
      %936 = vmatpush1.msra.mxu0 0.0
      %937 = vmatprep.subr.mxu0 0.0
      %938 = vmatpush1.msra.mxu0 0.0
      %939 = vmatprep.mubr.f32.mxu0 0.0
      %940 = vmatmul.mubr.f32.gmra.mrb[0].mxu0 %v792
      %v941 = vpop.f32.mrb[0].mxu0
      %v942 = vadd.f32 %v873, %v941
      %v943 = vpop.f32.mrb[0].mxu0
      %944 = vdwg.mxu0
      %v945 = vld [vmem:[%s8] sm:$0xff]
      %v946 = vld [vmem:[%s8 + $0x8] sm:$0xff]
      %v947 = vld [vmem:[%s8 + $0x10] sm:$0xff]
      %v948 = vld [vmem:[%s8 + $0x18] sm:$0xff]
      %v949 = vld [vmem:[%s9] sm:$0x1]
      %v951 = vlaneseq
      %v952 = vshrl.u32 %v951, 7
      %v953 = vsub.s32 0, %v952
      %v954 = vrot.slane %v949, %v953
      %956 = vmatprep.subr.mxu0 0.0
      %957 = vmatpush1.msra.mxu0 %v945
      %958 = vmatprep.subr.mxu0 0.0
      %959 = vmatpush1.msra.mxu0 %v946
      %960 = vmatprep.subr.mxu0 0.0
      %961 = vmatpush1.msra.mxu0 %v947
      %962 = vmatprep.subr.mxu0 0.0
      %963 = vmatpush1.msra.mxu0 %v948
      %964 = vmatprep.subr.mxu0 0.0
      %965 = vmatpush1.msra.mxu0 0.0
      %966 = vmatprep.subr.mxu0 0.0
      %967 = vmatpush1.msra.mxu0 0.0
      %968 = vmatprep.subr.mxu0 0.0
      %969 = vmatpush1.msra.mxu0 0.0
      %970 = vmatprep.subr.mxu0 0.0
      %971 = vmatpush1.msra.mxu0 0.0
      %972 = vmatprep.subr.mxu0 0.0
      %973 = vmatpush1.msra.mxu0 0.0
      %974 = vmatprep.subr.mxu0 0.0
      %975 = vmatpush1.msra.mxu0 0.0
      %976 = vmatprep.subr.mxu0 0.0
      %977 = vmatpush1.msra.mxu0 0.0
      %978 = vmatprep.subr.mxu0 0.0
      %979 = vmatpush1.msra.mxu0 0.0
      %980 = vmatprep.subr.mxu0 0.0
      %981 = vmatpush1.msra.mxu0 0.0
      %982 = vmatprep.subr.mxu0 0.0
      %983 = vmatpush1.msra.mxu0 0.0
      %984 = vmatprep.subr.mxu0 0.0
      %985 = vmatpush1.msra.mxu0 0.0
      %986 = vmatprep.subr.mxu0 0.0
      %987 = vmatpush1.msra.mxu0 0.0
      %988 = vmatprep.subr.mxu0 0.0
      %989 = vmatpush1.msra.mxu0 0.0
      %990 = vmatprep.subr.mxu0 0.0
      %991 = vmatpush1.msra.mxu0 0.0
      %992 = vmatprep.subr.mxu0 0.0
      %993 = vmatpush1.msra.mxu0 0.0
      %994 = vmatprep.subr.mxu0 0.0
      %995 = vmatpush1.msra.mxu0 0.0
      %996 = vmatprep.subr.mxu0 0.0
      %997 = vmatpush1.msra.mxu0 0.0
      %998 = vmatprep.subr.mxu0 0.0
      %999 = vmatpush1.msra.mxu0 0.0
      %1000 = vmatprep.subr.mxu0 0.0
      %1001 = vmatpush1.msra.mxu0 0.0
      %1002 = vmatprep.subr.mxu0 0.0
      %1003 = vmatpush1.msra.mxu0 0.0
      %1004 = vmatprep.subr.mxu0 0.0
      %1005 = vmatpush1.msra.mxu0 0.0
      %1006 = vmatprep.subr.mxu0 0.0
      %1007 = vmatpush1.msra.mxu0 0.0
      %1008 = vmatprep.subr.mxu0 0.0
      %1009 = vmatpush1.msra.mxu0 0.0
      %1010 = vmatprep.subr.mxu0 0.0
      %1011 = vmatpush1.msra.mxu0 0.0
      %1012 = vmatprep.subr.mxu0 0.0
      %1013 = vmatpush1.msra.mxu0 0.0
      %1014 = vmatprep.subr.mxu0 0.0
      %1015 = vmatpush1.msra.mxu0 0.0
      %1016 = vmatprep.subr.mxu0 0.0
      %1017 = vmatpush1.msra.mxu0 0.0
      %1018 = vmatprep.subr.mxu0 0.0
      %1019 = vmatpush1.msra.mxu0 0.0
      %1020 = vmatprep.mubr.f32.mxu0 0.0
      %1021 = vmatmul.mubr.f32.gmra.mrb[0].mxu0 %v792
      %v1022 = vpop.f32.mrb[0].mxu0
      %v1023 = vadd.f32 %v954, %v1022
      %v1024 = vpop.f32.mrb[0].mxu0
      %1025 = vdwg.mxu0
      %vm1026 = vcmask 64512
      %v1028 = vsel %vm1026, %v861, 0
      %v1031 = vsel %vm1026, %v942, 0
      %1033 = vmatprep.subr.mxu0 0.0
      %1034 = vmatpush1.xpose.msra.mxu0 %v1031
      %1035 = vmatprep.subr.mxu0 0.0
      %1036 = vmatpush1.xpose.msra.mxu0 0.0
      %1037 = vmatprep.subr.mxu0 0.0
      %1038 = vmatpush1.xpose.msra.mxu0 0.0
      %1039 = vmatprep.subr.mxu0 0.0
      %1040 = vmatpush1.xpose.msra.mxu0 0.0
      %1041 = vmatprep.subr.mxu0 0.0
      %1042 = vmatpush1.xpose.msra.mxu0 0.0
      %1043 = vmatprep.subr.mxu0 0.0
      %1044 = vmatpush1.xpose.msra.mxu0 0.0
      %1045 = vmatprep.subr.mxu0 0.0
      %1046 = vmatpush1.xpose.msra.mxu0 0.0
      %1047 = vmatprep.subr.mxu0 0.0
      %1048 = vmatpush1.xpose.msra.mxu0 0.0
      %1049 = vmatprep.subr.mxu0 0.0
      %1050 = vmatpush1.xpose.msra.mxu0 0.0
      %1051 = vmatprep.subr.mxu0 0.0
      %1052 = vmatpush1.xpose.msra.mxu0 0.0
      %1053 = vmatprep.subr.mxu0 0.0
      %1054 = vmatpush1.xpose.msra.mxu0 0.0
      %1055 = vmatprep.subr.mxu0 0.0
      %1056 = vmatpush1.xpose.msra.mxu0 0.0
      %1057 = vmatprep.subr.mxu0 0.0
      %1058 = vmatpush1.xpose.msra.mxu0 0.0
      %1059 = vmatprep.subr.mxu0 0.0
      %1060 = vmatpush1.xpose.msra.mxu0 0.0
      %1061 = vmatprep.subr.mxu0 0.0
      %1062 = vmatpush1.xpose.msra.mxu0 0.0
      %1063 = vmatprep.subr.mxu0 0.0
      %1064 = vmatpush1.xpose.msra.mxu0 0.0
      %1065 = vmatprep.subr.mxu0 0.0
      %1066 = vmatpush1.xpose.msra.mxu0 0.0
      %1067 = vmatprep.subr.mxu0 0.0
      %1068 = vmatpush1.xpose.msra.mxu0 0.0
      %1069 = vmatprep.subr.mxu0 0.0
      %1070 = vmatpush1.xpose.msra.mxu0 0.0
      %1071 = vmatprep.subr.mxu0 0.0
      %1072 = vmatpush1.xpose.msra.mxu0 0.0
      %1073 = vmatprep.subr.mxu0 0.0
      %1074 = vmatpush1.xpose.msra.mxu0 0.0
      %1075 = vmatprep.subr.mxu0 0.0
      %1076 = vmatpush1.xpose.msra.mxu0 0.0
      %1077 = vmatprep.subr.mxu0 0.0
      %1078 = vmatpush1.xpose.msra.mxu0 0.0
      %1079 = vmatprep.subr.mxu0 0.0
      %1080 = vmatpush1.xpose.msra.mxu0 0.0
      %1081 = vmatprep.subr.mxu0 0.0
      %1082 = vmatpush1.xpose.msra.mxu0 0.0
      %1083 = vmatprep.subr.mxu0 0.0
      %1084 = vmatpush1.xpose.msra.mxu0 0.0
      %1085 = vmatprep.subr.mxu0 0.0
      %1086 = vmatpush1.xpose.msra.mxu0 0.0
      %1087 = vmatprep.subr.mxu0 0.0
      %1088 = vmatpush1.xpose.msra.mxu0 0.0
      %1089 = vmatprep.subr.mxu0 0.0
      %1090 = vmatpush1.xpose.msra.mxu0 0.0
      %1091 = vmatprep.subr.mxu0 0.0
      %1092 = vmatpush1.xpose.msra.mxu0 0.0
      %1093 = vmatprep.subr.mxu0 0.0
      %1094 = vmatpush1.xpose.msra.mxu0 0.0
      %1095 = vmatprep.subr.mxu0 0.0
      %1096 = vmatpush1.xpose.msra.mxu0 0.0
      %1097 = vmatprep.mubr.f32.mxu0 0.0
      %1098 = vmatmul.mubr.f32.gmra.mrb[0].mxu0 %v1028
      %v1099 = vpop.f32.mrb[0].mxu0
      %v1100 = vadd.f32 0.0, %v1099
      %v1101 = vpop.f32.mrb[0].mxu0
      %1102 = vdwg.mxu0
      %v1103 = vmul.f32 %v1100, 0.35355338
      %v1105 = vlaneseq
      %v1106 = vshrl.u32 %v1105, 7
      %v1107 = vsub.s32 0, %v1106
      %v1108 = vrot.slane %v747, %v1107
      %v1110 = vadd.f32 %v1103, %v1108
      %v1111 = vsel %vm1026, %v1110, -inf
      %1112 = vmax.xlane.f32.xlu0 %v1111
      %v1113 = vpop.xlane.xlu0 %1112
      %v1114 = vsub.f32 %v1110, %v1113
      %v1115 = vmul.f32 %v1114, 1.442695
      %v1116 = vpow.pop %v1115
      %v1117 = vsel %vm1026, %v1116, 0.0
      %1118 = vadd.xlane.f32.xlu0 %v1117
      %v1119 = vpop.xlane.xlu0 %1118
      %v1120 = vrcp.pop %v1119
      %v1121 = vmul.f32 %v1116, %v1120
      %v1123 = vsel %vm1026, %v1121, 0
      %1125 = vmatprep.subr.mxu0 0.0
      %1126 = vmatpush1.msra.mxu0 %v1023
      %1127 = vmatprep.subr.mxu0 0.0
      %1128 = vmatpush1.msra.mxu0 0.0
      %1129 = vmatprep.subr.mxu0 0.0
      %1130 = vmatpush1.msra.mxu0 0.0
      %1131 = vmatprep.subr.mxu0 0.0
      %1132 = vmatpush1.msra.mxu0 0.0
      %1133 = vmatprep.subr.mxu0 0.0
      %1134 = vmatpush1.msra.mxu0 0.0
      %1135 = vmatprep.subr.mxu0 0.0
      %1136 = vmatpush1.msra.mxu0 0.0
      %1137 = vmatprep.subr.mxu0 0.0
      %1138 = vmatpush1.msra.mxu0 0.0
      %1139 = vmatprep.subr.mxu0 0.0
      %1140 = vmatpush1.msra.mxu0 0.0
      %1141 = vmatprep.subr.mxu0 0.0
      %1142 = vmatpush1.msra.mxu0 0.0
      %1143 = vmatprep.subr.mxu0 0.0
      %1144 = vmatpush1.msra.mxu0 0.0
      %1145 = vmatprep.subr.mxu0 0.0
      %1146 = vmatpush1.msra.mxu0 0.0
      %1147 = vmatprep.subr.mxu0 0.0
      %1148 = vmatpush1.msra.mxu0 0.0
      %1149 = vmatprep.subr.mxu0 0.0
      %1150 = vmatpush1.msra.mxu0 0.0
      %1151 = vmatprep.subr.mxu0 0.0
      %1152 = vmatpush1.msra.mxu0 0.0
      %1153 = vmatprep.subr.mxu0 0.0
      %1154 = vmatpush1.msra.mxu0 0.0
      %1155 = vmatprep.subr.mxu0 0.0
      %1156 = vmatpush1.msra.mxu0 0.0
      %1157 = vmatprep.subr.mxu0 0.0
      %1158 = vmatpush1.msra.mxu0 0.0
      %1159 = vmatprep.subr.mxu0 0.0
      %1160 = vmatpush1.msra.mxu0 0.0
      %1161 = vmatprep.subr.mxu0 0.0
      %1162 = vmatpush1.msra.mxu0 0.0
      %1163 = vmatprep.subr.mxu0 0.0
      %1164 = vmatpush1.msra.mxu0 0.0
      %1165 = vmatprep.subr.mxu0 0.0
      %1166 = vmatpush1.msra.mxu0 0.0
      %1167 = vmatprep.subr.mxu0 0.0
      %1168 = vmatpush1.msra.mxu0 0.0
      %1169 = vmatprep.subr.mxu0 0.0
      %1170 = vmatpush1.msra.mxu0 0.0
      %1171 = vmatprep.subr.mxu0 0.0
      %1172 = vmatpush1.msra.mxu0 0.0
      %1173 = vmatprep.subr.mxu0 0.0
      %1174 = vmatpush1.msra.mxu0 0.0
      %1175 = vmatprep.subr.mxu0 0.0
      %1176 = vmatpush1.msra.mxu0 0.0
      %1177 = vmatprep.subr.mxu0 0.0
      %1178 = vmatpush1.msra.mxu0 0.0
      %1179 = vmatprep.subr.mxu0 0.0
      %1180 = vmatpush1.msra.mxu0 0.0
      %1181 = vmatprep.subr.mxu0 0.0
      %1182 = vmatpush1.msra.mxu0 0.0
      %1183 = vmatprep.subr.mxu0 0.0
      %1184 = vmatpush1.msra.mxu0 0.0
      %1185 = vmatprep.subr.mxu0 0.0
      %1186 = vmatpush1.msra.mxu0 0.0
      %1187 = vmatprep.subr.mxu0 0.0
      %1188 = vmatpush1.msra.mxu0 0.0
      %1189 = vmatprep.mubr.f32.mxu0 0.0
      %1190 = vmatmul.mubr.f32.gmra.mrb[0].mxu0 %v1123
      %v1191 = vpop.f32.mrb[0].mxu0
      %v1192 = vadd.f32 0.0, %v1191
      %v1193 = vpop.f32.mrb[0].mxu0
      %1194 = vdwg.mxu0
      %v1195 = vld [vmem:[%s10] sm:$0xff]
      %s1196 = scalar_lea.vmem %s4, 32
      %v1197 = vld [vmem:[%s1196] sm:$0xff]
      %v1198 = vld [vmem:[%s1196 + $0x8] sm:$0xff]
      %v1199 = vld [vmem:[%s1196 + $0x10] sm:$0xff]
      %v1200 = vld [vmem:[%s1196 + $0x18] sm:$0xff]
      %s1201 = scalar_lea.vmem %s5, 1
      %v1202 = vld [vmem:[%s1201] sm:$0x1]
      %v1204 = vlaneseq
      %v1205 = vshrl.u32 %v1204, 7
      %v1206 = vsub.s32 0, %v1205
      %v1207 = vrot.slane %v1202, %v1206
      %1209 = vmatprep.subr.mxu0 0.0
      %1210 = vmatpush1.msra.mxu0 %v1197
      %1211 = vmatprep.subr.mxu0 0.0
      %1212 = vmatpush1.msra.mxu0 %v1198
      %1213 = vmatprep.subr.mxu0 0.0
      %1214 = vmatpush1.msra.mxu0 %v1199
      %1215 = vmatprep.subr.mxu0 0.0
      %1216 = vmatpush1.msra.mxu0 %v1200
      %1217 = vmatprep.subr.mxu0 0.0
      %1218 = vmatpush1.msra.mxu0 0.0
      %1219 = vmatprep.subr.mxu0 0.0
      %1220 = vmatpush1.msra.mxu0 0.0
      %1221 = vmatprep.subr.mxu0 0.0
      %1222 = vmatpush1.msra.mxu0 0.0
      %1223 = vmatprep.subr.mxu0 0.0
      %1224 = vmatpush1.msra.mxu0 0.0
      %1225 = vmatprep.subr.mxu0 0.0
      %1226 = vmatpush1.msra.mxu0 0.0
      %1227 = vmatprep.subr.mxu0 0.0
      %1228 = vmatpush1.msra.mxu0 0.0
      %1229 = vmatprep.subr.mxu0 0.0
      %1230 = vmatpush1.msra.mxu0 0.0
      %1231 = vmatprep.subr.mxu0 0.0
      %1232 = vmatpush1.msra.mxu0 0.0
      %1233 = vmatprep.subr.mxu0 0.0
      %1234 = vmatpush1.msra.mxu0 0.0
      %1235 = vmatprep.subr.mxu0 0.0
      %1236 = vmatpush1.msra.mxu0 0.0
      %1237 = vmatprep.subr.mxu0 0.0
      %1238 = vmatpush1.msra.mxu0 0.0
      %1239 = vmatprep.subr.mxu0 0.0
      %1240 = vmatpush1.msra.mxu0 0.0
      %1241 = vmatprep.subr.mxu0 0.0
      %1242 = vmatpush1.msra.mxu0 0.0
      %1243 = vmatprep.subr.mxu0 0.0
      %1244 = vmatpush1.msra.mxu0 0.0
      %1245 = vmatprep.subr.mxu0 0.0
      %1246 = vmatpush1.msra.mxu0 0.0
      %1247 = vmatprep.subr.mxu0 0.0
      %1248 = vmatpush1.msra.mxu0 0.0
      %1249 = vmatprep.subr.mxu0 0.0
      %1250 = vmatpush1.msra.mxu0 0.0
      %1251 = vmatprep.subr.mxu0 0.0
      %1252 = vmatpush1.msra.mxu0 0.0
      %1253 = vmatprep.subr.mxu0 0.0
      %1254 = vmatpush1.msra.mxu0 0.0
      %1255 = vmatprep.subr.mxu0 0.0
      %1256 = vmatpush1.msra.mxu0 0.0
      %1257 = vmatprep.subr.mxu0 0.0
      %1258 = vmatpush1.msra.mxu0 0.0
      %1259 = vmatprep.subr.mxu0 0.0
      %1260 = vmatpush1.msra.mxu0 0.0
      %1261 = vmatprep.subr.mxu0 0.0
      %1262 = vmatpush1.msra.mxu0 0.0
      %1263 = vmatprep.subr.mxu0 0.0
      %1264 = vmatpush1.msra.mxu0 0.0
      %1265 = vmatprep.subr.mxu0 0.0
      %1266 = vmatpush1.msra.mxu0 0.0
      %1267 = vmatprep.subr.mxu0 0.0
      %1268 = vmatpush1.msra.mxu0 0.0
      %1269 = vmatprep.subr.mxu0 0.0
      %1270 = vmatpush1.msra.mxu0 0.0
      %1271 = vmatprep.subr.mxu0 0.0
      %1272 = vmatpush1.msra.mxu0 0.0
      %1273 = vmatprep.mubr.f32.mxu0 0.0
      %1274 = vmatmul.mubr.f32.gmra.mrb[0].mxu0 %v792
      %v1275 = vpop.f32.mrb[0].mxu0
      %v1276 = vadd.f32 %v1207, %v1275
      %v1277 = vpop.f32.mrb[0].mxu0
      %1278 = vdwg.mxu0
      %s1279 = scalar_lea.vmem %s6, 32
      %v1280 = vld [vmem:[%s1279] sm:$0xff]
      %v1281 = vld [vmem:[%s1279 + $0x8] sm:$0xff]
      %v1282 = vld [vmem:[%s1279 + $0x10] sm:$0xff]
      %v1283 = vld [vmem:[%s1279 + $0x18] sm:$0xff]
      %s1284 = scalar_lea.vmem %s7, 1
      %v1285 = vld [vmem:[%s1284] sm:$0x1]
      %v1287 = vlaneseq
      %v1288 = vshrl.u32 %v1287, 7
      %v1289 = vsub.s32 0, %v1288
      %v1290 = vrot.slane %v1285, %v1289
      %1292 = vmatprep.subr.mxu0 0.0
      %1293 = vmatpush1.msra.mxu0 %v1280
      %1294 = vmatprep.subr.mxu0 0.0
      %1295 = vmatpush1.msra.mxu0 %v1281
      %1296 = vmatprep.subr.mxu0 0.0
      %1297 = vmatpush1.msra.mxu0 %v1282
      %1298 = vmatprep.subr.mxu0 0.0
      %1299 = vmatpush1.msra.mxu0 %v1283
      %1300 = vmatprep.subr.mxu0 0.0
      %1301 = vmatpush1.msra.mxu0 0.0
      %1302 = vmatprep.subr.mxu0 0.0
      %1303 = vmatpush1.msra.mxu0 0.0
      %1304 = vmatprep.subr.mxu0 0.0
      %1305 = vmatpush1.msra.mxu0 0.0
      %1306 = vmatprep.subr.mxu0 0.0
      %1307 = vmatpush1.msra.mxu0 0.0
      %1308 = vmatprep.subr.mxu0 0.0
      %1309 = vmatpush1.msra.mxu0 0.0
      %1310 = vmatprep.subr.mxu0 0.0
      %1311 = vmatpush1.msra.mxu0 0.0
      %1312 = vmatprep.subr.mxu0 0.0
      %1313 = vmatpush1.msra.mxu0 0.0
      %1314 = vmatprep.subr.mxu0 0.0
      %1315 = vmatpush1.msra.mxu0 0.0
      %1316 = vmatprep.subr.mxu0 0.0
      %1317 = vmatpush1.msra.mxu0 0.0
      %1318 = vmatprep.subr.mxu0 0.0
      %1319 = vmatpush1.msra.mxu0 0.0
      %1320 = vmatprep.subr.mxu0 0.0
      %1321 = vmatpush1.msra.mxu0 0.0
      %1322 = vmatprep.subr.mxu0 0.0
      %1323 = vmatpush1.msra.mxu0 0.0
      %1324 = vmatprep.subr.mxu0 0.0
      %1325 = vmatpush1.msra.mxu0 0.0
      %1326 = vmatprep.subr.mxu0 0.0
      %1327 = vmatpush1.msra.mxu0 0.0
      %1328 = vmatprep.subr.mxu0 0.0
      %1329 = vmatpush1.msra.mxu0 0.0
      %1330 = vmatprep.subr.mxu0 0.0
      %1331 = vmatpush1.msra.mxu0 0.0
      %1332 = vmatprep.subr.mxu0 0.0
      %1333 = vmatpush1.msra.mxu0 0.0
      %1334 = vmatprep.subr.mxu0 0.0
      %1335 = vmatpush1.msra.mxu0 0.0
      %1336 = vmatprep.subr.mxu0 0.0
      %1337 = vmatpush1.msra.mxu0 0.0
      %1338 = vmatprep.subr.mxu0 0.0
      %1339 = vmatpush1.msra.mxu0 0.0
      %1340 = vmatprep.subr.mxu0 0.0
      %1341 = vmatpush1.msra.mxu0 0.0
      %1342 = vmatprep.subr.mxu0 0.0
      %1343 = vmatpush1.msra.mxu0 0.0
      %1344 = vmatprep.subr.mxu0 0.0
      %1345 = vmatpush1.msra.mxu0 0.0
      %1346 = vmatprep.subr.mxu0 0.0
      %1347 = vmatpush1.msra.mxu0 0.0
      %1348 = vmatprep.subr.mxu0 0.0
      %1349 = vmatpush1.msra.mxu0 0.0
      %1350 = vmatprep.subr.mxu0 0.0
      %1351 = vmatpush1.msra.mxu0 0.0
      %1352 = vmatprep.subr.mxu0 0.0
      %1353 = vmatpush1.msra.mxu0 0.0
      %1354 = vmatprep.subr.mxu0 0.0
      %1355 = vmatpush1.msra.mxu0 0.0
      %1356 = vmatprep.mubr.f32.mxu0 0.0
      %1357 = vmatmul.mubr.f32.gmra.mrb[0].mxu0 %v792
      %v1358 = vpop.f32.mrb[0].mxu0
      %v1359 = vadd.f32 %v1290, %v1358
      %v1360 = vpop.f32.mrb[0].mxu0
      %1361 = vdwg.mxu0
      %s1362 = scalar_lea.vmem %s8, 32
      %v1363 = vld [vmem:[%s1362] sm:$0xff]
      %v1364 = vld [vmem:[%s1362 + $0x8] sm:$0xff]
      %v1365 = vld [vmem:[%s1362 + $0x10] sm:$0xff]
      %v1366 = vld [vmem:[%s1362 + $0x18] sm:$0xff]
      %s1367 = scalar_lea.vmem %s9, 1
      %v1368 = vld [vmem:[%s1367] sm:$0x1]
      %v1370 = vlaneseq
      %v1371 = vshrl.u32 %v1370, 7
      %v1372 = vsub.s32 0, %v1371
      %v1373 = vrot.slane %v1368, %v1372
      %1375 = vmatprep.subr.mxu0 0.0
      %1376 = vmatpush1.msra.mxu0 %v1363
      %1377 = vmatprep.subr.mxu0 0.0
      %1378 = vmatpush1.msra.mxu0 %v1364
      %1379 = vmatprep.subr.mxu0 0.0
      %1380 = vmatpush1.msra.mxu0 %v1365
      %1381 = vmatprep.subr.mxu0 0.0
      %1382 = vmatpush1.msra.mxu0 %v1366
      %1383 = vmatprep.subr.mxu0 0.0
      %1384 = vmatpush1.msra.mxu0 0.0
      %1385 = vmatprep.subr.mxu0 0.0
      %1386 = vmatpush1.msra.mxu0 0.0
      %1387 = vmatprep.subr.mxu0 0.0
      %1388 = vmatpush1.msra.mxu0 0.0
      %1389 = vmatprep.subr.mxu0 0.0
      %1390 = vmatpush1.msra.mxu0 0.0
      %1391 = vmatprep.subr.mxu0 0.0
      %1392 = vmatpush1.msra.mxu0 0.0
      %1393 = vmatprep.subr.mxu0 0.0
      %1394 = vmatpush1.msra.mxu0 0.0
      %1395 = vmatprep.subr.mxu0 0.0
      %1396 = vmatpush1.msra.mxu0 0.0
      %1397 = vmatprep.subr.mxu0 0.0
      %1398 = vmatpush1.msra.mxu0 0.0
      %1399 = vmatprep.subr.mxu0 0.0
      %1400 = vmatpush1.msra.mxu0 0.0
      %1401 = vmatprep.subr.mxu0 0.0
      %1402 = vmatpush1.msra.mxu0 0.0
      %1403 = vmatprep.subr.mxu0 0.0
      %1404 = vmatpush1.msra.mxu0 0.0
      %1405 = vmatprep.subr.mxu0 0.0
      %1406 = vmatpush1.msra.mxu0 0.0
      %1407 = vmatprep.subr.mxu0 0.0
      %1408 = vmatpush1.msra.mxu0 0.0
      %1409 = vmatprep.subr.mxu0 0.0
      %1410 = vmatpush1.msra.mxu0 0.0
      %1411 = vmatprep.subr.mxu0 0.0
      %1412 = vmatpush1.msra.mxu0 0.0
      %1413 = vmatprep.subr.mxu0 0.0
      %1414 = vmatpush1.msra.mxu0 0.0
      %1415 = vmatprep.subr.mxu0 0.0
      %1416 = vmatpush1.msra.mxu0 0.0
      %1417 = vmatprep.subr.mxu0 0.0
      %1418 = vmatpush1.msra.mxu0 0.0
      %1419 = vmatprep.subr.mxu0 0.0
      %1420 = vmatpush1.msra.mxu0 0.0
      %1421 = vmatprep.subr.mxu0 0.0
      %1422 = vmatpush1.msra.mxu0 0.0
      %1423 = vmatprep.subr.mxu0 0.0
      %1424 = vmatpush1.msra.mxu0 0.0
      %1425 = vmatprep.subr.mxu0 0.0
      %1426 = vmatpush1.msra.mxu0 0.0
      %1427 = vmatprep.subr.mxu0 0.0
      %1428 = vmatpush1.msra.mxu0 0.0
      %1429 = vmatprep.subr.mxu0 0.0
      %1430 = vmatpush1.msra.mxu0 0.0
      %1431 = vmatprep.subr.mxu0 0.0
      %1432 = vmatpush1.msra.mxu0 0.0
      %1433 = vmatprep.subr.mxu0 0.0
      %1434 = vmatpush1.msra.mxu0 0.0
      %1435 = vmatprep.subr.mxu0 0.0
      %1436 = vmatpush1.msra.mxu0 0.0
      %1437 = vmatprep.subr.mxu0 0.0
      %1438 = vmatpush1.msra.mxu0 0.0
      %1439 = vmatprep.mubr.f32.mxu0 0.0
      %1440 = vmatmul.mubr.f32.gmra.mrb[0].mxu0 %v792
      %v1441 = vpop.f32.mrb[0].mxu0
      %v1442 = vadd.f32 %v1373, %v1441
      %v1443 = vpop.f32.mrb[0].mxu0
      %1444 = vdwg.mxu0
      %v1446 = vsel %vm1026, %v1276, 0
      %v1449 = vsel %vm1026, %v1359, 0
      %1451 = vmatprep.subr.mxu0 0.0
      %1452 = vmatpush1.xpose.msra.mxu0 %v1449
      %1453 = vmatprep.subr.mxu0 0.0
      %1454 = vmatpush1.xpose.msra.mxu0 0.0
      %1455 = vmatprep.subr.mxu0 0.0
      %1456 = vmatpush1.xpose.msra.mxu0 0.0
      %1457 = vmatprep.subr.mxu0 0.0
      %1458 = vmatpush1.xpose.msra.mxu0 0.0
      %1459 = vmatprep.subr.mxu0 0.0
      %1460 = vmatpush1.xpose.msra.mxu0 0.0
      %1461 = vmatprep.subr.mxu0 0.0
      %1462 = vmatpush1.xpose.msra.mxu0 0.0
      %1463 = vmatprep.subr.mxu0 0.0
      %1464 = vmatpush1.xpose.msra.mxu0 0.0
      %1465 = vmatprep.subr.mxu0 0.0
      %1466 = vmatpush1.xpose.msra.mxu0 0.0
      %1467 = vmatprep.subr.mxu0 0.0
      %1468 = vmatpush1.xpose.msra.mxu0 0.0
      %1469 = vmatprep.subr.mxu0 0.0
      %1470 = vmatpush1.xpose.msra.mxu0 0.0
      %1471 = vmatprep.subr.mxu0 0.0
      %1472 = vmatpush1.xpose.msra.mxu0 0.0
      %1473 = vmatprep.subr.mxu0 0.0
      %1474 = vmatpush1.xpose.msra.mxu0 0.0
      %1475 = vmatprep.subr.mxu0 0.0
      %1476 = vmatpush1.xpose.msra.mxu0 0.0
      %1477 = vmatprep.subr.mxu0 0.0
      %1478 = vmatpush1.xpose.msra.mxu0 0.0
      %1479 = vmatprep.subr.mxu0 0.0
      %1480 = vmatpush1.xpose.msra.mxu0 0.0
      %1481 = vmatprep.subr.mxu0 0.0
      %1482 = vmatpush1.xpose.msra.mxu0 0.0
      %1483 = vmatprep.subr.mxu0 0.0
      %1484 = vmatpush1.xpose.msra.mxu0 0.0
      %1485 = vmatprep.subr.mxu0 0.0
      %1486 = vmatpush1.xpose.msra.mxu0 0.0
      %1487 = vmatprep.subr.mxu0 0.0
      %1488 = vmatpush1.xpose.msra.mxu0 0.0
      %1489 = vmatprep.subr.mxu0 0.0
      %1490 = vmatpush1.xpose.msra.mxu0 0.0
      %1491 = vmatprep.subr.mxu0 0.0
      %1492 = vmatpush1.xpose.msra.mxu0 0.0
      %1493 = vmatprep.subr.mxu0 0.0
      %1494 = vmatpush1.xpose.msra.mxu0 0.0
      %1495 = vmatprep.subr.mxu0 0.0
      %1496 = vmatpush1.xpose.msra.mxu0 0.0
      %1497 = vmatprep.subr.mxu0 0.0
      %1498 = vmatpush1.xpose.msra.mxu0 0.0
      %1499 = vmatprep.subr.mxu0 0.0
      %1500 = vmatpush1.xpose.msra.mxu0 0.0
      %1501 = vmatprep.subr.mxu0 0.0
      %1502 = vmatpush1.xpose.msra.mxu0 0.0
      %1503 = vmatprep.subr.mxu0 0.0
      %1504 = vmatpush1.xpose.msra.mxu0 0.0
      %1505 = vmatprep.subr.mxu0 0.0
      %1506 = vmatpush1.xpose.msra.mxu0 0.0
      %1507 = vmatprep.subr.mxu0 0.0
      %1508 = vmatpush1.xpose.msra.mxu0 0.0
      %1509 = vmatprep.subr.mxu0 0.0
      %1510 = vmatpush1.xpose.msra.mxu0 0.0
      %1511 = vmatprep.subr.mxu0 0.0
      %1512 = vmatpush1.xpose.msra.mxu0 0.0
      %1513 = vmatprep.subr.mxu0 0.0
      %1514 = vmatpush1.xpose.msra.mxu0 0.0
      %1515 = vmatprep.mubr.f32.mxu0 0.0
      %1516 = vmatmul.mubr.f32.gmra.mrb[0].mxu0 %v1446
      %v1517 = vpop.f32.mrb[0].mxu0
      %v1518 = vadd.f32 0.0, %v1517
      %v1519 = vpop.f32.mrb[0].mxu0
      %1520 = vdwg.mxu0
      %v1521 = vmul.f32 %v1518, 0.35355338
      %v1522 = vadd.f32 %v1521, %v1108
      %v1523 = vsel %vm1026, %v1522, -inf
      %1524 = vmax.xlane.f32.xlu0 %v1523
      %v1525 = vpop.xlane.xlu0 %1524
      %v1526 = vsub.f32 %v1522, %v1525
      %v1527 = vmul.f32 %v1526, 1.442695
      %v1528 = vpow.pop %v1527
      %v1529 = vsel %vm1026, %v1528, 0.0
      %1530 = vadd.xlane.f32.xlu0 %v1529
      %v1531 = vpop.xlane.xlu0 %1530
      %v1532 = vrcp.pop %v1531
      %v1533 = vmul.f32 %v1528, %v1532
      %v1535 = vsel %vm1026, %v1533, 0
      %1537 = vmatprep.subr.mxu0 0.0
      %1538 = vmatpush1.msra.mxu0 %v1442
      %1539 = vmatprep.subr.mxu0 0.0
      %1540 = vmatpush1.msra.mxu0 0.0
      %1541 = vmatprep.subr.mxu0 0.0
      %1542 = vmatpush1.msra.mxu0 0.0
      %1543 = vmatprep.subr.mxu0 0.0
      %1544 = vmatpush1.msra.mxu0 0.0
      %1545 = vmatprep.subr.mxu0 0.0
      %1546 = vmatpush1.msra.mxu0 0.0
      %1547 = vmatprep.subr.mxu0 0.0
      %1548 = vmatpush1.msra.mxu0 0.0
      %1549 = vmatprep.subr.mxu0 0.0
      %1550 = vmatpush1.msra.mxu0 0.0
      %1551 = vmatprep.subr.mxu0 0.0
      %1552 = vmatpush1.msra.mxu0 0.0
      %1553 = vmatprep.subr.mxu0 0.0
      %1554 = vmatpush1.msra.mxu0 0.0
      %1555 = vmatprep.subr.mxu0 0.0
      %1556 = vmatpush1.msra.mxu0 0.0
      %1557 = vmatprep.subr.mxu0 0.0
      %1558 = vmatpush1.msra.mxu0 0.0
      %1559 = vmatprep.subr.mxu0 0.0
      %1560 = vmatpush1.msra.mxu0 0.0
      %1561 = vmatprep.subr.mxu0 0.0
      %1562 = vmatpush1.msra.mxu0 0.0
      %1563 = vmatprep.subr.mxu0 0.0
      %1564 = vmatpush1.msra.mxu0 0.0
      %1565 = vmatprep.subr.mxu0 0.0
      %1566 = vmatpush1.msra.mxu0 0.0
      %1567 = vmatprep.subr.mxu0 0.0
      %1568 = vmatpush1.msra.mxu0 0.0
      %1569 = vmatprep.subr.mxu0 0.0
      %1570 = vmatpush1.msra.mxu0 0.0
      %1571 = vmatprep.subr.mxu0 0.0
      %1572 = vmatpush1.msra.mxu0 0.0
      %1573 = vmatprep.subr.mxu0 0.0
      %1574 = vmatpush1.msra.mxu0 0.0
      %1575 = vmatprep.subr.mxu0 0.0
      %1576 = vmatpush1.msra.mxu0 0.0
      %1577 = vmatprep.subr.mxu0 0.0
      %1578 = vmatpush1.msra.mxu0 0.0
      %1579 = vmatprep.subr.mxu0 0.0
      %1580 = vmatpush1.msra.mxu0 0.0
      %1581 = vmatprep.subr.mxu0 0.0
      %1582 = vmatpush1.msra.mxu0 0.0
      %1583 = vmatprep.subr.mxu0 0.0
      %1584 = vmatpush1.msra.mxu0 0.0
      %1585 = vmatprep.subr.mxu0 0.0
      %1586 = vmatpush1.msra.mxu0 0.0
      %1587 = vmatprep.subr.mxu0 0.0
      %1588 = vmatpush1.msra.mxu0 0.0
      %1589 = vmatprep.subr.mxu0 0.0
      %1590 = vmatpush1.msra.mxu0 0.0
      %1591 = vmatprep.subr.mxu0 0.0
      %1592 = vmatpush1.msra.mxu0 0.0
      %1593 = vmatprep.subr.mxu0 0.0
      %1594 = vmatpush1.msra.mxu0 0.0
      %1595 = vmatprep.subr.mxu0 0.0
      %1596 = vmatpush1.msra.mxu0 0.0
      %1597 = vmatprep.subr.mxu0 0.0
      %1598 = vmatpush1.msra.mxu0 0.0
      %1599 = vmatprep.subr.mxu0 0.0
      %1600 = vmatpush1.msra.mxu0 0.0
      %1601 = vmatprep.mubr.f32.mxu0 0.0
      %1602 = vmatmul.mubr.f32.gmra.mrb[0].mxu0 %v1535
      %v1603 = vpop.f32.mrb[0].mxu0
      %v1604 = vadd.f32 0.0, %v1603
      %v1605 = vpop.f32.mrb[0].mxu0
      %1606 = vdwg.mxu0
      %s1607 = scalar_lea.vmem %s10, 8
      %v1608 = vld [vmem:[%s1607] sm:$0xff]
      %v1610 = vsel %vm1026, %v1604, 0
      %1612 = vmatprep.subr.mxu0 0.0
      %1613 = vmatpush1.msra.mxu0 %v1608
      %1614 = vmatprep.subr.mxu0 0.0
      %1615 = vmatpush1.msra.mxu0 0.0
      %1616 = vmatprep.subr.mxu0 0.0
      %1617 = vmatpush1.msra.mxu0 0.0
      %1618 = vmatprep.subr.mxu0 0.0
      %1619 = vmatpush1.msra.mxu0 0.0
      %1620 = vmatprep.subr.mxu0 0.0
      %1621 = vmatpush1.msra.mxu0 0.0
      %1622 = vmatprep.subr.mxu0 0.0
      %1623 = vmatpush1.msra.mxu0 0.0
      %1624 = vmatprep.subr.mxu0 0.0
      %1625 = vmatpush1.msra.mxu0 0.0
      %1626 = vmatprep.subr.mxu0 0.0
      %1627 = vmatpush1.msra.mxu0 0.0
      %1628 = vmatprep.subr.mxu0 0.0
      %1629 = vmatpush1.msra.mxu0 0.0
      %1630 = vmatprep.subr.mxu0 0.0
      %1631 = vmatpush1.msra.mxu0 0.0
      %1632 = vmatprep.subr.mxu0 0.0
      %1633 = vmatpush1.msra.mxu0 0.0
      %1634 = vmatprep.subr.mxu0 0.0
      %1635 = vmatpush1.msra.mxu0 0.0
      %1636 = vmatprep.subr.mxu0 0.0
      %1637 = vmatpush1.msra.mxu0 0.0
      %1638 = vmatprep.subr.mxu0 0.0
      %1639 = vmatpush1.msra.mxu0 0.0
      %1640 = vmatprep.subr.mxu0 0.0
      %1641 = vmatpush1.msra.mxu0 0.0
      %1642 = vmatprep.subr.mxu0 0.0
      %1643 = vmatpush1.msra.mxu0 0.0
      %1644 = vmatprep.subr.mxu0 0.0
      %1645 = vmatpush1.msra.mxu0 0.0
      %1646 = vmatprep.subr.mxu0 0.0
      %1647 = vmatpush1.msra.mxu0 0.0
      %1648 = vmatprep.subr.mxu0 0.0
      %1649 = vmatpush1.msra.mxu0 0.0
      %1650 = vmatprep.subr.mxu0 0.0
      %1651 = vmatpush1.msra.mxu0 0.0
      %1652 = vmatprep.subr.mxu0 0.0
      %1653 = vmatpush1.msra.mxu0 0.0
      %1654 = vmatprep.subr.mxu0 0.0
      %1655 = vmatpush1.msra.mxu0 0.0
      %1656 = vmatprep.subr.mxu0 0.0
      %1657 = vmatpush1.msra.mxu0 0.0
      %1658 = vmatprep.subr.mxu0 0.0
      %1659 = vmatpush1.msra.mxu0 0.0
      %1660 = vmatprep.subr.mxu0 0.0
      %1661 = vmatpush1.msra.mxu0 0.0
      %1662 = vmatprep.subr.mxu0 0.0
      %1663 = vmatpush1.msra.mxu0 0.0
      %1664 = vmatprep.subr.mxu0 0.0
      %1665 = vmatpush1.msra.mxu0 0.0
      %1666 = vmatprep.subr.mxu0 0.0
      %1667 = vmatpush1.msra.mxu0 0.0
      %1668 = vmatprep.subr.mxu0 0.0
      %1669 = vmatpush1.msra.mxu0 0.0
      %1670 = vmatprep.subr.mxu0 0.0
      %1671 = vmatpush1.msra.mxu0 0.0
      %1672 = vmatprep.subr.mxu0 0.0
      %1673 = vmatpush1.msra.mxu0 0.0
      %1674 = vmatprep.subr.mxu0 0.0
      %1675 = vmatpush1.msra.mxu0 0.0
      %1676 = vmatprep.mubr.f32.mxu0 0.0
      %1677 = vmatmul.mubr.f32.gmra.mrb[0].mxu0 %v1610
      %v1678 = vpop.f32.mrb[0].mxu0
      %v1679 = vadd.f32 0.0, %v1678
      %v1680 = vpop.f32.mrb[0].mxu0
      %1681 = vdwg.mxu0
      %v1683 = vsel %vm1026, %v1192, 0
      %1685 = vmatprep.subr.mxu0 0.0
      %1686 = vmatpush1.msra.mxu0 %v1195
      %1687 = vmatprep.subr.mxu0 0.0
      %1688 = vmatpush1.msra.mxu0 0.0
      %1689 = vmatprep.subr.mxu0 0.0
      %1690 = vmatpush1.msra.mxu0 0.0
      %1691 = vmatprep.subr.mxu0 0.0
      %1692 = vmatpush1.msra.mxu0 0.0
      %1693 = vmatprep.subr.mxu0 0.0
      %1694 = vmatpush1.msra.mxu0 0.0
      %1695 = vmatprep.subr.mxu0 0.0
      %1696 = vmatpush1.msra.mxu0 0.0
      %1697 = vmatprep.subr.mxu0 0.0
      %1698 = vmatpush1.msra.mxu0 0.0
      %1699 = vmatprep.subr.mxu0 0.0
      %1700 = vmatpush1.msra.mxu0 0.0
      %1701 = vmatprep.subr.mxu0 0.0
      %1702 = vmatpush1.msra.mxu0 0.0
      %1703 = vmatprep.subr.mxu0 0.0
      %1704 = vmatpush1.msra.mxu0 0.0
      %1705 = vmatprep.subr.mxu0 0.0
      %1706 = vmatpush1.msra.mxu0 0.0
      %1707 = vmatprep.subr.mxu0 0.0
      %1708 = vmatpush1.msra.mxu0 0.0
      %1709 = vmatprep.subr.mxu0 0.0
      %1710 = vmatpush1.msra.mxu0 0.0
      %1711 = vmatprep.subr.mxu0 0.0
      %1712 = vmatpush1.msra.mxu0 0.0
      %1713 = vmatprep.subr.mxu0 0.0
      %1714 = vmatpush1.msra.mxu0 0.0
      %1715 = vmatprep.subr.mxu0 0.0
      %1716 = vmatpush1.msra.mxu0 0.0
      %1717 = vmatprep.subr.mxu0 0.0
      %1718 = vmatpush1.msra.mxu0 0.0
      %1719 = vmatprep.subr.mxu0 0.0
      %1720 = vmatpush1.msra.mxu0 0.0
      %1721 = vmatprep.subr.mxu0 0.0
      %1722 = vmatpush1.msra.mxu0 0.0
      %1723 = vmatprep.subr.mxu0 0.0
      %1724 = vmatpush1.msra.mxu0 0.0
      %1725 = vmatprep.subr.mxu0 0.0
      %1726 = vmatpush1.msra.mxu0 0.0
      %1727 = vmatprep.subr.mxu0 0.0
      %1728 = vmatpush1.msra.mxu0 0.0
      %1729 = vmatprep.subr.mxu0 0.0
      %1730 = vmatpush1.msra.mxu0 0.0
      %1731 = vmatprep.subr.mxu0 0.0
      %1732 = vmatpush1.msra.mxu0 0.0
      %1733 = vmatprep.subr.mxu0 0.0
      %1734 = vmatpush1.msra.mxu0 0.0
      %1735 = vmatprep.subr.mxu0 0.0
      %1736 = vmatpush1.msra.mxu0 0.0
      %1737 = vmatprep.subr.mxu0 0.0
      %1738 = vmatpush1.msra.mxu0 0.0
      %1739 = vmatprep.subr.mxu0 0.0
      %1740 = vmatpush1.msra.mxu0 0.0
      %1741 = vmatprep.subr.mxu0 0.0
      %1742 = vmatpush1.msra.mxu0 0.0
      %1743 = vmatprep.subr.mxu0 0.0
      %1744 = vmatpush1.msra.mxu0 0.0
      %1745 = vmatprep.subr.mxu0 0.0
      %1746 = vmatpush1.msra.mxu0 0.0
      %1747 = vmatprep.subr.mxu0 0.0
      %1748 = vmatpush1.msra.mxu0 0.0
      %1749 = vmatprep.mubr.f32.mxu0 0.0
      %1750 = vmatmul.mubr.f32.gmra.mrb[0].mxu0 %v1683
      %v1751 = vpop.f32.mrb[0].mxu0
      %v1752 = vadd.f32 %v1679, %v1751
      %v1753 = vpop.f32.mrb[0].mxu0
      %1754 = vdwg.mxu0
      %s1755 = scalar_lea.vmem %s4, 64
      %v1756 = vld [vmem:[%s1755] sm:$0xff]
      %v1757 = vld [vmem:[%s1755 + $0x8] sm:$0xff]
      %v1758 = vld [vmem:[%s1755 + $0x10] sm:$0xff]
      %v1759 = vld [vmem:[%s1755 + $0x18] sm:$0xff]
      %s1760 = scalar_lea.vmem %s5, 2
      %v1761 = vld [vmem:[%s1760] sm:$0x1]
      %v1763 = vlaneseq
      %v1764 = vshrl.u32 %v1763, 7
      %v1765 = vsub.s32 0, %v1764
      %v1766 = vrot.slane %v1761, %v1765
      %1768 = vmatprep.subr.mxu0 0.0
      %1769 = vmatpush1.msra.mxu0 %v1756
      %1770 = vmatprep.subr.mxu0 0.0
      %1771 = vmatpush1.msra.mxu0 %v1757
      %1772 = vmatprep.subr.mxu0 0.0
      %1773 = vmatpush1.msra.mxu0 %v1758
      %1774 = vmatprep.subr.mxu0 0.0
      %1775 = vmatpush1.msra.mxu0 %v1759
      %1776 = vmatprep.subr.mxu0 0.0
      %1777 = vmatpush1.msra.mxu0 0.0
      %1778 = vmatprep.subr.mxu0 0.0
      %1779 = vmatpush1.msra.mxu0 0.0
      %1780 = vmatprep.subr.mxu0 0.0
      %1781 = vmatpush1.msra.mxu0 0.0
      %1782 = vmatprep.subr.mxu0 0.0
      %1783 = vmatpush1.msra.mxu0 0.0
      %1784 = vmatprep.subr.mxu0 0.0
      %1785 = vmatpush1.msra.mxu0 0.0
      %1786 = vmatprep.subr.mxu0 0.0
      %1787 = vmatpush1.msra.mxu0 0.0
      %1788 = vmatprep.subr.mxu0 0.0
      %1789 = vmatpush1.msra.mxu0 0.0
      %1790 = vmatprep.subr.mxu0 0.0
      %1791 = vmatpush1.msra.mxu0 0.0
      %1792 = vmatprep.subr.mxu0 0.0
      %1793 = vmatpush1.msra.mxu0 0.0
      %1794 = vmatprep.subr.mxu0 0.0
      %1795 = vmatpush1.msra.mxu0 0.0
      %1796 = vmatprep.subr.mxu0 0.0
      %1797 = vmatpush1.msra.mxu0 0.0
      %1798 = vmatprep.subr.mxu0 0.0
      %1799 = vmatpush1.msra.mxu0 0.0
      %1800 = vmatprep.subr.mxu0 0.0
      %1801 = vmatpush1.msra.mxu0 0.0
      %1802 = vmatprep.subr.mxu0 0.0
      %1803 = vmatpush1.msra.mxu0 0.0
      %1804 = vmatprep.subr.mxu0 0.0
      %1805 = vmatpush1.msra.mxu0 0.0
      %1806 = vmatprep.subr.mxu0 0.0
      %1807 = vmatpush1.msra.mxu0 0.0
      %1808 = vmatprep.subr.mxu0 0.0
      %1809 = vmatpush1.msra.mxu0 0.0
      %1810 = vmatprep.subr.mxu0 0.0
      %1811 = vmatpush1.msra.mxu0 0.0
      %1812 = vmatprep.subr.mxu0 0.0
      %1813 = vmatpush1.msra.mxu0 0.0
      %1814 = vmatprep.subr.mxu0 0.0
      %1815 = vmatpush1.msra.mxu0 0.0
      %1816 = vmatprep.subr.mxu0 0.0
      %1817 = vmatpush1.msra.mxu0 0.0
      %1818 = vmatprep.subr.mxu0 0.0
      %1819 = vmatpush1.msra.mxu0 0.0
      %1820 = vmatprep.subr.mxu0 0.0
      %1821 = vmatpush1.msra.mxu0 0.0
      %1822 = vmatprep.subr.mxu0 0.0
      %1823 = vmatpush1.msra.mxu0 0.0
      %1824 = vmatprep.subr.mxu0 0.0
      %1825 = vmatpush1.msra.mxu0 0.0
      %1826 = vmatprep.subr.mxu0 0.0
      %1827 = vmatpush1.msra.mxu0 0.0
      %1828 = vmatprep.subr.mxu0 0.0
      %1829 = vmatpush1.msra.mxu0 0.0
      %1830 = vmatprep.subr.mxu0 0.0
      %1831 = vmatpush1.msra.mxu0 0.0
      %1832 = vmatprep.mubr.f32.mxu0 0.0
      %1833 = vmatmul.mubr.f32.gmra.mrb[0].mxu0 %v792
      %v1834 = vpop.f32.mrb[0].mxu0
      %v1835 = vadd.f32 %v1766, %v1834
      %v1836 = vpop.f32.mrb[0].mxu0
      %1837 = vdwg.mxu0
      %s1838 = scalar_lea.vmem %s6, 64
      %v1839 = vld [vmem:[%s1838] sm:$0xff]
      %v1840 = vld [vmem:[%s1838 + $0x8] sm:$0xff]
      %v1841 = vld [vmem:[%s1838 + $0x10] sm:$0xff]
      %v1842 = vld [vmem:[%s1838 + $0x18] sm:$0xff]
      %s1843 = scalar_lea.vmem %s7, 2
      %v1844 = vld [vmem:[%s1843] sm:$0x1]
      %v1846 = vlaneseq
      %v1847 = vshrl.u32 %v1846, 7
      %v1848 = vsub.s32 0, %v1847
      %v1849 = vrot.slane %v1844, %v1848
      %1851 = vmatprep.subr.mxu0 0.0
      %1852 = vmatpush1.msra.mxu0 %v1839
      %1853 = vmatprep.subr.mxu0 0.0
      %1854 = vmatpush1.msra.mxu0 %v1840
      %1855 = vmatprep.subr.mxu0 0.0
      %1856 = vmatpush1.msra.mxu0 %v1841
      %1857 = vmatprep.subr.mxu0 0.0
      %1858 = vmatpush1.msra.mxu0 %v1842
      %1859 = vmatprep.subr.mxu0 0.0
      %1860 = vmatpush1.msra.mxu0 0.0
      %1861 = vmatprep.subr.mxu0 0.0
      %1862 = vmatpush1.msra.mxu0 0.0
      %1863 = vmatprep.subr.mxu0 0.0
      %1864 = vmatpush1.msra.mxu0 0.0
      %1865 = vmatprep.subr.mxu0 0.0
      %1866 = vmatpush1.msra.mxu0 0.0
      %1867 = vmatprep.subr.mxu0 0.0
      %1868 = vmatpush1.msra.mxu0 0.0
      %1869 = vmatprep.subr.mxu0 0.0
      %1870 = vmatpush1.msra.mxu0 0.0
      %1871 = vmatprep.subr.mxu0 0.0
      %1872 = vmatpush1.msra.mxu0 0.0
      %1873 = vmatprep.subr.mxu0 0.0
      %1874 = vmatpush1.msra.mxu0 0.0
      %1875 = vmatprep.subr.mxu0 0.0
      %1876 = vmatpush1.msra.mxu0 0.0
      %1877 = vmatprep.subr.mxu0 0.0
      %1878 = vmatpush1.msra.mxu0 0.0
      %1879 = vmatprep.subr.mxu0 0.0
      %1880 = vmatpush1.msra.mxu0 0.0
      %1881 = vmatprep.subr.mxu0 0.0
      %1882 = vmatpush1.msra.mxu0 0.0
      %1883 = vmatprep.subr.mxu0 0.0
      %1884 = vmatpush1.msra.mxu0 0.0
      %1885 = vmatprep.subr.mxu0 0.0
      %1886 = vmatpush1.msra.mxu0 0.0
      %1887 = vmatprep.subr.mxu0 0.0
      %1888 = vmatpush1.msra.mxu0 0.0
      %1889 = vmatprep.subr.mxu0 0.0
      %1890 = vmatpush1.msra.mxu0 0.0
      %1891 = vmatprep.subr.mxu0 0.0
      %1892 = vmatpush1.msra.mxu0 0.0
      %1893 = vmatprep.subr.mxu0 0.0
      %1894 = vmatpush1.msra.mxu0 0.0
      %1895 = vmatprep.subr.mxu0 0.0
      %1896 = vmatpush1.msra.mxu0 0.0
      %1897 = vmatprep.subr.mxu0 0.0
      %1898 = vmatpush1.msra.mxu0 0.0
      %1899 = vmatprep.subr.mxu0 0.0
      %1900 = vmatpush1.msra.mxu0 0.0
      %1901 = vmatprep.subr.mxu0 0.0
      %1902 = vmatpush1.msra.mxu0 0.0
      %1903 = vmatprep.subr.mxu0 0.0
      %1904 = vmatpush1.msra.mxu0 0.0
      %1905 = vmatprep.subr.mxu0 0.0
      %1906 = vmatpush1.msra.mxu0 0.0
      %1907 = vmatprep.subr.mxu0 0.0
      %1908 = vmatpush1.msra.mxu0 0.0
      %1909 = vmatprep.subr.mxu0 0.0
      %1910 = vmatpush1.msra.mxu0 0.0
      %1911 = vmatprep.subr.mxu0 0.0
      %1912 = vmatpush1.msra.mxu0 0.0
      %1913 = vmatprep.subr.mxu0 0.0
      %1914 = vmatpush1.msra.mxu0 0.0
      %1915 = vmatprep.mubr.f32.mxu0 0.0
      %1916 = vmatmul.mubr.f32.gmra.mrb[0].mxu0 %v792
      %v1917 = vpop.f32.mrb[0].mxu0
      %v1918 = vadd.f32 %v1849, %v1917
      %v1919 = vpop.f32.mrb[0].mxu0
      %1920 = vdwg.mxu0
      %s1921 = scalar_lea.vmem %s8, 64
      %v1922 = vld [vmem:[%s1921] sm:$0xff]
      %v1923 = vld [vmem:[%s1921 + $0x8] sm:$0xff]
      %v1924 = vld [vmem:[%s1921 + $0x10] sm:$0xff]
      %v1925 = vld [vmem:[%s1921 + $0x18] sm:$0xff]
      %s1926 = scalar_lea.vmem %s9, 2
      %v1927 = vld [vmem:[%s1926] sm:$0x1]
      %v1929 = vlaneseq
      %v1930 = vshrl.u32 %v1929, 7
      %v1931 = vsub.s32 0, %v1930
      %v1932 = vrot.slane %v1927, %v1931
      %1934 = vmatprep.subr.mxu0 0.0
      %1935 = vmatpush1.msra.mxu0 %v1922
      %1936 = vmatprep.subr.mxu0 0.0
      %1937 = vmatpush1.msra.mxu0 %v1923
      %1938 = vmatprep.subr.mxu0 0.0
      %1939 = vmatpush1.msra.mxu0 %v1924
      %1940 = vmatprep.subr.mxu0 0.0
      %1941 = vmatpush1.msra.mxu0 %v1925
      %1942 = vmatprep.subr.mxu0 0.0
      %1943 = vmatpush1.msra.mxu0 0.0
      %1944 = vmatprep.subr.mxu0 0.0
      %1945 = vmatpush1.msra.mxu0 0.0
      %1946 = vmatprep.subr.mxu0 0.0
      %1947 = vmatpush1.msra.mxu0 0.0
      %1948 = vmatprep.subr.mxu0 0.0
      %1949 = vmatpush1.msra.mxu0 0.0
      %1950 = vmatprep.subr.mxu0 0.0
      %1951 = vmatpush1.msra.mxu0 0.0
      %1952 = vmatprep.subr.mxu0 0.0
      %1953 = vmatpush1.msra.mxu0 0.0
      %1954 = vmatprep.subr.mxu0 0.0
      %1955 = vmatpush1.msra.mxu0 0.0
      %1956 = vmatprep.subr.mxu0 0.0
      %1957 = vmatpush1.msra.mxu0 0.0
      %1958 = vmatprep.subr.mxu0 0.0
      %1959 = vmatpush1.msra.mxu0 0.0
      %1960 = vmatprep.subr.mxu0 0.0
      %1961 = vmatpush1.msra.mxu0 0.0
      %1962 = vmatprep.subr.mxu0 0.0
      %1963 = vmatpush1.msra.mxu0 0.0
      %1964 = vmatprep.subr.mxu0 0.0
      %1965 = vmatpush1.msra.mxu0 0.0
      %1966 = vmatprep.subr.mxu0 0.0
      %1967 = vmatpush1.msra.mxu0 0.0
      %1968 = vmatprep.subr.mxu0 0.0
      %1969 = vmatpush1.msra.mxu0 0.0
      %1970 = vmatprep.subr.mxu0 0.0
      %1971 = vmatpush1.msra.mxu0 0.0
      %1972 = vmatprep.subr.mxu0 0.0
      %1973 = vmatpush1.msra.mxu0 0.0
      %1974 = vmatprep.subr.mxu0 0.0
      %1975 = vmatpush1.msra.mxu0 0.0
      %1976 = vmatprep.subr.mxu0 0.0
      %1977 = vmatpush1.msra.mxu0 0.0
      %1978 = vmatprep.subr.mxu0 0.0
      %1979 = vmatpush1.msra.mxu0 0.0
      %1980 = vmatprep.subr.mxu0 0.0
      %1981 = vmatpush1.msra.mxu0 0.0
      %1982 = vmatprep.subr.mxu0 0.0
      %1983 = vmatpush1.msra.mxu0 0.0
      %1984 = vmatprep.subr.mxu0 0.0
      %1985 = vmatpush1.msra.mxu0 0.0
      %1986 = vmatprep.subr.mxu0 0.0
      %1987 = vmatpush1.msra.mxu0 0.0
      %1988 = vmatprep.subr.mxu0 0.0
      %1989 = vmatpush1.msra.mxu0 0.0
      %1990 = vmatprep.subr.mxu0 0.0
      %1991 = vmatpush1.msra.mxu0 0.0
      %1992 = vmatprep.subr.mxu0 0.0
      %1993 = vmatpush1.msra.mxu0 0.0
      %1994 = vmatprep.subr.mxu0 0.0
      %1995 = vmatpush1.msra.mxu0 0.0
      %1996 = vmatprep.subr.mxu0 0.0
      %1997 = vmatpush1.msra.mxu0 0.0
      %1998 = vmatprep.mubr.f32.mxu0 0.0
      %1999 = vmatmul.mubr.f32.gmra.mrb[0].mxu0 %v792
      %v2000 = vpop.f32.mrb[0].mxu0
      %v2001 = vadd.f32 %v1932, %v2000
      %v2002 = vpop.f32.mrb[0].mxu0
      %2003 = vdwg.mxu0
      %v2005 = vsel %vm1026, %v1835, 0
      %v2008 = vsel %vm1026, %v1918, 0
      %2010 = vmatprep.subr.mxu0 0.0
      %2011 = vmatpush1.xpose.msra.mxu0 %v2008
      %2012 = vmatprep.subr.mxu0 0.0
      %2013 = vmatpush1.xpose.msra.mxu0 0.0
      %2014 = vmatprep.subr.mxu0 0.0
      %2015 = vmatpush1.xpose.msra.mxu0 0.0
      %2016 = vmatprep.subr.mxu0 0.0
      %2017 = vmatpush1.xpose.msra.mxu0 0.0
      %2018 = vmatprep.subr.mxu0 0.0
      %2019 = vmatpush1.xpose.msra.mxu0 0.0
      %2020 = vmatprep.subr.mxu0 0.0
      %2021 = vmatpush1.xpose.msra.mxu0 0.0
      %2022 = vmatprep.subr.mxu0 0.0
      %2023 = vmatpush1.xpose.msra.mxu0 0.0
      %2024 = vmatprep.subr.mxu0 0.0
      %2025 = vmatpush1.xpose.msra.mxu0 0.0
      %2026 = vmatprep.subr.mxu0 0.0
      %2027 = vmatpush1.xpose.msra.mxu0 0.0
      %2028 = vmatprep.subr.mxu0 0.0
      %2029 = vmatpush1.xpose.msra.mxu0 0.0
      %2030 = vmatprep.subr.mxu0 0.0
      %2031 = vmatpush1.xpose.msra.mxu0 0.0
      %2032 = vmatprep.subr.mxu0 0.0
      %2033 = vmatpush1.xpose.msra.mxu0 0.0
      %2034 = vmatprep.subr.mxu0 0.0
      %2035 = vmatpush1.xpose.msra.mxu0 0.0
      %2036 = vmatprep.subr.mxu0 0.0
      %2037 = vmatpush1.xpose.msra.mxu0 0.0
      %2038 = vmatprep.subr.mxu0 0.0
      %2039 = vmatpush1.xpose.msra.mxu0 0.0
      %2040 = vmatprep.subr.mxu0 0.0
      %2041 = vmatpush1.xpose.msra.mxu0 0.0
      %2042 = vmatprep.subr.mxu0 0.0
      %2043 = vmatpush1.xpose.msra.mxu0 0.0
      %2044 = vmatprep.subr.mxu0 0.0
      %2045 = vmatpush1.xpose.msra.mxu0 0.0
      %2046 = vmatprep.subr.mxu0 0.0
      %2047 = vmatpush1.xpose.msra.mxu0 0.0
      %2048 = vmatprep.subr.mxu0 0.0
      %2049 = vmatpush1.xpose.msra.mxu0 0.0
      %2050 = vmatprep.subr.mxu0 0.0
      %2051 = vmatpush1.xpose.msra.mxu0 0.0
      %2052 = vmatprep.subr.mxu0 0.0
      %2053 = vmatpush1.xpose.msra.mxu0 0.0
      %2054 = vmatprep.subr.mxu0 0.0
      %2055 = vmatpush1.xpose.msra.mxu0 0.0
      %2056 = vmatprep.subr.mxu0 0.0
      %2057 = vmatpush1.xpose.msra.mxu0 0.0
      %2058 = vmatprep.subr.mxu0 0.0
      %2059 = vmatpush1.xpose.msra.mxu0 0.0
      %2060 = vmatprep.subr.mxu0 0.0
      %2061 = vmatpush1.xpose.msra.mxu0 0.0
      %2062 = vmatprep.subr.mxu0 0.0
      %2063 = vmatpush1.xpose.msra.mxu0 0.0
      %2064 = vmatprep.subr.mxu0 0.0
      %2065 = vmatpush1.xpose.msra.mxu0 0.0
      %2066 = vmatprep.subr.mxu0 0.0
      %2067 = vmatpush1.xpose.msra.mxu0 0.0
      %2068 = vmatprep.subr.mxu0 0.0
      %2069 = vmatpush1.xpose.msra.mxu0 0.0
      %2070 = vmatprep.subr.mxu0 0.0
      %2071 = vmatpush1.xpose.msra.mxu0 0.0
      %2072 = vmatprep.subr.mxu0 0.0
      %2073 = vmatpush1.xpose.msra.mxu0 0.0
      %2074 = vmatprep.mubr.f32.mxu0 0.0
      %2075 = vmatmul.mubr.f32.gmra.mrb[0].mxu0 %v2005
      %v2076 = vpop.f32.mrb[0].mxu0
      %v2077 = vadd.f32 0.0, %v2076
      %v2078 = vpop.f32.mrb[0].mxu0
      %2079 = vdwg.mxu0
      %v2080 = vmul.f32 %v2077, 0.35355338
      %v2081 = vadd.f32 %v2080, %v1108
      %v2082 = vsel %vm1026, %v2081, -inf
      %2083 = vmax.xlane.f32.xlu0 %v2082
      %v2084 = vpop.xlane.xlu0 %2083
      %v2085 = vsub.f32 %v2081, %v2084
      %v2086 = vmul.f32 %v2085, 1.442695
      %v2087 = vpow.pop %v2086
      %v2088 = vsel %vm1026, %v2087, 0.0
      %2089 = vadd.xlane.f32.xlu0 %v2088
      %v2090 = vpop.xlane.xlu0 %2089
      %v2091 = vrcp.pop %v2090
      %v2092 = vmul.f32 %v2087, %v2091
      %v2094 = vsel %vm1026, %v2092, 0
      %2096 = vmatprep.subr.mxu0 0.0
      %2097 = vmatpush1.msra.mxu0 %v2001
      %2098 = vmatprep.subr.mxu0 0.0
      %2099 = vmatpush1.msra.mxu0 0.0
      %2100 = vmatprep.subr.mxu0 0.0
      %2101 = vmatpush1.msra.mxu0 0.0
      %2102 = vmatprep.subr.mxu0 0.0
      %2103 = vmatpush1.msra.mxu0 0.0
      %2104 = vmatprep.subr.mxu0 0.0
      %2105 = vmatpush1.msra.mxu0 0.0
      %2106 = vmatprep.subr.mxu0 0.0
      %2107 = vmatpush1.msra.mxu0 0.0
      %2108 = vmatprep.subr.mxu0 0.0
      %2109 = vmatpush1.msra.mxu0 0.0
      %2110 = vmatprep.subr.mxu0 0.0
      %2111 = vmatpush1.msra.mxu0 0.0
      %2112 = vmatprep.subr.mxu0 0.0
      %2113 = vmatpush1.msra.mxu0 0.0
      %2114 = vmatprep.subr.mxu0 0.0
      %2115 = vmatpush1.msra.mxu0 0.0
      %2116 = vmatprep.subr.mxu0 0.0
      %2117 = vmatpush1.msra.mxu0 0.0
      %2118 = vmatprep.subr.mxu0 0.0
      %2119 = vmatpush1.msra.mxu0 0.0
      %2120 = vmatprep.subr.mxu0 0.0
      %2121 = vmatpush1.msra.mxu0 0.0
      %2122 = vmatprep.subr.mxu0 0.0
      %2123 = vmatpush1.msra.mxu0 0.0
      %2124 = vmatprep.subr.mxu0 0.0
      %2125 = vmatpush1.msra.mxu0 0.0
      %2126 = vmatprep.subr.mxu0 0.0
      %2127 = vmatpush1.msra.mxu0 0.0
      %2128 = vmatprep.subr.mxu0 0.0
      %2129 = vmatpush1.msra.mxu0 0.0
      %2130 = vmatprep.subr.mxu0 0.0
      %2131 = vmatpush1.msra.mxu0 0.0
      %2132 = vmatprep.subr.mxu0 0.0
      %2133 = vmatpush1.msra.mxu0 0.0
      %2134 = vmatprep.subr.mxu0 0.0
      %2135 = vmatpush1.msra.mxu0 0.0
      %2136 = vmatprep.subr.mxu0 0.0
      %2137 = vmatpush1.msra.mxu0 0.0
      %2138 = vmatprep.subr.mxu0 0.0
      %2139 = vmatpush1.msra.mxu0 0.0
      %2140 = vmatprep.subr.mxu0 0.0
      %2141 = vmatpush1.msra.mxu0 0.0
      %2142 = vmatprep.subr.mxu0 0.0
      %2143 = vmatpush1.msra.mxu0 0.0
      %2144 = vmatprep.subr.mxu0 0.0
      %2145 = vmatpush1.msra.mxu0 0.0
      %2146 = vmatprep.subr.mxu0 0.0
      %2147 = vmatpush1.msra.mxu0 0.0
      %2148 = vmatprep.subr.mxu0 0.0
      %2149 = vmatpush1.msra.mxu0 0.0
      %2150 = vmatprep.subr.mxu0 0.0
      %2151 = vmatpush1.msra.mxu0 0.0
      %2152 = vmatprep.subr.mxu0 0.0
      %2153 = vmatpush1.msra.mxu0 0.0
      %2154 = vmatprep.subr.mxu0 0.0
      %2155 = vmatpush1.msra.mxu0 0.0
      %2156 = vmatprep.subr.mxu0 0.0
      %2157 = vmatpush1.msra.mxu0 0.0
      %2158 = vmatprep.subr.mxu0 0.0
      %2159 = vmatpush1.msra.mxu0 0.0
      %2160 = vmatprep.mubr.f32.mxu0 0.0
      %2161 = vmatmul.mubr.f32.gmra.mrb[0].mxu0 %v2094
      %v2162 = vpop.f32.mrb[0].mxu0
      %v2163 = vadd.f32 0.0, %v2162
      %v2164 = vpop.f32.mrb[0].mxu0
      %2165 = vdwg.mxu0
      %s2166 = scalar_lea.vmem %s10, 16
      %v2167 = vld [vmem:[%s2166] sm:$0xff]
      %v2169 = vsel %vm1026, %v2163, 0
      %2171 = vmatprep.subr.mxu0 0.0
      %2172 = vmatpush1.msra.mxu0 %v2167
      %2173 = vmatprep.subr.mxu0 0.0
      %2174 = vmatpush1.msra.mxu0 0.0
      %2175 = vmatprep.subr.mxu0 0.0
      %2176 = vmatpush1.msra.mxu0 0.0
      %2177 = vmatprep.subr.mxu0 0.0
      %2178 = vmatpush1.msra.mxu0 0.0
      %2179 = vmatprep.subr.mxu0 0.0
      %2180 = vmatpush1.msra.mxu0 0.0
      %2181 = vmatprep.subr.mxu0 0.0
      %2182 = vmatpush1.msra.mxu0 0.0
      %2183 = vmatprep.subr.mxu0 0.0
      %2184 = vmatpush1.msra.mxu0 0.0
      %2185 = vmatprep.subr.mxu0 0.0
      %2186 = vmatpush1.msra.mxu0 0.0
      %2187 = vmatprep.subr.mxu0 0.0
      %2188 = vmatpush1.msra.mxu0 0.0
      %2189 = vmatprep.subr.mxu0 0.0
      %2190 = vmatpush1.msra.mxu0 0.0
      %2191 = vmatprep.subr.mxu0 0.0
      %2192 = vmatpush1.msra.mxu0 0.0
      %2193 = vmatprep.subr.mxu0 0.0
      %2194 = vmatpush1.msra.mxu0 0.0
      %2195 = vmatprep.subr.mxu0 0.0
      %2196 = vmatpush1.msra.mxu0 0.0
      %2197 = vmatprep.subr.mxu0 0.0
      %2198 = vmatpush1.msra.mxu0 0.0
      %2199 = vmatprep.subr.mxu0 0.0
      %2200 = vmatpush1.msra.mxu0 0.0
      %2201 = vmatprep.subr.mxu0 0.0
      %2202 = vmatpush1.msra.mxu0 0.0
      %2203 = vmatprep.subr.mxu0 0.0
      %2204 = vmatpush1.msra.mxu0 0.0
      %2205 = vmatprep.subr.mxu0 0.0
      %2206 = vmatpush1.msra.mxu0 0.0
      %2207 = vmatprep.subr.mxu0 0.0
      %2208 = vmatpush1.msra.mxu0 0.0
      %2209 = vmatprep.subr.mxu0 0.0
      %2210 = vmatpush1.msra.mxu0 0.0
      %2211 = vmatprep.subr.mxu0 0.0
      %2212 = vmatpush1.msra.mxu0 0.0
      %2213 = vmatprep.subr.mxu0 0.0
      %2214 = vmatpush1.msra.mxu0 0.0
      %2215 = vmatprep.subr.mxu0 0.0
      %2216 = vmatpush1.msra.mxu0 0.0
      %2217 = vmatprep.subr.mxu0 0.0
      %2218 = vmatpush1.msra.mxu0 0.0
      %2219 = vmatprep.subr.mxu0 0.0
      %2220 = vmatpush1.msra.mxu0 0.0
      %2221 = vmatprep.subr.mxu0 0.0
      %2222 = vmatpush1.msra.mxu0 0.0
      %2223 = vmatprep.subr.mxu0 0.0
      %2224 = vmatpush1.msra.mxu0 0.0
      %2225 = vmatprep.subr.mxu0 0.0
      %2226 = vmatpush1.msra.mxu0 0.0
      %2227 = vmatprep.subr.mxu0 0.0
      %2228 = vmatpush1.msra.mxu0 0.0
      %2229 = vmatprep.subr.mxu0 0.0
      %2230 = vmatpush1.msra.mxu0 0.0
      %2231 = vmatprep.subr.mxu0 0.0
      %2232 = vmatpush1.msra.mxu0 0.0
      %2233 = vmatprep.subr.mxu0 0.0
      %2234 = vmatpush1.msra.mxu0 0.0
      %2235 = vmatprep.mubr.f32.mxu0 0.0
      %2236 = vmatmul.mubr.f32.gmra.mrb[0].mxu0 %v2169
      %v2237 = vpop.f32.mrb[0].mxu0
      %v2238 = vadd.f32 0.0, %v2237
      %v2239 = vpop.f32.mrb[0].mxu0
      %2240 = vdwg.mxu0
      %v2241 = vadd.f32 %v1752, %v2238
      %s2242 = scalar_lea.vmem %s4, 96
      %v2243 = vld [vmem:[%s2242] sm:$0xff]
      %v2244 = vld [vmem:[%s2242 + $0x8] sm:$0xff]
      %v2245 = vld [vmem:[%s2242 + $0x10] sm:$0xff]
      %v2246 = vld [vmem:[%s2242 + $0x18] sm:$0xff]
      %s2247 = scalar_lea.vmem %s5, 3
      %v2248 = vld [vmem:[%s2247] sm:$0x1]
      %v2250 = vlaneseq
      %v2251 = vshrl.u32 %v2250, 7
      %v2252 = vsub.s32 0, %v2251
      %v2253 = vrot.slane %v2248, %v2252
      %2255 = vmatprep.subr.mxu0 0.0
      %2256 = vmatpush1.msra.mxu0 %v2243
      %2257 = vmatprep.subr.mxu0 0.0
      %2258 = vmatpush1.msra.mxu0 %v2244
      %2259 = vmatprep.subr.mxu0 0.0
      %2260 = vmatpush1.msra.mxu0 %v2245
      %2261 = vmatprep.subr.mxu0 0.0
      %2262 = vmatpush1.msra.mxu0 %v2246
      %2263 = vmatprep.subr.mxu0 0.0
      %2264 = vmatpush1.msra.mxu0 0.0
      %2265 = vmatprep.subr.mxu0 0.0
      %2266 = vmatpush1.msra.mxu0 0.0
      %2267 = vmatprep.subr.mxu0 0.0
      %2268 = vmatpush1.msra.mxu0 0.0
      %2269 = vmatprep.subr.mxu0 0.0
      %2270 = vmatpush1.msra.mxu0 0.0
      %2271 = vmatprep.subr.mxu0 0.0
      %2272 = vmatpush1.msra.mxu0 0.0
      %2273 = vmatprep.subr.mxu0 0.0
      %2274 = vmatpush1.msra.mxu0 0.0
      %2275 = vmatprep.subr.mxu0 0.0
      %2276 = vmatpush1.msra.mxu0 0.0
      %2277 = vmatprep.subr.mxu0 0.0
      %2278 = vmatpush1.msra.mxu0 0.0
      %2279 = vmatprep.subr.mxu0 0.0
      %2280 = vmatpush1.msra.mxu0 0.0
      %2281 = vmatprep.subr.mxu0 0.0
      %2282 = vmatpush1.msra.mxu0 0.0
      %2283 = vmatprep.subr.mxu0 0.0
      %2284 = vmatpush1.msra.mxu0 0.0
      %2285 = vmatprep.subr.mxu0 0.0
      %2286 = vmatpush1.msra.mxu0 0.0
      %2287 = vmatprep.subr.mxu0 0.0
      %2288 = vmatpush1.msra.mxu0 0.0
      %2289 = vmatprep.subr.mxu0 0.0
      %2290 = vmatpush1.msra.mxu0 0.0
      %2291 = vmatprep.subr.mxu0 0.0
      %2292 = vmatpush1.msra.mxu0 0.0
      %2293 = vmatprep.subr.mxu0 0.0
      %2294 = vmatpush1.msra.mxu0 0.0
      %2295 = vmatprep.subr.mxu0 0.0
      %2296 = vmatpush1.msra.mxu0 0.0
      %2297 = vmatprep.subr.mxu0 0.0
      %2298 = vmatpush1.msra.mxu0 0.0
      %2299 = vmatprep.subr.mxu0 0.0
      %2300 = vmatpush1.msra.mxu0 0.0
      %2301 = vmatprep.subr.mxu0 0.0
      %2302 = vmatpush1.msra.mxu0 0.0
      %2303 = vmatprep.subr.mxu0 0.0
      %2304 = vmatpush1.msra.mxu0 0.0
      %2305 = vmatprep.subr.mxu0 0.0
      %2306 = vmatpush1.msra.mxu0 0.0
      %2307 = vmatprep.subr.mxu0 0.0
      %2308 = vmatpush1.msra.mxu0 0.0
      %2309 = vmatprep.subr.mxu0 0.0
      %2310 = vmatpush1.msra.mxu0 0.0
      %2311 = vmatprep.subr.mxu0 0.0
      %2312 = vmatpush1.msra.mxu0 0.0
      %2313 = vmatprep.subr.mxu0 0.0
      %2314 = vmatpush1.msra.mxu0 0.0
      %2315 = vmatprep.subr.mxu0 0.0
      %2316 = vmatpush1.msra.mxu0 0.0
      %2317 = vmatprep.subr.mxu0 0.0
      %2318 = vmatpush1.msra.mxu0 0.0
      %2319 = vmatprep.mubr.f32.mxu0 0.0
      %2320 = vmatmul.mubr.f32.gmra.mrb[0].mxu0 %v792
      %v2321 = vpop.f32.mrb[0].mxu0
      %v2322 = vadd.f32 %v2253, %v2321
      %v2323 = vpop.f32.mrb[0].mxu0
      %2324 = vdwg.mxu0
      %s2325 = scalar_lea.vmem %s6, 96
      %v2326 = vld [vmem:[%s2325] sm:$0xff]
      %v2327 = vld [vmem:[%s2325 + $0x8] sm:$0xff]
      %v2328 = vld [vmem:[%s2325 + $0x10] sm:$0xff]
      %v2329 = vld [vmem:[%s2325 + $0x18] sm:$0xff]
      %s2330 = scalar_lea.vmem %s7, 3
      %v2331 = vld [vmem:[%s2330] sm:$0x1]
      %v2333 = vlaneseq
      %v2334 = vshrl.u32 %v2333, 7
      %v2335 = vsub.s32 0, %v2334
      %v2336 = vrot.slane %v2331, %v2335
      %2338 = vmatprep.subr.mxu0 0.0
      %2339 = vmatpush1.msra.mxu0 %v2326
      %2340 = vmatprep.subr.mxu0 0.0
      %2341 = vmatpush1.msra.mxu0 %v2327
      %2342 = vmatprep.subr.mxu0 0.0
      %2343 = vmatpush1.msra.mxu0 %v2328
      %2344 = vmatprep.subr.mxu0 0.0
      %2345 = vmatpush1.msra.mxu0 %v2329
      %2346 = vmatprep.subr.mxu0 0.0
      %2347 = vmatpush1.msra.mxu0 0.0
      %2348 = vmatprep.subr.mxu0 0.0
      %2349 = vmatpush1.msra.mxu0 0.0
      %2350 = vmatprep.subr.mxu0 0.0
      %2351 = vmatpush1.msra.mxu0 0.0
      %2352 = vmatprep.subr.mxu0 0.0
      %2353 = vmatpush1.msra.mxu0 0.0
      %2354 = vmatprep.subr.mxu0 0.0
      %2355 = vmatpush1.msra.mxu0 0.0
      %2356 = vmatprep.subr.mxu0 0.0
      %2357 = vmatpush1.msra.mxu0 0.0
      %2358 = vmatprep.subr.mxu0 0.0
      %2359 = vmatpush1.msra.mxu0 0.0
      %2360 = vmatprep.subr.mxu0 0.0
      %2361 = vmatpush1.msra.mxu0 0.0
      %2362 = vmatprep.subr.mxu0 0.0
      %2363 = vmatpush1.msra.mxu0 0.0
      %2364 = vmatprep.subr.mxu0 0.0
      %2365 = vmatpush1.msra.mxu0 0.0
      %2366 = vmatprep.subr.mxu0 0.0
      %2367 = vmatpush1.msra.mxu0 0.0
      %2368 = vmatprep.subr.mxu0 0.0
      %2369 = vmatpush1.msra.mxu0 0.0
      %2370 = vmatprep.subr.mxu0 0.0
      %2371 = vmatpush1.msra.mxu0 0.0
      %2372 = vmatprep.subr.mxu0 0.0
      %2373 = vmatpush1.msra.mxu0 0.0
      %2374 = vmatprep.subr.mxu0 0.0
      %2375 = vmatpush1.msra.mxu0 0.0
      %2376 = vmatprep.subr.mxu0 0.0
      %2377 = vmatpush1.msra.mxu0 0.0
      %2378 = vmatprep.subr.mxu0 0.0
      %2379 = vmatpush1.msra.mxu0 0.0
      %2380 = vmatprep.subr.mxu0 0.0
      %2381 = vmatpush1.msra.mxu0 0.0
      %2382 = vmatprep.subr.mxu0 0.0
      %2383 = vmatpush1.msra.mxu0 0.0
      %2384 = vmatprep.subr.mxu0 0.0
      %2385 = vmatpush1.msra.mxu0 0.0
      %2386 = vmatprep.subr.mxu0 0.0
      %2387 = vmatpush1.msra.mxu0 0.0
      %2388 = vmatprep.subr.mxu0 0.0
      %2389 = vmatpush1.msra.mxu0 0.0
      %2390 = vmatprep.subr.mxu0 0.0
      %2391 = vmatpush1.msra.mxu0 0.0
      %2392 = vmatprep.subr.mxu0 0.0
      %2393 = vmatpush1.msra.mxu0 0.0
      %2394 = vmatprep.subr.mxu0 0.0
      %2395 = vmatpush1.msra.mxu0 0.0
      %2396 = vmatprep.subr.mxu0 0.0
      %2397 = vmatpush1.msra.mxu0 0.0
      %2398 = vmatprep.subr.mxu0 0.0
      %2399 = vmatpush1.msra.mxu0 0.0
      %2400 = vmatprep.subr.mxu0 0.0
      %2401 = vmatpush1.msra.mxu0 0.0
      %2402 = vmatprep.mubr.f32.mxu0 0.0
      %2403 = vmatmul.mubr.f32.gmra.mrb[0].mxu0 %v792
      %v2404 = vpop.f32.mrb[0].mxu0
      %v2405 = vadd.f32 %v2336, %v2404
      %v2406 = vpop.f32.mrb[0].mxu0
      %2407 = vdwg.mxu0
      %s2408 = scalar_lea.vmem %s8, 96
      %v2409 = vld [vmem:[%s2408] sm:$0xff]
      %v2410 = vld [vmem:[%s2408 + $0x8] sm:$0xff]
      %v2411 = vld [vmem:[%s2408 + $0x10] sm:$0xff]
      %v2412 = vld [vmem:[%s2408 + $0x18] sm:$0xff]
      %s2413 = scalar_lea.vmem %s9, 3
      %v2414 = vld [vmem:[%s2413] sm:$0x1]
      %v2416 = vlaneseq
      %v2417 = vshrl.u32 %v2416, 7
      %v2418 = vsub.s32 0, %v2417
      %v2419 = vrot.slane %v2414, %v2418
      %2421 = vmatprep.subr.mxu0 0.0
      %2422 = vmatpush1.msra.mxu0 %v2409
      %2423 = vmatprep.subr.mxu0 0.0
      %2424 = vmatpush1.msra.mxu0 %v2410
      %2425 = vmatprep.subr.mxu0 0.0
      %2426 = vmatpush1.msra.mxu0 %v2411
      %2427 = vmatprep.subr.mxu0 0.0
      %2428 = vmatpush1.msra.mxu0 %v2412
      %2429 = vmatprep.subr.mxu0 0.0
      %2430 = vmatpush1.msra.mxu0 0.0
      %2431 = vmatprep.subr.mxu0 0.0
      %2432 = vmatpush1.msra.mxu0 0.0
      %2433 = vmatprep.subr.mxu0 0.0
      %2434 = vmatpush1.msra.mxu0 0.0
      %2435 = vmatprep.subr.mxu0 0.0
      %2436 = vmatpush1.msra.mxu0 0.0
      %2437 = vmatprep.subr.mxu0 0.0
      %2438 = vmatpush1.msra.mxu0 0.0
      %2439 = vmatprep.subr.mxu0 0.0
      %2440 = vmatpush1.msra.mxu0 0.0
      %2441 = vmatprep.subr.mxu0 0.0
      %2442 = vmatpush1.msra.mxu0 0.0
      %2443 = vmatprep.subr.mxu0 0.0
      %2444 = vmatpush1.msra.mxu0 0.0
      %2445 = vmatprep.subr.mxu0 0.0
      %2446 = vmatpush1.msra.mxu0 0.0
      %2447 = vmatprep.subr.mxu0 0.0
      %2448 = vmatpush1.msra.mxu0 0.0
      %2449 = vmatprep.subr.mxu0 0.0
      %2450 = vmatpush1.msra.mxu0 0.0
      %2451 = vmatprep.subr.mxu0 0.0
      %2452 = vmatpush1.msra.mxu0 0.0
      %2453 = vmatprep.subr.mxu0 0.0
      %2454 = vmatpush1.msra.mxu0 0.0
      %2455 = vmatprep.subr.mxu0 0.0
      %2456 = vmatpush1.msra.mxu0 0.0
      %2457 = vmatprep.subr.mxu0 0.0
      %2458 = vmatpush1.msra.mxu0 0.0
      %2459 = vmatprep.subr.mxu0 0.0
      %2460 = vmatpush1.msra.mxu0 0.0
      %2461 = vmatprep.subr.mxu0 0.0
      %2462 = vmatpush1.msra.mxu0 0.0
      %2463 = vmatprep.subr.mxu0 0.0
      %2464 = vmatpush1.msra.mxu0 0.0
      %2465 = vmatprep.subr.mxu0 0.0
      %2466 = vmatpush1.msra.mxu0 0.0
      %2467 = vmatprep.subr.mxu0 0.0
      %2468 = vmatpush1.msra.mxu0 0.0
      %2469 = vmatprep.subr.mxu0 0.0
      %2470 = vmatpush1.msra.mxu0 0.0
      %2471 = vmatprep.subr.mxu0 0.0
      %2472 = vmatpush1.msra.mxu0 0.0
      %2473 = vmatprep.subr.mxu0 0.0
      %2474 = vmatpush1.msra.mxu0 0.0
      %2475 = vmatprep.subr.mxu0 0.0
      %2476 = vmatpush1.msra.mxu0 0.0
      %2477 = vmatprep.subr.mxu0 0.0
      %2478 = vmatpush1.msra.mxu0 0.0
      %2479 = vmatprep.subr.mxu0 0.0
      %2480 = vmatpush1.msra.mxu0 0.0
      %2481 = vmatprep.subr.mxu0 0.0
      %2482 = vmatpush1.msra.mxu0 0.0
      %2483 = vmatprep.subr.mxu0 0.0
      %2484 = vmatpush1.msra.mxu0 0.0
      %2485 = vmatprep.mubr.f32.mxu0 0.0
      %2486 = vmatmul.mubr.f32.gmra.mrb[0].mxu0 %v792
      %v2487 = vpop.f32.mrb[0].mxu0
      %v2488 = vadd.f32 %v2419, %v2487
      %v2489 = vpop.f32.mrb[0].mxu0
      %2490 = vdwg.mxu0
      %v2492 = vsel %vm1026, %v2322, 0
      %v2495 = vsel %vm1026, %v2405, 0
      %2497 = vmatprep.subr.mxu0 0.0
      %2498 = vmatpush1.xpose.msra.mxu0 %v2495
      %2499 = vmatprep.subr.mxu0 0.0
      %2500 = vmatpush1.xpose.msra.mxu0 0.0
      %2501 = vmatprep.subr.mxu0 0.0
      %2502 = vmatpush1.xpose.msra.mxu0 0.0
      %2503 = vmatprep.subr.mxu0 0.0
      %2504 = vmatpush1.xpose.msra.mxu0 0.0
      %2505 = vmatprep.subr.mxu0 0.0
      %2506 = vmatpush1.xpose.msra.mxu0 0.0
      %2507 = vmatprep.subr.mxu0 0.0
      %2508 = vmatpush1.xpose.msra.mxu0 0.0
      %2509 = vmatprep.subr.mxu0 0.0
      %2510 = vmatpush1.xpose.msra.mxu0 0.0
      %2511 = vmatprep.subr.mxu0 0.0
      %2512 = vmatpush1.xpose.msra.mxu0 0.0
      %2513 = vmatprep.subr.mxu0 0.0
      %2514 = vmatpush1.xpose.msra.mxu0 0.0
      %2515 = vmatprep.subr.mxu0 0.0
      %2516 = vmatpush1.xpose.msra.mxu0 0.0
      %2517 = vmatprep.subr.mxu0 0.0
      %2518 = vmatpush1.xpose.msra.mxu0 0.0
      %2519 = vmatprep.subr.mxu0 0.0
      %2520 = vmatpush1.xpose.msra.mxu0 0.0
      %2521 = vmatprep.subr.mxu0 0.0
      %2522 = vmatpush1.xpose.msra.mxu0 0.0
      %2523 = vmatprep.subr.mxu0 0.0
      %2524 = vmatpush1.xpose.msra.mxu0 0.0
      %2525 = vmatprep.subr.mxu0 0.0
      %2526 = vmatpush1.xpose.msra.mxu0 0.0
      %2527 = vmatprep.subr.mxu0 0.0
      %2528 = vmatpush1.xpose.msra.mxu0 0.0
      %2529 = vmatprep.subr.mxu0 0.0
      %2530 = vmatpush1.xpose.msra.mxu0 0.0
      %2531 = vmatprep.subr.mxu0 0.0
      %2532 = vmatpush1.xpose.msra.mxu0 0.0
      %2533 = vmatprep.subr.mxu0 0.0
      %2534 = vmatpush1.xpose.msra.mxu0 0.0
      %2535 = vmatprep.subr.mxu0 0.0
      %2536 = vmatpush1.xpose.msra.mxu0 0.0
      %2537 = vmatprep.subr.mxu0 0.0
      %2538 = vmatpush1.xpose.msra.mxu0 0.0
      %2539 = vmatprep.subr.mxu0 0.0
      %2540 = vmatpush1.xpose.msra.mxu0 0.0
      %2541 = vmatprep.subr.mxu0 0.0
      %2542 = vmatpush1.xpose.msra.mxu0 0.0
      %2543 = vmatprep.subr.mxu0 0.0
      %2544 = vmatpush1.xpose.msra.mxu0 0.0
      %2545 = vmatprep.subr.mxu0 0.0
      %2546 = vmatpush1.xpose.msra.mxu0 0.0
      %2547 = vmatprep.subr.mxu0 0.0
      %2548 = vmatpush1.xpose.msra.mxu0 0.0
      %2549 = vmatprep.subr.mxu0 0.0
      %2550 = vmatpush1.xpose.msra.mxu0 0.0
      %2551 = vmatprep.subr.mxu0 0.0
      %2552 = vmatpush1.xpose.msra.mxu0 0.0
      %2553 = vmatprep.subr.mxu0 0.0
      %2554 = vmatpush1.xpose.msra.mxu0 0.0
      %2555 = vmatprep.subr.mxu0 0.0
      %2556 = vmatpush1.xpose.msra.mxu0 0.0
      %2557 = vmatprep.subr.mxu0 0.0
      %2558 = vmatpush1.xpose.msra.mxu0 0.0
      %2559 = vmatprep.subr.mxu0 0.0
      %2560 = vmatpush1.xpose.msra.mxu0 0.0
      %2561 = vmatprep.mubr.f32.mxu0 0.0
      %2562 = vmatmul.mubr.f32.gmra.mrb[0].mxu0 %v2492
      %v2563 = vpop.f32.mrb[0].mxu0
      %v2564 = vadd.f32 0.0, %v2563
      %v2565 = vpop.f32.mrb[0].mxu0
      %2566 = vdwg.mxu0
      %v2567 = vmul.f32 %v2564, 0.35355338
      %v2568 = vadd.f32 %v2567, %v1108
      %v2569 = vsel %vm1026, %v2568, -inf
      %2570 = vmax.xlane.f32.xlu0 %v2569
      %v2571 = vpop.xlane.xlu0 %2570
      %v2572 = vsub.f32 %v2568, %v2571
      %v2573 = vmul.f32 %v2572, 1.442695
      %v2574 = vpow.pop %v2573
      %v2575 = vsel %vm1026, %v2574, 0.0
      %2576 = vadd.xlane.f32.xlu0 %v2575
      %v2577 = vpop.xlane.xlu0 %2576
      %v2578 = vrcp.pop %v2577
      %v2579 = vmul.f32 %v2574, %v2578
      %v2581 = vsel %vm1026, %v2579, 0
      %2583 = vmatprep.subr.mxu0 0.0
      %2584 = vmatpush1.msra.mxu0 %v2488
      %2585 = vmatprep.subr.mxu0 0.0
      %2586 = vmatpush1.msra.mxu0 0.0
      %2587 = vmatprep.subr.mxu0 0.0
      %2588 = vmatpush1.msra.mxu0 0.0
      %2589 = vmatprep.subr.mxu0 0.0
      %2590 = vmatpush1.msra.mxu0 0.0
      %2591 = vmatprep.subr.mxu0 0.0
      %2592 = vmatpush1.msra.mxu0 0.0
      %2593 = vmatprep.subr.mxu0 0.0
      %2594 = vmatpush1.msra.mxu0 0.0
      %2595 = vmatprep.subr.mxu0 0.0
      %2596 = vmatpush1.msra.mxu0 0.0
      %2597 = vmatprep.subr.mxu0 0.0
      %2598 = vmatpush1.msra.mxu0 0.0
      %2599 = vmatprep.subr.mxu0 0.0
      %2600 = vmatpush1.msra.mxu0 0.0
      %2601 = vmatprep.subr.mxu0 0.0
      %2602 = vmatpush1.msra.mxu0 0.0
      %2603 = vmatprep.subr.mxu0 0.0
      %2604 = vmatpush1.msra.mxu0 0.0
      %2605 = vmatprep.subr.mxu0 0.0
      %2606 = vmatpush1.msra.mxu0 0.0
      %2607 = vmatprep.subr.mxu0 0.0
      %2608 = vmatpush1.msra.mxu0 0.0
      %2609 = vmatprep.subr.mxu0 0.0
      %2610 = vmatpush1.msra.mxu0 0.0
      %2611 = vmatprep.subr.mxu0 0.0
      %2612 = vmatpush1.msra.mxu0 0.0
      %2613 = vmatprep.subr.mxu0 0.0
      %2614 = vmatpush1.msra.mxu0 0.0
      %2615 = vmatprep.subr.mxu0 0.0
      %2616 = vmatpush1.msra.mxu0 0.0
      %2617 = vmatprep.subr.mxu0 0.0
      %2618 = vmatpush1.msra.mxu0 0.0
      %2619 = vmatprep.subr.mxu0 0.0
      %2620 = vmatpush1.msra.mxu0 0.0
      %2621 = vmatprep.subr.mxu0 0.0
      %2622 = vmatpush1.msra.mxu0 0.0
      %2623 = vmatprep.subr.mxu0 0.0
      %2624 = vmatpush1.msra.mxu0 0.0
      %2625 = vmatprep.subr.mxu0 0.0
      %2626 = vmatpush1.msra.mxu0 0.0
      %2627 = vmatprep.subr.mxu0 0.0
      %2628 = vmatpush1.msra.mxu0 0.0
      %2629 = vmatprep.subr.mxu0 0.0
      %2630 = vmatpush1.msra.mxu0 0.0
      %2631 = vmatprep.subr.mxu0 0.0
      %2632 = vmatpush1.msra.mxu0 0.0
      %2633 = vmatprep.subr.mxu0 0.0
      %2634 = vmatpush1.msra.mxu0 0.0
      %2635 = vmatprep.subr.mxu0 0.0
      %2636 = vmatpush1.msra.mxu0 0.0
      %2637 = vmatprep.subr.mxu0 0.0
      %2638 = vmatpush1.msra.mxu0 0.0
      %2639 = vmatprep.subr.mxu0 0.0
      %2640 = vmatpush1.msra.mxu0 0.0
      %2641 = vmatprep.subr.mxu0 0.0
      %2642 = vmatpush1.msra.mxu0 0.0
      %2643 = vmatprep.subr.mxu0 0.0
      %2644 = vmatpush1.msra.mxu0 0.0
      %2645 = vmatprep.subr.mxu0 0.0
      %2646 = vmatpush1.msra.mxu0 0.0
      %2647 = vmatprep.mubr.f32.mxu0 0.0
      %2648 = vmatmul.mubr.f32.gmra.mrb[0].mxu0 %v2581
      %v2649 = vpop.f32.mrb[0].mxu0
      %v2650 = vadd.f32 0.0, %v2649
      %v2651 = vpop.f32.mrb[0].mxu0
      %2652 = vdwg.mxu0
      %s2653 = scalar_lea.vmem %s10, 24
      %v2654 = vld [vmem:[%s2653] sm:$0xff]
      %v2656 = vsel %vm1026, %v2650, 0
      %2658 = vmatprep.subr.mxu0 0.0
      %2659 = vmatpush1.msra.mxu0 %v2654
      %2660 = vmatprep.subr.mxu0 0.0
      %2661 = vmatpush1.msra.mxu0 0.0
      %2662 = vmatprep.subr.mxu0 0.0
      %2663 = vmatpush1.msra.mxu0 0.0
      %2664 = vmatprep.subr.mxu0 0.0
      %2665 = vmatpush1.msra.mxu0 0.0
      %2666 = vmatprep.subr.mxu0 0.0
      %2667 = vmatpush1.msra.mxu0 0.0
      %2668 = vmatprep.subr.mxu0 0.0
      %2669 = vmatpush1.msra.mxu0 0.0
      %2670 = vmatprep.subr.mxu0 0.0
      %2671 = vmatpush1.msra.mxu0 0.0
      %2672 = vmatprep.subr.mxu0 0.0
      %2673 = vmatpush1.msra.mxu0 0.0
      %2674 = vmatprep.subr.mxu0 0.0
      %2675 = vmatpush1.msra.mxu0 0.0
      %2676 = vmatprep.subr.mxu0 0.0
      %2677 = vmatpush1.msra.mxu0 0.0
      %2678 = vmatprep.subr.mxu0 0.0
      %2679 = vmatpush1.msra.mxu0 0.0
      %2680 = vmatprep.subr.mxu0 0.0
      %2681 = vmatpush1.msra.mxu0 0.0
      %2682 = vmatprep.subr.mxu0 0.0
      %2683 = vmatpush1.msra.mxu0 0.0
      %2684 = vmatprep.subr.mxu0 0.0
      %2685 = vmatpush1.msra.mxu0 0.0
      %2686 = vmatprep.subr.mxu0 0.0
      %2687 = vmatpush1.msra.mxu0 0.0
      %2688 = vmatprep.subr.mxu0 0.0
      %2689 = vmatpush1.msra.mxu0 0.0
      %2690 = vmatprep.subr.mxu0 0.0
      %2691 = vmatpush1.msra.mxu0 0.0
      %2692 = vmatprep.subr.mxu0 0.0
      %2693 = vmatpush1.msra.mxu0 0.0
      %2694 = vmatprep.subr.mxu0 0.0
      %2695 = vmatpush1.msra.mxu0 0.0
      %2696 = vmatprep.subr.mxu0 0.0
      %2697 = vmatpush1.msra.mxu0 0.0
      %2698 = vmatprep.subr.mxu0 0.0
      %2699 = vmatpush1.msra.mxu0 0.0
      %2700 = vmatprep.subr.mxu0 0.0
      %2701 = vmatpush1.msra.mxu0 0.0
      %2702 = vmatprep.subr.mxu0 0.0
      %2703 = vmatpush1.msra.mxu0 0.0
      %2704 = vmatprep.subr.mxu0 0.0
      %2705 = vmatpush1.msra.mxu0 0.0
      %2706 = vmatprep.subr.mxu0 0.0
      %2707 = vmatpush1.msra.mxu0 0.0
      %2708 = vmatprep.subr.mxu0 0.0
      %2709 = vmatpush1.msra.mxu0 0.0
      %2710 = vmatprep.subr.mxu0 0.0
      %2711 = vmatpush1.msra.mxu0 0.0
      %2712 = vmatprep.subr.mxu0 0.0
      %2713 = vmatpush1.msra.mxu0 0.0
      %2714 = vmatprep.subr.mxu0 0.0
      %2715 = vmatpush1.msra.mxu0 0.0
      %2716 = vmatprep.subr.mxu0 0.0
      %2717 = vmatpush1.msra.mxu0 0.0
      %2718 = vmatprep.subr.mxu0 0.0
      %2719 = vmatpush1.msra.mxu0 0.0
      %2720 = vmatprep.subr.mxu0 0.0
      %2721 = vmatpush1.msra.mxu0 0.0
      %2722 = vmatprep.mubr.f32.mxu0 0.0
      %2723 = vmatmul.mubr.f32.gmra.mrb[0].mxu0 %v2656
      %v2724 = vpop.f32.mrb[0].mxu0
      %v2725 = vadd.f32 0.0, %v2724
      %v2726 = vpop.f32.mrb[0].mxu0
      %2727 = vdwg.mxu0
      %v2728 = vadd.f32 %v2241, %v2725
      %v2729 = vld [vmem:[%s11] sm:$0x1]
      %v2731 = vlaneseq
      %v2732 = vshrl.u32 %v2731, 7
      %v2733 = vsub.s32 0, %v2732
      %v2734 = vrot.slane %v2729, %v2733
      %v2736 = vadd.f32 %v2728, %v2734
      %v2737 = vadd.f32 %v779, %v2736
      %v2738 = vld [vmem:[%s12] sm:$0x1]
      %v2739 = vld [vmem:[%s13] sm:$0x1]
      %v2740 = vsel %vm751, %v2737, 0.0
      %2741 = vadd.xlane.f32.xlu0 %v2740
      %v2742 = vpop.xlane.xlu0 %2741
      %v2743 = vmul.f32 %v2742, %v755
      %v2744 = vsub.f32 %v2737, %v2743
      %v2745 = vmul.f32 %v2744, %v2744
      %v2746 = vsel %vm751, %v2745, 0.0
      %2747 = vadd.xlane.f32.xlu0 %v2746
      %v2748 = vpop.xlane.xlu0 %2747
      %v2749 = vmul.f32 %v2748, %v755
      %v2750 = vadd.f32 %v2749, 1e-12
      %v2751 = vrsqrt.pop %v2750
      %v2752 = vmul.f32 %v2744, %v2751
      %v2754 = vlaneseq
      %v2755 = vshrl.u32 %v2754, 7
      %v2756 = vsub.s32 0, %v2755
      %v2757 = vrot.slane %v2738, %v2756
      %v2759 = vmul.f32 %v2752, %v2757
      %v2761 = vlaneseq
      %v2762 = vshrl.u32 %v2761, 7
      %v2763 = vsub.s32 0, %v2762
      %v2764 = vrot.slane %v2739, %v2763
      %v2766 = vadd.f32 %v2759, %v2764
      %v2767 = vld [vmem:[%s14] sm:$0xff]
      %v2768 = vld [vmem:[%s14 + $0x8] sm:$0xff]
      %v2769 = vld [vmem:[%s14 + $0x10] sm:$0xff]
      %v2770 = vld [vmem:[%s14 + $0x18] sm:$0xff]
      %v2771 = vld [vmem:[%s15] sm:$0x1]
      %v2773 = vlaneseq
      %v2774 = vshrl.u32 %v2773, 7
      %v2775 = vsub.s32 0, %v2774
      %v2776 = vrot.slane %v2771, %v2775
      %v2779 = vsel %vm751, %v2766, 0
      %2781 = vmatprep.subr.mxu0 0.0
      %2782 = vmatpush1.msra.mxu0 %v2767
      %2783 = vmatprep.subr.mxu0 0.0
      %2784 = vmatpush1.msra.mxu0 %v2768
      %2785 = vmatprep.subr.mxu0 0.0
      %2786 = vmatpush1.msra.mxu0 %v2769
      %2787 = vmatprep.subr.mxu0 0.0
      %2788 = vmatpush1.msra.mxu0 %v2770
      %2789 = vmatprep.subr.mxu0 0.0
      %2790 = vmatpush1.msra.mxu0 0.0
      %2791 = vmatprep.subr.mxu0 0.0
      %2792 = vmatpush1.msra.mxu0 0.0
      %2793 = vmatprep.subr.mxu0 0.0
      %2794 = vmatpush1.msra.mxu0 0.0
      %2795 = vmatprep.subr.mxu0 0.0
      %2796 = vmatpush1.msra.mxu0 0.0
      %2797 = vmatprep.subr.mxu0 0.0
      %2798 = vmatpush1.msra.mxu0 0.0
      %2799 = vmatprep.subr.mxu0 0.0
      %2800 = vmatpush1.msra.mxu0 0.0
      %2801 = vmatprep.subr.mxu0 0.0
      %2802 = vmatpush1.msra.mxu0 0.0
      %2803 = vmatprep.subr.mxu0 0.0
      %2804 = vmatpush1.msra.mxu0 0.0
      %2805 = vmatprep.subr.mxu0 0.0
      %2806 = vmatpush1.msra.mxu0 0.0
      %2807 = vmatprep.subr.mxu0 0.0
      %2808 = vmatpush1.msra.mxu0 0.0
      %2809 = vmatprep.subr.mxu0 0.0
      %2810 = vmatpush1.msra.mxu0 0.0
      %2811 = vmatprep.subr.mxu0 0.0
      %2812 = vmatpush1.msra.mxu0 0.0
      %2813 = vmatprep.subr.mxu0 0.0
      %2814 = vmatpush1.msra.mxu0 0.0
      %2815 = vmatprep.subr.mxu0 0.0
      %2816 = vmatpush1.msra.mxu0 0.0
      %2817 = vmatprep.subr.mxu0 0.0
      %2818 = vmatpush1.msra.mxu0 0.0
      %2819 = vmatprep.subr.mxu0 0.0
      %2820 = vmatpush1.msra.mxu0 0.0
      %2821 = vmatprep.subr.mxu0 0.0
      %2822 = vmatpush1.msra.mxu0 0.0
      %2823 = vmatprep.subr.mxu0 0.0
      %2824 = vmatpush1.msra.mxu0 0.0
      %2825 = vmatprep.subr.mxu0 0.0
      %2826 = vmatpush1.msra.mxu0 0.0
      %2827 = vmatprep.subr.mxu0 0.0
      %2828 = vmatpush1.msra.mxu0 0.0
      %2829 = vmatprep.subr.mxu0 0.0
      %2830 = vmatpush1.msra.mxu0 0.0
      %2831 = vmatprep.subr.mxu0 0.0
      %2832 = vmatpush1.msra.mxu0 0.0
      %2833 = vmatprep.subr.mxu0 0.0
      %2834 = vmatpush1.msra.mxu0 0.0
      %2835 = vmatprep.subr.mxu0 0.0
      %2836 = vmatpush1.msra.mxu0 0.0
      %2837 = vmatprep.subr.mxu0 0.0
      %2838 = vmatpush1.msra.mxu0 0.0
      %2839 = vmatprep.subr.mxu0 0.0
      %2840 = vmatpush1.msra.mxu0 0.0
      %2841 = vmatprep.subr.mxu0 0.0
      %2842 = vmatpush1.msra.mxu0 0.0
      %2843 = vmatprep.subr.mxu0 0.0
      %2844 = vmatpush1.msra.mxu0 0.0
      %2845 = vmatprep.mubr.f32.mxu0 0.0
      %2846 = vmatmul.mubr.f32.gmra.mrb[0].mxu0 %v2779
      %v2847 = vpop.f32.mrb[0].mxu0
      %v2848 = vadd.f32 %v2776, %v2847
      %v2849 = vpop.f32.mrb[0].mxu0
      %2850 = vdwg.mxu0
      %vm2851 = vcmp.ge.f32.partialorder %v2848, 0.0
      %v2852 = vsel %vm2851, 1.0, -1.0
      %v2853 = vmul.f32 %v2848, %v2852
      %v2854 = vmul.f32 %v2853, 0.70710677
      %v2855 = vmul.f32 %v2854, 0.3275911
      %v2856 = vadd.f32 %v2855, 1.0
      %v2857 = vrcp.pop %v2856
      %v2858 = vmul.f32 1.0, %v2857
      %v2859 = vmul.f32 %v2858, 1.0614054
      %v2860 = vsub.f32 %v2859, 1.4531521
      %v2861 = vmul.f32 %v2860, %v2858
      %v2862 = vadd.f32 %v2861, 1.4214138
      %v2863 = vmul.f32 %v2862, %v2858
      %v2864 = vsub.f32 %v2863, 0.28449672
      %v2865 = vmul.f32 %v2864, %v2858
      %v2866 = vadd.f32 %v2865, 0.2548296
      %v2867 = vmul.f32 %v2866, %v2858
      %v2868 = vsub.f32 0.0, %v2854
      %v2869 = vmul.f32 %v2868, %v2854
      %v2870 = vmul.f32 %v2869, 1.442695
      %v2871 = vpow.pop %v2870
      %v2872 = vmul.f32 %v2867, %v2871
      %v2873 = vsub.f32 1.0, %v2872
      %v2874 = vmul.f32 %v2852, %v2873
      %v2875 = vmul.f32 %v2848, 0.5
      %v2876 = vadd.f32 %v2874, 1.0
      %v2877 = vmul.f32 %v2875, %v2876
      %v2878 = vld [vmem:[%s16] sm:$0xff]
      %v2879 = vld [vmem:[%s16 + $0x8] sm:$0xff]
      %v2880 = vld [vmem:[%s16 + $0x10] sm:$0xff]
      %v2881 = vld [vmem:[%s16 + $0x18] sm:$0xff]
      %v2882 = vld [vmem:[%s16 + $0x20] sm:$0xff]
      %v2883 = vld [vmem:[%s16 + $0x28] sm:$0xff]
      %v2884 = vld [vmem:[%s16 + $0x30] sm:$0xff]
      %v2885 = vld [vmem:[%s16 + $0x38] sm:$0xff]
      %v2886 = vld [vmem:[%s17] sm:$0x1]
      %v2888 = vlaneseq
      %v2889 = vshrl.u32 %v2888, 7
      %v2890 = vsub.s32 0, %v2889
      %v2891 = vrot.slane %v2886, %v2890
      %vm2893 = vcmask 523264
      %v2895 = vsel %vm2893, %v2877, 0
      %2897 = vmatprep.subr.mxu0 0.0
      %2898 = vmatpush1.msra.mxu0 %v2878
      %2899 = vmatprep.subr.mxu0 0.0
      %2900 = vmatpush1.msra.mxu0 %v2879
      %2901 = vmatprep.subr.mxu0 0.0
      %2902 = vmatpush1.msra.mxu0 %v2880
      %2903 = vmatprep.subr.mxu0 0.0
      %2904 = vmatpush1.msra.mxu0 %v2881
      %2905 = vmatprep.subr.mxu0 0.0
      %2906 = vmatpush1.msra.mxu0 %v2882
      %2907 = vmatprep.subr.mxu0 0.0
      %2908 = vmatpush1.msra.mxu0 %v2883
      %2909 = vmatprep.subr.mxu0 0.0
      %2910 = vmatpush1.msra.mxu0 %v2884
      %2911 = vmatprep.subr.mxu0 0.0
      %2912 = vmatpush1.msra.mxu0 %v2885
      %2913 = vmatprep.subr.mxu0 0.0
      %2914 = vmatpush1.msra.mxu0 0.0
      %2915 = vmatprep.subr.mxu0 0.0
      %2916 = vmatpush1.msra.mxu0 0.0
      %2917 = vmatprep.subr.mxu0 0.0
      %2918 = vmatpush1.msra.mxu0 0.0
      %2919 = vmatprep.subr.mxu0 0.0
      %2920 = vmatpush1.msra.mxu0 0.0
      %2921 = vmatprep.subr.mxu0 0.0
      %2922 = vmatpush1.msra.mxu0 0.0
      %2923 = vmatprep.subr.mxu0 0.0
      %2924 = vmatpush1.msra.mxu0 0.0
      %2925 = vmatprep.subr.mxu0 0.0
      %2926 = vmatpush1.msra.mxu0 0.0
      %2927 = vmatprep.subr.mxu0 0.0
      %2928 = vmatpush1.msra.mxu0 0.0
      %2929 = vmatprep.subr.mxu0 0.0
      %2930 = vmatpush1.msra.mxu0 0.0
      %2931 = vmatprep.subr.mxu0 0.0
      %2932 = vmatpush1.msra.mxu0 0.0
      %2933 = vmatprep.subr.mxu0 0.0
      %2934 = vmatpush1.msra.mxu0 0.0
      %2935 = vmatprep.subr.mxu0 0.0
      %2936 = vmatpush1.msra.mxu0 0.0
      %2937 = vmatprep.subr.mxu0 0.0
      %2938 = vmatpush1.msra.mxu0 0.0
      %2939 = vmatprep.subr.mxu0 0.0
      %2940 = vmatpush1.msra.mxu0 0.0
      %2941 = vmatprep.subr.mxu0 0.0
      %2942 = vmatpush1.msra.mxu0 0.0
      %2943 = vmatprep.subr.mxu0 0.0
      %2944 = vmatpush1.msra.mxu0 0.0
      %2945 = vmatprep.subr.mxu0 0.0
      %2946 = vmatpush1.msra.mxu0 0.0
      %2947 = vmatprep.subr.mxu0 0.0
      %2948 = vmatpush1.msra.mxu0 0.0
      %2949 = vmatprep.subr.mxu0 0.0
      %2950 = vmatpush1.msra.mxu0 0.0
      %2951 = vmatprep.subr.mxu0 0.0
      %2952 = vmatpush1.msra.mxu0 0.0
      %2953 = vmatprep.subr.mxu0 0.0
      %2954 = vmatpush1.msra.mxu0 0.0
      %2955 = vmatprep.subr.mxu0 0.0
      %2956 = vmatpush1.msra.mxu0 0.0
      %2957 = vmatprep.subr.mxu0 0.0
      %2958 = vmatpush1.msra.mxu0 0.0
      %2959 = vmatprep.subr.mxu0 0.0
      %2960 = vmatpush1.msra.mxu0 0.0
      %2961 = vmatprep.mubr.f32.mxu0 0.0
      %2962 = vmatmul.mubr.f32.gmra.mrb[0].mxu0 %v2895
      %v2963 = vpop.f32.mrb[0].mxu0
      %v2964 = vadd.f32 %v2891, %v2963
      %v2965 = vpop.f32.mrb[0].mxu0
      %2966 = vdwg.mxu0
      %v2967 = vadd.f32 %v2766, %v2964
      %v2968 = vld [vmem:[%s18] sm:$0x1]
      %v2969 = vld [vmem:[%s19] sm:$0x1]
      %v2970 = vsel %vm751, %v2967, 0.0
      %2971 = vadd.xlane.f32.xlu0 %v2970
      %v2972 = vpop.xlane.xlu0 %2971
      %v2973 = vmul.f32 %v2972, %v755
      %v2974 = vsub.f32 %v2967, %v2973
      %v2975 = vmul.f32 %v2974, %v2974
      %v2976 = vsel %vm751, %v2975, 0.0
      %2977 = vadd.xlane.f32.xlu0 %v2976
      %v2978 = vpop.xlane.xlu0 %2977
      %v2979 = vmul.f32 %v2978, %v755
      %v2980 = vadd.f32 %v2979, 1e-12
      %v2981 = vrsqrt.pop %v2980
      %v2982 = vmul.f32 %v2974, %v2981
      %v2984 = vlaneseq
      %v2985 = vshrl.u32 %v2984, 7
      %v2986 = vsub.s32 0, %v2985
      %v2987 = vrot.slane %v2968, %v2986
      %v2989 = vmul.f32 %v2982, %v2987
      %v2991 = vlaneseq
      %v2992 = vshrl.u32 %v2991, 7
      %v2993 = vsub.s32 0, %v2992
      %v2994 = vrot.slane %v2969, %v2993
      %v2996 = vadd.f32 %v2989, %v2994
      %s2997 = scalar_lea.vmem %s4, 128
      %v2998 = vld [vmem:[%s2997] sm:$0xff]
      %v2999 = vld [vmem:[%s2997 + $0x8] sm:$0xff]
      %v3000 = vld [vmem:[%s2997 + $0x10] sm:$0xff]
      %v3001 = vld [vmem:[%s2997 + $0x18] sm:$0xff]
      %s3002 = scalar_lea.vmem %s5, 4
      %v3003 = vld [vmem:[%s3002] sm:$0x1]
      %v3005 = vlaneseq
      %v3006 = vshrl.u32 %v3005, 7
      %v3007 = vsub.s32 0, %v3006
      %v3008 = vrot.slane %v3003, %v3007
      %v3011 = vsel %vm751, %v2996, 0
      %3013 = vmatprep.subr.mxu0 0.0
      %3014 = vmatpush1.msra.mxu0 %v2998
      %3015 = vmatprep.subr.mxu0 0.0
      %3016 = vmatpush1.msra.mxu0 %v2999
      %3017 = vmatprep.subr.mxu0 0.0
      %3018 = vmatpush1.msra.mxu0 %v3000
      %3019 = vmatprep.subr.mxu0 0.0
      %3020 = vmatpush1.msra.mxu0 %v3001
      %3021 = vmatprep.subr.mxu0 0.0
      %3022 = vmatpush1.msra.mxu0 0.0
      %3023 = vmatprep.subr.mxu0 0.0
      %3024 = vmatpush1.msra.mxu0 0.0
      %3025 = vmatprep.subr.mxu0 0.0
      %3026 = vmatpush1.msra.mxu0 0.0
      %3027 = vmatprep.subr.mxu0 0.0
      %3028 = vmatpush1.msra.mxu0 0.0
      %3029 = vmatprep.subr.mxu0 0.0
      %3030 = vmatpush1.msra.mxu0 0.0
      %3031 = vmatprep.subr.mxu0 0.0
      %3032 = vmatpush1.msra.mxu0 0.0
      %3033 = vmatprep.subr.mxu0 0.0
      %3034 = vmatpush1.msra.mxu0 0.0
      %3035 = vmatprep.subr.mxu0 0.0
      %3036 = vmatpush1.msra.mxu0 0.0
      %3037 = vmatprep.subr.mxu0 0.0
      %3038 = vmatpush1.msra.mxu0 0.0
      %3039 = vmatprep.subr.mxu0 0.0
      %3040 = vmatpush1.msra.mxu0 0.0
      %3041 = vmatprep.subr.mxu0 0.0
      %3042 = vmatpush1.msra.mxu0 0.0
      %3043 = vmatprep.subr.mxu0 0.0
      %3044 = vmatpush1.msra.mxu0 0.0
      %3045 = vmatprep.subr.mxu0 0.0
      %3046 = vmatpush1.msra.mxu0 0.0
      %3047 = vmatprep.subr.mxu0 0.0
      %3048 = vmatpush1.msra.mxu0 0.0
      %3049 = vmatprep.subr.mxu0 0.0
      %3050 = vmatpush1.msra.mxu0 0.0
      %3051 = vmatprep.subr.mxu0 0.0
      %3052 = vmatpush1.msra.mxu0 0.0
      %3053 = vmatprep.subr.mxu0 0.0
      %3054 = vmatpush1.msra.mxu0 0.0
      %3055 = vmatprep.subr.mxu0 0.0
      %3056 = vmatpush1.msra.mxu0 0.0
      %3057 = vmatprep.subr.mxu0 0.0
      %3058 = vmatpush1.msra.mxu0 0.0
      %3059 = vmatprep.subr.mxu0 0.0
      %3060 = vmatpush1.msra.mxu0 0.0
      %3061 = vmatprep.subr.mxu0 0.0
      %3062 = vmatpush1.msra.mxu0 0.0
      %3063 = vmatprep.subr.mxu0 0.0
      %3064 = vmatpush1.msra.mxu0 0.0
      %3065 = vmatprep.subr.mxu0 0.0
      %3066 = vmatpush1.msra.mxu0 0.0
      %3067 = vmatprep.subr.mxu0 0.0
      %3068 = vmatpush1.msra.mxu0 0.0
      %3069 = vmatprep.subr.mxu0 0.0
      %3070 = vmatpush1.msra.mxu0 0.0
      %3071 = vmatprep.subr.mxu0 0.0
      %3072 = vmatpush1.msra.mxu0 0.0
      %3073 = vmatprep.subr.mxu0 0.0
      %3074 = vmatpush1.msra.mxu0 0.0
      %3075 = vmatprep.subr.mxu0 0.0
      %3076 = vmatpush1.msra.mxu0 0.0
      %3077 = vmatprep.mubr.f32.mxu0 0.0
      %3078 = vmatmul.mubr.f32.gmra.mrb[0].mxu0 %v3011
      %v3079 = vpop.f32.mrb[0].mxu0
      %v3080 = vadd.f32 %v3008, %v3079
      %v3081 = vpop.f32.mrb[0].mxu0
      %3082 = vdwg.mxu0
      %s3083 = scalar_lea.vmem %s6, 128
      %v3084 = vld [vmem:[%s3083] sm:$0xff]
      %v3085 = vld [vmem:[%s3083 + $0x8] sm:$0xff]
      %v3086 = vld [vmem:[%s3083 + $0x10] sm:$0xff]
      %v3087 = vld [vmem:[%s3083 + $0x18] sm:$0xff]
      %s3088 = scalar_lea.vmem %s7, 4
      %v3089 = vld [vmem:[%s3088] sm:$0x1]
      %v3091 = vlaneseq
      %v3092 = vshrl.u32 %v3091, 7
      %v3093 = vsub.s32 0, %v3092
      %v3094 = vrot.slane %v3089, %v3093
      %3096 = vmatprep.subr.mxu0 0.0
      %3097 = vmatpush1.msra.mxu0 %v3084
      %3098 = vmatprep.subr.mxu0 0.0
      %3099 = vmatpush1.msra.mxu0 %v3085
      %3100 = vmatprep.subr.mxu0 0.0
      %3101 = vmatpush1.msra.mxu0 %v3086
      %3102 = vmatprep.subr.mxu0 0.0
      %3103 = vmatpush1.msra.mxu0 %v3087
      %3104 = vmatprep.subr.mxu0 0.0
      %3105 = vmatpush1.msra.mxu0 0.0
      %3106 = vmatprep.subr.mxu0 0.0
      %3107 = vmatpush1.msra.mxu0 0.0
      %3108 = vmatprep.subr.mxu0 0.0
      %3109 = vmatpush1.msra.mxu0 0.0
      %3110 = vmatprep.subr.mxu0 0.0
      %3111 = vmatpush1.msra.mxu0 0.0
      %3112 = vmatprep.subr.mxu0 0.0
      %3113 = vmatpush1.msra.mxu0 0.0
      %3114 = vmatprep.subr.mxu0 0.0
      %3115 = vmatpush1.msra.mxu0 0.0
      %3116 = vmatprep.subr.mxu0 0.0
      %3117 = vmatpush1.msra.mxu0 0.0
      %3118 = vmatprep.subr.mxu0 0.0
      %3119 = vmatpush1.msra.mxu0 0.0
      %3120 = vmatprep.subr.mxu0 0.0
      %3121 = vmatpush1.msra.mxu0 0.0
      %3122 = vmatprep.subr.mxu0 0.0
      %3123 = vmatpush1.msra.mxu0 0.0
      %3124 = vmatprep.subr.mxu0 0.0
      %3125 = vmatpush1.msra.mxu0 0.0
      %3126 = vmatprep.subr.mxu0 0.0
      %3127 = vmatpush1.msra.mxu0 0.0
      %3128 = vmatprep.subr.mxu0 0.0
      %3129 = vmatpush1.msra.mxu0 0.0
      %3130 = vmatprep.subr.mxu0 0.0
      %3131 = vmatpush1.msra.mxu0 0.0
      %3132 = vmatprep.subr.mxu0 0.0
      %3133 = vmatpush1.msra.mxu0 0.0
      %3134 = vmatprep.subr.mxu0 0.0
      %3135 = vmatpush1.msra.mxu0 0.0
      %3136 = vmatprep.subr.mxu0 0.0
      %3137 = vmatpush1.msra.mxu0 0.0
      %3138 = vmatprep.subr.mxu0 0.0
      %3139 = vmatpush1.msra.mxu0 0.0
      %3140 = vmatprep.subr.mxu0 0.0
      %3141 = vmatpush1.msra.mxu0 0.0
      %3142 = vmatprep.subr.mxu0 0.0
      %3143 = vmatpush1.msra.mxu0 0.0
      %3144 = vmatprep.subr.mxu0 0.0
      %3145 = vmatpush1.msra.mxu0 0.0
      %3146 = vmatprep.subr.mxu0 0.0
      %3147 = vmatpush1.msra.mxu0 0.0
      %3148 = vmatprep.subr.mxu0 0.0
      %3149 = vmatpush1.msra.mxu0 0.0
      %3150 = vmatprep.subr.mxu0 0.0
      %3151 = vmatpush1.msra.mxu0 0.0
      %3152 = vmatprep.subr.mxu0 0.0
      %3153 = vmatpush1.msra.mxu0 0.0
      %3154 = vmatprep.subr.mxu0 0.0
      %3155 = vmatpush1.msra.mxu0 0.0
      %3156 = vmatprep.subr.mxu0 0.0
      %3157 = vmatpush1.msra.mxu0 0.0
      %3158 = vmatprep.subr.mxu0 0.0
      %3159 = vmatpush1.msra.mxu0 0.0
      %3160 = vmatprep.mubr.f32.mxu0 0.0
      %3161 = vmatmul.mubr.f32.gmra.mrb[0].mxu0 %v3011
      %v3162 = vpop.f32.mrb[0].mxu0
      %v3163 = vadd.f32 %v3094, %v3162
      %v3164 = vpop.f32.mrb[0].mxu0
      %3165 = vdwg.mxu0
      %s3166 = scalar_lea.vmem %s8, 128
      %v3167 = vld [vmem:[%s3166] sm:$0xff]
      %v3168 = vld [vmem:[%s3166 + $0x8] sm:$0xff]
      %v3169 = vld [vmem:[%s3166 + $0x10] sm:$0xff]
      %v3170 = vld [vmem:[%s3166 + $0x18] sm:$0xff]
      %s3171 = scalar_lea.vmem %s9, 4
      %v3172 = vld [vmem:[%s3171] sm:$0x1]
      %v3174 = vlaneseq
      %v3175 = vshrl.u32 %v3174, 7
      %v3176 = vsub.s32 0, %v3175
      %v3177 = vrot.slane %v3172, %v3176
      %3179 = vmatprep.subr.mxu0 0.0
      %3180 = vmatpush1.msra.mxu0 %v3167
      %3181 = vmatprep.subr.mxu0 0.0
      %3182 = vmatpush1.msra.mxu0 %v3168
      %3183 = vmatprep.subr.mxu0 0.0
      %3184 = vmatpush1.msra.mxu0 %v3169
      %3185 = vmatprep.subr.mxu0 0.0
      %3186 = vmatpush1.msra.mxu0 %v3170
      %3187 = vmatprep.subr.mxu0 0.0
      %3188 = vmatpush1.msra.mxu0 0.0
      %3189 = vmatprep.subr.mxu0 0.0
      %3190 = vmatpush1.msra.mxu0 0.0
      %3191 = vmatprep.subr.mxu0 0.0
      %3192 = vmatpush1.msra.mxu0 0.0
      %3193 = vmatprep.subr.mxu0 0.0
      %3194 = vmatpush1.msra.mxu0 0.0
      %3195 = vmatprep.subr.mxu0 0.0
      %3196 = vmatpush1.msra.mxu0 0.0
      %3197 = vmatprep.subr.mxu0 0.0
      %3198 = vmatpush1.msra.mxu0 0.0
      %3199 = vmatprep.subr.mxu0 0.0
      %3200 = vmatpush1.msra.mxu0 0.0
      %3201 = vmatprep.subr.mxu0 0.0
      %3202 = vmatpush1.msra.mxu0 0.0
      %3203 = vmatprep.subr.mxu0 0.0
      %3204 = vmatpush1.msra.mxu0 0.0
      %3205 = vmatprep.subr.mxu0 0.0
      %3206 = vmatpush1.msra.mxu0 0.0
      %3207 = vmatprep.subr.mxu0 0.0
      %3208 = vmatpush1.msra.mxu0 0.0
      %3209 = vmatprep.subr.mxu0 0.0
      %3210 = vmatpush1.msra.mxu0 0.0
      %3211 = vmatprep.subr.mxu0 0.0
      %3212 = vmatpush1.msra.mxu0 0.0
      %3213 = vmatprep.subr.mxu0 0.0
      %3214 = vmatpush1.msra.mxu0 0.0
      %3215 = vmatprep.subr.mxu0 0.0
      %3216 = vmatpush1.msra.mxu0 0.0
      %3217 = vmatprep.subr.mxu0 0.0
      %3218 = vmatpush1.msra.mxu0 0.0
      %3219 = vmatprep.subr.mxu0 0.0
      %3220 = vmatpush1.msra.mxu0 0.0
      %3221 = vmatprep.subr.mxu0 0.0
      %3222 = vmatpush1.msra.mxu0 0.0
      %3223 = vmatprep.subr.mxu0 0.0
      %3224 = vmatpush1.msra.mxu0 0.0
      %3225 = vmatprep.subr.mxu0 0.0
      %3226 = vmatpush1.msra.mxu0 0.0
      %3227 = vmatprep.subr.mxu0 0.0
      %3228 = vmatpush1.msra.mxu0 0.0
      %3229 = vmatprep.subr.mxu0 0.0
      %3230 = vmatpush1.msra.mxu0 0.0
      %3231 = vmatprep.subr.mxu0 0.0
      %3232 = vmatpush1.msra.mxu0 0.0
      %3233 = vmatprep.subr.mxu0 0.0
      %3234 = vmatpush1.msra.mxu0 0.0
      %3235 = vmatprep.subr.mxu0 0.0
      %3236 = vmatpush1.msra.mxu0 0.0
      %3237 = vmatprep.subr.mxu0 0.0
      %3238 = vmatpush1.msra.mxu0 0.0
      %3239 = vmatprep.subr.mxu0 0.0
      %3240 = vmatpush1.msra.mxu0 0.0
      %3241 = vmatprep.subr.mxu0 0.0
      %3242 = vmatpush1.msra.mxu0 0.0
      %3243 = vmatprep.mubr.f32.mxu0 0.0
      %3244 = vmatmul.mubr.f32.gmra.mrb[0].mxu0 %v3011
      %v3245 = vpop.f32.mrb[0].mxu0
      %v3246 = vadd.f32 %v3177, %v3245
      %v3247 = vpop.f32.mrb[0].mxu0
      %3248 = vdwg.mxu0
      %v3250 = vsel %vm1026, %v3080, 0
      %v3253 = vsel %vm1026, %v3163, 0
      %3255 = vmatprep.subr.mxu0 0.0
      %3256 = vmatpush1.xpose.msra.mxu0 %v3253
      %3257 = vmatprep.subr.mxu0 0.0
      %3258 = vmatpush1.xpose.msra.mxu0 0.0
      %3259 = vmatprep.subr.mxu0 0.0
      %3260 = vmatpush1.xpose.msra.mxu0 0.0
      %3261 = vmatprep.subr.mxu0 0.0
      %3262 = vmatpush1.xpose.msra.mxu0 0.0
      %3263 = vmatprep.subr.mxu0 0.0
      %3264 = vmatpush1.xpose.msra.mxu0 0.0
      %3265 = vmatprep.subr.mxu0 0.0
      %3266 = vmatpush1.xpose.msra.mxu0 0.0
      %3267 = vmatprep.subr.mxu0 0.0
      %3268 = vmatpush1.xpose.msra.mxu0 0.0
      %3269 = vmatprep.subr.mxu0 0.0
      %3270 = vmatpush1.xpose.msra.mxu0 0.0
      %3271 = vmatprep.subr.mxu0 0.0
      %3272 = vmatpush1.xpose.msra.mxu0 0.0
      %3273 = vmatprep.subr.mxu0 0.0
      %3274 = vmatpush1.xpose.msra.mxu0 0.0
      %3275 = vmatprep.subr.mxu0 0.0
      %3276 = vmatpush1.xpose.msra.mxu0 0.0
      %3277 = vmatprep.subr.mxu0 0.0
      %3278 = vmatpush1.xpose.msra.mxu0 0.0
      %3279 = vmatprep.subr.mxu0 0.0
      %3280 = vmatpush1.xpose.msra.mxu0 0.0
      %3281 = vmatprep.subr.mxu0 0.0
      %3282 = vmatpush1.xpose.msra.mxu0 0.0
      %3283 = vmatprep.subr.mxu0 0.0
      %3284 = vmatpush1.xpose.msra.mxu0 0.0
      %3285 = vmatprep.subr.mxu0 0.0
      %3286 = vmatpush1.xpose.msra.mxu0 0.0
      %3287 = vmatprep.subr.mxu0 0.0
      %3288 = vmatpush1.xpose.msra.mxu0 0.0
      %3289 = vmatprep.subr.mxu0 0.0
      %3290 = vmatpush1.xpose.msra.mxu0 0.0
      %3291 = vmatprep.subr.mxu0 0.0
      %3292 = vmatpush1.xpose.msra.mxu0 0.0
      %3293 = vmatprep.subr.mxu0 0.0
      %3294 = vmatpush1.xpose.msra.mxu0 0.0
      %3295 = vmatprep.subr.mxu0 0.0
      %3296 = vmatpush1.xpose.msra.mxu0 0.0
      %3297 = vmatprep.subr.mxu0 0.0
      %3298 = vmatpush1.xpose.msra.mxu0 0.0
      %3299 = vmatprep.subr.mxu0 0.0
      %3300 = vmatpush1.xpose.msra.mxu0 0.0
      %3301 = vmatprep.subr.mxu0 0.0
      %3302 = vmatpush1.xpose.msra.mxu0 0.0
      %3303 = vmatprep.subr.mxu0 0.0
      %3304 = vmatpush1.xpose.msra.mxu0 0.0
      %3305 = vmatprep.subr.mxu0 0.0
      %3306 = vmatpush1.xpose.msra.mxu0 0.0
      %3307 = vmatprep.subr.mxu0 0.0
      %3308 = vmatpush1.xpose.msra.mxu0 0.0
      %3309 = vmatprep.subr.mxu0 0.0
      %3310 = vmatpush1.xpose.msra.mxu0 0.0
      %3311 = vmatprep.subr.mxu0 0.0
      %3312 = vmatpush1.xpose.msra.mxu0 0.0
      %3313 = vmatprep.subr.mxu0 0.0
      %3314 = vmatpush1.xpose.msra.mxu0 0.0
      %3315 = vmatprep.subr.mxu0 0.0
      %3316 = vmatpush1.xpose.msra.mxu0 0.0
      %3317 = vmatprep.subr.mxu0 0.0
      %3318 = vmatpush1.xpose.msra.mxu0 0.0
      %3319 = vmatprep.mubr.f32.mxu0 0.0
      %3320 = vmatmul.mubr.f32.gmra.mrb[0].mxu0 %v3250
      %v3321 = vpop.f32.mrb[0].mxu0
      %v3322 = vadd.f32 0.0, %v3321
      %v3323 = vpop.f32.mrb[0].mxu0
      %3324 = vdwg.mxu0
      %v3325 = vmul.f32 %v3322, 0.35355338
      %v3326 = vadd.f32 %v3325, %v1108
      %v3327 = vsel %vm1026, %v3326, -inf
      %3328 = vmax.xlane.f32.xlu0 %v3327
      %v3329 = vpop.xlane.xlu0 %3328
      %v3330 = vsub.f32 %v3326, %v3329
      %v3331 = vmul.f32 %v3330, 1.442695
      %v3332 = vpow.pop %v3331
      %v3333 = vsel %vm1026, %v3332, 0.0
      %3334 = vadd.xlane.f32.xlu0 %v3333
      %v3335 = vpop.xlane.xlu0 %3334
      %v3336 = vrcp.pop %v3335
      %v3337 = vmul.f32 %v3332, %v3336
      %v3339 = vsel %vm1026, %v3337, 0
      %3341 = vmatprep.subr.mxu0 0.0
      %3342 = vmatpush1.msra.mxu0 %v3246
      %3343 = vmatprep.subr.mxu0 0.0
      %3344 = vmatpush1.msra.mxu0 0.0
      %3345 = vmatprep.subr.mxu0 0.0
      %3346 = vmatpush1.msra.mxu0 0.0
      %3347 = vmatprep.subr.mxu0 0.0
      %3348 = vmatpush1.msra.mxu0 0.0
      %3349 = vmatprep.subr.mxu0 0.0
      %3350 = vmatpush1.msra.mxu0 0.0
      %3351 = vmatprep.subr.mxu0 0.0
      %3352 = vmatpush1.msra.mxu0 0.0
      %3353 = vmatprep.subr.mxu0 0.0
      %3354 = vmatpush1.msra.mxu0 0.0
      %3355 = vmatprep.subr.mxu0 0.0
      %3356 = vmatpush1.msra.mxu0 0.0
      %3357 = vmatprep.subr.mxu0 0.0
      %3358 = vmatpush1.msra.mxu0 0.0
      %3359 = vmatprep.subr.mxu0 0.0
      %3360 = vmatpush1.msra.mxu0 0.0
      %3361 = vmatprep.subr.mxu0 0.0
      %3362 = vmatpush1.msra.mxu0 0.0
      %3363 = vmatprep.subr.mxu0 0.0
      %3364 = vmatpush1.msra.mxu0 0.0
      %3365 = vmatprep.subr.mxu0 0.0
      %3366 = vmatpush1.msra.mxu0 0.0
      %3367 = vmatprep.subr.mxu0 0.0
      %3368 = vmatpush1.msra.mxu0 0.0
      %3369 = vmatprep.subr.mxu0 0.0
      %3370 = vmatpush1.msra.mxu0 0.0
      %3371 = vmatprep.subr.mxu0 0.0
      %3372 = vmatpush1.msra.mxu0 0.0
      %3373 = vmatprep.subr.mxu0 0.0
      %3374 = vmatpush1.msra.mxu0 0.0
      %3375 = vmatprep.subr.mxu0 0.0
      %3376 = vmatpush1.msra.mxu0 0.0
      %3377 = vmatprep.subr.mxu0 0.0
      %3378 = vmatpush1.msra.mxu0 0.0
      %3379 = vmatprep.subr.mxu0 0.0
      %3380 = vmatpush1.msra.mxu0 0.0
      %3381 = vmatprep.subr.mxu0 0.0
      %3382 = vmatpush1.msra.mxu0 0.0
      %3383 = vmatprep.subr.mxu0 0.0
      %3384 = vmatpush1.msra.mxu0 0.0
      %3385 = vmatprep.subr.mxu0 0.0
      %3386 = vmatpush1.msra.mxu0 0.0
      %3387 = vmatprep.subr.mxu0 0.0
      %3388 = vmatpush1.msra.mxu0 0.0
      %3389 = vmatprep.subr.mxu0 0.0
      %3390 = vmatpush1.msra.mxu0 0.0
      %3391 = vmatprep.subr.mxu0 0.0
      %3392 = vmatpush1.msra.mxu0 0.0
      %3393 = vmatprep.subr.mxu0 0.0
      %3394 = vmatpush1.msra.mxu0 0.0
      %3395 = vmatprep.subr.mxu0 0.0
      %3396 = vmatpush1.msra.mxu0 0.0
      %3397 = vmatprep.subr.mxu0 0.0
      %3398 = vmatpush1.msra.mxu0 0.0
      %3399 = vmatprep.subr.mxu0 0.0
      %3400 = vmatpush1.msra.mxu0 0.0
      %3401 = vmatprep.subr.mxu0 0.0
      %3402 = vmatpush1.msra.mxu0 0.0
      %3403 = vmatprep.subr.mxu0 0.0
      %3404 = vmatpush1.msra.mxu0 0.0
      %3405 = vmatprep.mubr.f32.mxu0 0.0
      %3406 = vmatmul.mubr.f32.gmra.mrb[0].mxu0 %v3339
      %v3407 = vpop.f32.mrb[0].mxu0
      %v3408 = vadd.f32 0.0, %v3407
      %v3409 = vpop.f32.mrb[0].mxu0
      %3410 = vdwg.mxu0
      %s3411 = scalar_lea.vmem %s10, 32
      %v3412 = vld [vmem:[%s3411] sm:$0xff]
      %s3413 = scalar_lea.vmem %s4, 160
      %v3414 = vld [vmem:[%s3413] sm:$0xff]
      %v3415 = vld [vmem:[%s3413 + $0x8] sm:$0xff]
      %v3416 = vld [vmem:[%s3413 + $0x10] sm:$0xff]
      %v3417 = vld [vmem:[%s3413 + $0x18] sm:$0xff]
      %s3418 = scalar_lea.vmem %s5, 5
      %v3419 = vld [vmem:[%s3418] sm:$0x1]
      %v3421 = vlaneseq
      %v3422 = vshrl.u32 %v3421, 7
      %v3423 = vsub.s32 0, %v3422
      %v3424 = vrot.slane %v3419, %v3423
      %3426 = vmatprep.subr.mxu0 0.0
      %3427 = vmatpush1.msra.mxu0 %v3414
      %3428 = vmatprep.subr.mxu0 0.0
      %3429 = vmatpush1.msra.mxu0 %v3415
      %3430 = vmatprep.subr.mxu0 0.0
      %3431 = vmatpush1.msra.mxu0 %v3416
      %3432 = vmatprep.subr.mxu0 0.0
      %3433 = vmatpush1.msra.mxu0 %v3417
      %3434 = vmatprep.subr.mxu0 0.0
      %3435 = vmatpush1.msra.mxu0 0.0
      %3436 = vmatprep.subr.mxu0 0.0
      %3437 = vmatpush1.msra.mxu0 0.0
      %3438 = vmatprep.subr.mxu0 0.0
      %3439 = vmatpush1.msra.mxu0 0.0
      %3440 = vmatprep.subr.mxu0 0.0
      %3441 = vmatpush1.msra.mxu0 0.0
      %3442 = vmatprep.subr.mxu0 0.0
      %3443 = vmatpush1.msra.mxu0 0.0
      %3444 = vmatprep.subr.mxu0 0.0
      %3445 = vmatpush1.msra.mxu0 0.0
      %3446 = vmatprep.subr.mxu0 0.0
      %3447 = vmatpush1.msra.mxu0 0.0
      %3448 = vmatprep.subr.mxu0 0.0
      %3449 = vmatpush1.msra.mxu0 0.0
      %3450 = vmatprep.subr.mxu0 0.0
      %3451 = vmatpush1.msra.mxu0 0.0
      %3452 = vmatprep.subr.mxu0 0.0
      %3453 = vmatpush1.msra.mxu0 0.0
      %3454 = vmatprep.subr.mxu0 0.0
      %3455 = vmatpush1.msra.mxu0 0.0
      %3456 = vmatprep.subr.mxu0 0.0
      %3457 = vmatpush1.msra.mxu0 0.0
      %3458 = vmatprep.subr.mxu0 0.0
      %3459 = vmatpush1.msra.mxu0 0.0
      %3460 = vmatprep.subr.mxu0 0.0
      %3461 = vmatpush1.msra.mxu0 0.0
      %3462 = vmatprep.subr.mxu0 0.0
      %3463 = vmatpush1.msra.mxu0 0.0
      %3464 = vmatprep.subr.mxu0 0.0
      %3465 = vmatpush1.msra.mxu0 0.0
      %3466 = vmatprep.subr.mxu0 0.0
      %3467 = vmatpush1.msra.mxu0 0.0
      %3468 = vmatprep.subr.mxu0 0.0
      %3469 = vmatpush1.msra.mxu0 0.0
      %3470 = vmatprep.subr.mxu0 0.0
      %3471 = vmatpush1.msra.mxu0 0.0
      %3472 = vmatprep.subr.mxu0 0.0
      %3473 = vmatpush1.msra.mxu0 0.0
      %3474 = vmatprep.subr.mxu0 0.0
      %3475 = vmatpush1.msra.mxu0 0.0
      %3476 = vmatprep.subr.mxu0 0.0
      %3477 = vmatpush1.msra.mxu0 0.0
      %3478 = vmatprep.subr.mxu0 0.0
      %3479 = vmatpush1.msra.mxu0 0.0
      %3480 = vmatprep.subr.mxu0 0.0
      %3481 = vmatpush1.msra.mxu0 0.0
      %3482 = vmatprep.subr.mxu0 0.0
      %3483 = vmatpush1.msra.mxu0 0.0
      %3484 = vmatprep.subr.mxu0 0.0
      %3485 = vmatpush1.msra.mxu0 0.0
      %3486 = vmatprep.subr.mxu0 0.0
      %3487 = vmatpush1.msra.mxu0 0.0
      %3488 = vmatprep.subr.mxu0 0.0
      %3489 = vmatpush1.msra.mxu0 0.0
      %3490 = vmatprep.mubr.f32.mxu0 0.0
      %3491 = vmatmul.mubr.f32.gmra.mrb[0].mxu0 %v3011
      %v3492 = vpop.f32.mrb[0].mxu0
      %v3493 = vadd.f32 %v3424, %v3492
      %v3494 = vpop.f32.mrb[0].mxu0
      %3495 = vdwg.mxu0
      %s3496 = scalar_lea.vmem %s6, 160
      %v3497 = vld [vmem:[%s3496] sm:$0xff]
      %v3498 = vld [vmem:[%s3496 + $0x8] sm:$0xff]
      %v3499 = vld [vmem:[%s3496 + $0x10] sm:$0xff]
      %v3500 = vld [vmem:[%s3496 + $0x18] sm:$0xff]
      %s3501 = scalar_lea.vmem %s7, 5
      %v3502 = vld [vmem:[%s3501] sm:$0x1]
      %v3504 = vlaneseq
      %v3505 = vshrl.u32 %v3504, 7
      %v3506 = vsub.s32 0, %v3505
      %v3507 = vrot.slane %v3502, %v3506
      %3509 = vmatprep.subr.mxu0 0.0
      %3510 = vmatpush1.msra.mxu0 %v3497
      %3511 = vmatprep.subr.mxu0 0.0
      %3512 = vmatpush1.msra.mxu0 %v3498
      %3513 = vmatprep.subr.mxu0 0.0
      %3514 = vmatpush1.msra.mxu0 %v3499
      %3515 = vmatprep.subr.mxu0 0.0
      %3516 = vmatpush1.msra.mxu0 %v3500
      %3517 = vmatprep.subr.mxu0 0.0
      %3518 = vmatpush1.msra.mxu0 0.0
      %3519 = vmatprep.subr.mxu0 0.0
      %3520 = vmatpush1.msra.mxu0 0.0
      %3521 = vmatprep.subr.mxu0 0.0
      %3522 = vmatpush1.msra.mxu0 0.0
      %3523 = vmatprep.subr.mxu0 0.0
      %3524 = vmatpush1.msra.mxu0 0.0
      %3525 = vmatprep.subr.mxu0 0.0
      %3526 = vmatpush1.msra.mxu0 0.0
      %3527 = vmatprep.subr.mxu0 0.0
      %3528 = vmatpush1.msra.mxu0 0.0
      %3529 = vmatprep.subr.mxu0 0.0
      %3530 = vmatpush1.msra.mxu0 0.0
      %3531 = vmatprep.subr.mxu0 0.0
      %3532 = vmatpush1.msra.mxu0 0.0
      %3533 = vmatprep.subr.mxu0 0.0
      %3534 = vmatpush1.msra.mxu0 0.0
      %3535 = vmatprep.subr.mxu0 0.0
      %3536 = vmatpush1.msra.mxu0 0.0
      %3537 = vmatprep.subr.mxu0 0.0
      %3538 = vmatpush1.msra.mxu0 0.0
      %3539 = vmatprep.subr.mxu0 0.0
      %3540 = vmatpush1.msra.mxu0 0.0
      %3541 = vmatprep.subr.mxu0 0.0
      %3542 = vmatpush1.msra.mxu0 0.0
      %3543 = vmatprep.subr.mxu0 0.0
      %3544 = vmatpush1.msra.mxu0 0.0
      %3545 = vmatprep.subr.mxu0 0.0
      %3546 = vmatpush1.msra.mxu0 0.0
      %3547 = vmatprep.subr.mxu0 0.0
      %3548 = vmatpush1.msra.mxu0 0.0
      %3549 = vmatprep.subr.mxu0 0.0
      %3550 = vmatpush1.msra.mxu0 0.0
      %3551 = vmatprep.subr.mxu0 0.0
      %3552 = vmatpush1.msra.mxu0 0.0
      %3553 = vmatprep.subr.mxu0 0.0
      %3554 = vmatpush1.msra.mxu0 0.0
      %3555 = vmatprep.subr.mxu0 0.0
      %3556 = vmatpush1.msra.mxu0 0.0
      %3557 = vmatprep.subr.mxu0 0.0
      %3558 = vmatpush1.msra.mxu0 0.0
      %3559 = vmatprep.subr.mxu0 0.0
      %3560 = vmatpush1.msra.mxu0 0.0
      %3561 = vmatprep.subr.mxu0 0.0
      %3562 = vmatpush1.msra.mxu0 0.0
      %3563 = vmatprep.subr.mxu0 0.0
      %3564 = vmatpush1.msra.mxu0 0.0
      %3565 = vmatprep.subr.mxu0 0.0
      %3566 = vmatpush1.msra.mxu0 0.0
      %3567 = vmatprep.subr.mxu0 0.0
      %3568 = vmatpush1.msra.mxu0 0.0
      %3569 = vmatprep.subr.mxu0 0.0
      %3570 = vmatpush1.msra.mxu0 0.0
      %3571 = vmatprep.subr.mxu0 0.0
      %3572 = vmatpush1.msra.mxu0 0.0
      %3573 = vmatprep.mubr.f32.mxu0 0.0
      %3574 = vmatmul.mubr.f32.gmra.mrb[0].mxu0 %v3011
      %v3575 = vpop.f32.mrb[0].mxu0
      %v3576 = vadd.f32 %v3507, %v3575
      %v3577 = vpop.f32.mrb[0].mxu0
      %3578 = vdwg.mxu0
      %s3579 = scalar_lea.vmem %s8, 160
      %v3580 = vld [vmem:[%s3579] sm:$0xff]
      %v3581 = vld [vmem:[%s3579 + $0x8] sm:$0xff]
      %v3582 = vld [vmem:[%s3579 + $0x10] sm:$0xff]
      %v3583 = vld [vmem:[%s3579 + $0x18] sm:$0xff]
      %s3584 = scalar_lea.vmem %s9, 5
      %v3585 = vld [vmem:[%s3584] sm:$0x1]
      %v3587 = vlaneseq
      %v3588 = vshrl.u32 %v3587, 7
      %v3589 = vsub.s32 0, %v3588
      %v3590 = vrot.slane %v3585, %v3589
      %3592 = vmatprep.subr.mxu0 0.0
      %3593 = vmatpush1.msra.mxu0 %v3580
      %3594 = vmatprep.subr.mxu0 0.0
      %3595 = vmatpush1.msra.mxu0 %v3581
      %3596 = vmatprep.subr.mxu0 0.0
      %3597 = vmatpush1.msra.mxu0 %v3582
      %3598 = vmatprep.subr.mxu0 0.0
      %3599 = vmatpush1.msra.mxu0 %v3583
      %3600 = vmatprep.subr.mxu0 0.0
      %3601 = vmatpush1.msra.mxu0 0.0
      %3602 = vmatprep.subr.mxu0 0.0
      %3603 = vmatpush1.msra.mxu0 0.0
      %3604 = vmatprep.subr.mxu0 0.0
      %3605 = vmatpush1.msra.mxu0 0.0
      %3606 = vmatprep.subr.mxu0 0.0
      %3607 = vmatpush1.msra.mxu0 0.0
      %3608 = vmatprep.subr.mxu0 0.0
      %3609 = vmatpush1.msra.mxu0 0.0
      %3610 = vmatprep.subr.mxu0 0.0
      %3611 = vmatpush1.msra.mxu0 0.0
      %3612 = vmatprep.subr.mxu0 0.0
      %3613 = vmatpush1.msra.mxu0 0.0
      %3614 = vmatprep.subr.mxu0 0.0
      %3615 = vmatpush1.msra.mxu0 0.0
      %3616 = vmatprep.subr.mxu0 0.0
      %3617 = vmatpush1.msra.mxu0 0.0
      %3618 = vmatprep.subr.mxu0 0.0
      %3619 = vmatpush1.msra.mxu0 0.0
      %3620 = vmatprep.subr.mxu0 0.0
      %3621 = vmatpush1.msra.mxu0 0.0
      %3622 = vmatprep.subr.mxu0 0.0
      %3623 = vmatpush1.msra.mxu0 0.0
      %3624 = vmatprep.subr.mxu0 0.0
      %3625 = vmatpush1.msra.mxu0 0.0
      %3626 = vmatprep.subr.mxu0 0.0
      %3627 = vmatpush1.msra.mxu0 0.0
      %3628 = vmatprep.subr.mxu0 0.0
      %3629 = vmatpush1.msra.mxu0 0.0
      %3630 = vmatprep.subr.mxu0 0.0
      %3631 = vmatpush1.msra.mxu0 0.0
      %3632 = vmatprep.subr.mxu0 0.0
      %3633 = vmatpush1.msra.mxu0 0.0
      %3634 = vmatprep.subr.mxu0 0.0
      %3635 = vmatpush1.msra.mxu0 0.0
      %3636 = vmatprep.subr.mxu0 0.0
      %3637 = vmatpush1.msra.mxu0 0.0
      %3638 = vmatprep.subr.mxu0 0.0
      %3639 = vmatpush1.msra.mxu0 0.0
      %3640 = vmatprep.subr.mxu0 0.0
      %3641 = vmatpush1.msra.mxu0 0.0
      %3642 = vmatprep.subr.mxu0 0.0
      %3643 = vmatpush1.msra.mxu0 0.0
      %3644 = vmatprep.subr.mxu0 0.0
      %3645 = vmatpush1.msra.mxu0 0.0
      %3646 = vmatprep.subr.mxu0 0.0
      %3647 = vmatpush1.msra.mxu0 0.0
      %3648 = vmatprep.subr.mxu0 0.0
      %3649 = vmatpush1.msra.mxu0 0.0
      %3650 = vmatprep.subr.mxu0 0.0
      %3651 = vmatpush1.msra.mxu0 0.0
      %3652 = vmatprep.subr.mxu0 0.0
      %3653 = vmatpush1.msra.mxu0 0.0
      %3654 = vmatprep.subr.mxu0 0.0
      %3655 = vmatpush1.msra.mxu0 0.0
      %3656 = vmatprep.mubr.f32.mxu0 0.0
      %3657 = vmatmul.mubr.f32.gmra.mrb[0].mxu0 %v3011
      %v3658 = vpop.f32.mrb[0].mxu0
      %v3659 = vadd.f32 %v3590, %v3658
      %v3660 = vpop.f32.mrb[0].mxu0
      %3661 = vdwg.mxu0
      %v3663 = vsel %vm1026, %v3493, 0
      %v3666 = vsel %vm1026, %v3576, 0
      %3668 = vmatprep.subr.mxu0 0.0
      %3669 = vmatpush1.xpose.msra.mxu0 %v3666
      %3670 = vmatprep.subr.mxu0 0.0
      %3671 = vmatpush1.xpose.msra.mxu0 0.0
      %3672 = vmatprep.subr.mxu0 0.0
      %3673 = vmatpush1.xpose.msra.mxu0 0.0
      %3674 = vmatprep.subr.mxu0 0.0
      %3675 = vmatpush1.xpose.msra.mxu0 0.0
      %3676 = vmatprep.subr.mxu0 0.0
      %3677 = vmatpush1.xpose.msra.mxu0 0.0
      %3678 = vmatprep.subr.mxu0 0.0
      %3679 = vmatpush1.xpose.msra.mxu0 0.0
      %3680 = vmatprep.subr.mxu0 0.0
      %3681 = vmatpush1.xpose.msra.mxu0 0.0
      %3682 = vmatprep.subr.mxu0 0.0
      %3683 = vmatpush1.xpose.msra.mxu0 0.0
      %3684 = vmatprep.subr.mxu0 0.0
      %3685 = vmatpush1.xpose.msra.mxu0 0.0
      %3686 = vmatprep.subr.mxu0 0.0
      %3687 = vmatpush1.xpose.msra.mxu0 0.0
      %3688 = vmatprep.subr.mxu0 0.0
      %3689 = vmatpush1.xpose.msra.mxu0 0.0
      %3690 = vmatprep.subr.mxu0 0.0
      %3691 = vmatpush1.xpose.msra.mxu0 0.0
      %3692 = vmatprep.subr.mxu0 0.0
      %3693 = vmatpush1.xpose.msra.mxu0 0.0
      %3694 = vmatprep.subr.mxu0 0.0
      %3695 = vmatpush1.xpose.msra.mxu0 0.0
      %3696 = vmatprep.subr.mxu0 0.0
      %3697 = vmatpush1.xpose.msra.mxu0 0.0
      %3698 = vmatprep.subr.mxu0 0.0
      %3699 = vmatpush1.xpose.msra.mxu0 0.0
      %3700 = vmatprep.subr.mxu0 0.0
      %3701 = vmatpush1.xpose.msra.mxu0 0.0
      %3702 = vmatprep.subr.mxu0 0.0
      %3703 = vmatpush1.xpose.msra.mxu0 0.0
      %3704 = vmatprep.subr.mxu0 0.0
      %3705 = vmatpush1.xpose.msra.mxu0 0.0
      %3706 = vmatprep.subr.mxu0 0.0
      %3707 = vmatpush1.xpose.msra.mxu0 0.0
      %3708 = vmatprep.subr.mxu0 0.0
      %3709 = vmatpush1.xpose.msra.mxu0 0.0
      %3710 = vmatprep.subr.mxu0 0.0
      %3711 = vmatpush1.xpose.msra.mxu0 0.0
      %3712 = vmatprep.subr.mxu0 0.0
      %3713 = vmatpush1.xpose.msra.mxu0 0.0
      %3714 = vmatprep.subr.mxu0 0.0
      %3715 = vmatpush1.xpose.msra.mxu0 0.0
      %3716 = vmatprep.subr.mxu0 0.0
      %3717 = vmatpush1.xpose.msra.mxu0 0.0
      %3718 = vmatprep.subr.mxu0 0.0
      %3719 = vmatpush1.xpose.msra.mxu0 0.0
      %3720 = vmatprep.subr.mxu0 0.0
      %3721 = vmatpush1.xpose.msra.mxu0 0.0
      %3722 = vmatprep.subr.mxu0 0.0
      %3723 = vmatpush1.xpose.msra.mxu0 0.0
      %3724 = vmatprep.subr.mxu0 0.0
      %3725 = vmatpush1.xpose.msra.mxu0 0.0
      %3726 = vmatprep.subr.mxu0 0.0
      %3727 = vmatpush1.xpose.msra.mxu0 0.0
      %3728 = vmatprep.subr.mxu0 0.0
      %3729 = vmatpush1.xpose.msra.mxu0 0.0
      %3730 = vmatprep.subr.mxu0 0.0
      %3731 = vmatpush1.xpose.msra.mxu0 0.0
      %3732 = vmatprep.mubr.f32.mxu0 0.0
      %3733 = vmatmul.mubr.f32.gmra.mrb[0].mxu0 %v3663
      %v3734 = vpop.f32.mrb[0].mxu0
      %v3735 = vadd.f32 0.0, %v3734
      %v3736 = vpop.f32.mrb[0].mxu0
      %3737 = vdwg.mxu0
      %v3738 = vmul.f32 %v3735, 0.35355338
      %v3739 = vadd.f32 %v3738, %v1108
      %v3740 = vsel %vm1026, %v3739, -inf
      %3741 = vmax.xlane.f32.xlu0 %v3740
      %v3742 = vpop.xlane.xlu0 %3741
      %v3743 = vsub.f32 %v3739, %v3742
      %v3744 = vmul.f32 %v3743, 1.442695
      %v3745 = vpow.pop %v3744
      %v3746 = vsel %vm1026, %v3745, 0.0
      %3747 = vadd.xlane.f32.xlu0 %v3746
      %v3748 = vpop.xlane.xlu0 %3747
      %v3749 = vrcp.pop %v3748
      %v3750 = vmul.f32 %v3745, %v3749
      %v3752 = vsel %vm1026, %v3750, 0
      %3754 = vmatprep.subr.mxu0 0.0
      %3755 = vmatpush1.msra.mxu0 %v3659
      %3756 = vmatprep.subr.mxu0 0.0
      %3757 = vmatpush1.msra.mxu0 0.0
      %3758 = vmatprep.subr.mxu0 0.0
      %3759 = vmatpush1.msra.mxu0 0.0
      %3760 = vmatprep.subr.mxu0 0.0
      %3761 = vmatpush1.msra.mxu0 0.0
      %3762 = vmatprep.subr.mxu0 0.0
      %3763 = vmatpush1.msra.mxu0 0.0
      %3764 = vmatprep.subr.mxu0 0.0
      %3765 = vmatpush1.msra.mxu0 0.0
      %3766 = vmatprep.subr.mxu0 0.0
      %3767 = vmatpush1.msra.mxu0 0.0
      %3768 = vmatprep.subr.mxu0 0.0
      %3769 = vmatpush1.msra.mxu0 0.0
      %3770 = vmatprep.subr.mxu0 0.0
      %3771 = vmatpush1.msra.mxu0 0.0
      %3772 = vmatprep.subr.mxu0 0.0
      %3773 = vmatpush1.msra.mxu0 0.0
      %3774 = vmatprep.subr.mxu0 0.0
      %3775 = vmatpush1.msra.mxu0 0.0
      %3776 = vmatprep.subr.mxu0 0.0
      %3777 = vmatpush1.msra.mxu0 0.0
      %3778 = vmatprep.subr.mxu0 0.0
      %3779 = vmatpush1.msra.mxu0 0.0
      %3780 = vmatprep.subr.mxu0 0.0
      %3781 = vmatpush1.msra.mxu0 0.0
      %3782 = vmatprep.subr.mxu0 0.0
      %3783 = vmatpush1.msra.mxu0 0.0
      %3784 = vmatprep.subr.mxu0 0.0
      %3785 = vmatpush1.msra.mxu0 0.0
      %3786 = vmatprep.subr.mxu0 0.0
      %3787 = vmatpush1.msra.mxu0 0.0
      %3788 = vmatprep.subr.mxu0 0.0
      %3789 = vmatpush1.msra.mxu0 0.0
      %3790 = vmatprep.subr.mxu0 0.0
      %3791 = vmatpush1.msra.mxu0 0.0
      %3792 = vmatprep.subr.mxu0 0.0
      %3793 = vmatpush1.msra.mxu0 0.0
      %3794 = vmatprep.subr.mxu0 0.0
      %3795 = vmatpush1.msra.mxu0 0.0
      %3796 = vmatprep.subr.mxu0 0.0
      %3797 = vmatpush1.msra.mxu0 0.0
      %3798 = vmatprep.subr.mxu0 0.0
      %3799 = vmatpush1.msra.mxu0 0.0
      %3800 = vmatprep.subr.mxu0 0.0
      %3801 = vmatpush1.msra.mxu0 0.0
      %3802 = vmatprep.subr.mxu0 0.0
      %3803 = vmatpush1.msra.mxu0 0.0
      %3804 = vmatprep.subr.mxu0 0.0
      %3805 = vmatpush1.msra.mxu0 0.0
      %3806 = vmatprep.subr.mxu0 0.0
      %3807 = vmatpush1.msra.mxu0 0.0
      %3808 = vmatprep.subr.mxu0 0.0
      %3809 = vmatpush1.msra.mxu0 0.0
      %3810 = vmatprep.subr.mxu0 0.0
      %3811 = vmatpush1.msra.mxu0 0.0
      %3812 = vmatprep.subr.mxu0 0.0
      %3813 = vmatpush1.msra.mxu0 0.0
      %3814 = vmatprep.subr.mxu0 0.0
      %3815 = vmatpush1.msra.mxu0 0.0
      %3816 = vmatprep.subr.mxu0 0.0
      %3817 = vmatpush1.msra.mxu0 0.0
      %3818 = vmatprep.mubr.f32.mxu0 0.0
      %3819 = vmatmul.mubr.f32.gmra.mrb[0].mxu0 %v3752
      %v3820 = vpop.f32.mrb[0].mxu0
      %v3821 = vadd.f32 0.0, %v3820
      %v3822 = vpop.f32.mrb[0].mxu0
      %3823 = vdwg.mxu0
      %s3824 = scalar_lea.vmem %s10, 40
      %v3825 = vld [vmem:[%s3824] sm:$0xff]
      %v3827 = vsel %vm1026, %v3821, 0
      %3829 = vmatprep.subr.mxu0 0.0
      %3830 = vmatpush1.msra.mxu0 %v3825
      %3831 = vmatprep.subr.mxu0 0.0
      %3832 = vmatpush1.msra.mxu0 0.0
      %3833 = vmatprep.subr.mxu0 0.0
      %3834 = vmatpush1.msra.mxu0 0.0
      %3835 = vmatprep.subr.mxu0 0.0
      %3836 = vmatpush1.msra.mxu0 0.0
      %3837 = vmatprep.subr.mxu0 0.0
      %3838 = vmatpush1.msra.mxu0 0.0
      %3839 = vmatprep.subr.mxu0 0.0
      %3840 = vmatpush1.msra.mxu0 0.0
      %3841 = vmatprep.subr.mxu0 0.0
      %3842 = vmatpush1.msra.mxu0 0.0
      %3843 = vmatprep.subr.mxu0 0.0
      %3844 = vmatpush1.msra.mxu0 0.0
      %3845 = vmatprep.subr.mxu0 0.0
      %3846 = vmatpush1.msra.mxu0 0.0
      %3847 = vmatprep.subr.mxu0 0.0
      %3848 = vmatpush1.msra.mxu0 0.0
      %3849 = vmatprep.subr.mxu0 0.0
      %3850 = vmatpush1.msra.mxu0 0.0
      %3851 = vmatprep.subr.mxu0 0.0
      %3852 = vmatpush1.msra.mxu0 0.0
      %3853 = vmatprep.subr.mxu0 0.0
      %3854 = vmatpush1.msra.mxu0 0.0
      %3855 = vmatprep.subr.mxu0 0.0
      %3856 = vmatpush1.msra.mxu0 0.0
      %3857 = vmatprep.subr.mxu0 0.0
      %3858 = vmatpush1.msra.mxu0 0.0
      %3859 = vmatprep.subr.mxu0 0.0
      %3860 = vmatpush1.msra.mxu0 0.0
      %3861 = vmatprep.subr.mxu0 0.0
      %3862 = vmatpush1.msra.mxu0 0.0
      %3863 = vmatprep.subr.mxu0 0.0
      %3864 = vmatpush1.msra.mxu0 0.0
      %3865 = vmatprep.subr.mxu0 0.0
      %3866 = vmatpush1.msra.mxu0 0.0
      %3867 = vmatprep.subr.mxu0 0.0
      %3868 = vmatpush1.msra.mxu0 0.0
      %3869 = vmatprep.subr.mxu0 0.0
      %3870 = vmatpush1.msra.mxu0 0.0
      %3871 = vmatprep.subr.mxu0 0.0
      %3872 = vmatpush1.msra.mxu0 0.0
      %3873 = vmatprep.subr.mxu0 0.0
      %3874 = vmatpush1.msra.mxu0 0.0
      %3875 = vmatprep.subr.mxu0 0.0
      %3876 = vmatpush1.msra.mxu0 0.0
      %3877 = vmatprep.subr.mxu0 0.0
      %3878 = vmatpush1.msra.mxu0 0.0
      %3879 = vmatprep.subr.mxu0 0.0
      %3880 = vmatpush1.msra.mxu0 0.0
      %3881 = vmatprep.subr.mxu0 0.0
      %3882 = vmatpush1.msra.mxu0 0.0
      %3883 = vmatprep.subr.mxu0 0.0
      %3884 = vmatpush1.msra.mxu0 0.0
      %3885 = vmatprep.subr.mxu0 0.0
      %3886 = vmatpush1.msra.mxu0 0.0
      %3887 = vmatprep.subr.mxu0 0.0
      %3888 = vmatpush1.msra.mxu0 0.0
      %3889 = vmatprep.subr.mxu0 0.0
      %3890 = vmatpush1.msra.mxu0 0.0
      %3891 = vmatprep.subr.mxu0 0.0
      %3892 = vmatpush1.msra.mxu0 0.0
      %3893 = vmatprep.mubr.f32.mxu0 0.0
      %3894 = vmatmul.mubr.f32.gmra.mrb[0].mxu0 %v3827
      %v3895 = vpop.f32.mrb[0].mxu0
      %v3896 = vadd.f32 0.0, %v3895
      %v3897 = vpop.f32.mrb[0].mxu0
      %3898 = vdwg.mxu0
      %v3900 = vsel %vm1026, %v3408, 0
      %3902 = vmatprep.subr.mxu0 0.0
      %3903 = vmatpush1.msra.mxu0 %v3412
      %3904 = vmatprep.subr.mxu0 0.0
      %3905 = vmatpush1.msra.mxu0 0.0
      %3906 = vmatprep.subr.mxu0 0.0
      %3907 = vmatpush1.msra.mxu0 0.0
      %3908 = vmatprep.subr.mxu0 0.0
      %3909 = vmatpush1.msra.mxu0 0.0
      %3910 = vmatprep.subr.mxu0 0.0
      %3911 = vmatpush1.msra.mxu0 0.0
      %3912 = vmatprep.subr.mxu0 0.0
      %3913 = vmatpush1.msra.mxu0 0.0
      %3914 = vmatprep.subr.mxu0 0.0
      %3915 = vmatpush1.msra.mxu0 0.0
      %3916 = vmatprep.subr.mxu0 0.0
      %3917 = vmatpush1.msra.mxu0 0.0
      %3918 = vmatprep.subr.mxu0 0.0
      %3919 = vmatpush1.msra.mxu0 0.0
      %3920 = vmatprep.subr.mxu0 0.0
      %3921 = vmatpush1.msra.mxu0 0.0
      %3922 = vmatprep.subr.mxu0 0.0
      %3923 = vmatpush1.msra.mxu0 0.0
      %3924 = vmatprep.subr.mxu0 0.0
      %3925 = vmatpush1.msra.mxu0 0.0
      %3926 = vmatprep.subr.mxu0 0.0
      %3927 = vmatpush1.msra.mxu0 0.0
      %3928 = vmatprep.subr.mxu0 0.0
      %3929 = vmatpush1.msra.mxu0 0.0
      %3930 = vmatprep.subr.mxu0 0.0
      %3931 = vmatpush1.msra.mxu0 0.0
      %3932 = vmatprep.subr.mxu0 0.0
      %3933 = vmatpush1.msra.mxu0 0.0
      %3934 = vmatprep.subr.mxu0 0.0
      %3935 = vmatpush1.msra.mxu0 0.0
      %3936 = vmatprep.subr.mxu0 0.0
      %3937 = vmatpush1.msra.mxu0 0.0
      %3938 = vmatprep.subr.mxu0 0.0
      %3939 = vmatpush1.msra.mxu0 0.0
      %3940 = vmatprep.subr.mxu0 0.0
      %3941 = vmatpush1.msra.mxu0 0.0
      %3942 = vmatprep.subr.mxu0 0.0
      %3943 = vmatpush1.msra.mxu0 0.0
      %3944 = vmatprep.subr.mxu0 0.0
      %3945 = vmatpush1.msra.mxu0 0.0
      %3946 = vmatprep.subr.mxu0 0.0
      %3947 = vmatpush1.msra.mxu0 0.0
      %3948 = vmatprep.subr.mxu0 0.0
      %3949 = vmatpush1.msra.mxu0 0.0
      %3950 = vmatprep.subr.mxu0 0.0
      %3951 = vmatpush1.msra.mxu0 0.0
      %3952 = vmatprep.subr.mxu0 0.0
      %3953 = vmatpush1.msra.mxu0 0.0
      %3954 = vmatprep.subr.mxu0 0.0
      %3955 = vmatpush1.msra.mxu0 0.0
      %3956 = vmatprep.subr.mxu0 0.0
      %3957 = vmatpush1.msra.mxu0 0.0
      %3958 = vmatprep.subr.mxu0 0.0
      %3959 = vmatpush1.msra.mxu0 0.0
      %3960 = vmatprep.subr.mxu0 0.0
      %3961 = vmatpush1.msra.mxu0 0.0
      %3962 = vmatprep.subr.mxu0 0.0
      %3963 = vmatpush1.msra.mxu0 0.0
      %3964 = vmatprep.subr.mxu0 0.0
      %3965 = vmatpush1.msra.mxu0 0.0
      %3966 = vmatprep.mubr.f32.mxu0 0.0
      %3967 = vmatmul.mubr.f32.gmra.mrb[0].mxu0 %v3900
      %v3968 = vpop.f32.mrb[0].mxu0
      %v3969 = vadd.f32 %v3896, %v3968
      %v3970 = vpop.f32.mrb[0].mxu0
      %3971 = vdwg.mxu0
      %s3972 = scalar_lea.vmem %s4, 192
      %v3973 = vld [vmem:[%s3972] sm:$0xff]
      %v3974 = vld [vmem:[%s3972 + $0x8] sm:$0xff]
      %v3975 = vld [vmem:[%s3972 + $0x10] sm:$0xff]
      %v3976 = vld [vmem:[%s3972 + $0x18] sm:$0xff]
      %s3977 = scalar_lea.vmem %s5, 6
      %v3978 = vld [vmem:[%s3977] sm:$0x1]
      %v3980 = vlaneseq
      %v3981 = vshrl.u32 %v3980, 7
      %v3982 = vsub.s32 0, %v3981
      %v3983 = vrot.slane %v3978, %v3982
      %3985 = vmatprep.subr.mxu0 0.0
      %3986 = vmatpush1.msra.mxu0 %v3973
      %3987 = vmatprep.subr.mxu0 0.0
      %3988 = vmatpush1.msra.mxu0 %v3974
      %3989 = vmatprep.subr.mxu0 0.0
      %3990 = vmatpush1.msra.mxu0 %v3975
      %3991 = vmatprep.subr.mxu0 0.0
      %3992 = vmatpush1.msra.mxu0 %v3976
      %3993 = vmatprep.subr.mxu0 0.0
      %3994 = vmatpush1.msra.mxu0 0.0
      %3995 = vmatprep.subr.mxu0 0.0
      %3996 = vmatpush1.msra.mxu0 0.0
      %3997 = vmatprep.subr.mxu0 0.0
      %3998 = vmatpush1.msra.mxu0 0.0
      %3999 = vmatprep.subr.mxu0 0.0
      %4000 = vmatpush1.msra.mxu0 0.0
      %4001 = vmatprep.subr.mxu0 0.0
      %4002 = vmatpush1.msra.mxu0 0.0
      %4003 = vmatprep.subr.mxu0 0.0
      %4004 = vmatpush1.msra.mxu0 0.0
      %4005 = vmatprep.subr.mxu0 0.0
      %4006 = vmatpush1.msra.mxu0 0.0
      %4007 = vmatprep.subr.mxu0 0.0
      %4008 = vmatpush1.msra.mxu0 0.0
      %4009 = vmatprep.subr.mxu0 0.0
      %4010 = vmatpush1.msra.mxu0 0.0
      %4011 = vmatprep.subr.mxu0 0.0
      %4012 = vmatpush1.msra.mxu0 0.0
      %4013 = vmatprep.subr.mxu0 0.0
      %4014 = vmatpush1.msra.mxu0 0.0
      %4015 = vmatprep.subr.mxu0 0.0
      %4016 = vmatpush1.msra.mxu0 0.0
      %4017 = vmatprep.subr.mxu0 0.0
      %4018 = vmatpush1.msra.mxu0 0.0
      %4019 = vmatprep.subr.mxu0 0.0
      %4020 = vmatpush1.msra.mxu0 0.0
      %4021 = vmatprep.subr.mxu0 0.0
      %4022 = vmatpush1.msra.mxu0 0.0
      %4023 = vmatprep.subr.mxu0 0.0
      %4024 = vmatpush1.msra.mxu0 0.0
      %4025 = vmatprep.subr.mxu0 0.0
      %4026 = vmatpush1.msra.mxu0 0.0
      %4027 = vmatprep.subr.mxu0 0.0
      %4028 = vmatpush1.msra.mxu0 0.0
      %4029 = vmatprep.subr.mxu0 0.0
      %4030 = vmatpush1.msra.mxu0 0.0
      %4031 = vmatprep.subr.mxu0 0.0
      %4032 = vmatpush1.msra.mxu0 0.0
      %4033 = vmatprep.subr.mxu0 0.0
      %4034 = vmatpush1.msra.mxu0 0.0
      %4035 = vmatprep.subr.mxu0 0.0
      %4036 = vmatpush1.msra.mxu0 0.0
      %4037 = vmatprep.subr.mxu0 0.0
      %4038 = vmatpush1.msra.mxu0 0.0
      %4039 = vmatprep.subr.mxu0 0.0
      %4040 = vmatpush1.msra.mxu0 0.0
      %4041 = vmatprep.subr.mxu0 0.0
      %4042 = vmatpush1.msra.mxu0 0.0
      %4043 = vmatprep.subr.mxu0 0.0
      %4044 = vmatpush1.msra.mxu0 0.0
      %4045 = vmatprep.subr.mxu0 0.0
      %4046 = vmatpush1.msra.mxu0 0.0
      %4047 = vmatprep.subr.mxu0 0.0
      %4048 = vmatpush1.msra.mxu0 0.0
      %4049 = vmatprep.mubr.f32.mxu0 0.0
      %4050 = vmatmul.mubr.f32.gmra.mrb[0].mxu0 %v3011
      %v4051 = vpop.f32.mrb[0].mxu0
      %v4052 = vadd.f32 %v3983, %v4051
      %v4053 = vpop.f32.mrb[0].mxu0
      %4054 = vdwg.mxu0
      %s4055 = scalar_lea.vmem %s6, 192
      %v4056 = vld [vmem:[%s4055] sm:$0xff]
      %v4057 = vld [vmem:[%s4055 + $0x8] sm:$0xff]
      %v4058 = vld [vmem:[%s4055 + $0x10] sm:$0xff]
      %v4059 = vld [vmem:[%s4055 + $0x18] sm:$0xff]
      %s4060 = scalar_lea.vmem %s7, 6
      %v4061 = vld [vmem:[%s4060] sm:$0x1]
      %v4063 = vlaneseq
      %v4064 = vshrl.u32 %v4063, 7
      %v4065 = vsub.s32 0, %v4064
      %v4066 = vrot.slane %v4061, %v4065
      %4068 = vmatprep.subr.mxu0 0.0
      %4069 = vmatpush1.msra.mxu0 %v4056
      %4070 = vmatprep.subr.mxu0 0.0
      %4071 = vmatpush1.msra.mxu0 %v4057
      %4072 = vmatprep.subr.mxu0 0.0
      %4073 = vmatpush1.msra.mxu0 %v4058
      %4074 = vmatprep.subr.mxu0 0.0
      %4075 = vmatpush1.msra.mxu0 %v4059
      %4076 = vmatprep.subr.mxu0 0.0
      %4077 = vmatpush1.msra.mxu0 0.0
      %4078 = vmatprep.subr.mxu0 0.0
      %4079 = vmatpush1.msra.mxu0 0.0
      %4080 = vmatprep.subr.mxu0 0.0
      %4081 = vmatpush1.msra.mxu0 0.0
      %4082 = vmatprep.subr.mxu0 0.0
      %4083 = vmatpush1.msra.mxu0 0.0
      %4084 = vmatprep.subr.mxu0 0.0
      %4085 = vmatpush1.msra.mxu0 0.0
      %4086 = vmatprep.subr.mxu0 0.0
      %4087 = vmatpush1.msra.mxu0 0.0
      %4088 = vmatprep.subr.mxu0 0.0
      %4089 = vmatpush1.msra.mxu0 0.0
      %4090 = vmatprep.subr.mxu0 0.0
      %4091 = vmatpush1.msra.mxu0 0.0
      %4092 = vmatprep.subr.mxu0 0.0
      %4093 = vmatpush1.msra.mxu0 0.0
      %4094 = vmatprep.subr.mxu0 0.0
      %4095 = vmatpush1.msra.mxu0 0.0
      %4096 = vmatprep.subr.mxu0 0.0
      %4097 = vmatpush1.msra.mxu0 0.0
      %4098 = vmatprep.subr.mxu0 0.0
      %4099 = vmatpush1.msra.mxu0 0.0
      %4100 = vmatprep.subr.mxu0 0.0
      %4101 = vmatpush1.msra.mxu0 0.0
      %4102 = vmatprep.subr.mxu0 0.0
      %4103 = vmatpush1.msra.mxu0 0.0
      %4104 = vmatprep.subr.mxu0 0.0
      %4105 = vmatpush1.msra.mxu0 0.0
      %4106 = vmatprep.subr.mxu0 0.0
      %4107 = vmatpush1.msra.mxu0 0.0
      %4108 = vmatprep.subr.mxu0 0.0
      %4109 = vmatpush1.msra.mxu0 0.0
      %4110 = vmatprep.subr.mxu0 0.0
      %4111 = vmatpush1.msra.mxu0 0.0
      %4112 = vmatprep.subr.mxu0 0.0
      %4113 = vmatpush1.msra.mxu0 0.0
      %4114 = vmatprep.subr.mxu0 0.0
      %4115 = vmatpush1.msra.mxu0 0.0
      %4116 = vmatprep.subr.mxu0 0.0
      %4117 = vmatpush1.msra.mxu0 0.0
      %4118 = vmatprep.subr.mxu0 0.0
      %4119 = vmatpush1.msra.mxu0 0.0
      %4120 = vmatprep.subr.mxu0 0.0
      %4121 = vmatpush1.msra.mxu0 0.0
      %4122 = vmatprep.subr.mxu0 0.0
      %4123 = vmatpush1.msra.mxu0 0.0
      %4124 = vmatprep.subr.mxu0 0.0
      %4125 = vmatpush1.msra.mxu0 0.0
      %4126 = vmatprep.subr.mxu0 0.0
      %4127 = vmatpush1.msra.mxu0 0.0
      %4128 = vmatprep.subr.mxu0 0.0
      %4129 = vmatpush1.msra.mxu0 0.0
      %4130 = vmatprep.subr.mxu0 0.0
      %4131 = vmatpush1.msra.mxu0 0.0
      %4132 = vmatprep.mubr.f32.mxu0 0.0
      %4133 = vmatmul.mubr.f32.gmra.mrb[0].mxu0 %v3011
      %v4134 = vpop.f32.mrb[0].mxu0
      %v4135 = vadd.f32 %v4066, %v4134
      %v4136 = vpop.f32.mrb[0].mxu0
      %4137 = vdwg.mxu0
      %s4138 = scalar_lea.vmem %s8, 192
      %v4139 = vld [vmem:[%s4138] sm:$0xff]
      %v4140 = vld [vmem:[%s4138 + $0x8] sm:$0xff]
      %v4141 = vld [vmem:[%s4138 + $0x10] sm:$0xff]
      %v4142 = vld [vmem:[%s4138 + $0x18] sm:$0xff]
      %s4143 = scalar_lea.vmem %s9, 6
      %v4144 = vld [vmem:[%s4143] sm:$0x1]
      %v4146 = vlaneseq
      %v4147 = vshrl.u32 %v4146, 7
      %v4148 = vsub.s32 0, %v4147
      %v4149 = vrot.slane %v4144, %v4148
      %4151 = vmatprep.subr.mxu0 0.0
      %4152 = vmatpush1.msra.mxu0 %v4139
      %4153 = vmatprep.subr.mxu0 0.0
      %4154 = vmatpush1.msra.mxu0 %v4140
      %4155 = vmatprep.subr.mxu0 0.0
      %4156 = vmatpush1.msra.mxu0 %v4141
      %4157 = vmatprep.subr.mxu0 0.0
      %4158 = vmatpush1.msra.mxu0 %v4142
      %4159 = vmatprep.subr.mxu0 0.0
      %4160 = vmatpush1.msra.mxu0 0.0
      %4161 = vmatprep.subr.mxu0 0.0
      %4162 = vmatpush1.msra.mxu0 0.0
      %4163 = vmatprep.subr.mxu0 0.0
      %4164 = vmatpush1.msra.mxu0 0.0
      %4165 = vmatprep.subr.mxu0 0.0
      %4166 = vmatpush1.msra.mxu0 0.0
      %4167 = vmatprep.subr.mxu0 0.0
      %4168 = vmatpush1.msra.mxu0 0.0
      %4169 = vmatprep.subr.mxu0 0.0
      %4170 = vmatpush1.msra.mxu0 0.0
      %4171 = vmatprep.subr.mxu0 0.0
      %4172 = vmatpush1.msra.mxu0 0.0
      %4173 = vmatprep.subr.mxu0 0.0
      %4174 = vmatpush1.msra.mxu0 0.0
      %4175 = vmatprep.subr.mxu0 0.0
      %4176 = vmatpush1.msra.mxu0 0.0
      %4177 = vmatprep.subr.mxu0 0.0
      %4178 = vmatpush1.msra.mxu0 0.0
      %4179 = vmatprep.subr.mxu0 0.0
      %4180 = vmatpush1.msra.mxu0 0.0
      %4181 = vmatprep.subr.mxu0 0.0
      %4182 = vmatpush1.msra.mxu0 0.0
      %4183 = vmatprep.subr.mxu0 0.0
      %4184 = vmatpush1.msra.mxu0 0.0
      %4185 = vmatprep.subr.mxu0 0.0
      %4186 = vmatpush1.msra.mxu0 0.0
      %4187 = vmatprep.subr.mxu0 0.0
      %4188 = vmatpush1.msra.mxu0 0.0
      %4189 = vmatprep.subr.mxu0 0.0
      %4190 = vmatpush1.msra.mxu0 0.0
      %4191 = vmatprep.subr.mxu0 0.0
      %4192 = vmatpush1.msra.mxu0 0.0
      %4193 = vmatprep.subr.mxu0 0.0
      %4194 = vmatpush1.msra.mxu0 0.0
      %4195 = vmatprep.subr.mxu0 0.0
      %4196 = vmatpush1.msra.mxu0 0.0
      %4197 = vmatprep.subr.mxu0 0.0
      %4198 = vmatpush1.msra.mxu0 0.0
      %4199 = vmatprep.subr.mxu0 0.0
      %4200 = vmatpush1.msra.mxu0 0.0
      %4201 = vmatprep.subr.mxu0 0.0
      %4202 = vmatpush1.msra.mxu0 0.0
      %4203 = vmatprep.subr.mxu0 0.0
      %4204 = vmatpush1.msra.mxu0 0.0
      %4205 = vmatprep.subr.mxu0 0.0
      %4206 = vmatpush1.msra.mxu0 0.0
      %4207 = vmatprep.subr.mxu0 0.0
      %4208 = vmatpush1.msra.mxu0 0.0
      %4209 = vmatprep.subr.mxu0 0.0
      %4210 = vmatpush1.msra.mxu0 0.0
      %4211 = vmatprep.subr.mxu0 0.0
      %4212 = vmatpush1.msra.mxu0 0.0
      %4213 = vmatprep.subr.mxu0 0.0
      %4214 = vmatpush1.msra.mxu0 0.0
      %4215 = vmatprep.mubr.f32.mxu0 0.0
      %4216 = vmatmul.mubr.f32.gmra.mrb[0].mxu0 %v3011
      %v4217 = vpop.f32.mrb[0].mxu0
      %v4218 = vadd.f32 %v4149, %v4217
      %v4219 = vpop.f32.mrb[0].mxu0
      %4220 = vdwg.mxu0
      %v4222 = vsel %vm1026, %v4052, 0
      %v4225 = vsel %vm1026, %v4135, 0
      %4227 = vmatprep.subr.mxu0 0.0
      %4228 = vmatpush1.xpose.msra.mxu0 %v4225
      %4229 = vmatprep.subr.mxu0 0.0
      %4230 = vmatpush1.xpose.msra.mxu0 0.0
      %4231 = vmatprep.subr.mxu0 0.0
      %4232 = vmatpush1.xpose.msra.mxu0 0.0
      %4233 = vmatprep.subr.mxu0 0.0
      %4234 = vmatpush1.xpose.msra.mxu0 0.0
      %4235 = vmatprep.subr.mxu0 0.0
      %4236 = vmatpush1.xpose.msra.mxu0 0.0
      %4237 = vmatprep.subr.mxu0 0.0
      %4238 = vmatpush1.xpose.msra.mxu0 0.0
      %4239 = vmatprep.subr.mxu0 0.0
      %4240 = vmatpush1.xpose.msra.mxu0 0.0
      %4241 = vmatprep.subr.mxu0 0.0
      %4242 = vmatpush1.xpose.msra.mxu0 0.0
      %4243 = vmatprep.subr.mxu0 0.0
      %4244 = vmatpush1.xpose.msra.mxu0 0.0
      %4245 = vmatprep.subr.mxu0 0.0
      %4246 = vmatpush1.xpose.msra.mxu0 0.0
      %4247 = vmatprep.subr.mxu0 0.0
      %4248 = vmatpush1.xpose.msra.mxu0 0.0
      %4249 = vmatprep.subr.mxu0 0.0
      %4250 = vmatpush1.xpose.msra.mxu0 0.0
      %4251 = vmatprep.subr.mxu0 0.0
      %4252 = vmatpush1.xpose.msra.mxu0 0.0
      %4253 = vmatprep.subr.mxu0 0.0
      %4254 = vmatpush1.xpose.msra.mxu0 0.0
      %4255 = vmatprep.subr.mxu0 0.0
      %4256 = vmatpush1.xpose.msra.mxu0 0.0
      %4257 = vmatprep.subr.mxu0 0.0
      %4258 = vmatpush1.xpose.msra.mxu0 0.0
      %4259 = vmatprep.subr.mxu0 0.0
      %4260 = vmatpush1.xpose.msra.mxu0 0.0
      %4261 = vmatprep.subr.mxu0 0.0
      %4262 = vmatpush1.xpose.msra.mxu0 0.0
      %4263 = vmatprep.subr.mxu0 0.0
      %4264 = vmatpush1.xpose.msra.mxu0 0.0
      %4265 = vmatprep.subr.mxu0 0.0
      %4266 = vmatpush1.xpose.msra.mxu0 0.0
      %4267 = vmatprep.subr.mxu0 0.0
      %4268 = vmatpush1.xpose.msra.mxu0 0.0
      %4269 = vmatprep.subr.mxu0 0.0
      %4270 = vmatpush1.xpose.msra.mxu0 0.0
      %4271 = vmatprep.subr.mxu0 0.0
      %4272 = vmatpush1.xpose.msra.mxu0 0.0
      %4273 = vmatprep.subr.mxu0 0.0
      %4274 = vmatpush1.xpose.msra.mxu0 0.0
      %4275 = vmatprep.subr.mxu0 0.0
      %4276 = vmatpush1.xpose.msra.mxu0 0.0
      %4277 = vmatprep.subr.mxu0 0.0
      %4278 = vmatpush1.xpose.msra.mxu0 0.0
      %4279 = vmatprep.subr.mxu0 0.0
      %4280 = vmatpush1.xpose.msra.mxu0 0.0
      %4281 = vmatprep.subr.mxu0 0.0
      %4282 = vmatpush1.xpose.msra.mxu0 0.0
      %4283 = vmatprep.subr.mxu0 0.0
      %4284 = vmatpush1.xpose.msra.mxu0 0.0
      %4285 = vmatprep.subr.mxu0 0.0
      %4286 = vmatpush1.xpose.msra.mxu0 0.0
      %4287 = vmatprep.subr.mxu0 0.0
      %4288 = vmatpush1.xpose.msra.mxu0 0.0
      %4289 = vmatprep.subr.mxu0 0.0
      %4290 = vmatpush1.xpose.msra.mxu0 0.0
      %4291 = vmatprep.mubr.f32.mxu0 0.0
      %4292 = vmatmul.mubr.f32.gmra.mrb[0].mxu0 %v4222
      %v4293 = vpop.f32.mrb[0].mxu0
      %v4294 = vadd.f32 0.0, %v4293
      %v4295 = vpop.f32.mrb[0].mxu0
      %4296 = vdwg.mxu0
      %v4297 = vmul.f32 %v4294, 0.35355338
      %v4298 = vadd.f32 %v4297, %v1108
      %v4299 = vsel %vm1026, %v4298, -inf
      %4300 = vmax.xlane.f32.xlu0 %v4299
      %v4301 = vpop.xlane.xlu0 %4300
      %v4302 = vsub.f32 %v4298, %v4301
      %v4303 = vmul.f32 %v4302, 1.442695
      %v4304 = vpow.pop %v4303
      %v4305 = vsel %vm1026, %v4304, 0.0
      %4306 = vadd.xlane.f32.xlu0 %v4305
      %v4307 = vpop.xlane.xlu0 %4306
      %v4308 = vrcp.pop %v4307
      %v4309 = vmul.f32 %v4304, %v4308
      %v4311 = vsel %vm1026, %v4309, 0
      %4313 = vmatprep.subr.mxu0 0.0
      %4314 = vmatpush1.msra.mxu0 %v4218
      %4315 = vmatprep.subr.mxu0 0.0
      %4316 = vmatpush1.msra.mxu0 0.0
      %4317 = vmatprep.subr.mxu0 0.0
      %4318 = vmatpush1.msra.mxu0 0.0
      %4319 = vmatprep.subr.mxu0 0.0
      %4320 = vmatpush1.msra.mxu0 0.0
      %4321 = vmatprep.subr.mxu0 0.0
      %4322 = vmatpush1.msra.mxu0 0.0
      %4323 = vmatprep.subr.mxu0 0.0
      %4324 = vmatpush1.msra.mxu0 0.0
      %4325 = vmatprep.subr.mxu0 0.0
      %4326 = vmatpush1.msra.mxu0 0.0
      %4327 = vmatprep.subr.mxu0 0.0
      %4328 = vmatpush1.msra.mxu0 0.0
      %4329 = vmatprep.subr.mxu0 0.0
      %4330 = vmatpush1.msra.mxu0 0.0
      %4331 = vmatprep.subr.mxu0 0.0
      %4332 = vmatpush1.msra.mxu0 0.0
      %4333 = vmatprep.subr.mxu0 0.0
      %4334 = vmatpush1.msra.mxu0 0.0
      %4335 = vmatprep.subr.mxu0 0.0
      %4336 = vmatpush1.msra.mxu0 0.0
      %4337 = vmatprep.subr.mxu0 0.0
      %4338 = vmatpush1.msra.mxu0 0.0
      %4339 = vmatprep.subr.mxu0 0.0
      %4340 = vmatpush1.msra.mxu0 0.0
      %4341 = vmatprep.subr.mxu0 0.0
      %4342 = vmatpush1.msra.mxu0 0.0
      %4343 = vmatprep.subr.mxu0 0.0
      %4344 = vmatpush1.msra.mxu0 0.0
      %4345 = vmatprep.subr.mxu0 0.0
      %4346 = vmatpush1.msra.mxu0 0.0
      %4347 = vmatprep.subr.mxu0 0.0
      %4348 = vmatpush1.msra.mxu0 0.0
      %4349 = vmatprep.subr.mxu0 0.0
      %4350 = vmatpush1.msra.mxu0 0.0
      %4351 = vmatprep.subr.mxu0 0.0
      %4352 = vmatpush1.msra.mxu0 0.0
      %4353 = vmatprep.subr.mxu0 0.0
      %4354 = vmatpush1.msra.mxu0 0.0
      %4355 = vmatprep.subr.mxu0 0.0
      %4356 = vmatpush1.msra.mxu0 0.0
      %4357 = vmatprep.subr.mxu0 0.0
      %4358 = vmatpush1.msra.mxu0 0.0
      %4359 = vmatprep.subr.mxu0 0.0
      %4360 = vmatpush1.msra.mxu0 0.0
      %4361 = vmatprep.subr.mxu0 0.0
      %4362 = vmatpush1.msra.mxu0 0.0
      %4363 = vmatprep.subr.mxu0 0.0
      %4364 = vmatpush1.msra.mxu0 0.0
      %4365 = vmatprep.subr.mxu0 0.0
      %4366 = vmatpush1.msra.mxu0 0.0
      %4367 = vmatprep.subr.mxu0 0.0
      %4368 = vmatpush1.msra.mxu0 0.0
      %4369 = vmatprep.subr.mxu0 0.0
      %4370 = vmatpush1.msra.mxu0 0.0
      %4371 = vmatprep.subr.mxu0 0.0
      %4372 = vmatpush1.msra.mxu0 0.0
      %4373 = vmatprep.subr.mxu0 0.0
      %4374 = vmatpush1.msra.mxu0 0.0
      %4375 = vmatprep.subr.mxu0 0.0
      %4376 = vmatpush1.msra.mxu0 0.0
      %4377 = vmatprep.mubr.f32.mxu0 0.0
      %4378 = vmatmul.mubr.f32.gmra.mrb[0].mxu0 %v4311
      %v4379 = vpop.f32.mrb[0].mxu0
      %v4380 = vadd.f32 0.0, %v4379
      %v4381 = vpop.f32.mrb[0].mxu0
      %4382 = vdwg.mxu0
      %s4383 = scalar_lea.vmem %s10, 48
      %v4384 = vld [vmem:[%s4383] sm:$0xff]
      %v4386 = vsel %vm1026, %v4380, 0
      %4388 = vmatprep.subr.mxu0 0.0
      %4389 = vmatpush1.msra.mxu0 %v4384
      %4390 = vmatprep.subr.mxu0 0.0
      %4391 = vmatpush1.msra.mxu0 0.0
      %4392 = vmatprep.subr.mxu0 0.0
      %4393 = vmatpush1.msra.mxu0 0.0
      %4394 = vmatprep.subr.mxu0 0.0
      %4395 = vmatpush1.msra.mxu0 0.0
      %4396 = vmatprep.subr.mxu0 0.0
      %4397 = vmatpush1.msra.mxu0 0.0
      %4398 = vmatprep.subr.mxu0 0.0
      %4399 = vmatpush1.msra.mxu0 0.0
      %4400 = vmatprep.subr.mxu0 0.0
      %4401 = vmatpush1.msra.mxu0 0.0
      %4402 = vmatprep.subr.mxu0 0.0
      %4403 = vmatpush1.msra.mxu0 0.0
      %4404 = vmatprep.subr.mxu0 0.0
      %4405 = vmatpush1.msra.mxu0 0.0
      %4406 = vmatprep.subr.mxu0 0.0
      %4407 = vmatpush1.msra.mxu0 0.0
      %4408 = vmatprep.subr.mxu0 0.0
      %4409 = vmatpush1.msra.mxu0 0.0
      %4410 = vmatprep.subr.mxu0 0.0
      %4411 = vmatpush1.msra.mxu0 0.0
      %4412 = vmatprep.subr.mxu0 0.0
      %4413 = vmatpush1.msra.mxu0 0.0
      %4414 = vmatprep.subr.mxu0 0.0
      %4415 = vmatpush1.msra.mxu0 0.0
      %4416 = vmatprep.subr.mxu0 0.0
      %4417 = vmatpush1.msra.mxu0 0.0
      %4418 = vmatprep.subr.mxu0 0.0
      %4419 = vmatpush1.msra.mxu0 0.0
      %4420 = vmatprep.subr.mxu0 0.0
      %4421 = vmatpush1.msra.mxu0 0.0
      %4422 = vmatprep.subr.mxu0 0.0
      %4423 = vmatpush1.msra.mxu0 0.0
      %4424 = vmatprep.subr.mxu0 0.0
      %4425 = vmatpush1.msra.mxu0 0.0
      %4426 = vmatprep.subr.mxu0 0.0
      %4427 = vmatpush1.msra.mxu0 0.0
      %4428 = vmatprep.subr.mxu0 0.0
      %4429 = vmatpush1.msra.mxu0 0.0
      %4430 = vmatprep.subr.mxu0 0.0
      %4431 = vmatpush1.msra.mxu0 0.0
      %4432 = vmatprep.subr.mxu0 0.0
      %4433 = vmatpush1.msra.mxu0 0.0
      %4434 = vmatprep.subr.mxu0 0.0
      %4435 = vmatpush1.msra.mxu0 0.0
      %4436 = vmatprep.subr.mxu0 0.0
      %4437 = vmatpush1.msra.mxu0 0.0
      %4438 = vmatprep.subr.mxu0 0.0
      %4439 = vmatpush1.msra.mxu0 0.0
      %4440 = vmatprep.subr.mxu0 0.0
      %4441 = vmatpush1.msra.mxu0 0.0
      %4442 = vmatprep.subr.mxu0 0.0
      %4443 = vmatpush1.msra.mxu0 0.0
      %4444 = vmatprep.subr.mxu0 0.0
      %4445 = vmatpush1.msra.mxu0 0.0
      %4446 = vmatprep.subr.mxu0 0.0
      %4447 = vmatpush1.msra.mxu0 0.0
      %4448 = vmatprep.subr.mxu0 0.0
      %4449 = vmatpush1.msra.mxu0 0.0
      %4450 = vmatprep.subr.mxu0 0.0
      %4451 = vmatpush1.msra.mxu0 0.0
      %4452 = vmatprep.mubr.f32.mxu0 0.0
      %4453 = vmatmul.mubr.f32.gmra.mrb[0].mxu0 %v4386
      %v4454 = vpop.f32.mrb[0].mxu0
      %v4455 = vadd.f32 0.0, %v4454
      %v4456 = vpop.f32.mrb[0].mxu0
      %4457 = vdwg.mxu0
      %v4458 = vadd.f32 %v3969, %v4455
      %s4459 = scalar_lea.vmem %s4, 224
      %v4460 = vld [vmem:[%s4459] sm:$0xff]
      %v4461 = vld [vmem:[%s4459 + $0x8] sm:$0xff]
      %v4462 = vld [vmem:[%s4459 + $0x10] sm:$0xff]
      %v4463 = vld [vmem:[%s4459 + $0x18] sm:$0xff]
      %s4464 = scalar_lea.vmem %s5, 7
      %v4465 = vld [vmem:[%s4464] sm:$0x1]
      %v4467 = vlaneseq
      %v4468 = vshrl.u32 %v4467, 7
      %v4469 = vsub.s32 0, %v4468
      %v4470 = vrot.slane %v4465, %v4469
      %4472 = vmatprep.subr.mxu0 0.0
      %4473 = vmatpush1.msra.mxu0 %v4460
      %4474 = vmatprep.subr.mxu0 0.0
      %4475 = vmatpush1.msra.mxu0 %v4461
      %4476 = vmatprep.subr.mxu0 0.0
      %4477 = vmatpush1.msra.mxu0 %v4462
      %4478 = vmatprep.subr.mxu0 0.0
      %4479 = vmatpush1.msra.mxu0 %v4463
      %4480 = vmatprep.subr.mxu0 0.0
      %4481 = vmatpush1.msra.mxu0 0.0
      %4482 = vmatprep.subr.mxu0 0.0
      %4483 = vmatpush1.msra.mxu0 0.0
      %4484 = vmatprep.subr.mxu0 0.0
      %4485 = vmatpush1.msra.mxu0 0.0
      %4486 = vmatprep.subr.mxu0 0.0
      %4487 = vmatpush1.msra.mxu0 0.0
      %4488 = vmatprep.subr.mxu0 0.0
      %4489 = vmatpush1.msra.mxu0 0.0
      %4490 = vmatprep.subr.mxu0 0.0
      %4491 = vmatpush1.msra.mxu0 0.0
      %4492 = vmatprep.subr.mxu0 0.0
      %4493 = vmatpush1.msra.mxu0 0.0
      %4494 = vmatprep.subr.mxu0 0.0
      %4495 = vmatpush1.msra.mxu0 0.0
      %4496 = vmatprep.subr.mxu0 0.0
      %4497 = vmatpush1.msra.mxu0 0.0
      %4498 = vmatprep.subr.mxu0 0.0
      %4499 = vmatpush1.msra.mxu0 0.0
      %4500 = vmatprep.subr.mxu0 0.0
      %4501 = vmatpush1.msra.mxu0 0.0
      %4502 = vmatprep.subr.mxu0 0.0
      %4503 = vmatpush1.msra.mxu0 0.0
      %4504 = vmatprep.subr.mxu0 0.0
      %4505 = vmatpush1.msra.mxu0 0.0
      %4506 = vmatprep.subr.mxu0 0.0
      %4507 = vmatpush1.msra.mxu0 0.0
      %4508 = vmatprep.subr.mxu0 0.0
      %4509 = vmatpush1.msra.mxu0 0.0
      %4510 = vmatprep.subr.mxu0 0.0
      %4511 = vmatpush1.msra.mxu0 0.0
      %4512 = vmatprep.subr.mxu0 0.0
      %4513 = vmatpush1.msra.mxu0 0.0
      %4514 = vmatprep.subr.mxu0 0.0
      %4515 = vmatpush1.msra.mxu0 0.0
      %4516 = vmatprep.subr.mxu0 0.0
      %4517 = vmatpush1.msra.mxu0 0.0
      %4518 = vmatprep.subr.mxu0 0.0
      %4519 = vmatpush1.msra.mxu0 0.0
      %4520 = vmatprep.subr.mxu0 0.0
      %4521 = vmatpush1.msra.mxu0 0.0
      %4522 = vmatprep.subr.mxu0 0.0
      %4523 = vmatpush1.msra.mxu0 0.0
      %4524 = vmatprep.subr.mxu0 0.0
      %4525 = vmatpush1.msra.mxu0 0.0
      %4526 = vmatprep.subr.mxu0 0.0
      %4527 = vmatpush1.msra.mxu0 0.0
      %4528 = vmatprep.subr.mxu0 0.0
      %4529 = vmatpush1.msra.mxu0 0.0
      %4530 = vmatprep.subr.mxu0 0.0
      %4531 = vmatpush1.msra.mxu0 0.0
      %4532 = vmatprep.subr.mxu0 0.0
      %4533 = vmatpush1.msra.mxu0 0.0
      %4534 = vmatprep.subr.mxu0 0.0
      %4535 = vmatpush1.msra.mxu0 0.0
      %4536 = vmatprep.mubr.f32.mxu0 0.0
      %4537 = vmatmul.mubr.f32.gmra.mrb[0].mxu0 %v3011
      %v4538 = vpop.f32.mrb[0].mxu0
      %v4539 = vadd.f32 %v4470, %v4538
      %v4540 = vpop.f32.mrb[0].mxu0
      %4541 = vdwg.mxu0
      %s4542 = scalar_lea.vmem %s6, 224
      %v4543 = vld [vmem:[%s4542] sm:$0xff]
      %v4544 = vld [vmem:[%s4542 + $0x8] sm:$0xff]
      %v4545 = vld [vmem:[%s4542 + $0x10] sm:$0xff]
      %v4546 = vld [vmem:[%s4542 + $0x18] sm:$0xff]
      %s4547 = scalar_lea.vmem %s7, 7
      %v4548 = vld [vmem:[%s4547] sm:$0x1]
      %v4550 = vlaneseq
      %v4551 = vshrl.u32 %v4550, 7
      %v4552 = vsub.s32 0, %v4551
      %v4553 = vrot.slane %v4548, %v4552
      %4555 = vmatprep.subr.mxu0 0.0
      %4556 = vmatpush1.msra.mxu0 %v4543
      %4557 = vmatprep.subr.mxu0 0.0
      %4558 = vmatpush1.msra.mxu0 %v4544
      %4559 = vmatprep.subr.mxu0 0.0
      %4560 = vmatpush1.msra.mxu0 %v4545
      %4561 = vmatprep.subr.mxu0 0.0
      %4562 = vmatpush1.msra.mxu0 %v4546
      %4563 = vmatprep.subr.mxu0 0.0
      %4564 = vmatpush1.msra.mxu0 0.0
      %4565 = vmatprep.subr.mxu0 0.0
      %4566 = vmatpush1.msra.mxu0 0.0
      %4567 = vmatprep.subr.mxu0 0.0
      %4568 = vmatpush1.msra.mxu0 0.0
      %4569 = vmatprep.subr.mxu0 0.0
      %4570 = vmatpush1.msra.mxu0 0.0
      %4571 = vmatprep.subr.mxu0 0.0
      %4572 = vmatpush1.msra.mxu0 0.0
      %4573 = vmatprep.subr.mxu0 0.0
      %4574 = vmatpush1.msra.mxu0 0.0
      %4575 = vmatprep.subr.mxu0 0.0
      %4576 = vmatpush1.msra.mxu0 0.0
      %4577 = vmatprep.subr.mxu0 0.0
      %4578 = vmatpush1.msra.mxu0 0.0
      %4579 = vmatprep.subr.mxu0 0.0
      %4580 = vmatpush1.msra.mxu0 0.0
      %4581 = vmatprep.subr.mxu0 0.0
      %4582 = vmatpush1.msra.mxu0 0.0
      %4583 = vmatprep.subr.mxu0 0.0
      %4584 = vmatpush1.msra.mxu0 0.0
      %4585 = vmatprep.subr.mxu0 0.0
      %4586 = vmatpush1.msra.mxu0 0.0
      %4587 = vmatprep.subr.mxu0 0.0
      %4588 = vmatpush1.msra.mxu0 0.0
      %4589 = vmatprep.subr.mxu0 0.0
      %4590 = vmatpush1.msra.mxu0 0.0
      %4591 = vmatprep.subr.mxu0 0.0
      %4592 = vmatpush1.msra.mxu0 0.0
      %4593 = vmatprep.subr.mxu0 0.0
      %4594 = vmatpush1.msra.mxu0 0.0
      %4595 = vmatprep.subr.mxu0 0.0
      %4596 = vmatpush1.msra.mxu0 0.0
      %4597 = vmatprep.subr.mxu0 0.0
      %4598 = vmatpush1.msra.mxu0 0.0
      %4599 = vmatprep.subr.mxu0 0.0
      %4600 = vmatpush1.msra.mxu0 0.0
      %4601 = vmatprep.subr.mxu0 0.0
      %4602 = vmatpush1.msra.mxu0 0.0
      %4603 = vmatprep.subr.mxu0 0.0
      %4604 = vmatpush1.msra.mxu0 0.0
      %4605 = vmatprep.subr.mxu0 0.0
      %4606 = vmatpush1.msra.mxu0 0.0
      %4607 = vmatprep.subr.mxu0 0.0
      %4608 = vmatpush1.msra.mxu0 0.0
      %4609 = vmatprep.subr.mxu0 0.0
      %4610 = vmatpush1.msra.mxu0 0.0
      %4611 = vmatprep.subr.mxu0 0.0
      %4612 = vmatpush1.msra.mxu0 0.0
      %4613 = vmatprep.subr.mxu0 0.0
      %4614 = vmatpush1.msra.mxu0 0.0
      %4615 = vmatprep.subr.mxu0 0.0
      %4616 = vmatpush1.msra.mxu0 0.0
      %4617 = vmatprep.subr.mxu0 0.0
      %4618 = vmatpush1.msra.mxu0 0.0
      %4619 = vmatprep.mubr.f32.mxu0 0.0
      %4620 = vmatmul.mubr.f32.gmra.mrb[0].mxu0 %v3011
      %v4621 = vpop.f32.mrb[0].mxu0
      %v4622 = vadd.f32 %v4553, %v4621
      %v4623 = vpop.f32.mrb[0].mxu0
      %4624 = vdwg.mxu0
      %s4625 = scalar_lea.vmem %s8, 224
      %v4626 = vld [vmem:[%s4625] sm:$0xff]
      %v4627 = vld [vmem:[%s4625 + $0x8] sm:$0xff]
      %v4628 = vld [vmem:[%s4625 + $0x10] sm:$0xff]
      %v4629 = vld [vmem:[%s4625 + $0x18] sm:$0xff]
      %s4630 = scalar_lea.vmem %s9, 7
      %v4631 = vld [vmem:[%s4630] sm:$0x1]
      %v4633 = vlaneseq
      %v4634 = vshrl.u32 %v4633, 7
      %v4635 = vsub.s32 0, %v4634
      %v4636 = vrot.slane %v4631, %v4635
      %4638 = vmatprep.subr.mxu0 0.0
      %4639 = vmatpush1.msra.mxu0 %v4626
      %4640 = vmatprep.subr.mxu0 0.0
      %4641 = vmatpush1.msra.mxu0 %v4627
      %4642 = vmatprep.subr.mxu0 0.0
      %4643 = vmatpush1.msra.mxu0 %v4628
      %4644 = vmatprep.subr.mxu0 0.0
      %4645 = vmatpush1.msra.mxu0 %v4629
      %4646 = vmatprep.subr.mxu0 0.0
      %4647 = vmatpush1.msra.mxu0 0.0
      %4648 = vmatprep.subr.mxu0 0.0
      %4649 = vmatpush1.msra.mxu0 0.0
      %4650 = vmatprep.subr.mxu0 0.0
      %4651 = vmatpush1.msra.mxu0 0.0
      %4652 = vmatprep.subr.mxu0 0.0
      %4653 = vmatpush1.msra.mxu0 0.0
      %4654 = vmatprep.subr.mxu0 0.0
      %4655 = vmatpush1.msra.mxu0 0.0
      %4656 = vmatprep.subr.mxu0 0.0
      %4657 = vmatpush1.msra.mxu0 0.0
      %4658 = vmatprep.subr.mxu0 0.0
      %4659 = vmatpush1.msra.mxu0 0.0
      %4660 = vmatprep.subr.mxu0 0.0
      %4661 = vmatpush1.msra.mxu0 0.0
      %4662 = vmatprep.subr.mxu0 0.0
      %4663 = vmatpush1.msra.mxu0 0.0
      %4664 = vmatprep.subr.mxu0 0.0
      %4665 = vmatpush1.msra.mxu0 0.0
      %4666 = vmatprep.subr.mxu0 0.0
      %4667 = vmatpush1.msra.mxu0 0.0
      %4668 = vmatprep.subr.mxu0 0.0
      %4669 = vmatpush1.msra.mxu0 0.0
      %4670 = vmatprep.subr.mxu0 0.0
      %4671 = vmatpush1.msra.mxu0 0.0
      %4672 = vmatprep.subr.mxu0 0.0
      %4673 = vmatpush1.msra.mxu0 0.0
      %4674 = vmatprep.subr.mxu0 0.0
      %4675 = vmatpush1.msra.mxu0 0.0
      %4676 = vmatprep.subr.mxu0 0.0
      %4677 = vmatpush1.msra.mxu0 0.0
      %4678 = vmatprep.subr.mxu0 0.0
      %4679 = vmatpush1.msra.mxu0 0.0
      %4680 = vmatprep.subr.mxu0 0.0
      %4681 = vmatpush1.msra.mxu0 0.0
      %4682 = vmatprep.subr.mxu0 0.0
      %4683 = vmatpush1.msra.mxu0 0.0
      %4684 = vmatprep.subr.mxu0 0.0
      %4685 = vmatpush1.msra.mxu0 0.0
      %4686 = vmatprep.subr.mxu0 0.0
      %4687 = vmatpush1.msra.mxu0 0.0
      %4688 = vmatprep.subr.mxu0 0.0
      %4689 = vmatpush1.msra.mxu0 0.0
      %4690 = vmatprep.subr.mxu0 0.0
      %4691 = vmatpush1.msra.mxu0 0.0
      %4692 = vmatprep.subr.mxu0 0.0
      %4693 = vmatpush1.msra.mxu0 0.0
      %4694 = vmatprep.subr.mxu0 0.0
      %4695 = vmatpush1.msra.mxu0 0.0
      %4696 = vmatprep.subr.mxu0 0.0
      %4697 = vmatpush1.msra.mxu0 0.0
      %4698 = vmatprep.subr.mxu0 0.0
      %4699 = vmatpush1.msra.mxu0 0.0
      %4700 = vmatprep.subr.mxu0 0.0
      %4701 = vmatpush1.msra.mxu0 0.0
      %4702 = vmatprep.mubr.f32.mxu0 0.0
      %4703 = vmatmul.mubr.f32.gmra.mrb[0].mxu0 %v3011
      %v4704 = vpop.f32.mrb[0].mxu0
      %v4705 = vadd.f32 %v4636, %v4704
      %v4706 = vpop.f32.mrb[0].mxu0
      %4707 = vdwg.mxu0
      %v4709 = vsel %vm1026, %v4539, 0
      %v4712 = vsel %vm1026, %v4622, 0
      %4714 = vmatprep.subr.mxu0 0.0
      %4715 = vmatpush1.xpose.msra.mxu0 %v4712
      %4716 = vmatprep.subr.mxu0 0.0
      %4717 = vmatpush1.xpose.msra.mxu0 0.0
      %4718 = vmatprep.subr.mxu0 0.0
      %4719 = vmatpush1.xpose.msra.mxu0 0.0
      %4720 = vmatprep.subr.mxu0 0.0
      %4721 = vmatpush1.xpose.msra.mxu0 0.0
      %4722 = vmatprep.subr.mxu0 0.0
      %4723 = vmatpush1.xpose.msra.mxu0 0.0
      %4724 = vmatprep.subr.mxu0 0.0
      %4725 = vmatpush1.xpose.msra.mxu0 0.0
      %4726 = vmatprep.subr.mxu0 0.0
      %4727 = vmatpush1.xpose.msra.mxu0 0.0
      %4728 = vmatprep.subr.mxu0 0.0
      %4729 = vmatpush1.xpose.msra.mxu0 0.0
      %4730 = vmatprep.subr.mxu0 0.0
      %4731 = vmatpush1.xpose.msra.mxu0 0.0
      %4732 = vmatprep.subr.mxu0 0.0
      %4733 = vmatpush1.xpose.msra.mxu0 0.0
      %4734 = vmatprep.subr.mxu0 0.0
      %4735 = vmatpush1.xpose.msra.mxu0 0.0
      %4736 = vmatprep.subr.mxu0 0.0
      %4737 = vmatpush1.xpose.msra.mxu0 0.0
      %4738 = vmatprep.subr.mxu0 0.0
      %4739 = vmatpush1.xpose.msra.mxu0 0.0
      %4740 = vmatprep.subr.mxu0 0.0
      %4741 = vmatpush1.xpose.msra.mxu0 0.0
      %4742 = vmatprep.subr.mxu0 0.0
      %4743 = vmatpush1.xpose.msra.mxu0 0.0
      %4744 = vmatprep.subr.mxu0 0.0
      %4745 = vmatpush1.xpose.msra.mxu0 0.0
      %4746 = vmatprep.subr.mxu0 0.0
      %4747 = vmatpush1.xpose.msra.mxu0 0.0
      %4748 = vmatprep.subr.mxu0 0.0
      %4749 = vmatpush1.xpose.msra.mxu0 0.0
      %4750 = vmatprep.subr.mxu0 0.0
      %4751 = vmatpush1.xpose.msra.mxu0 0.0
      %4752 = vmatprep.subr.mxu0 0.0
      %4753 = vmatpush1.xpose.msra.mxu0 0.0
      %4754 = vmatprep.subr.mxu0 0.0
      %4755 = vmatpush1.xpose.msra.mxu0 0.0
      %4756 = vmatprep.subr.mxu0 0.0
      %4757 = vmatpush1.xpose.msra.mxu0 0.0
      %4758 = vmatprep.subr.mxu0 0.0
      %4759 = vmatpush1.xpose.msra.mxu0 0.0
      %4760 = vmatprep.subr.mxu0 0.0
      %4761 = vmatpush1.xpose.msra.mxu0 0.0
      %4762 = vmatprep.subr.mxu0 0.0
      %4763 = vmatpush1.xpose.msra.mxu0 0.0
      %4764 = vmatprep.subr.mxu0 0.0
      %4765 = vmatpush1.xpose.msra.mxu0 0.0
      %4766 = vmatprep.subr.mxu0 0.0
      %4767 = vmatpush1.xpose.msra.mxu0 0.0
      %4768 = vmatprep.subr.mxu0 0.0
      %4769 = vmatpush1.xpose.msra.mxu0 0.0
      %4770 = vmatprep.subr.mxu0 0.0
      %4771 = vmatpush1.xpose.msra.mxu0 0.0
      %4772 = vmatprep.subr.mxu0 0.0
      %4773 = vmatpush1.xpose.msra.mxu0 0.0
      %4774 = vmatprep.subr.mxu0 0.0
      %4775 = vmatpush1.xpose.msra.mxu0 0.0
      %4776 = vmatprep.subr.mxu0 0.0
      %4777 = vmatpush1.xpose.msra.mxu0 0.0
      %4778 = vmatprep.mubr.f32.mxu0 0.0
      %4779 = vmatmul.mubr.f32.gmra.mrb[0].mxu0 %v4709
      %v4780 = vpop.f32.mrb[0].mxu0
      %v4781 = vadd.f32 0.0, %v4780
      %v4782 = vpop.f32.mrb[0].mxu0
      %4783 = vdwg.mxu0
      %v4784 = vmul.f32 %v4781, 0.35355338
      %v4785 = vadd.f32 %v4784, %v1108
      %v4786 = vsel %vm1026, %v4785, -inf
      %4787 = vmax.xlane.f32.xlu0 %v4786
      %v4788 = vpop.xlane.xlu0 %4787
      %v4789 = vsub.f32 %v4785, %v4788
      %v4790 = vmul.f32 %v4789, 1.442695
      %v4791 = vpow.pop %v4790
      %v4792 = vsel %vm1026, %v4791, 0.0
      %4793 = vadd.xlane.f32.xlu0 %v4792
      %v4794 = vpop.xlane.xlu0 %4793
      %v4795 = vrcp.pop %v4794
      %v4796 = vmul.f32 %v4791, %v4795
      %v4798 = vsel %vm1026, %v4796, 0
      %4800 = vmatprep.subr.mxu0 0.0
      %4801 = vmatpush1.msra.mxu0 %v4705
      %4802 = vmatprep.subr.mxu0 0.0
      %4803 = vmatpush1.msra.mxu0 0.0
      %4804 = vmatprep.subr.mxu0 0.0
      %4805 = vmatpush1.msra.mxu0 0.0
      %4806 = vmatprep.subr.mxu0 0.0
      %4807 = vmatpush1.msra.mxu0 0.0
      %4808 = vmatprep.subr.mxu0 0.0
      %4809 = vmatpush1.msra.mxu0 0.0
      %4810 = vmatprep.subr.mxu0 0.0
      %4811 = vmatpush1.msra.mxu0 0.0
      %4812 = vmatprep.subr.mxu0 0.0
      %4813 = vmatpush1.msra.mxu0 0.0
      %4814 = vmatprep.subr.mxu0 0.0
      %4815 = vmatpush1.msra.mxu0 0.0
      %4816 = vmatprep.subr.mxu0 0.0
      %4817 = vmatpush1.msra.mxu0 0.0
      %4818 = vmatprep.subr.mxu0 0.0
      %4819 = vmatpush1.msra.mxu0 0.0
      %4820 = vmatprep.subr.mxu0 0.0
      %4821 = vmatpush1.msra.mxu0 0.0
      %4822 = vmatprep.subr.mxu0 0.0
      %4823 = vmatpush1.msra.mxu0 0.0
      %4824 = vmatprep.subr.mxu0 0.0
      %4825 = vmatpush1.msra.mxu0 0.0
      %4826 = vmatprep.subr.mxu0 0.0
      %4827 = vmatpush1.msra.mxu0 0.0
      %4828 = vmatprep.subr.mxu0 0.0
      %4829 = vmatpush1.msra.mxu0 0.0
      %4830 = vmatprep.subr.mxu0 0.0
      %4831 = vmatpush1.msra.mxu0 0.0
      %4832 = vmatprep.subr.mxu0 0.0
      %4833 = vmatpush1.msra.mxu0 0.0
      %4834 = vmatprep.subr.mxu0 0.0
      %4835 = vmatpush1.msra.mxu0 0.0
      %4836 = vmatprep.subr.mxu0 0.0
      %4837 = vmatpush1.msra.mxu0 0.0
      %4838 = vmatprep.subr.mxu0 0.0
      %4839 = vmatpush1.msra.mxu0 0.0
      %4840 = vmatprep.subr.mxu0 0.0
      %4841 = vmatpush1.msra.mxu0 0.0
      %4842 = vmatprep.subr.mxu0 0.0
      %4843 = vmatpush1.msra.mxu0 0.0
      %4844 = vmatprep.subr.mxu0 0.0
      %4845 = vmatpush1.msra.mxu0 0.0
      %4846 = vmatprep.subr.mxu0 0.0
      %4847 = vmatpush1.msra.mxu0 0.0
      %4848 = vmatprep.subr.mxu0 0.0
      %4849 = vmatpush1.msra.mxu0 0.0
      %4850 = vmatprep.subr.mxu0 0.0
      %4851 = vmatpush1.msra.mxu0 0.0
      %4852 = vmatprep.subr.mxu0 0.0
      %4853 = vmatpush1.msra.mxu0 0.0
      %4854 = vmatprep.subr.mxu0 0.0
      %4855 = vmatpush1.msra.mxu0 0.0
      %4856 = vmatprep.subr.mxu0 0.0
      %4857 = vmatpush1.msra.mxu0 0.0
      %4858 = vmatprep.subr.mxu0 0.0
      %4859 = vmatpush1.msra.mxu0 0.0
      %4860 = vmatprep.subr.mxu0 0.0
      %4861 = vmatpush1.msra.mxu0 0.0
      %4862 = vmatprep.subr.mxu0 0.0
      %4863 = vmatpush1.msra.mxu0 0.0
      %4864 = vmatprep.mubr.f32.mxu0 0.0
      %4865 = vmatmul.mubr.f32.gmra.mrb[0].mxu0 %v4798
      %v4866 = vpop.f32.mrb[0].mxu0
      %v4867 = vadd.f32 0.0, %v4866
      %v4868 = vpop.f32.mrb[0].mxu0
      %4869 = vdwg.mxu0
      %s4870 = scalar_lea.vmem %s10, 56
      %v4871 = vld [vmem:[%s4870] sm:$0xff]
      %v4873 = vsel %vm1026, %v4867, 0
      %4875 = vmatprep.subr.mxu0 0.0
      %4876 = vmatpush1.msra.mxu0 %v4871
      %4877 = vmatprep.subr.mxu0 0.0
      %4878 = vmatpush1.msra.mxu0 0.0
      %4879 = vmatprep.subr.mxu0 0.0
      %4880 = vmatpush1.msra.mxu0 0.0
      %4881 = vmatprep.subr.mxu0 0.0
      %4882 = vmatpush1.msra.mxu0 0.0
      %4883 = vmatprep.subr.mxu0 0.0
      %4884 = vmatpush1.msra.mxu0 0.0
      %4885 = vmatprep.subr.mxu0 0.0
      %4886 = vmatpush1.msra.mxu0 0.0
      %4887 = vmatprep.subr.mxu0 0.0
      %4888 = vmatpush1.msra.mxu0 0.0
      %4889 = vmatprep.subr.mxu0 0.0
      %4890 = vmatpush1.msra.mxu0 0.0
      %4891 = vmatprep.subr.mxu0 0.0
      %4892 = vmatpush1.msra.mxu0 0.0
      %4893 = vmatprep.subr.mxu0 0.0
      %4894 = vmatpush1.msra.mxu0 0.0
      %4895 = vmatprep.subr.mxu0 0.0
      %4896 = vmatpush1.msra.mxu0 0.0
      %4897 = vmatprep.subr.mxu0 0.0
      %4898 = vmatpush1.msra.mxu0 0.0
      %4899 = vmatprep.subr.mxu0 0.0
      %4900 = vmatpush1.msra.mxu0 0.0
      %4901 = vmatprep.subr.mxu0 0.0
      %4902 = vmatpush1.msra.mxu0 0.0
      %4903 = vmatprep.subr.mxu0 0.0
      %4904 = vmatpush1.msra.mxu0 0.0
      %4905 = vmatprep.subr.mxu0 0.0
      %4906 = vmatpush1.msra.mxu0 0.0
      %4907 = vmatprep.subr.mxu0 0.0
      %4908 = vmatpush1.msra.mxu0 0.0
      %4909 = vmatprep.subr.mxu0 0.0
      %4910 = vmatpush1.msra.mxu0 0.0
      %4911 = vmatprep.subr.mxu0 0.0
      %4912 = vmatpush1.msra.mxu0 0.0
      %4913 = vmatprep.subr.mxu0 0.0
      %4914 = vmatpush1.msra.mxu0 0.0
      %4915 = vmatprep.subr.mxu0 0.0
      %4916 = vmatpush1.msra.mxu0 0.0
      %4917 = vmatprep.subr.mxu0 0.0
      %4918 = vmatpush1.msra.mxu0 0.0
      %4919 = vmatprep.subr.mxu0 0.0
      %4920 = vmatpush1.msra.mxu0 0.0
      %4921 = vmatprep.subr.mxu0 0.0
      %4922 = vmatpush1.msra.mxu0 0.0
      %4923 = vmatprep.subr.mxu0 0.0
      %4924 = vmatpush1.msra.mxu0 0.0
      %4925 = vmatprep.subr.mxu0 0.0
      %4926 = vmatpush1.msra.mxu0 0.0
      %4927 = vmatprep.subr.mxu0 0.0
      %4928 = vmatpush1.msra.mxu0 0.0
      %4929 = vmatprep.subr.mxu0 0.0
      %4930 = vmatpush1.msra.mxu0 0.0
      %4931 = vmatprep.subr.mxu0 0.0
      %4932 = vmatpush1.msra.mxu0 0.0
      %4933 = vmatprep.subr.mxu0 0.0
      %4934 = vmatpush1.msra.mxu0 0.0
      %4935 = vmatprep.subr.mxu0 0.0
      %4936 = vmatpush1.msra.mxu0 0.0
      %4937 = vmatprep.subr.mxu0 0.0
      %4938 = vmatpush1.msra.mxu0 0.0
      %4939 = vmatprep.mubr.f32.mxu0 0.0
      %4940 = vmatmul.mubr.f32.gmra.mrb[0].mxu0 %v4873
      %v4941 = vpop.f32.mrb[0].mxu0
      %v4942 = vadd.f32 0.0, %v4941
      %v4943 = vpop.f32.mrb[0].mxu0
      %4944 = vdwg.mxu0
      %v4945 = vadd.f32 %v4458, %v4942
      %s4946 = scalar_lea.vmem %s11, 1
      %v4947 = vld [vmem:[%s4946] sm:$0x1]
      %v4949 = vlaneseq
      %v4950 = vshrl.u32 %v4949, 7
      %v4951 = vsub.s32 0, %v4950
      %v4952 = vrot.slane %v4947, %v4951
      %v4954 = vadd.f32 %v4945, %v4952
      %v4955 = vadd.f32 %v2996, %v4954
      %s4956 = scalar_lea.vmem %s12, 1
      %v4957 = vld [vmem:[%s4956] sm:$0x1]
      %s4958 = scalar_lea.vmem %s13, 1
      %v4959 = vld [vmem:[%s4958] sm:$0x1]
      %v4960 = vsel %vm751, %v4955, 0.0
      %4961 = vadd.xlane.f32.xlu0 %v4960
      %v4962 = vpop.xlane.xlu0 %4961
      %v4963 = vmul.f32 %v4962, %v755
      %v4964 = vsub.f32 %v4955, %v4963
      %v4965 = vmul.f32 %v4964, %v4964
      %v4966 = vsel %vm751, %v4965, 0.0
      %4967 = vadd.xlane.f32.xlu0 %v4966
      %v4968 = vpop.xlane.xlu0 %4967
      %v4969 = vmul.f32 %v4968, %v755
      %v4970 = vadd.f32 %v4969, 1e-12
      %v4971 = vrsqrt.pop %v4970
      %v4972 = vmul.f32 %v4964, %v4971
      %v4974 = vlaneseq
      %v4975 = vshrl.u32 %v4974, 7
      %v4976 = vsub.s32 0, %v4975
      %v4977 = vrot.slane %v4957, %v4976
      %v4979 = vmul.f32 %v4972, %v4977
      %v4981 = vlaneseq
      %v4982 = vshrl.u32 %v4981, 7
      %v4983 = vsub.s32 0, %v4982
      %v4984 = vrot.slane %v4959, %v4983
      %v4986 = vadd.f32 %v4979, %v4984
      %s4987 = scalar_lea.vmem %s14, 32
      %v4988 = vld [vmem:[%s4987] sm:$0xff]
      %v4989 = vld [vmem:[%s4987 + $0x8] sm:$0xff]
      %v4990 = vld [vmem:[%s4987 + $0x10] sm:$0xff]
      %v4991 = vld [vmem:[%s4987 + $0x18] sm:$0xff]
      %s4992 = scalar_lea.vmem %s15, 1
      %v4993 = vld [vmem:[%s4992] sm:$0x1]
      %v4995 = vlaneseq
      %v4996 = vshrl.u32 %v4995, 7
      %v4997 = vsub.s32 0, %v4996
      %v4998 = vrot.slane %v4993, %v4997
      %v5001 = vsel %vm751, %v4986, 0
      %5003 = vmatprep.subr.mxu0 0.0
      %5004 = vmatpush1.msra.mxu0 %v4988
      %5005 = vmatprep.subr.mxu0 0.0
      %5006 = vmatpush1.msra.mxu0 %v4989
      %5007 = vmatprep.subr.mxu0 0.0
      %5008 = vmatpush1.msra.mxu0 %v4990
      %5009 = vmatprep.subr.mxu0 0.0
      %5010 = vmatpush1.msra.mxu0 %v4991
      %5011 = vmatprep.subr.mxu0 0.0
      %5012 = vmatpush1.msra.mxu0 0.0
      %5013 = vmatprep.subr.mxu0 0.0
      %5014 = vmatpush1.msra.mxu0 0.0
      %5015 = vmatprep.subr.mxu0 0.0
      %5016 = vmatpush1.msra.mxu0 0.0
      %5017 = vmatprep.subr.mxu0 0.0
      %5018 = vmatpush1.msra.mxu0 0.0
      %5019 = vmatprep.subr.mxu0 0.0
      %5020 = vmatpush1.msra.mxu0 0.0
      %5021 = vmatprep.subr.mxu0 0.0
      %5022 = vmatpush1.msra.mxu0 0.0
      %5023 = vmatprep.subr.mxu0 0.0
      %5024 = vmatpush1.msra.mxu0 0.0
      %5025 = vmatprep.subr.mxu0 0.0
      %5026 = vmatpush1.msra.mxu0 0.0
      %5027 = vmatprep.subr.mxu0 0.0
      %5028 = vmatpush1.msra.mxu0 0.0
      %5029 = vmatprep.subr.mxu0 0.0
      %5030 = vmatpush1.msra.mxu0 0.0
      %5031 = vmatprep.subr.mxu0 0.0
      %5032 = vmatpush1.msra.mxu0 0.0
      %5033 = vmatprep.subr.mxu0 0.0
      %5034 = vmatpush1.msra.mxu0 0.0
      %5035 = vmatprep.subr.mxu0 0.0
      %5036 = vmatpush1.msra.mxu0 0.0
      %5037 = vmatprep.subr.mxu0 0.0
      %5038 = vmatpush1.msra.mxu0 0.0
      %5039 = vmatprep.subr.mxu0 0.0
      %5040 = vmatpush1.msra.mxu0 0.0
      %5041 = vmatprep.subr.mxu0 0.0
      %5042 = vmatpush1.msra.mxu0 0.0
      %5043 = vmatprep.subr.mxu0 0.0
      %5044 = vmatpush1.msra.mxu0 0.0
      %5045 = vmatprep.subr.mxu0 0.0
      %5046 = vmatpush1.msra.mxu0 0.0
      %5047 = vmatprep.subr.mxu0 0.0
      %5048 = vmatpush1.msra.mxu0 0.0
      %5049 = vmatprep.subr.mxu0 0.0
      %5050 = vmatpush1.msra.mxu0 0.0
      %5051 = vmatprep.subr.mxu0 0.0
      %5052 = vmatpush1.msra.mxu0 0.0
      %5053 = vmatprep.subr.mxu0 0.0
      %5054 = vmatpush1.msra.mxu0 0.0
      %5055 = vmatprep.subr.mxu0 0.0
      %5056 = vmatpush1.msra.mxu0 0.0
      %5057 = vmatprep.subr.mxu0 0.0
      %5058 = vmatpush1.msra.mxu0 0.0
      %5059 = vmatprep.subr.mxu0 0.0
      %5060 = vmatpush1.msra.mxu0 0.0
      %5061 = vmatprep.subr.mxu0 0.0
      %5062 = vmatpush1.msra.mxu0 0.0
      %5063 = vmatprep.subr.mxu0 0.0
      %5064 = vmatpush1.msra.mxu0 0.0
      %5065 = vmatprep.subr.mxu0 0.0
      %5066 = vmatpush1.msra.mxu0 0.0
      %5067 = vmatprep.mubr.f32.mxu0 0.0
      %5068 = vmatmul.mubr.f32.gmra.mrb[0].mxu0 %v5001
      %v5069 = vpop.f32.mrb[0].mxu0
      %v5070 = vadd.f32 %v4998, %v5069
      %v5071 = vpop.f32.mrb[0].mxu0
      %5072 = vdwg.mxu0
      %vm5073 = vcmp.ge.f32.partialorder %v5070, 0.0
      %v5074 = vsel %vm5073, 1.0, -1.0
      %v5075 = vmul.f32 %v5070, %v5074
      %v5076 = vmul.f32 %v5075, 0.70710677
      %v5077 = vmul.f32 %v5076, 0.3275911
      %v5078 = vadd.f32 %v5077, 1.0
      %v5079 = vrcp.pop %v5078
      %v5080 = vmul.f32 1.0, %v5079
      %v5081 = vmul.f32 %v5080, 1.0614054
      %v5082 = vsub.f32 %v5081, 1.4531521
      %v5083 = vmul.f32 %v5082, %v5080
      %v5084 = vadd.f32 %v5083, 1.4214138
      %v5085 = vmul.f32 %v5084, %v5080
      %v5086 = vsub.f32 %v5085, 0.28449672
      %v5087 = vmul.f32 %v5086, %v5080
      %v5088 = vadd.f32 %v5087, 0.2548296
      %v5089 = vmul.f32 %v5088, %v5080
      %v5090 = vsub.f32 0.0, %v5076
      %v5091 = vmul.f32 %v5090, %v5076
      %v5092 = vmul.f32 %v5091, 1.442695
      %v5093 = vpow.pop %v5092
      %v5094 = vmul.f32 %v5089, %v5093
      %v5095 = vsub.f32 1.0, %v5094
      %v5096 = vmul.f32 %v5074, %v5095
      %v5097 = vmul.f32 %v5070, 0.5
      %v5098 = vadd.f32 %v5096, 1.0
      %v5099 = vmul.f32 %v5097, %v5098
      %s5100 = scalar_lea.vmem %s16, 64
      %v5101 = vld [vmem:[%s5100] sm:$0xff]
      %v5102 = vld [vmem:[%s5100 + $0x8] sm:$0xff]
      %v5103 = vld [vmem:[%s5100 + $0x10] sm:$0xff]
      %v5104 = vld [vmem:[%s5100 + $0x18] sm:$0xff]
      %v5105 = vld [vmem:[%s5100 + $0x20] sm:$0xff]
      %v5106 = vld [vmem:[%s5100 + $0x28] sm:$0xff]
      %v5107 = vld [vmem:[%s5100 + $0x30] sm:$0xff]
      %v5108 = vld [vmem:[%s5100 + $0x38] sm:$0xff]
      %s5109 = scalar_lea.vmem %s17, 1
      %v5110 = vld [vmem:[%s5109] sm:$0x1]
      %v5112 = vlaneseq
      %v5113 = vshrl.u32 %v5112, 7
      %v5114 = vsub.s32 0, %v5113
      %v5115 = vrot.slane %v5110, %v5114
      %v5118 = vsel %vm2893, %v5099, 0
      %5120 = vmatprep.subr.mxu0 0.0
      %5121 = vmatpush1.msra.mxu0 %v5101
      %5122 = vmatprep.subr.mxu0 0.0
      %5123 = vmatpush1.msra.mxu0 %v5102
      %5124 = vmatprep.subr.mxu0 0.0
      %5125 = vmatpush1.msra.mxu0 %v5103
      %5126 = vmatprep.subr.mxu0 0.0
      %5127 = vmatpush1.msra.mxu0 %v5104
      %5128 = vmatprep.subr.mxu0 0.0
      %5129 = vmatpush1.msra.mxu0 %v5105
      %5130 = vmatprep.subr.mxu0 0.0
      %5131 = vmatpush1.msra.mxu0 %v5106
      %5132 = vmatprep.subr.mxu0 0.0
      %5133 = vmatpush1.msra.mxu0 %v5107
      %5134 = vmatprep.subr.mxu0 0.0
      %5135 = vmatpush1.msra.mxu0 %v5108
      %5136 = vmatprep.subr.mxu0 0.0
      %5137 = vmatpush1.msra.mxu0 0.0
      %5138 = vmatprep.subr.mxu0 0.0
      %5139 = vmatpush1.msra.mxu0 0.0
      %5140 = vmatprep.subr.mxu0 0.0
      %5141 = vmatpush1.msra.mxu0 0.0
      %5142 = vmatprep.subr.mxu0 0.0
      %5143 = vmatpush1.msra.mxu0 0.0
      %5144 = vmatprep.subr.mxu0 0.0
      %5145 = vmatpush1.msra.mxu0 0.0
      %5146 = vmatprep.subr.mxu0 0.0
      %5147 = vmatpush1.msra.mxu0 0.0
      %5148 = vmatprep.subr.mxu0 0.0
      %5149 = vmatpush1.msra.mxu0 0.0
      %5150 = vmatprep.subr.mxu0 0.0
      %5151 = vmatpush1.msra.mxu0 0.0
      %5152 = vmatprep.subr.mxu0 0.0
      %5153 = vmatpush1.msra.mxu0 0.0
      %5154 = vmatprep.subr.mxu0 0.0
      %5155 = vmatpush1.msra.mxu0 0.0
      %5156 = vmatprep.subr.mxu0 0.0
      %5157 = vmatpush1.msra.mxu0 0.0
      %5158 = vmatprep.subr.mxu0 0.0
      %5159 = vmatpush1.msra.mxu0 0.0
      %5160 = vmatprep.subr.mxu0 0.0
      %5161 = vmatpush1.msra.mxu0 0.0
      %5162 = vmatprep.subr.mxu0 0.0
      %5163 = vmatpush1.msra.mxu0 0.0
      %5164 = vmatprep.subr.mxu0 0.0
      %5165 = vmatpush1.msra.mxu0 0.0
      %5166 = vmatprep.subr.mxu0 0.0
      %5167 = vmatpush1.msra.mxu0 0.0
      %5168 = vmatprep.subr.mxu0 0.0
      %5169 = vmatpush1.msra.mxu0 0.0
      %5170 = vmatprep.subr.mxu0 0.0
      %5171 = vmatpush1.msra.mxu0 0.0
      %5172 = vmatprep.subr.mxu0 0.0
      %5173 = vmatpush1.msra.mxu0 0.0
      %5174 = vmatprep.subr.mxu0 0.0
      %5175 = vmatpush1.msra.mxu0 0.0
      %5176 = vmatprep.subr.mxu0 0.0
      %5177 = vmatpush1.msra.mxu0 0.0
      %5178 = vmatprep.subr.mxu0 0.0
      %5179 = vmatpush1.msra.mxu0 0.0
      %5180 = vmatprep.subr.mxu0 0.0
      %5181 = vmatpush1.msra.mxu0 0.0
      %5182 = vmatprep.subr.mxu0 0.0
      %5183 = vmatpush1.msra.mxu0 0.0
      %5184 = vmatprep.mubr.f32.mxu0 0.0
      %5185 = vmatmul.mubr.f32.gmra.mrb[0].mxu0 %v5118
      %v5186 = vpop.f32.mrb[0].mxu0
      %v5187 = vadd.f32 %v5115, %v5186
      %v5188 = vpop.f32.mrb[0].mxu0
      %5189 = vdwg.mxu0
      %v5190 = vadd.f32 %v4986, %v5187
      %s5191 = scalar_lea.vmem %s18, 1
      %v5192 = vld [vmem:[%s5191] sm:$0x1]
      %s5193 = scalar_lea.vmem %s19, 1
      %v5194 = vld [vmem:[%s5193] sm:$0x1]
      %v5195 = vsel %vm751, %v5190, 0.0
      %5196 = vadd.xlane.f32.xlu0 %v5195
      %v5197 = vpop.xlane.xlu0 %5196
      %v5198 = vmul.f32 %v5197, %v755
      %v5199 = vsub.f32 %v5190, %v5198
      %v5200 = vmul.f32 %v5199, %v5199
      %v5201 = vsel %vm751, %v5200, 0.0
      %5202 = vadd.xlane.f32.xlu0 %v5201
      %v5203 = vpop.xlane.xlu0 %5202
      %v5204 = vmul.f32 %v5203, %v755
      %v5205 = vadd.f32 %v5204, 1e-12
      %v5206 = vrsqrt.pop %v5205
      %v5207 = vmul.f32 %v5199, %v5206
      %v5209 = vlaneseq
      %v5210 = vshrl.u32 %v5209, 7
      %v5211 = vsub.s32 0, %v5210
      %v5212 = vrot.slane %v5192, %v5211
      %v5214 = vmul.f32 %v5207, %v5212
      %v5216 = vlaneseq
      %v5217 = vshrl.u32 %v5216, 7
      %v5218 = vsub.s32 0, %v5217
      %v5219 = vrot.slane %v5194, %v5218
      %v5221 = vadd.f32 %v5214, %v5219
      %v5222 = vld [vmem:[%s20] sm:$0xff]
      %v5223 = vld [vmem:[%s20 + $0x8] sm:$0xff]
      %v5224 = vld [vmem:[%s20 + $0x10] sm:$0xff]
      %v5225 = vld [vmem:[%s20 + $0x18] sm:$0xff]
      %v5226 = vld [vmem:[%s21] sm:$0x1]
      %v5228 = vsel %vm751, %v5221, 0
      %5230 = vmatprep.subr.mxu0 0.0
      %5231 = vmatpush1.msra.mxu0 %v5222
      %5232 = vmatprep.subr.mxu0 0.0
      %5233 = vmatpush1.msra.mxu0 %v5223
      %5234 = vmatprep.subr.mxu0 0.0
      %5235 = vmatpush1.msra.mxu0 %v5224
      %5236 = vmatprep.subr.mxu0 0.0
      %5237 = vmatpush1.msra.mxu0 %v5225
      %5238 = vmatprep.subr.mxu0 0.0
      %5239 = vmatpush1.msra.mxu0 0.0
      %5240 = vmatprep.subr.mxu0 0.0
      %5241 = vmatpush1.msra.mxu0 0.0
      %5242 = vmatprep.subr.mxu0 0.0
      %5243 = vmatpush1.msra.mxu0 0.0
      %5244 = vmatprep.subr.mxu0 0.0
      %5245 = vmatpush1.msra.mxu0 0.0
      %5246 = vmatprep.subr.mxu0 0.0
      %5247 = vmatpush1.msra.mxu0 0.0
      %5248 = vmatprep.subr.mxu0 0.0
      %5249 = vmatpush1.msra.mxu0 0.0
      %5250 = vmatprep.subr.mxu0 0.0
      %5251 = vmatpush1.msra.mxu0 0.0
      %5252 = vmatprep.subr.mxu0 0.0
      %5253 = vmatpush1.msra.mxu0 0.0
      %5254 = vmatprep.subr.mxu0 0.0
      %5255 = vmatpush1.msra.mxu0 0.0
      %5256 = vmatprep.subr.mxu0 0.0
      %5257 = vmatpush1.msra.mxu0 0.0
      %5258 = vmatprep.subr.mxu0 0.0
      %5259 = vmatpush1.msra.mxu0 0.0
      %5260 = vmatprep.subr.mxu0 0.0
      %5261 = vmatpush1.msra.mxu0 0.0
      %5262 = vmatprep.subr.mxu0 0.0
      %5263 = vmatpush1.msra.mxu0 0.0
      %5264 = vmatprep.subr.mxu0 0.0
      %5265 = vmatpush1.msra.mxu0 0.0
      %5266 = vmatprep.subr.mxu0 0.0
      %5267 = vmatpush1.msra.mxu0 0.0
      %5268 = vmatprep.subr.mxu0 0.0
      %5269 = vmatpush1.msra.mxu0 0.0
      %5270 = vmatprep.subr.mxu0 0.0
      %5271 = vmatpush1.msra.mxu0 0.0
      %5272 = vmatprep.subr.mxu0 0.0
      %5273 = vmatpush1.msra.mxu0 0.0
      %5274 = vmatprep.subr.mxu0 0.0
      %5275 = vmatpush1.msra.mxu0 0.0
      %5276 = vmatprep.subr.mxu0 0.0
      %5277 = vmatpush1.msra.mxu0 0.0
      %5278 = vmatprep.subr.mxu0 0.0
      %5279 = vmatpush1.msra.mxu0 0.0
      %5280 = vmatprep.subr.mxu0 0.0
      %5281 = vmatpush1.msra.mxu0 0.0
      %5282 = vmatprep.subr.mxu0 0.0
      %5283 = vmatpush1.msra.mxu0 0.0
      %5284 = vmatprep.subr.mxu0 0.0
      %5285 = vmatpush1.msra.mxu0 0.0
      %5286 = vmatprep.subr.mxu0 0.0
      %5287 = vmatpush1.msra.mxu0 0.0
      %5288 = vmatprep.subr.mxu0 0.0
      %5289 = vmatpush1.msra.mxu0 0.0
      %5290 = vmatprep.subr.mxu0 0.0
      %5291 = vmatpush1.msra.mxu0 0.0
      %5292 = vmatprep.subr.mxu0 0.0
      %5293 = vmatpush1.msra.mxu0 0.0
      %5294 = vmatprep.mubr.f32.mxu0 0.0
      %5295 = vmatmul.mubr.f32.gmra.mrb[0].mxu0 %v5228
      %v5296 = vpop.f32.mrb[0].mxu0
      %v5297 = vadd.f32 %v5226, %v5296
      %v5298 = vpop.f32.mrb[0].mxu0
      %5299 = vdwg.mxu0
      %v5300 = vtanh.pop %v5297
      %v5301 = vld [vmem:[%s22] sm:$0xff]
      %v5302 = vld [vmem:[%s22 + $0x8] sm:$0xff]
      %v5303 = vld [vmem:[%s22 + $0x10] sm:$0xff]
      %v5304 = vld [vmem:[%s22 + $0x18] sm:$0xff]
      %v5305 = vld [vmem:[#allocation2] sm:$0x1]
      %v5307 = vsel %vm751, %v5300, 0
      %5309 = vmatprep.subr.mxu0 0.0
      %5310 = vmatpush1.msra.mxu0 %v5301
      %5311 = vmatprep.subr.mxu0 0.0
      %5312 = vmatpush1.msra.mxu0 %v5302
      %5313 = vmatprep.subr.mxu0 0.0
      %5314 = vmatpush1.msra.mxu0 %v5303
      %5315 = vmatprep.subr.mxu0 0.0
      %5316 = vmatpush1.msra.mxu0 %v5304
      %5317 = vmatprep.subr.mxu0 0.0
      %5318 = vmatpush1.msra.mxu0 0.0
      %5319 = vmatprep.subr.mxu0 0.0
      %5320 = vmatpush1.msra.mxu0 0.0
      %5321 = vmatprep.subr.mxu0 0.0
      %5322 = vmatpush1.msra.mxu0 0.0
      %5323 = vmatprep.subr.mxu0 0.0
      %5324 = vmatpush1.msra.mxu0 0.0
      %5325 = vmatprep.subr.mxu0 0.0
      %5326 = vmatpush1.msra.mxu0 0.0
      %5327 = vmatprep.subr.mxu0 0.0
      %5328 = vmatpush1.msra.mxu0 0.0
      %5329 = vmatprep.subr.mxu0 0.0
      %5330 = vmatpush1.msra.mxu0 0.0
      %5331 = vmatprep.subr.mxu0 0.0
      %5332 = vmatpush1.msra.mxu0 0.0
      %5333 = vmatprep.subr.mxu0 0.0
      %5334 = vmatpush1.msra.mxu0 0.0
      %5335 = vmatprep.subr.mxu0 0.0
      %5336 = vmatpush1.msra.mxu0 0.0
      %5337 = vmatprep.subr.mxu0 0.0
      %5338 = vmatpush1.msra.mxu0 0.0
      %5339 = vmatprep.subr.mxu0 0.0
      %5340 = vmatpush1.msra.mxu0 0.0
      %5341 = vmatprep.subr.mxu0 0.0
      %5342 = vmatpush1.msra.mxu0 0.0
      %5343 = vmatprep.subr.mxu0 0.0
      %5344 = vmatpush1.msra.mxu0 0.0
      %5345 = vmatprep.subr.mxu0 0.0
      %5346 = vmatpush1.msra.mxu0 0.0
      %5347 = vmatprep.subr.mxu0 0.0
      %5348 = vmatpush1.msra.mxu0 0.0
      %5349 = vmatprep.subr.mxu0 0.0
      %5350 = vmatpush1.msra.mxu0 0.0
      %5351 = vmatprep.subr.mxu0 0.0
      %5352 = vmatpush1.msra.mxu0 0.0
      %5353 = vmatprep.subr.mxu0 0.0
      %5354 = vmatpush1.msra.mxu0 0.0
      %5355 = vmatprep.subr.mxu0 0.0
      %5356 = vmatpush1.msra.mxu0 0.0
      %5357 = vmatprep.subr.mxu0 0.0
      %5358 = vmatpush1.msra.mxu0 0.0
      %5359 = vmatprep.subr.mxu0 0.0
      %5360 = vmatpush1.msra.mxu0 0.0
      %5361 = vmatprep.subr.mxu0 0.0
      %5362 = vmatpush1.msra.mxu0 0.0
      %5363 = vmatprep.subr.mxu0 0.0
      %5364 = vmatpush1.msra.mxu0 0.0
      %5365 = vmatprep.subr.mxu0 0.0
      %5366 = vmatpush1.msra.mxu0 0.0
      %5367 = vmatprep.subr.mxu0 0.0
      %5368 = vmatpush1.msra.mxu0 0.0
      %5369 = vmatprep.subr.mxu0 0.0
      %5370 = vmatpush1.msra.mxu0 0.0
      %5371 = vmatprep.subr.mxu0 0.0
      %5372 = vmatpush1.msra.mxu0 0.0
      %5373 = vmatprep.mubr.f32.mxu0 0.0
      %5374 = vmatmul.mubr.f32.gmra.mrb[0].mxu0 %v5307
      %v5375 = vpop.f32.mrb[0].mxu0
      %v5376 = vadd.f32 %v5305, %v5375
      %v5377 = vpop.f32.mrb[0].mxu0
      %5378 = vdwg.mxu0
      %v5379 = vxor.u32 %v5376, 2147483648
      %v5380 = vmul.f32 %v5379, 1.442695
      %v5381 = vpow.pop %v5380
      %v5382 = vadd.f32 %v5381, 1.0
      %v5383 = vrcp.pop %v5382
      %v5384 = vmul.f32 1.0, %v5383
      %vm5385 = vcmask 0
      %5386 = vst.msk [vmem:[%s746] sm:$0x1] %vm5385, %v5384
      %p5387 = scmp.lt.s32.totalorder %s37, 1
      %s5388 = scalar_select %p5387, %s37, 1
      %s5389 = scalar_lea.vmem %s24, %s5388
      // Predicated region
      $region117: #{transformer_reg_forward.1} parent=115 // pred_check
        %p5390 = pneg %p569
      $region118: #{transformer_reg_forward.1} parent=115 // pred_check_branch
        %5392 = sbr.rel (%p5390) target = $region120
      $region119: #{transformer_reg_forward.1} parent=115 // pred_region
        _
      $region120: #{transformer_reg_forward.1} parent=115 // pred_fallthru
        _
    $region116: #{transformer_reg_forward.1} parent=5 // pred_fallthru
      _
    %p5393 = scmp.le.s32.totalorder 2, %s32
    // Predicated region
    $region121: #{transformer_reg_forward.1} parent=5 // pred_check
      %p5394 = pneg %p5393
    $region122: #{transformer_reg_forward.1} parent=5 // pred_check_branch
      %5396 = sbr.rel (%p5394) target = $region124
    $region123: #{transformer_reg_forward.1} parent=5 // pred_region
      %s5397 = ssub.s32 %s32, 2
      // Predicated region
      $region125: #{transformer_reg_forward.1} parent=123 // pred_check
        %p5398 = pneg %p575
      $region126: #{transformer_reg_forward.1} parent=123 // pred_check_branch
        %5400 = sbr.rel (%p5398) target = $region128
      $region127: #{transformer_reg_forward.1} parent=123 // pred_region
        %p5401 = scmp.lt.s32.totalorder %s38, 1
        %s5402 = scalar_select %p5401, %s38, 1
        %s5403 = scalar_lea.vmem %s24, %s5402
      $region128: #{transformer_reg_forward.1} parent=123 // pred_fallthru
        _
    $region124: #{transformer_reg_forward.1} parent=5 // pred_fallthru
      _
  $region6: #{transformer_reg_forward.1} parent=0 // loop_footer
    %s36 = sadd.s32 1, %s32
  $region7: #{transformer_reg_forward.1} parent=0 // loop_footer_branch
    %31 = sbr.rel target = $region3
  $region8: #{transformer_reg_forward.1} parent=0 // loop_exit
    _

</llo_original>
